<compile_context>
chip_gen: v7x
topology: tpu7x:2x2x1
jax: 0.10.0
libtpu: 0.0.40
codegen_flags: <defaults>
</compile_context>

<pallas_src>
import functools
import math

import jax
import jax.numpy as jnp
from jax.experimental import pallas as pl
from jax.experimental.pallas import tpu as pltpu


# ---------------------------------------------------------------------------
# Generation-aware configuration + VMEM budgeting
# ---------------------------------------------------------------------------

def _tpu_config():
    vmem_cap = 128 << 20
    try:
        info = pltpu.get_tpu_info()
        vmem_cap = int(getattr(info, "vmem_capacity_bytes", vmem_cap))
    except Exception:
        pass
    small_vmem = vmem_cap <= (64 << 20)          # v7x-class part (64 MiB per TC)
    return {
        "vmem_budget": (36 << 20) if small_vmem else (48 << 20),
        "attn_q_tile": 256 if small_vmem else 512,
        "ffn_row_tile": 512,
        "vocab_lane_tile": 1024 if small_vmem else 2048,
    }


_CFG = _tpu_config()


def _bytes(shape, dtype):
    n = 1
    for d in shape:
        n *= int(d)
    return n * jnp.dtype(dtype).itemsize


def _vmem_limit(blocks):
    total = sum(_bytes(s, d) for s, d in blocks)
    return int(min(max(2 * total + (2 << 20), 4 << 20), _CFG["vmem_budget"]))


def _fits(blocks):
    return 2 * sum(_bytes(s, d) for s, d in blocks) + (2 << 20) <= _CFG["vmem_budget"]


def _maybe_buffered_spec(shape, index_map, nbuf):
    """BlockSpec with deeper pipelining when the API supports it (no-op fallback)."""
    buffered = getattr(pl, "Buffered", None)
    if buffered is not None:
        try:
            return pl.BlockSpec(shape, index_map, pipeline_mode=buffered(nbuf))
        except TypeError:
            pass
    return pl.BlockSpec(shape, index_map)


# ---------------------------------------------------------------------------
# Fused attention (+ optional FFN) block:
#   QKV proj -> per-head attention -> out proj -> residual -> LN [-> FFN -> residual -> LN]
# ---------------------------------------------------------------------------

def _attn_kernel(*refs, n_heads, inv_scale, causal, dedup_q, fuse_ffn, return_attn, tq):
    it = iter(refs)
    xq_ref = None if dedup_q else next(it)
    xkv_ref = next(it)
    valid_ref = next(it)
    wq_ref, bq_ref = next(it), next(it)
    wk_ref, bk_ref = next(it), next(it)
    wv_ref, bv_ref = next(it), next(it)
    wo_ref, bo_ref = next(it), next(it)
    g1_ref, be1_ref = next(it), next(it)
    if fuse_ffn:
        fw1_ref, fb1_ref = next(it), next(it)
        fw2_ref, fb2_ref = next(it), next(it)
        g2_ref, be2_ref = next(it), next(it)
    o_ref = next(it)
    p_ref = next(it) if return_attn else None
    acc_ref = next(it)                                   # [tq, H] f32 VMEM scratch

    qi = pl.program_id(1)
    xkv = xkv_ref[0]                                     # [Lk, H] bf16 (resident per batch)
    Lk = xkv.shape[0]

    if dedup_q:
        # self-attention: slice the query tile from the already-resident K/V activation
        start = pl.multiple_of(qi * tq, tq)
        xq = xkv_ref[0, pl.ds(start, tq), :]             # [tq, H] bf16
    else:
        xq = xq_ref[0]                                   # [tq, H] bf16

    # Query-axis pad-valid mask (exactly the reference module's semantics), plus causal tril.
    keep = valid_ref[0] > 0.5                            # [tq, 1] bool
    if causal:
        row = jax.lax.broadcasted_iota(jnp.int32, (tq, Lk), 0) + qi * tq
        col = jax.lax.broadcasted_iota(jnp.int32, (tq, Lk), 1)
        keep = jnp.logical_and(keep, col <= row)         # [tq, Lk]
    keep = jnp.broadcast_to(keep, (tq, Lk))
    neg = jnp.float32(-1e10)

    acc_ref[...] = jnp.zeros_like(acc_ref)

    def head_body(h, carry):
        # Per-head projections (bf16 MXU operands, f32 accumulate); weights are stored
        # head-major so the head "slice" is a cheap leading-dim ref index, not a lane slice.
        q = jnp.dot(xq, wq_ref[h], preferred_element_type=jnp.float32) + bq_ref[h]   # [tq, dh]
        k = jnp.dot(xkv, wk_ref[h], preferred_element_type=jnp.float32) + bk_ref[h]  # [Lk, dh]
        v = jnp.dot(xkv, wv_ref[h], preferred_element_type=jnp.float32) + bv_ref[h]  # [Lk, dh]

        s = jax.lax.dot_general(q.astype(jnp.bfloat16), k.astype(jnp.bfloat16),
                                (((1,), (1,)), ((), ())),
                                preferred_element_type=jnp.float32) * inv_scale       # [tq, Lk]
        e = jnp.where(keep, s, neg)                       # == masked_fill(mask == 0, -1e10)
        m = jnp.max(e, axis=-1, keepdims=True)
        p = jnp.exp(e - m)
        a = p * pl.reciprocal(jnp.sum(p, axis=-1, keepdims=True), approx=True)        # [tq, Lk]
        if return_attn:
            p_ref[0, h] = a.astype(p_ref.dtype)           # only last decoder cross-attn

        ctx = jnp.dot(a.astype(jnp.bfloat16), v.astype(jnp.bfloat16),
                      preferred_element_type=jnp.float32)                             # [tq, dh]
        # Per-head slice of the output projection, accumulated into the f32 scratch.
        acc_ref[...] += jnp.dot(ctx.astype(jnp.bfloat16), wo_ref[h],
                                preferred_element_type=jnp.float32)                   # [tq, H]
        return carry

    jax.lax.fori_loop(0, n_heads, head_body, 0)

    out = acc_ref[...] + bo_ref[...]
    # residual + LayerNorm (PyTorch default eps=1e-5); dropout is eval-mode identity.
    y = out + xq.astype(jnp.float32)
    mean = jnp.mean(y, axis=-1, keepdims=True)
    var = jnp.mean((y - mean) ** 2, axis=-1, keepdims=True)
    y = (y - mean) * jax.lax.rsqrt(var + 1e-5) * g1_ref[...] + be1_ref[...]

    if fuse_ffn:
        hdn = jnp.dot(y.astype(jnp.bfloat16), fw1_ref[...],
                      preferred_element_type=jnp.float32) + fb1_ref[...]
        hdn = jnp.maximum(hdn, 0.0)
        f = jnp.dot(hdn.astype(jnp.bfloat16), fw2_ref[...],
                    preferred_element_type=jnp.float32) + fb2_ref[...]
        y2 = f + y
        mean2 = jnp.mean(y2, axis=-1, keepdims=True)
        var2 = jnp.mean((y2 - mean2) ** 2, axis=-1, keepdims=True)
        y = (y2 - mean2) * jax.lax.rsqrt(var2 + 1e-5) * g2_ref[...] + be2_ref[...]

    o_ref[0] = y.astype(o_ref.dtype)


def attention_block(ap, ln_g, ln_b, x_q, x_kv, valid_q, *, n_heads, causal,
                    ffn=None, return_attn=False):
    """Returns (y_bf16 [B,Lq,H], probs_bf16 [B,nh,Lq,Lk] or None)."""
    B, Lq, H = x_q.shape
    Lk = x_kv.shape[1]
    # Reference module's masks vary along the query axis -> trg_len == src_len constraint.
    assert valid_q.shape == (B, Lq, 1), (valid_q.shape, (B, Lq, 1))
    dh = H // n_heads
    inv_scale = 1.0 / math.sqrt(dh)

    tq = Lq if Lq <= _CFG["attn_q_tile"] else _CFG["attn_q_tile"]
    n_qt = pl.cdiv(Lq, tq)
    dedup_q = (x_q is x_kv) and (Lq % tq == 0)      # self-attn: fetch activation once

    # --- block footprint (for vmem limit + fuse decision) ---
    blocks = []
    if not dedup_q:
        blocks.append(((1, tq, H), x_q.dtype))
    blocks += [((1, Lk, H), x_kv.dtype), ((1, tq, 1), valid_q.dtype),
               ((n_heads, H, dh), ap["wq"].dtype), ((n_heads, 1, dh), jnp.float32),
               ((n_heads, H, dh), ap["wk"].dtype), ((n_heads, 1, dh), jnp.float32),
               ((n_heads, H, dh), ap["wv"].dtype), ((n_heads, 1, dh), jnp.float32),
               ((n_heads, dh, H), ap["wo"].dtype), ((1, H), jnp.float32),
               ((1, H), jnp.float32), ((1, H), jnp.float32)]
    fuse_ffn = ffn is not None
    ffn_blocks = []
    if fuse_ffn:
        PF = ffn["w1"].shape[1]
        ffn_blocks = [((H, PF), ffn["w1"].dtype), ((1, PF), jnp.float32),
                      ((PF, H), ffn["w2"].dtype), ((1, H), jnp.float32),
                      ((1, H), jnp.float32), ((1, H), jnp.float32)]
    out_blocks = [((1, tq, H), jnp.bfloat16)]
    if return_attn:
        out_blocks.append(((1, n_heads, tq, Lk), jnp.bfloat16))
    scratch_blocks = [((tq, H), jnp.float32)]
    all_blocks = blocks + ffn_blocks + out_blocks + scratch_blocks

    if fuse_ffn and not _fits(all_blocks):
        # v7x-style fallback: attention alone, then the separate row-tiled FFN kernel.
        y, attn = attention_block(ap, ln_g, ln_b, x_q, x_kv, valid_q, n_heads=n_heads,
                                  causal=causal, ffn=None, return_attn=return_attn)
        y = ffn_block(y.reshape(B * Lq, H), ffn["w1"], ffn["b1"], ffn["w2"], ffn["b2"],
                      ffn["g"], ffn["b"]).reshape(B, Lq, H)
        return y, attn

    def _const(shape):
        return pl.BlockSpec(shape, lambda b, qi: (0,) * len(shape))

    in_specs, args = [], []
    if not dedup_q:
        in_specs.append(pl.BlockSpec((1, tq, H), lambda b, qi: (b, qi, 0)))
        args.append(x_q)
    in_specs.append(pl.BlockSpec((1, Lk, H), lambda b, qi: (b, 0, 0)))   # resident per batch
    args.append(x_kv)
    in_specs.append(pl.BlockSpec((1, tq, 1), lambda b, qi: (b, qi, 0)))
    args.append(valid_q)
    for name, shp in [("wq", (n_heads, H, dh)), ("bq", (n_heads, 1, dh)),
                      ("wk", (n_heads, H, dh)), ("bk", (n_heads, 1, dh)),
                      ("wv", (n_heads, H, dh)), ("bv", (n_heads, 1, dh)),
                      ("wo", (n_heads, dh, H)), ("bo", (1, H))]:
        in_specs.append(_const(shp))
        args.append(ap[name])
    in_specs += [_const((1, H)), _const((1, H))]
    args += [ln_g, ln_b]
    if fuse_ffn:
        PF = ffn["w1"].shape[1]
        for a, shp in [(ffn["w1"], (H, PF)), (ffn["b1"], (1, PF)),
                       (ffn["w2"], (PF, H)), (ffn["b2"], (1, H)),
                       (ffn["g"], (1, H)), (ffn["b"], (1, H))]:
            in_specs.append(_const(shp))
            args.append(a)

    out_shapes = [jax.ShapeDtypeStruct((B, Lq, H), jnp.bfloat16)]
    out_specs = [pl.BlockSpec((1, tq, H), lambda b, qi: (b, qi, 0))]
    if return_attn:
        out_shapes.append(jax.ShapeDtypeStruct((B, n_heads, Lq, Lk), jnp.bfloat16))
        out_specs.append(pl.BlockSpec((1, n_heads, tq, Lk), lambda b, qi: (b, 0, qi, 0)))

    kernel = functools.partial(_attn_kernel, n_heads=n_heads, inv_scale=inv_scale,
                               causal=causal, dedup_q=dedup_q, fuse_ffn=fuse_ffn,
                               return_attn=return_attn, tq=tq)

    outs = pl.pallas_call(
        kernel,
        out_shape=tuple(out_shapes),
        grid=(B, n_qt),
        in_specs=in_specs,
        out_specs=tuple(out_specs),
        scratch_shapes=[pltpu.VMEM((tq, H), jnp.float32)],
        compiler_params=pltpu.CompilerParams(
            dimension_semantics=("parallel", "parallel"),
            vmem_limit_bytes=_vmem_limit(all_blocks)),
    )(*args)

    if return_attn:
        return outs[0], outs[1]
    return outs[0], None


# ---------------------------------------------------------------------------
# Standalone FFN kernel (fallback when attn+FFN fusion would not fit VMEM)
# ---------------------------------------------------------------------------

def _ffn_kernel(x_ref, w1_ref, b1_ref, w2_ref, b2_ref, g_ref, beta_ref, o_ref):
    x = x_ref[...]                                         # [tm, H] bf16
    h = jnp.dot(x, w1_ref[...], preferred_element_type=jnp.float32) + b1_ref[...]
    h = jnp.maximum(h, 0.0)
    f = jnp.dot(h.astype(jnp.bfloat16), w2_ref[...],
                preferred_element_type=jnp.float32) + b2_ref[...]
    y = f + x.astype(jnp.float32)
    mean = jnp.mean(y, axis=-1, keepdims=True)
    var = jnp.mean((y - mean) ** 2, axis=-1, keepdims=True)
    o_ref[...] = ((y - mean) * jax.lax.rsqrt(var + 1e-5) * g_ref[...]
                  + beta_ref[...]).astype(o_ref.dtype)


def ffn_block(x, w1, b1, w2, b2, g, beta):
    M, H = x.shape
    PF = w1.shape[1]
    tm = M if M <= _CFG["ffn_row_tile"] else _CFG["ffn_row_tile"]
    blocks = [((tm, H), x.dtype), ((H, PF), w1.dtype), ((1, PF), jnp.float32),
              ((PF, H), w2.dtype), ((1, H), jnp.float32), ((1, H), jnp.float32),
              ((1, H), jnp.float32), ((tm, H), jnp.bfloat16)]
    return pl.pallas_call(
        _ffn_kernel,
        out_shape=jax.ShapeDtypeStruct((M, H), jnp.bfloat16),
        grid=(pl.cdiv(M, tm),),
        in_specs=[
            pl.BlockSpec((tm, H), lambda i: (i, 0)),
            pl.BlockSpec((H, PF), lambda i: (0, 0)),
            pl.BlockSpec((1, PF), lambda i: (0, 0)),
            pl.BlockSpec((PF, H), lambda i: (0, 0)),
            pl.BlockSpec((1, H), lambda i: (0, 0)),
            pl.BlockSpec((1, H), lambda i: (0, 0)),
            pl.BlockSpec((1, H), lambda i: (0, 0)),
        ],
        out_specs=pl.BlockSpec((tm, H), lambda i: (i, 0)),
        compiler_params=pltpu.CompilerParams(
            dimension_semantics=("parallel",),
            vmem_limit_bytes=_vmem_limit(blocks)),
    )(x, w1, b1, w2, b2, g, beta)


# ---------------------------------------------------------------------------
# Tiled linear (decoder fc_out vocabulary projection)
# ---------------------------------------------------------------------------

def _linear_kernel(x_ref, w_ref, b_ref, o_ref):
    o_ref[...] = jnp.dot(x_ref[...], w_ref[...],
                         preferred_element_type=jnp.float32) + b_ref[...]


def linear(x, w, b):
    # TODO(synk): K (= hidden) is left untiled; add a K grid axis with an f32 VMEM accumulator
    # if the hidden size grows to the point where a (K, lane_tile) weight slab is large.
    M, K = x.shape
    N = w.shape[1]
    tm = M if M <= 512 else 512
    lane = _CFG["vocab_lane_tile"]
    tn = N if N <= lane else lane
    blocks = [((tm, K), x.dtype), ((K, tn), w.dtype), ((1, tn), jnp.float32),
              ((tm, tn), jnp.float32)]
    if N > lane:
        w_spec = _maybe_buffered_spec((K, tn), lambda i, j: (0, j), 3)
    else:
        w_spec = pl.BlockSpec((K, tn), lambda i, j: (0, j))
    return pl.pallas_call(
        _linear_kernel,
        out_shape=jax.ShapeDtypeStruct((M, N), jnp.float32),
        grid=(pl.cdiv(M, tm), pl.cdiv(N, tn)),
        in_specs=[
            pl.BlockSpec((tm, K), lambda i, j: (i, 0)),
            w_spec,
            pl.BlockSpec((1, tn), lambda i, j: (0, j)),
        ],
        out_specs=pl.BlockSpec((tm, tn), lambda i, j: (i, j)),
        compiler_params=pltpu.CompilerParams(
            dimension_semantics=("parallel", "parallel"),
            vmem_limit_bytes=_vmem_limit(blocks)),
    )(x, w, b)


# ---------------------------------------------------------------------------
# Model glue (embeddings, layer stacking) in plain JAX
# ---------------------------------------------------------------------------

def encoder_layer(lp, h, src_valid_q, n_heads):
    ffn = {"w1": lp["ff_w1"], "b1": lp["ff_b1"], "w2": lp["ff_w2"], "b2": lp["ff_b2"],
           "g": lp["ln2_g"], "b": lp["ln2_b"]}
    h, _ = attention_block(lp["attn"], lp["ln1_g"], lp["ln1_b"], h, h, src_valid_q,
                           n_heads=n_heads, causal=False, ffn=ffn)
    return h


def decoder_layer(lp, t, z, src_valid_q, trg_valid_q, n_heads, return_attn):
    t, _ = attention_block(lp["self_attn"], lp["ln1_g"], lp["ln1_b"], t, t, trg_valid_q,
                           n_heads=n_heads, causal=True)
    ffn = {"w1": lp["ff_w1"], "b1": lp["ff_b1"], "w2": lp["ff_w2"], "b2": lp["ff_b2"],
           "g": lp["ln3_g"], "b": lp["ln3_b"]}
    t, attention = attention_block(lp["cross_attn"], lp["ln2_g"], lp["ln2_b"],
                                   t, z, src_valid_q, n_heads=n_heads, causal=False,
                                   ffn=ffn, return_attn=return_attn)
    return t, attention


def encode(p, src_bt, src_valid_q, n_heads):
    Ls = src_bt.shape[1]
    hid = p["tok_emb"].shape[1]
    # TODO(synk): embedding gathers stay in XLA (no clean tiny-Pallas equivalent w/o DMA gather).
    tok = jnp.take(p["tok_emb"], src_bt, axis=0)                # [B, Ls, hid]
    pos = p["pos_emb"][:Ls][None]                               # [1, Ls, hid]
    h = (tok * math.sqrt(hid) + pos).astype(jnp.bfloat16)       # dropout = eval identity
    for lp in p["layers"]:
        h = encoder_layer(lp, h, src_valid_q, n_heads)
    return h


def decode(p, trg_bt, z, src_valid_q, trg_valid_q, n_heads):
    B, Lt = trg_bt.shape
    hid = p["tok_emb"].shape[1]
    tok = jnp.take(p["tok_emb"], trg_bt, axis=0)
    pos = p["pos_emb"][:Lt][None]
    t = (tok * math.sqrt(hid) + pos).astype(jnp.bfloat16)
    attention = None
    n_layers = len(p["layers"])
    for i, lp in enumerate(p["layers"]):
        t, a = decoder_layer(lp, t, z, src_valid_q, trg_valid_q, n_heads,
                             return_attn=(i == n_layers - 1))
        if a is not None:
            attention = a
    logits = linear(t.reshape(B * Lt, hid), p["fc_out_w"], p["fc_out_b"])
    return logits.reshape(B, Lt, p["fc_out_w"].shape[1]), attention


def seq2seq_forward(params, src, trg, *, src_pad_idx, trg_pad_idx, n_heads):
    # src: [src_len, batch] int32, trg: [trg_len, batch] int32 (module convention)
    src_bt = src.T                                              # [B, Ls]
    trg_bt = trg.T                                              # [B, Lt]
    # Reference module builds masks that vary along the *query* axis:
    #   src_mask[b, i, j] = (src[i, b] != pad);  trg_mask = trg_pad_mask * tril
    # Only the [B, L, 1] valid vectors are materialized; full masks are built in-kernel.
    src_valid_q = (src_bt != src_pad_idx).astype(jnp.float32)[:, :, None]   # [B, Ls, 1]
    trg_valid_q = (trg_bt != trg_pad_idx).astype(jnp.float32)[:, :, None]   # [B, Lt, 1]
    z = encode(params["enc"], src_bt, src_valid_q, n_heads)
    out, attention = decode(params["dec"], trg_bt, z, src_valid_q, trg_valid_q, n_heads)
    return out, attention


# ---------------------------------------------------------------------------
# Deterministic parameter initialization (matmul weights stored bf16, head-major layout)
# ---------------------------------------------------------------------------

def _init_mha(key, hid, n_heads):
    dh = hid // n_heads
    kq, kk, kv, ko = jax.random.split(key, 4)

    def _head_cols(k):      # [H, H] -> [n_heads, H, dh] (columns of head h)
        w = jax.random.normal(k, (hid, hid), jnp.float32) * 0.02
        return jnp.transpose(w.reshape(hid, n_heads, dh), (1, 0, 2)).astype(jnp.bfloat16)

    wo = jax.random.normal(ko, (hid, hid), jnp.float32) * 0.02
    return {
        "wq": _head_cols(kq), "bq": jnp.zeros((n_heads, 1, dh), jnp.float32),
        "wk": _head_cols(kk), "bk": jnp.zeros((n_heads, 1, dh), jnp.float32),
        "wv": _head_cols(kv), "bv": jnp.zeros((n_heads, 1, dh), jnp.float32),
        "wo": wo.reshape(n_heads, dh, hid).astype(jnp.bfloat16),   # rows of head h
        "bo": jnp.zeros((1, hid), jnp.float32),
    }


def _init_ffn(k1, k2, hid, pf):
    return {
        "ff_w1": (jax.random.normal(k1, (hid, pf), jnp.float32) * 0.02).astype(jnp.bfloat16),
        "ff_b1": jnp.zeros((1, pf), jnp.float32),
        "ff_w2": (jax.random.normal(k2, (pf, hid), jnp.float32) * 0.02).astype(jnp.bfloat16),
        "ff_b2": jnp.zeros((1, hid), jnp.float32),
    }


def _init_enc_layer(key, hid, pf, n_heads):
    k1, k2, k3 = jax.random.split(key, 3)
    p = {"attn": _init_mha(k1, hid, n_heads),
         "ln1_g": jnp.ones((1, hid), jnp.float32), "ln1_b": jnp.zeros((1, hid), jnp.float32),
         "ln2_g": jnp.ones((1, hid), jnp.float32), "ln2_b": jnp.zeros((1, hid), jnp.float32)}
    p.update(_init_ffn(k2, k3, hid, pf))
    return p


def _init_dec_layer(key, hid, pf, n_heads):
    k1, k2, k3, k4 = jax.random.split(key, 4)
    p = {"self_attn": _init_mha(k1, hid, n_heads),
         "cross_attn": _init_mha(k2, hid, n_heads),
         "ln1_g": jnp.ones((1, hid), jnp.float32), "ln1_b": jnp.zeros((1, hid), jnp.float32),
         "ln2_g": jnp.ones((1, hid), jnp.float32), "ln2_b": jnp.zeros((1, hid), jnp.float32),
         "ln3_g": jnp.ones((1, hid), jnp.float32), "ln3_b": jnp.zeros((1, hid), jnp.float32)}
    p.update(_init_ffn(k3, k4, hid, pf))
    return p


def init_params(key, input_dim, output_dim, hid, pf, n_layers, n_heads, max_len):
    k_enc, k_dec = jax.random.split(key, 2)
    ke = jax.random.split(k_enc, n_layers + 2)
    kd = jax.random.split(k_dec, n_layers + 3)
    enc = {
        "tok_emb": jax.random.normal(ke[0], (input_dim, hid), jnp.float32) * 0.02,
        "pos_emb": jax.random.normal(ke[1], (max_len, hid), jnp.float32) * 0.02,
        "layers": [_init_enc_layer(ke[2 + i], hid, pf, n_heads) for i in range(n_layers)],
    }
    dec = {
        "tok_emb": jax.random.normal(kd[0], (output_dim, hid), jnp.float32) * 0.02,
        "pos_emb": jax.random.normal(kd[1], (max_len, hid), jnp.float32) * 0.02,
        "layers": [_init_dec_layer(kd[2 + i], hid, pf, n_heads) for i in range(n_layers)],
        "fc_out_w": (jax.random.normal(kd[-1], (hid, output_dim), jnp.float32) * 0.02
                     ).astype(jnp.bfloat16),
        "fc_out_b": jnp.zeros((1, output_dim), jnp.float32),
    }
    return {"enc": enc, "dec": dec}


# ---------------------------------------------------------------------------

if __name__ == "__main__":
    SRC_LEN, TRG_LEN, BATCH = 8, 8, 2
    INPUT_DIM, OUTPUT_DIM = 16, 16
    HID, N_HEADS, PF_DIM, N_LAYERS, MAX_LEN = 32, 4, 64, 2, 32
    SRC_PAD_IDX, TRG_PAD_IDX = 0, 0

    key = jax.random.PRNGKey(0)
    k_param, k_src, k_trg = jax.random.split(key, 3)
    params = init_params(k_param, INPUT_DIM, OUTPUT_DIM, HID, PF_DIM, N_LAYERS, N_HEADS,
                         MAX_LEN)

    src = jax.random.randint(k_src, (SRC_LEN, BATCH), 0, INPUT_DIM, dtype=jnp.int32)
    trg = jax.random.randint(k_trg, (TRG_LEN, BATCH), 0, OUTPUT_DIM, dtype=jnp.int32)

    fwd = jax.jit(
        functools.partial(
            seq2seq_forward,
            src_pad_idx=SRC_PAD_IDX,
            trg_pad_idx=TRG_PAD_IDX,
            n_heads=N_HEADS,
        )
    )
    out, attention = fwd(params, src, trg)
    jax.block_until_ready((out, attention))

    assert out.shape == (BATCH, TRG_LEN, OUTPUT_DIM), out.shape
    assert attention.shape == (BATCH, N_HEADS, TRG_LEN, SRC_LEN), attention.shape
    assert jnp.all(jnp.isfinite(out.astype(jnp.float32)))
    assert jnp.all(jnp.isfinite(attention.astype(jnp.float32)))
    print("KERNEL_OK")
</pallas_src>

<mosaic_0001>
module attributes {stable_mosaic.version = 11 : i64} {
  func.func @_attn_kernel(%arg0: i32, %arg1: i32, %arg2: memref<1x8x32xbf16, #tpu.memory_space<vmem>>, %arg3: memref<1x8x1xf32, #tpu.memory_space<vmem>>, %arg4: memref<4x32x8xbf16, #tpu.memory_space<vmem>>, %arg5: memref<4x1x8xf32, #tpu.memory_space<vmem>>, %arg6: memref<4x32x8xbf16, #tpu.memory_space<vmem>>, %arg7: memref<4x1x8xf32, #tpu.memory_space<vmem>>, %arg8: memref<4x32x8xbf16, #tpu.memory_space<vmem>>, %arg9: memref<4x1x8xf32, #tpu.memory_space<vmem>>, %arg10: memref<4x8x32xbf16, #tpu.memory_space<vmem>>, %arg11: memref<1x32xf32, #tpu.memory_space<vmem>>, %arg12: memref<1x32xf32, #tpu.memory_space<vmem>>, %arg13: memref<1x32xf32, #tpu.memory_space<vmem>>, %arg14: memref<1x8x32xbf16, #tpu.memory_space<vmem>>, %arg15: memref<8x32xf32, #tpu.memory_space<vmem>>) attributes {dimension_semantics = [#tpu.dimension_semantics<parallel>, #tpu.dimension_semantics<parallel>], iteration_bounds = array<i64: 2, 1>, scalar_prefetch = 0 : i64, scratch_operands = 1 : i64, tpu.core_type = #tpu.core_type<tc>, window_params = [{transform_indices = @transform_0, window_bounds = array<i64: 1, 8, 32>}, {transform_indices = @transform_1, window_bounds = array<i64: 1, 8, 1>}, {pipeline_mode = #tpu.pipeline_mode<synchronous>, transform_indices = @transform_2, window_bounds = array<i64: 4, 32, 8>}, {pipeline_mode = #tpu.pipeline_mode<synchronous>, transform_indices = @transform_3, window_bounds = array<i64: 4, 1, 8>}, {pipeline_mode = #tpu.pipeline_mode<synchronous>, transform_indices = @transform_4, window_bounds = array<i64: 4, 32, 8>}, {pipeline_mode = #tpu.pipeline_mode<synchronous>, transform_indices = @transform_5, window_bounds = array<i64: 4, 1, 8>}, {pipeline_mode = #tpu.pipeline_mode<synchronous>, transform_indices = @transform_6, window_bounds = array<i64: 4, 32, 8>}, {pipeline_mode = #tpu.pipeline_mode<synchronous>, transform_indices = @transform_7, window_bounds = array<i64: 4, 1, 8>}, {pipeline_mode = #tpu.pipeline_mode<synchronous>, transform_indices = @transform_8, window_bounds = array<i64: 4, 8, 32>}, {pipeline_mode = #tpu.pipeline_mode<synchronous>, transform_indices = @transform_9, window_bounds = array<i64: 1, 32>}, {pipeline_mode = #tpu.pipeline_mode<synchronous>, transform_indices = @transform_10, window_bounds = array<i64: 1, 32>}, {pipeline_mode = #tpu.pipeline_mode<synchronous>, transform_indices = @transform_11, window_bounds = array<i64: 1, 32>}, {transform_indices = @transform_12, window_bounds = array<i64: 1, 8, 32>}]} {
    %c0 = arith.constant 0 : index
    %c0_0 = arith.constant 0 : index
    %c0_1 = arith.constant 0 : index
    %0 = vector.load %arg2[%c0, %c0_0, %c0_1] : memref<1x8x32xbf16, #tpu.memory_space<vmem>>, vector<1x8x32xbf16>
    %1 = vector.shape_cast %0 : vector<1x8x32xbf16> to vector<8x32xbf16>
    %c8_i32 = arith.constant 8 : i32
    %2 = arith.muli %arg1, %c8_i32 : i32
    %3 = tpu.assume_multiple %2, 8 : i32
    %c0_2 = arith.constant 0 : index
    %4 = arith.index_cast %3 : i32 to index
    %c0_3 = arith.constant 0 : index
    %5 = vector.load %arg2[%c0_2, %4, %c0_3] : memref<1x8x32xbf16, #tpu.memory_space<vmem>>, vector<1x8x32xbf16>
    %6 = vector.shape_cast %5 : vector<1x8x32xbf16> to vector<8x32xbf16>
    %c0_4 = arith.constant 0 : index
    %c0_5 = arith.constant 0 : index
    %c0_6 = arith.constant 0 : index
    %7 = vector.load %arg3[%c0_4, %c0_5, %c0_6] : memref<1x8x1xf32, #tpu.memory_space<vmem>>, vector<1x8x1xf32>
    %8 = vector.shape_cast %7 : vector<1x8x1xf32> to vector<8x1xf32>
    %cst = arith.constant 5.000000e-01 : f32
    %9 = vector.broadcast %cst : f32 to vector<8x1xf32>
    %10 = arith.cmpf ogt, %8, %9 : vector<8x1xf32>
    %11 = tpu.iota {dimensions = array<i32: 0>} : vector<8x8xi32>
    %c8_i32_7 = arith.constant 8 : i32
    %12 = arith.muli %arg1, %c8_i32_7 : i32
    %13 = vector.broadcast %12 : i32 to vector<8x8xi32>
    %14 = arith.addi %11, %13 : vector<8x8xi32>
    %15 = tpu.iota {dimensions = array<i32: 1>} : vector<8x8xi32>
    %16 = arith.cmpi sle, %15, %14 : vector<8x8xi32>
    %17 = vector.broadcast %10 : vector<8x1xi1> to vector<8x8xi1>
    %18 = arith.andi %17, %16 : vector<8x8xi1>
    %cst_8 = arith.constant 0.000000e+00 : f32
    %19 = vector.broadcast %cst_8 : f32 to vector<8x32xf32>
    %c0_9 = arith.constant 0 : index
    %c0_10 = arith.constant 0 : index
    %20 = vector.load %arg15[%c0_9, %c0_10] : memref<8x32xf32, #tpu.memory_space<vmem>>, vector<8x32xf32>
    tpu.vector_store %arg15[%c0_9, %c0_10], %19 {strides = array<i32>} : memref<8x32xf32, #tpu.memory_space<vmem>>, vector<8x32xf32>,
    %cst_11 = arith.constant -1.000000e+10 : f32
    %c0_i32 = arith.constant 0 : i32
    %c4_i32 = arith.constant 4 : i32
    %21 = arith.addi %c0_i32, %c4_i32 : i32
    %c1_i32 = arith.constant 1 : i32
    scf.for %arg16 = %c0_i32 to %21 step %c1_i32  : i32 {
      %56 = arith.index_cast %arg16 : i32 to index
      %c0_29 = arith.constant 0 : index
      %c0_30 = arith.constant 0 : index
      %57 = vector.load %arg4[%56, %c0_29, %c0_30] : memref<4x32x8xbf16, #tpu.memory_space<vmem>>, vector<1x32x8xbf16>
      %58 = vector.shape_cast %57 : vector<1x32x8xbf16> to vector<32x8xbf16>
      %cst_31 = arith.constant dense<0.000000e+00> : vector<8x8xf32>
      %59 = tpu.matmul %6, %58, %cst_31 {dimension_numbers = #tpu.dot_dimension_numbers<[1], [0], [0], [1], [0, 0, 1, 1], [], []>} : vector<8x32xbf16>, vector<32x8xbf16>, vector<8x8xf32> -> vector<8x8xf32>
      %60 = arith.index_cast %arg16 : i32 to index
      %c0_32 = arith.constant 0 : index
      %c0_33 = arith.constant 0 : index
      %61 = vector.load %arg5[%60, %c0_32, %c0_33] : memref<4x1x8xf32, #tpu.memory_space<vmem>>, vector<1x1x8xf32>
      %62 = vector.shape_cast %61 : vector<1x1x8xf32> to vector<1x8xf32>
      %63 = vector.broadcast %62 : vector<1x8xf32> to vector<8x8xf32>
      %64 = arith.addf %59, %63 : vector<8x8xf32>
      %65 = arith.index_cast %arg16 : i32 to index
      %c0_34 = arith.constant 0 : index
      %c0_35 = arith.constant 0 : index
      %66 = vector.load %arg6[%65, %c0_34, %c0_35] : memref<4x32x8xbf16, #tpu.memory_space<vmem>>, vector<1x32x8xbf16>
      %67 = vector.shape_cast %66 : vector<1x32x8xbf16> to vector<32x8xbf16>
      %cst_36 = arith.constant dense<0.000000e+00> : vector<8x8xf32>
      %68 = tpu.matmul %1, %67, %cst_36 {dimension_numbers = #tpu.dot_dimension_numbers<[1], [0], [0], [1], [0, 0, 1, 1], [], []>} : vector<8x32xbf16>, vector<32x8xbf16>, vector<8x8xf32> -> vector<8x8xf32>
      %69 = arith.index_cast %arg16 : i32 to index
      %c0_37 = arith.constant 0 : index
      %c0_38 = arith.constant 0 : index
      %70 = vector.load %arg7[%69, %c0_37, %c0_38] : memref<4x1x8xf32, #tpu.memory_space<vmem>>, vector<1x1x8xf32>
      %71 = vector.shape_cast %70 : vector<1x1x8xf32> to vector<1x8xf32>
      %72 = vector.broadcast %71 : vector<1x8xf32> to vector<8x8xf32>
      %73 = arith.addf %68, %72 : vector<8x8xf32>
      %74 = arith.index_cast %arg16 : i32 to index
      %c0_39 = arith.constant 0 : index
      %c0_40 = arith.constant 0 : index
      %75 = vector.load %arg8[%74, %c0_39, %c0_40] : memref<4x32x8xbf16, #tpu.memory_space<vmem>>, vector<1x32x8xbf16>
      %76 = vector.shape_cast %75 : vector<1x32x8xbf16> to vector<32x8xbf16>
      %cst_41 = arith.constant dense<0.000000e+00> : vector<8x8xf32>
      %77 = tpu.matmul %1, %76, %cst_41 {dimension_numbers = #tpu.dot_dimension_numbers<[1], [0], [0], [1], [0, 0, 1, 1], [], []>} : vector<8x32xbf16>, vector<32x8xbf16>, vector<8x8xf32> -> vector<8x8xf32>
      %78 = arith.index_cast %arg16 : i32 to index
      %c0_42 = arith.constant 0 : index
      %c0_43 = arith.constant 0 : index
      %79 = vector.load %arg9[%78, %c0_42, %c0_43] : memref<4x1x8xf32, #tpu.memory_space<vmem>>, vector<1x1x8xf32>
      %80 = vector.shape_cast %79 : vector<1x1x8xf32> to vector<1x8xf32>
      %81 = vector.broadcast %80 : vector<1x8xf32> to vector<8x8xf32>
      %82 = arith.addf %77, %81 : vector<8x8xf32>
      %83 = arith.truncf %64 : vector<8x8xf32> to vector<8x8xbf16>
      %84 = arith.truncf %73 : vector<8x8xf32> to vector<8x8xbf16>
      %cst_44 = arith.constant dense<0.000000e+00> : vector<8x8xf32>
      %85 = tpu.matmul %83, %84, %cst_44 {dimension_numbers = #tpu.dot_dimension_numbers<[1], [1], [0], [0], [0, 0, 1, 0], [], []>} : vector<8x8xbf16>, vector<8x8xbf16>, vector<8x8xf32> -> vector<8x8xf32>
      %cst_45 = arith.constant 0.353553385 : f32
      %86 = vector.broadcast %cst_45 : f32 to vector<8x8xf32>
      %87 = arith.mulf %85, %86 : vector<8x8xf32>
      %88 = vector.broadcast %cst_11 : f32 to vector<8x8xf32>
      %89 = arith.select %18, %87, %88 : vector<8x8xi1>, vector<8x8xf32>
      %cst_46 = arith.constant dense<0xFF800000> : vector<8xf32>
      %90 = vector.multi_reduction <maximumf>, %89, %cst_46 [1] : vector<8x8xf32> to vector<8xf32>
      %91 = vector.shape_cast %90 : vector<8xf32> to vector<8x1xf32>
      %92 = vector.broadcast %91 : vector<8x1xf32> to vector<8x8xf32>
      %93 = arith.subf %89, %92 : vector<8x8xf32>
      %94 = math.exp %93 : vector<8x8xf32>
      %cst_47 = arith.constant dense<0.000000e+00> : vector<8xf32>
      %95 = vector.multi_reduction <add>, %94, %cst_47 [1] : vector<8x8xf32> to vector<8xf32>
      %96 = vector.shape_cast %95 : vector<8xf32> to vector<8x1xf32>
      %97 = tpu.reciprocal %96 {approx = true} : vector<8x1xf32> -> vector<8x1xf32>
      %98 = vector.broadcast %97 : vector<8x1xf32> to vector<8x8xf32>
      %99 = arith.mulf %94, %98 : vector<8x8xf32>
      %100 = arith.truncf %99 : vector<8x8xf32> to vector<8x8xbf16>
      %101 = arith.truncf %82 : vector<8x8xf32> to vector<8x8xbf16>
      %cst_48 = arith.constant dense<0.000000e+00> : vector<8x8xf32>
      %102 = tpu.matmul %100, %101, %cst_48 {dimension_numbers = #tpu.dot_dimension_numbers<[1], [0], [0], [1], [0, 0, 1, 1], [], []>} : vector<8x8xbf16>, vector<8x8xbf16>, vector<8x8xf32> -> vector<8x8xf32>
      %c0_49 = arith.constant 0 : index
      %c0_50 = arith.constant 0 : index
      %103 = vector.load %arg15[%c0_49, %c0_50] : memref<8x32xf32, #tpu.memory_space<vmem>>, vector<8x32xf32>
      %104 = arith.truncf %102 : vector<8x8xf32> to vector<8x8xbf16>
      %105 = arith.index_cast %arg16 : i32 to index
      %c0_51 = arith.constant 0 : index
      %c0_52 = arith.constant 0 : index
      %106 = vector.load %arg10[%105, %c0_51, %c0_52] : memref<4x8x32xbf16, #tpu.memory_space<vmem>>, vector<1x8x32xbf16>
      %107 = vector.shape_cast %106 : vector<1x8x32xbf16> to vector<8x32xbf16>
      %cst_53 = arith.constant dense<0.000000e+00> : vector<8x32xf32>
      %108 = tpu.matmul %104, %107, %cst_53 {dimension_numbers = #tpu.dot_dimension_numbers<[1], [0], [0], [1], [0, 0, 1, 1], [], []>} : vector<8x8xbf16>, vector<8x32xbf16>, vector<8x32xf32> -> vector<8x32xf32>
      %109 = arith.addf %103, %108 : vector<8x32xf32>
      %c0_54 = arith.constant 0 : index
      %c0_55 = arith.constant 0 : index
      %110 = vector.load %arg15[%c0_54, %c0_55] : memref<8x32xf32, #tpu.memory_space<vmem>>, vector<8x32xf32>
      tpu.vector_store %arg15[%c0_54, %c0_55], %109 {strides = array<i32>} : memref<8x32xf32, #tpu.memory_space<vmem>>, vector<8x32xf32>,
    }
    %c4_i32_12 = arith.constant 4 : i32
    %c0_13 = arith.constant 0 : index
    %c0_14 = arith.constant 0 : index
    %22 = vector.load %arg15[%c0_13, %c0_14] : memref<8x32xf32, #tpu.memory_space<vmem>>, vector<8x32xf32>
    %c0_15 = arith.constant 0 : index
    %c0_16 = arith.constant 0 : index
    %23 = vector.load %arg11[%c0_15, %c0_16] : memref<1x32xf32, #tpu.memory_space<vmem>>, vector<1x32xf32>
    %24 = vector.broadcast %23 : vector<1x32xf32> to vector<8x32xf32>
    %25 = arith.addf %22, %24 : vector<8x32xf32>
    %26 = arith.extf %6 : vector<8x32xbf16> to vector<8x32xf32>
    %27 = arith.addf %25, %26 : vector<8x32xf32>
    %cst_17 = arith.constant dense<0.000000e+00> : vector<8xf32>
    %28 = vector.multi_reduction <add>, %27, %cst_17 [1] : vector<8x32xf32> to vector<8xf32>
    %29 = vector.shape_cast %28 : vector<8xf32> to vector<8x1xf32>
    %cst_18 = arith.constant 3.200000e+01 : f32
    %30 = vector.broadcast %cst_18 : f32 to vector<8x1xf32>
    %31 = arith.divf %29, %30 : vector<8x1xf32>
    %32 = vector.broadcast %31 : vector<8x1xf32> to vector<8x32xf32>
    %33 = arith.subf %27, %32 : vector<8x32xf32>
    %34 = arith.mulf %33, %33 : vector<8x32xf32>
    %cst_19 = arith.constant dense<0.000000e+00> : vector<8xf32>
    %35 = vector.multi_reduction <add>, %34, %cst_19 [1] : vector<8x32xf32> to vector<8xf32>
    %36 = vector.shape_cast %35 : vector<8xf32> to vector<8x1xf32>
    %cst_20 = arith.constant 3.200000e+01 : f32
    %37 = vector.broadcast %cst_20 : f32 to vector<8x1xf32>
    %38 = arith.divf %36, %37 : vector<8x1xf32>
    %39 = vector.broadcast %31 : vector<8x1xf32> to vector<8x32xf32>
    %40 = arith.subf %27, %39 : vector<8x32xf32>
    %cst_21 = arith.constant 9.99999974E-6 : f32
    %41 = vector.broadcast %cst_21 : f32 to vector<8x1xf32>
    %42 = arith.addf %38, %41 : vector<8x1xf32>
    %43 = math.rsqrt %42 : vector<8x1xf32>
    %44 = vector.broadcast %43 : vector<8x1xf32> to vector<8x32xf32>
    %45 = arith.mulf %40, %44 : vector<8x32xf32>
    %c0_22 = arith.constant 0 : index
    %c0_23 = arith.constant 0 : index
    %46 = vector.load %arg12[%c0_22, %c0_23] : memref<1x32xf32, #tpu.memory_space<vmem>>, vector<1x32xf32>
    %47 = vector.broadcast %46 : vector<1x32xf32> to vector<8x32xf32>
    %48 = arith.mulf %45, %47 : vector<8x32xf32>
    %c0_24 = arith.constant 0 : index
    %c0_25 = arith.constant 0 : index
    %49 = vector.load %arg13[%c0_24, %c0_25] : memref<1x32xf32, #tpu.memory_space<vmem>>, vector<1x32xf32>
    %50 = vector.broadcast %49 : vector<1x32xf32> to vector<8x32xf32>
    %51 = arith.addf %48, %50 : vector<8x32xf32>
    %52 = arith.truncf %51 : vector<8x32xf32> to vector<8x32xbf16>
    %c0_26 = arith.constant 0 : index
    %c0_27 = arith.constant 0 : index
    %c0_28 = arith.constant 0 : index
    %53 = vector.load %arg14[%c0_26, %c0_27, %c0_28] : memref<1x8x32xbf16, #tpu.memory_space<vmem>>, vector<1x8x32xbf16>
    %54 = vector.shape_cast %53 : vector<1x8x32xbf16> to vector<8x32xbf16>
    %55 = vector.shape_cast %52 : vector<8x32xbf16> to vector<1x8x32xbf16>
    tpu.vector_store %arg14[%c0_26, %c0_27, %c0_28], %55 {strides = array<i32>} : memref<1x8x32xbf16, #tpu.memory_space<vmem>>, vector<1x8x32xbf16>,
    return
  }
  func.func @transform_0(%arg0: i32, %arg1: i32) -> (i32, i32, i32) {
    %c0_i32 = arith.constant 0 : i32
    %c0_i32_0 = arith.constant 0 : i32
    %c0_i32_1 = arith.constant 0 : i32
    return %arg0, %c0_i32, %c0_i32_0 : i32, i32, i32
  }
  func.func @transform_1(%arg0: i32, %arg1: i32) -> (i32, i32, i32) {
    %c0_i32 = arith.constant 0 : i32
    %c0_i32_0 = arith.constant 0 : i32
    return %arg0, %arg1, %c0_i32 : i32, i32, i32
  }
  func.func @transform_2(%arg0: i32, %arg1: i32) -> (i32, i32, i32) {
    %c0_i32 = arith.constant 0 : i32
    %c0_i32_0 = arith.constant 0 : i32
    %c0_i32_1 = arith.constant 0 : i32
    %c0_i32_2 = arith.constant 0 : i32
    return %c0_i32, %c0_i32_0, %c0_i32_1 : i32, i32, i32
  }
  func.func @transform_3(%arg0: i32, %arg1: i32) -> (i32, i32, i32) {
    %c0_i32 = arith.constant 0 : i32
    %c0_i32_0 = arith.constant 0 : i32
    %c0_i32_1 = arith.constant 0 : i32
    %c0_i32_2 = arith.constant 0 : i32
    return %c0_i32, %c0_i32_0, %c0_i32_1 : i32, i32, i32
  }
  func.func @transform_4(%arg0: i32, %arg1: i32) -> (i32, i32, i32) {
    %c0_i32 = arith.constant 0 : i32
    %c0_i32_0 = arith.constant 0 : i32
    %c0_i32_1 = arith.constant 0 : i32
    %c0_i32_2 = arith.constant 0 : i32
    return %c0_i32, %c0_i32_0, %c0_i32_1 : i32, i32, i32
  }
  func.func @transform_5(%arg0: i32, %arg1: i32) -> (i32, i32, i32) {
    %c0_i32 = arith.constant 0 : i32
    %c0_i32_0 = arith.constant 0 : i32
    %c0_i32_1 = arith.constant 0 : i32
    %c0_i32_2 = arith.constant 0 : i32
    return %c0_i32, %c0_i32_0, %c0_i32_1 : i32, i32, i32
  }
  func.func @transform_6(%arg0: i32, %arg1: i32) -> (i32, i32, i32) {
    %c0_i32 = arith.constant 0 : i32
    %c0_i32_0 = arith.constant 0 : i32
    %c0_i32_1 = arith.constant 0 : i32
    %c0_i32_2 = arith.constant 0 : i32
    return %c0_i32, %c0_i32_0, %c0_i32_1 : i32, i32, i32
  }
  func.func @transform_7(%arg0: i32, %arg1: i32) -> (i32, i32, i32) {
    %c0_i32 = arith.constant 0 : i32
    %c0_i32_0 = arith.constant 0 : i32
    %c0_i32_1 = arith.constant 0 : i32
    %c0_i32_2 = arith.constant 0 : i32
    return %c0_i32, %c0_i32_0, %c0_i32_1 : i32, i32, i32
  }
  func.func @transform_8(%arg0: i32, %arg1: i32) -> (i32, i32, i32) {
    %c0_i32 = arith.constant 0 : i32
    %c0_i32_0 = arith.constant 0 : i32
    %c0_i32_1 = arith.constant 0 : i32
    %c0_i32_2 = arith.constant 0 : i32
    return %c0_i32, %c0_i32_0, %c0_i32_1 : i32, i32, i32
  }
  func.func @transform_9(%arg0: i32, %arg1: i32) -> (i32, i32) {
    %c0_i32 = arith.constant 0 : i32
    %c0_i32_0 = arith.constant 0 : i32
    %c0_i32_1 = arith.constant 0 : i32
    return %c0_i32, %c0_i32_0 : i32, i32
  }
  func.func @transform_10(%arg0: i32, %arg1: i32) -> (i32, i32) {
    %c0_i32 = arith.constant 0 : i32
    %c0_i32_0 = arith.constant 0 : i32
    %c0_i32_1 = arith.constant 0 : i32
    return %c0_i32, %c0_i32_0 : i32, i32
  }
  func.func @transform_11(%arg0: i32, %arg1: i32) -> (i32, i32) {
    %c0_i32 = arith.constant 0 : i32
    %c0_i32_0 = arith.constant 0 : i32
    %c0_i32_1 = arith.constant 0 : i32
    return %c0_i32, %c0_i32_0 : i32, i32
  }
  func.func @transform_12(%arg0: i32, %arg1: i32) -> (i32, i32, i32) {
    %c0_i32 = arith.constant 0 : i32
    %c0_i32_0 = arith.constant 0 : i32
    return %arg0, %arg1, %c0_i32 : i32, i32, i32
  }
}

module attributes {stable_mosaic.version = 11 : i64} {
  func.func @_attn_kernel(%arg0: i32, %arg1: i32, %arg2: memref<1x8x32xbf16, #tpu.memory_space<vmem>>, %arg3: memref<1x8x32xbf16, #tpu.memory_space<vmem>>, %arg4: memref<1x8x1xf32, #tpu.memory_space<vmem>>, %arg5: memref<4x32x8xbf16, #tpu.memory_space<vmem>>, %arg6: memref<4x1x8xf32, #tpu.memory_space<vmem>>, %arg7: memref<4x32x8xbf16, #tpu.memory_space<vmem>>, %arg8: memref<4x1x8xf32, #tpu.memory_space<vmem>>, %arg9: memref<4x32x8xbf16, #tpu.memory_space<vmem>>, %arg10: memref<4x1x8xf32, #tpu.memory_space<vmem>>, %arg11: memref<4x8x32xbf16, #tpu.memory_space<vmem>>, %arg12: memref<1x32xf32, #tpu.memory_space<vmem>>, %arg13: memref<1x32xf32, #tpu.memory_space<vmem>>, %arg14: memref<1x32xf32, #tpu.memory_space<vmem>>, %arg15: memref<32x64xbf16, #tpu.memory_space<vmem>>, %arg16: memref<1x64xf32, #tpu.memory_space<vmem>>, %arg17: memref<64x32xbf16, #tpu.memory_space<vmem>>, %arg18: memref<1x32xf32, #tpu.memory_space<vmem>>, %arg19: memref<1x32xf32, #tpu.memory_space<vmem>>, %arg20: memref<1x32xf32, #tpu.memory_space<vmem>>, %arg21: memref<1x8x32xbf16, #tpu.memory_space<vmem>>, %arg22: memref<8x32xf32, #tpu.memory_space<vmem>>) attributes {dimension_semantics = [#tpu.dimension_semantics<parallel>, #tpu.dimension_semantics<parallel>], iteration_bounds = array<i64: 2, 1>, scalar_prefetch = 0 : i64, scratch_operands = 1 : i64, tpu.core_type = #tpu.core_type<tc>, window_params = [{transform_indices = @transform_0, window_bounds = array<i64: 1, 8, 32>}, {transform_indices = @transform_1, window_bounds = array<i64: 1, 8, 32>}, {transform_indices = @transform_2, window_bounds = array<i64: 1, 8, 1>}, {pipeline_mode = #tpu.pipeline_mode<synchronous>, transform_indices = @transform_3, window_bounds = array<i64: 4, 32, 8>}, {pipeline_mode = #tpu.pipeline_mode<synchronous>, transform_indices = @transform_4, window_bounds = array<i64: 4, 1, 8>}, {pipeline_mode = #tpu.pipeline_mode<synchronous>, transform_indices = @transform_5, window_bounds = array<i64: 4, 32, 8>}, {pipeline_mode = #tpu.pipeline_mode<synchronous>, transform_indices = @transform_6, window_bounds = array<i64: 4, 1, 8>}, {pipeline_mode = #tpu.pipeline_mode<synchronous>, transform_indices = @transform_7, window_bounds = array<i64: 4, 32, 8>}, {pipeline_mode = #tpu.pipeline_mode<synchronous>, transform_indices = @transform_8, window_bounds = array<i64: 4, 1, 8>}, {pipeline_mode = #tpu.pipeline_mode<synchronous>, transform_indices = @transform_9, window_bounds = array<i64: 4, 8, 32>}, {pipeline_mode = #tpu.pipeline_mode<synchronous>, transform_indices = @transform_10, window_bounds = array<i64: 1, 32>}, {pipeline_mode = #tpu.pipeline_mode<synchronous>, transform_indices = @transform_11, window_bounds = array<i64: 1, 32>}, {pipeline_mode = #tpu.pipeline_mode<synchronous>, transform_indices = @transform_12, window_bounds = array<i64: 1, 32>}, {pipeline_mode = #tpu.pipeline_mode<synchronous>, transform_indices = @transform_13, window_bounds = array<i64: 32, 64>}, {pipeline_mode = #tpu.pipeline_mode<synchronous>, transform_indices = @transform_14, window_bounds = array<i64: 1, 64>}, {pipeline_mode = #tpu.pipeline_mode<synchronous>, transform_indices = @transform_15, window_bounds = array<i64: 64, 32>}, {pipeline_mode = #tpu.pipeline_mode<synchronous>, transform_indices = @transform_16, window_bounds = array<i64: 1, 32>}, {pipeline_mode = #tpu.pipeline_mode<synchronous>, transform_indices = @transform_17, window_bounds = array<i64: 1, 32>}, {pipeline_mode = #tpu.pipeline_mode<synchronous>, transform_indices = @transform_18, window_bounds = array<i64: 1, 32>}, {transform_indices = @transform_19, window_bounds = array<i64: 1, 8, 32>}]} {
    %c0 = arith.constant 0 : index
    %c0_0 = arith.constant 0 : index
    %c0_1 = arith.constant 0 : index
    %0 = vector.load %arg3[%c0, %c0_0, %c0_1] : memref<1x8x32xbf16, #tpu.memory_space<vmem>>, vector<1x8x32xbf16>
    %1 = vector.shape_cast %0 : vector<1x8x32xbf16> to vector<8x32xbf16>
    %c0_2 = arith.constant 0 : index
    %c0_3 = arith.constant 0 : index
    %c0_4 = arith.constant 0 : index
    %2 = vector.load %arg2[%c0_2, %c0_3, %c0_4] : memref<1x8x32xbf16, #tpu.memory_space<vmem>>, vector<1x8x32xbf16>
    %3 = vector.shape_cast %2 : vector<1x8x32xbf16> to vector<8x32xbf16>
    %c0_5 = arith.constant 0 : index
    %c0_6 = arith.constant 0 : index
    %c0_7 = arith.constant 0 : index
    %4 = vector.load %arg4[%c0_5, %c0_6, %c0_7] : memref<1x8x1xf32, #tpu.memory_space<vmem>>, vector<1x8x1xf32>
    %5 = vector.shape_cast %4 : vector<1x8x1xf32> to vector<8x1xf32>
    %cst = arith.constant 5.000000e-01 : f32
    %6 = vector.broadcast %cst : f32 to vector<8x1xf32>
    %7 = arith.cmpf ogt, %5, %6 : vector<8x1xf32>
    %8 = vector.shape_cast %7 : vector<8x1xi1> to vector<8x1xi1>
    %9 = vector.broadcast %8 : vector<8x1xi1> to vector<8x8xi1>
    %cst_8 = arith.constant 0.000000e+00 : f32
    %10 = vector.broadcast %cst_8 : f32 to vector<8x32xf32>
    %c0_9 = arith.constant 0 : index
    %c0_10 = arith.constant 0 : index
    %11 = vector.load %arg22[%c0_9, %c0_10] : memref<8x32xf32, #tpu.memory_space<vmem>>, vector<8x32xf32>
    tpu.vector_store %arg22[%c0_9, %c0_10], %10 {strides = array<i32>} : memref<8x32xf32, #tpu.memory_space<vmem>>, vector<8x32xf32>,
    %cst_11 = arith.constant -1.000000e+10 : f32
    %c0_i32 = arith.constant 0 : i32
    %c4_i32 = arith.constant 4 : i32
    %12 = arith.addi %c0_i32, %c4_i32 : i32
    %c1_i32 = arith.constant 1 : i32
    scf.for %arg23 = %c0_i32 to %12 step %c1_i32  : i32 {
      %86 = arith.index_cast %arg23 : i32 to index
      %c0_49 = arith.constant 0 : index
      %c0_50 = arith.constant 0 : index
      %87 = vector.load %arg5[%86, %c0_49, %c0_50] : memref<4x32x8xbf16, #tpu.memory_space<vmem>>, vector<1x32x8xbf16>
      %88 = vector.shape_cast %87 : vector<1x32x8xbf16> to vector<32x8xbf16>
      %cst_51 = arith.constant dense<0.000000e+00> : vector<8x8xf32>
      %89 = tpu.matmul %3, %88, %cst_51 {dimension_numbers = #tpu.dot_dimension_numbers<[1], [0], [0], [1], [0, 0, 1, 1], [], []>} : vector<8x32xbf16>, vector<32x8xbf16>, vector<8x8xf32> -> vector<8x8xf32>
      %90 = arith.index_cast %arg23 : i32 to index
      %c0_52 = arith.constant 0 : index
      %c0_53 = arith.constant 0 : index
      %91 = vector.load %arg6[%90, %c0_52, %c0_53] : memref<4x1x8xf32, #tpu.memory_space<vmem>>, vector<1x1x8xf32>
      %92 = vector.shape_cast %91 : vector<1x1x8xf32> to vector<1x8xf32>
      %93 = vector.broadcast %92 : vector<1x8xf32> to vector<8x8xf32>
      %94 = arith.addf %89, %93 : vector<8x8xf32>
      %95 = arith.index_cast %arg23 : i32 to index
      %c0_54 = arith.constant 0 : index
      %c0_55 = arith.constant 0 : index
      %96 = vector.load %arg7[%95, %c0_54, %c0_55] : memref<4x32x8xbf16, #tpu.memory_space<vmem>>, vector<1x32x8xbf16>
      %97 = vector.shape_cast %96 : vector<1x32x8xbf16> to vector<32x8xbf16>
      %cst_56 = arith.constant dense<0.000000e+00> : vector<8x8xf32>
      %98 = tpu.matmul %1, %97, %cst_56 {dimension_numbers = #tpu.dot_dimension_numbers<[1], [0], [0], [1], [0, 0, 1, 1], [], []>} : vector<8x32xbf16>, vector<32x8xbf16>, vector<8x8xf32> -> vector<8x8xf32>
      %99 = arith.index_cast %arg23 : i32 to index
      %c0_57 = arith.constant 0 : index
      %c0_58 = arith.constant 0 : index
      %100 = vector.load %arg8[%99, %c0_57, %c0_58] : memref<4x1x8xf32, #tpu.memory_space<vmem>>, vector<1x1x8xf32>
      %101 = vector.shape_cast %100 : vector<1x1x8xf32> to vector<1x8xf32>
      %102 = vector.broadcast %101 : vector<1x8xf32> to vector<8x8xf32>
      %103 = arith.addf %98, %102 : vector<8x8xf32>
      %104 = arith.index_cast %arg23 : i32 to index
      %c0_59 = arith.constant 0 : index
      %c0_60 = arith.constant 0 : index
      %105 = vector.load %arg9[%104, %c0_59, %c0_60] : memref<4x32x8xbf16, #tpu.memory_space<vmem>>, vector<1x32x8xbf16>
      %106 = vector.shape_cast %105 : vector<1x32x8xbf16> to vector<32x8xbf16>
      %cst_61 = arith.constant dense<0.000000e+00> : vector<8x8xf32>
      %107 = tpu.matmul %1, %106, %cst_61 {dimension_numbers = #tpu.dot_dimension_numbers<[1], [0], [0], [1], [0, 0, 1, 1], [], []>} : vector<8x32xbf16>, vector<32x8xbf16>, vector<8x8xf32> -> vector<8x8xf32>
      %108 = arith.index_cast %arg23 : i32 to index
      %c0_62 = arith.constant 0 : index
      %c0_63 = arith.constant 0 : index
      %109 = vector.load %arg10[%108, %c0_62, %c0_63] : memref<4x1x8xf32, #tpu.memory_space<vmem>>, vector<1x1x8xf32>
      %110 = vector.shape_cast %109 : vector<1x1x8xf32> to vector<1x8xf32>
      %111 = vector.broadcast %110 : vector<1x8xf32> to vector<8x8xf32>
      %112 = arith.addf %107, %111 : vector<8x8xf32>
      %113 = arith.truncf %94 : vector<8x8xf32> to vector<8x8xbf16>
      %114 = arith.truncf %103 : vector<8x8xf32> to vector<8x8xbf16>
      %cst_64 = arith.constant dense<0.000000e+00> : vector<8x8xf32>
      %115 = tpu.matmul %113, %114, %cst_64 {dimension_numbers = #tpu.dot_dimension_numbers<[1], [1], [0], [0], [0, 0, 1, 0], [], []>} : vector<8x8xbf16>, vector<8x8xbf16>, vector<8x8xf32> -> vector<8x8xf32>
      %cst_65 = arith.constant 0.353553385 : f32
      %116 = vector.broadcast %cst_65 : f32 to vector<8x8xf32>
      %117 = arith.mulf %115, %116 : vector<8x8xf32>
      %118 = vector.broadcast %cst_11 : f32 to vector<8x8xf32>
      %119 = arith.select %9, %117, %118 : vector<8x8xi1>, vector<8x8xf32>
      %cst_66 = arith.constant dense<0xFF800000> : vector<8xf32>
      %120 = vector.multi_reduction <maximumf>, %119, %cst_66 [1] : vector<8x8xf32> to vector<8xf32>
      %121 = vector.shape_cast %120 : vector<8xf32> to vector<8x1xf32>
      %122 = vector.broadcast %121 : vector<8x1xf32> to vector<8x8xf32>
      %123 = arith.subf %119, %122 : vector<8x8xf32>
      %124 = math.exp %123 : vector<8x8xf32>
      %cst_67 = arith.constant dense<0.000000e+00> : vector<8xf32>
      %125 = vector.multi_reduction <add>, %124, %cst_67 [1] : vector<8x8xf32> to vector<8xf32>
      %126 = vector.shape_cast %125 : vector<8xf32> to vector<8x1xf32>
      %127 = tpu.reciprocal %126 {approx = true} : vector<8x1xf32> -> vector<8x1xf32>
      %128 = vector.broadcast %127 : vector<8x1xf32> to vector<8x8xf32>
      %129 = arith.mulf %124, %128 : vector<8x8xf32>
      %130 = arith.truncf %129 : vector<8x8xf32> to vector<8x8xbf16>
      %131 = arith.truncf %112 : vector<8x8xf32> to vector<8x8xbf16>
      %cst_68 = arith.constant dense<0.000000e+00> : vector<8x8xf32>
      %132 = tpu.matmul %130, %131, %cst_68 {dimension_numbers = #tpu.dot_dimension_numbers<[1], [0], [0], [1], [0, 0, 1, 1], [], []>} : vector<8x8xbf16>, vector<8x8xbf16>, vector<8x8xf32> -> vector<8x8xf32>
      %c0_69 = arith.constant 0 : index
      %c0_70 = arith.constant 0 : index
      %133 = vector.load %arg22[%c0_69, %c0_70] : memref<8x32xf32, #tpu.memory_space<vmem>>, vector<8x32xf32>
      %134 = arith.truncf %132 : vector<8x8xf32> to vector<8x8xbf16>
      %135 = arith.index_cast %arg23 : i32 to index
      %c0_71 = arith.constant 0 : index
      %c0_72 = arith.constant 0 : index
      %136 = vector.load %arg11[%135, %c0_71, %c0_72] : memref<4x8x32xbf16, #tpu.memory_space<vmem>>, vector<1x8x32xbf16>
      %137 = vector.shape_cast %136 : vector<1x8x32xbf16> to vector<8x32xbf16>
      %cst_73 = arith.constant dense<0.000000e+00> : vector<8x32xf32>
      %138 = tpu.matmul %134, %137, %cst_73 {dimension_numbers = #tpu.dot_dimension_numbers<[1], [0], [0], [1], [0, 0, 1, 1], [], []>} : vector<8x8xbf16>, vector<8x32xbf16>, vector<8x32xf32> -> vector<8x32xf32>
      %139 = arith.addf %133, %138 : vector<8x32xf32>
      %c0_74 = arith.constant 0 : index
      %c0_75 = arith.constant 0 : index
      %140 = vector.load %arg22[%c0_74, %c0_75] : memref<8x32xf32, #tpu.memory_space<vmem>>, vector<8x32xf32>
      tpu.vector_store %arg22[%c0_74, %c0_75], %139 {strides = array<i32>} : memref<8x32xf32, #tpu.memory_space<vmem>>, vector<8x32xf32>,
    }
    %c4_i32_12 = arith.constant 4 : i32
    %c0_13 = arith.constant 0 : index
    %c0_14 = arith.constant 0 : index
    %13 = vector.load %arg22[%c0_13, %c0_14] : memref<8x32xf32, #tpu.memory_space<vmem>>, vector<8x32xf32>
    %c0_15 = arith.constant 0 : index
    %c0_16 = arith.constant 0 : index
    %14 = vector.load %arg12[%c0_15, %c0_16] : memref<1x32xf32, #tpu.memory_space<vmem>>, vector<1x32xf32>
    %15 = vector.broadcast %14 : vector<1x32xf32> to vector<8x32xf32>
    %16 = arith.addf %13, %15 : vector<8x32xf32>
    %17 = arith.extf %3 : vector<8x32xbf16> to vector<8x32xf32>
    %18 = arith.addf %16, %17 : vector<8x32xf32>
    %cst_17 = arith.constant dense<0.000000e+00> : vector<8xf32>
    %19 = vector.multi_reduction <add>, %18, %cst_17 [1] : vector<8x32xf32> to vector<8xf32>
    %20 = vector.shape_cast %19 : vector<8xf32> to vector<8x1xf32>
    %cst_18 = arith.constant 3.200000e+01 : f32
    %21 = vector.broadcast %cst_18 : f32 to vector<8x1xf32>
    %22 = arith.divf %20, %21 : vector<8x1xf32>
    %23 = vector.broadcast %22 : vector<8x1xf32> to vector<8x32xf32>
    %24 = arith.subf %18, %23 : vector<8x32xf32>
    %25 = arith.mulf %24, %24 : vector<8x32xf32>
    %cst_19 = arith.constant dense<0.000000e+00> : vector<8xf32>
    %26 = vector.multi_reduction <add>, %25, %cst_19 [1] : vector<8x32xf32> to vector<8xf32>
    %27 = vector.shape_cast %26 : vector<8xf32> to vector<8x1xf32>
    %cst_20 = arith.constant 3.200000e+01 : f32
    %28 = vector.broadcast %cst_20 : f32 to vector<8x1xf32>
    %29 = arith.divf %27, %28 : vector<8x1xf32>
    %30 = vector.broadcast %22 : vector<8x1xf32> to vector<8x32xf32>
    %31 = arith.subf %18, %30 : vector<8x32xf32>
    %cst_21 = arith.constant 9.99999974E-6 : f32
    %32 = vector.broadcast %cst_21 : f32 to vector<8x1xf32>
    %33 = arith.addf %29, %32 : vector<8x1xf32>
    %34 = math.rsqrt %33 : vector<8x1xf32>
    %35 = vector.broadcast %34 : vector<8x1xf32> to vector<8x32xf32>
    %36 = arith.mulf %31, %35 : vector<8x32xf32>
    %c0_22 = arith.constant 0 : index
    %c0_23 = arith.constant 0 : index
    %37 = vector.load %arg13[%c0_22, %c0_23] : memref<1x32xf32, #tpu.memory_space<vmem>>, vector<1x32xf32>
    %38 = vector.broadcast %37 : vector<1x32xf32> to vector<8x32xf32>
    %39 = arith.mulf %36, %38 : vector<8x32xf32>
    %c0_24 = arith.constant 0 : index
    %c0_25 = arith.constant 0 : index
    %40 = vector.load %arg14[%c0_24, %c0_25] : memref<1x32xf32, #tpu.memory_space<vmem>>, vector<1x32xf32>
    %41 = vector.broadcast %40 : vector<1x32xf32> to vector<8x32xf32>
    %42 = arith.addf %39, %41 : vector<8x32xf32>
    %43 = arith.truncf %42 : vector<8x32xf32> to vector<8x32xbf16>
    %c0_26 = arith.constant 0 : index
    %c0_27 = arith.constant 0 : index
    %44 = vector.load %arg15[%c0_26, %c0_27] : memref<32x64xbf16, #tpu.memory_space<vmem>>, vector<32x64xbf16>
    %cst_28 = arith.constant dense<0.000000e+00> : vector<8x64xf32>
    %45 = tpu.matmul %43, %44, %cst_28 {dimension_numbers = #tpu.dot_dimension_numbers<[1], [0], [0], [1], [0, 0, 1, 1], [], []>} : vector<8x32xbf16>, vector<32x64xbf16>, vector<8x64xf32> -> vector<8x64xf32>
    %c0_29 = arith.constant 0 : index
    %c0_30 = arith.constant 0 : index
    %46 = vector.load %arg16[%c0_29, %c0_30] : memref<1x64xf32, #tpu.memory_space<vmem>>, vector<1x64xf32>
    %47 = vector.broadcast %46 : vector<1x64xf32> to vector<8x64xf32>
    %48 = arith.addf %45, %47 : vector<8x64xf32>
    %cst_31 = arith.constant 0.000000e+00 : f32
    %49 = vector.broadcast %cst_31 : f32 to vector<8x64xf32>
    %50 = arith.maximumf %48, %49 : vector<8x64xf32>
    %51 = arith.truncf %50 : vector<8x64xf32> to vector<8x64xbf16>
    %c0_32 = arith.constant 0 : index
    %c0_33 = arith.constant 0 : index
    %52 = vector.load %arg17[%c0_32, %c0_33] : memref<64x32xbf16, #tpu.memory_space<vmem>>, vector<64x32xbf16>
    %cst_34 = arith.constant dense<0.000000e+00> : vector<8x32xf32>
    %53 = tpu.matmul %51, %52, %cst_34 {dimension_numbers = #tpu.dot_dimension_numbers<[1], [0], [0], [1], [0, 0, 1, 1], [], []>} : vector<8x64xbf16>, vector<64x32xbf16>, vector<8x32xf32> -> vector<8x32xf32>
    %c0_35 = arith.constant 0 : index
    %c0_36 = arith.constant 0 : index
    %54 = vector.load %arg18[%c0_35, %c0_36] : memref<1x32xf32, #tpu.memory_space<vmem>>, vector<1x32xf32>
    %55 = vector.broadcast %54 : vector<1x32xf32> to vector<8x32xf32>
    %56 = arith.addf %53, %55 : vector<8x32xf32>
    %57 = arith.addf %56, %42 : vector<8x32xf32>
    %cst_37 = arith.constant dense<0.000000e+00> : vector<8xf32>
    %58 = vector.multi_reduction <add>, %57, %cst_37 [1] : vector<8x32xf32> to vector<8xf32>
    %59 = vector.shape_cast %58 : vector<8xf32> to vector<8x1xf32>
    %cst_38 = arith.constant 3.200000e+01 : f32
    %60 = vector.broadcast %cst_38 : f32 to vector<8x1xf32>
    %61 = arith.divf %59, %60 : vector<8x1xf32>
    %62 = vector.broadcast %61 : vector<8x1xf32> to vector<8x32xf32>
    %63 = arith.subf %57, %62 : vector<8x32xf32>
    %64 = arith.mulf %63, %63 : vector<8x32xf32>
    %cst_39 = arith.constant dense<0.000000e+00> : vector<8xf32>
    %65 = vector.multi_reduction <add>, %64, %cst_39 [1] : vector<8x32xf32> to vector<8xf32>
    %66 = vector.shape_cast %65 : vector<8xf32> to vector<8x1xf32>
    %cst_40 = arith.constant 3.200000e+01 : f32
    %67 = vector.broadcast %cst_40 : f32 to vector<8x1xf32>
    %68 = arith.divf %66, %67 : vector<8x1xf32>
    %69 = vector.broadcast %61 : vector<8x1xf32> to vector<8x32xf32>
    %70 = arith.subf %57, %69 : vector<8x32xf32>
    %cst_41 = arith.constant 9.99999974E-6 : f32
    %71 = vector.broadcast %cst_41 : f32 to vector<8x1xf32>
    %72 = arith.addf %68, %71 : vector<8x1xf32>
    %73 = math.rsqrt %72 : vector<8x1xf32>
    %74 = vector.broadcast %73 : vector<8x1xf32> to vector<8x32xf32>
    %75 = arith.mulf %70, %74 : vector<8x32xf32>
    %c0_42 = arith.constant 0 : index
    %c0_43 = arith.constant 0 : index
    %76 = vector.load %arg19[%c0_42, %c0_43] : memref<1x32xf32, #tpu.memory_space<vmem>>, vector<1x32xf32>
    %77 = vector.broadcast %76 : vector<1x32xf32> to vector<8x32xf32>
    %78 = arith.mulf %75, %77 : vector<8x32xf32>
    %c0_44 = arith.constant 0 : index
    %c0_45 = arith.constant 0 : index
    %79 = vector.load %arg20[%c0_44, %c0_45] : memref<1x32xf32, #tpu.memory_space<vmem>>, vector<1x32xf32>
    %80 = vector.broadcast %79 : vector<1x32xf32> to vector<8x32xf32>
    %81 = arith.addf %78, %80 : vector<8x32xf32>
    %82 = arith.truncf %81 : vector<8x32xf32> to vector<8x32xbf16>
    %c0_46 = arith.constant 0 : index
    %c0_47 = arith.constant 0 : index
    %c0_48 = arith.constant 0 : index
    %83 = vector.load %arg21[%c0_46, %c0_47, %c0_48] : memref<1x8x32xbf16, #tpu.memory_space<vmem>>, vector<1x8x32xbf16>
    %84 = vector.shape_cast %83 : vector<1x8x32xbf16> to vector<8x32xbf16>
    %85 = vector.shape_cast %82 : vector<8x32xbf16> to vector<1x8x32xbf16>
    tpu.vector_store %arg21[%c0_46, %c0_47, %c0_48], %85 {strides = array<i32>} : memref<1x8x32xbf16, #tpu.memory_space<vmem>>, vector<1x8x32xbf16>,
    return
  }
  func.func @transform_0(%arg0: i32, %arg1: i32) -> (i32, i32, i32) {
    %c0_i32 = arith.constant 0 : i32
    %c0_i32_0 = arith.constant 0 : i32
    return %arg0, %arg1, %c0_i32 : i32, i32, i32
  }
  func.func @transform_1(%arg0: i32, %arg1: i32) -> (i32, i32, i32) {
    %c0_i32 = arith.constant 0 : i32
    %c0_i32_0 = arith.constant 0 : i32
    %c0_i32_1 = arith.constant 0 : i32
    return %arg0, %c0_i32, %c0_i32_0 : i32, i32, i32
  }
  func.func @transform_2(%arg0: i32, %arg1: i32) -> (i32, i32, i32) {
    %c0_i32 = arith.constant 0 : i32
    %c0_i32_0 = arith.constant 0 : i32
    return %arg0, %arg1, %c0_i32 : i32, i32, i32
  }
  func.func @transform_3(%arg0: i32, %arg1: i32) -> (i32, i32, i32) {
    %c0_i32 = arith.constant 0 : i32
    %c0_i32_0 = arith.constant 0 : i32
    %c0_i32_1 = arith.constant 0 : i32
    %c0_i32_2 = arith.constant 0 : i32
    return %c0_i32, %c0_i32_0, %c0_i32_1 : i32, i32, i32
  }
  func.func @transform_4(%arg0: i32, %arg1: i32) -> (i32, i32, i32) {
    %c0_i32 = arith.constant 0 : i32
    %c0_i32_0 = arith.constant 0 : i32
    %c0_i32_1 = arith.constant 0 : i32
    %c0_i32_2 = arith.constant 0 : i32
    return %c0_i32, %c0_i32_0, %c0_i32_1 : i32, i32, i32
  }
  func.func @transform_5(%arg0: i32, %arg1: i32) -> (i32, i32, i32) {
    %c0_i32 = arith.constant 0 : i32
    %c0_i32_0 = arith.constant 0 : i32
    %c0_i32_1 = arith.constant 0 : i32
    %c0_i32_2 = arith.constant 0 : i32
    return %c0_i32, %c0_i32_0, %c0_i32_1 : i32, i32, i32
  }
  func.func @transform_6(%arg0: i32, %arg1: i32) -> (i32, i32, i32) {
    %c0_i32 = arith.constant 0 : i32
    %c0_i32_0 = arith.constant 0 : i32
    %c0_i32_1 = arith.constant 0 : i32
    %c0_i32_2 = arith.constant 0 : i32
    return %c0_i32, %c0_i32_0, %c0_i32_1 : i32, i32, i32
  }
  func.func @transform_7(%arg0: i32, %arg1: i32) -> (i32, i32, i32) {
    %c0_i32 = arith.constant 0 : i32
    %c0_i32_0 = arith.constant 0 : i32
    %c0_i32_1 = arith.constant 0 : i32
    %c0_i32_2 = arith.constant 0 : i32
    return %c0_i32, %c0_i32_0, %c0_i32_1 : i32, i32, i32
  }
  func.func @transform_8(%arg0: i32, %arg1: i32) -> (i32, i32, i32) {
    %c0_i32 = arith.constant 0 : i32
    %c0_i32_0 = arith.constant 0 : i32
    %c0_i32_1 = arith.constant 0 : i32
    %c0_i32_2 = arith.constant 0 : i32
    return %c0_i32, %c0_i32_0, %c0_i32_1 : i32, i32, i32
  }
  func.func @transform_9(%arg0: i32, %arg1: i32) -> (i32, i32, i32) {
    %c0_i32 = arith.constant 0 : i32
    %c0_i32_0 = arith.constant 0 : i32
    %c0_i32_1 = arith.constant 0 : i32
    %c0_i32_2 = arith.constant 0 : i32
    return %c0_i32, %c0_i32_0, %c0_i32_1 : i32, i32, i32
  }
  func.func @transform_10(%arg0: i32, %arg1: i32) -> (i32, i32) {
    %c0_i32 = arith.constant 0 : i32
    %c0_i32_0 = arith.constant 0 : i32
    %c0_i32_1 = arith.constant 0 : i32
    return %c0_i32, %c0_i32_0 : i32, i32
  }
  func.func @transform_11(%arg0: i32, %arg1: i32) -> (i32, i32) {
    %c0_i32 = arith.constant 0 : i32
    %c0_i32_0 = arith.constant 0 : i32
    %c0_i32_1 = arith.constant 0 : i32
    return %c0_i32, %c0_i32_0 : i32, i32
  }
  func.func @transform_12(%arg0: i32, %arg1: i32) -> (i32, i32) {
    %c0_i32 = arith.constant 0 : i32
    %c0_i32_0 = arith.constant 0 : i32
    %c0_i32_1 = arith.constant 0 : i32
    return %c0_i32, %c0_i32_0 : i32, i32
  }
  func.func @transform_13(%arg0: i32, %arg1: i32) -> (i32, i32) {
    %c0_i32 = arith.constant 0 : i32
    %c0_i32_0 = arith.constant 0 : i32
    %c0_i32_1 = arith.constant 0 : i32
    return %c0_i32, %c0_i32_0 : i32, i32
  }
  func.func @transform_14(%arg0: i32, %arg1: i32) -> (i32, i32) {
    %c0_i32 = arith.constant 0 : i32
    %c0_i32_0 = arith.constant 0 : i32
    %c0_i32_1 = arith.constant 0 : i32
    return %c0_i32, %c0_i32_0 : i32, i32
  }
  func.func @transform_15(%arg0: i32, %arg1: i32) -> (i32, i32) {
    %c0_i32 = arith.constant 0 : i32
    %c0_i32_0 = arith.constant 0 : i32
    %c0_i32_1 = arith.constant 0 : i32
    return %c0_i32, %c0_i32_0 : i32, i32
  }
  func.func @transform_16(%arg0: i32, %arg1: i32) -> (i32, i32) {
    %c0_i32 = arith.constant 0 : i32
    %c0_i32_0 = arith.constant 0 : i32
    %c0_i32_1 = arith.constant 0 : i32
    return %c0_i32, %c0_i32_0 : i32, i32
  }
  func.func @transform_17(%arg0: i32, %arg1: i32) -> (i32, i32) {
    %c0_i32 = arith.constant 0 : i32
    %c0_i32_0 = arith.constant 0 : i32
    %c0_i32_1 = arith.constant 0 : i32
    return %c0_i32, %c0_i32_0 : i32, i32
  }
  func.func @transform_18(%arg0: i32, %arg1: i32) -> (i32, i32) {
    %c0_i32 = arith.constant 0 : i32
    %c0_i32_0 = arith.constant 0 : i32
    %c0_i32_1 = arith.constant 0 : i32
    return %c0_i32, %c0_i32_0 : i32, i32
  }
  func.func @transform_19(%arg0: i32, %arg1: i32) -> (i32, i32, i32) {
    %c0_i32 = arith.constant 0 : i32
    %c0_i32_0 = arith.constant 0 : i32
    return %arg0, %arg1, %c0_i32 : i32, i32, i32
  }
}

module attributes {stable_mosaic.version = 11 : i64} {
  func.func @_attn_kernel(%arg0: i32, %arg1: i32, %arg2: memref<1x8x32xbf16, #tpu.memory_space<vmem>>, %arg3: memref<1x8x1xf32, #tpu.memory_space<vmem>>, %arg4: memref<4x32x8xbf16, #tpu.memory_space<vmem>>, %arg5: memref<4x1x8xf32, #tpu.memory_space<vmem>>, %arg6: memref<4x32x8xbf16, #tpu.memory_space<vmem>>, %arg7: memref<4x1x8xf32, #tpu.memory_space<vmem>>, %arg8: memref<4x32x8xbf16, #tpu.memory_space<vmem>>, %arg9: memref<4x1x8xf32, #tpu.memory_space<vmem>>, %arg10: memref<4x8x32xbf16, #tpu.memory_space<vmem>>, %arg11: memref<1x32xf32, #tpu.memory_space<vmem>>, %arg12: memref<1x32xf32, #tpu.memory_space<vmem>>, %arg13: memref<1x32xf32, #tpu.memory_space<vmem>>, %arg14: memref<32x64xbf16, #tpu.memory_space<vmem>>, %arg15: memref<1x64xf32, #tpu.memory_space<vmem>>, %arg16: memref<64x32xbf16, #tpu.memory_space<vmem>>, %arg17: memref<1x32xf32, #tpu.memory_space<vmem>>, %arg18: memref<1x32xf32, #tpu.memory_space<vmem>>, %arg19: memref<1x32xf32, #tpu.memory_space<vmem>>, %arg20: memref<1x8x32xbf16, #tpu.memory_space<vmem>>, %arg21: memref<8x32xf32, #tpu.memory_space<vmem>>) attributes {dimension_semantics = [#tpu.dimension_semantics<parallel>, #tpu.dimension_semantics<parallel>], iteration_bounds = array<i64: 2, 1>, scalar_prefetch = 0 : i64, scratch_operands = 1 : i64, tpu.core_type = #tpu.core_type<tc>, window_params = [{transform_indices = @transform_0, window_bounds = array<i64: 1, 8, 32>}, {transform_indices = @transform_1, window_bounds = array<i64: 1, 8, 1>}, {pipeline_mode = #tpu.pipeline_mode<synchronous>, transform_indices = @transform_2, window_bounds = array<i64: 4, 32, 8>}, {pipeline_mode = #tpu.pipeline_mode<synchronous>, transform_indices = @transform_3, window_bounds = array<i64: 4, 1, 8>}, {pipeline_mode = #tpu.pipeline_mode<synchronous>, transform_indices = @transform_4, window_bounds = array<i64: 4, 32, 8>}, {pipeline_mode = #tpu.pipeline_mode<synchronous>, transform_indices = @transform_5, window_bounds = array<i64: 4, 1, 8>}, {pipeline_mode = #tpu.pipeline_mode<synchronous>, transform_indices = @transform_6, window_bounds = array<i64: 4, 32, 8>}, {pipeline_mode = #tpu.pipeline_mode<synchronous>, transform_indices = @transform_7, window_bounds = array<i64: 4, 1, 8>}, {pipeline_mode = #tpu.pipeline_mode<synchronous>, transform_indices = @transform_8, window_bounds = array<i64: 4, 8, 32>}, {pipeline_mode = #tpu.pipeline_mode<synchronous>, transform_indices = @transform_9, window_bounds = array<i64: 1, 32>}, {pipeline_mode = #tpu.pipeline_mode<synchronous>, transform_indices = @transform_10, window_bounds = array<i64: 1, 32>}, {pipeline_mode = #tpu.pipeline_mode<synchronous>, transform_indices = @transform_11, window_bounds = array<i64: 1, 32>}, {pipeline_mode = #tpu.pipeline_mode<synchronous>, transform_indices = @transform_12, window_bounds = array<i64: 32, 64>}, {pipeline_mode = #tpu.pipeline_mode<synchronous>, transform_indices = @transform_13, window_bounds = array<i64: 1, 64>}, {pipeline_mode = #tpu.pipeline_mode<synchronous>, transform_indices = @transform_14, window_bounds = array<i64: 64, 32>}, {pipeline_mode = #tpu.pipeline_mode<synchronous>, transform_indices = @transform_15, window_bounds = array<i64: 1, 32>}, {pipeline_mode = #tpu.pipeline_mode<synchronous>, transform_indices = @transform_16, window_bounds = array<i64: 1, 32>}, {pipeline_mode = #tpu.pipeline_mode<synchronous>, transform_indices = @transform_17, window_bounds = array<i64: 1, 32>}, {transform_indices = @transform_18, window_bounds = array<i64: 1, 8, 32>}]} {
    %c0 = arith.constant 0 : index
    %c0_0 = arith.constant 0 : index
    %c0_1 = arith.constant 0 : index
    %0 = vector.load %arg2[%c0, %c0_0, %c0_1] : memref<1x8x32xbf16, #tpu.memory_space<vmem>>, vector<1x8x32xbf16>
    %1 = vector.shape_cast %0 : vector<1x8x32xbf16> to vector<8x32xbf16>
    %c8_i32 = arith.constant 8 : i32
    %2 = arith.muli %arg1, %c8_i32 : i32
    %3 = tpu.assume_multiple %2, 8 : i32
    %c0_2 = arith.constant 0 : index
    %4 = arith.index_cast %3 : i32 to index
    %c0_3 = arith.constant 0 : index
    %5 = vector.load %arg2[%c0_2, %4, %c0_3] : memref<1x8x32xbf16, #tpu.memory_space<vmem>>, vector<1x8x32xbf16>
    %6 = vector.shape_cast %5 : vector<1x8x32xbf16> to vector<8x32xbf16>
    %c0_4 = arith.constant 0 : index
    %c0_5 = arith.constant 0 : index
    %c0_6 = arith.constant 0 : index
    %7 = vector.load %arg3[%c0_4, %c0_5, %c0_6] : memref<1x8x1xf32, #tpu.memory_space<vmem>>, vector<1x8x1xf32>
    %8 = vector.shape_cast %7 : vector<1x8x1xf32> to vector<8x1xf32>
    %cst = arith.constant 5.000000e-01 : f32
    %9 = vector.broadcast %cst : f32 to vector<8x1xf32>
    %10 = arith.cmpf ogt, %8, %9 : vector<8x1xf32>
    %11 = vector.shape_cast %10 : vector<8x1xi1> to vector<8x1xi1>
    %12 = vector.broadcast %11 : vector<8x1xi1> to vector<8x8xi1>
    %cst_7 = arith.constant 0.000000e+00 : f32
    %13 = vector.broadcast %cst_7 : f32 to vector<8x32xf32>
    %c0_8 = arith.constant 0 : index
    %c0_9 = arith.constant 0 : index
    %14 = vector.load %arg21[%c0_8, %c0_9] : memref<8x32xf32, #tpu.memory_space<vmem>>, vector<8x32xf32>
    tpu.vector_store %arg21[%c0_8, %c0_9], %13 {strides = array<i32>} : memref<8x32xf32, #tpu.memory_space<vmem>>, vector<8x32xf32>,
    %cst_10 = arith.constant -1.000000e+10 : f32
    %c0_i32 = arith.constant 0 : i32
    %c4_i32 = arith.constant 4 : i32
    %15 = arith.addi %c0_i32, %c4_i32 : i32
    %c1_i32 = arith.constant 1 : i32
    scf.for %arg22 = %c0_i32 to %15 step %c1_i32  : i32 {
      %89 = arith.index_cast %arg22 : i32 to index
      %c0_48 = arith.constant 0 : index
      %c0_49 = arith.constant 0 : index
      %90 = vector.load %arg4[%89, %c0_48, %c0_49] : memref<4x32x8xbf16, #tpu.memory_space<vmem>>, vector<1x32x8xbf16>
      %91 = vector.shape_cast %90 : vector<1x32x8xbf16> to vector<32x8xbf16>
      %cst_50 = arith.constant dense<0.000000e+00> : vector<8x8xf32>
      %92 = tpu.matmul %6, %91, %cst_50 {dimension_numbers = #tpu.dot_dimension_numbers<[1], [0], [0], [1], [0, 0, 1, 1], [], []>} : vector<8x32xbf16>, vector<32x8xbf16>, vector<8x8xf32> -> vector<8x8xf32>
      %93 = arith.index_cast %arg22 : i32 to index
      %c0_51 = arith.constant 0 : index
      %c0_52 = arith.constant 0 : index
      %94 = vector.load %arg5[%93, %c0_51, %c0_52] : memref<4x1x8xf32, #tpu.memory_space<vmem>>, vector<1x1x8xf32>
      %95 = vector.shape_cast %94 : vector<1x1x8xf32> to vector<1x8xf32>
      %96 = vector.broadcast %95 : vector<1x8xf32> to vector<8x8xf32>
      %97 = arith.addf %92, %96 : vector<8x8xf32>
      %98 = arith.index_cast %arg22 : i32 to index
      %c0_53 = arith.constant 0 : index
      %c0_54 = arith.constant 0 : index
      %99 = vector.load %arg6[%98, %c0_53, %c0_54] : memref<4x32x8xbf16, #tpu.memory_space<vmem>>, vector<1x32x8xbf16>
      %100 = vector.shape_cast %99 : vector<1x32x8xbf16> to vector<32x8xbf16>
      %cst_55 = arith.constant dense<0.000000e+00> : vector<8x8xf32>
      %101 = tpu.matmul %1, %100, %cst_55 {dimension_numbers = #tpu.dot_dimension_numbers<[1], [0], [0], [1], [0, 0, 1, 1], [], []>} : vector<8x32xbf16>, vector<32x8xbf16>, vector<8x8xf32> -> vector<8x8xf32>
      %102 = arith.index_cast %arg22 : i32 to index
      %c0_56 = arith.constant 0 : index
      %c0_57 = arith.constant 0 : index
      %103 = vector.load %arg7[%102, %c0_56, %c0_57] : memref<4x1x8xf32, #tpu.memory_space<vmem>>, vector<1x1x8xf32>
      %104 = vector.shape_cast %103 : vector<1x1x8xf32> to vector<1x8xf32>
      %105 = vector.broadcast %104 : vector<1x8xf32> to vector<8x8xf32>
      %106 = arith.addf %101, %105 : vector<8x8xf32>
      %107 = arith.index_cast %arg22 : i32 to index
      %c0_58 = arith.constant 0 : index
      %c0_59 = arith.constant 0 : index
      %108 = vector.load %arg8[%107, %c0_58, %c0_59] : memref<4x32x8xbf16, #tpu.memory_space<vmem>>, vector<1x32x8xbf16>
      %109 = vector.shape_cast %108 : vector<1x32x8xbf16> to vector<32x8xbf16>
      %cst_60 = arith.constant dense<0.000000e+00> : vector<8x8xf32>
      %110 = tpu.matmul %1, %109, %cst_60 {dimension_numbers = #tpu.dot_dimension_numbers<[1], [0], [0], [1], [0, 0, 1, 1], [], []>} : vector<8x32xbf16>, vector<32x8xbf16>, vector<8x8xf32> -> vector<8x8xf32>
      %111 = arith.index_cast %arg22 : i32 to index
      %c0_61 = arith.constant 0 : index
      %c0_62 = arith.constant 0 : index
      %112 = vector.load %arg9[%111, %c0_61, %c0_62] : memref<4x1x8xf32, #tpu.memory_space<vmem>>, vector<1x1x8xf32>
      %113 = vector.shape_cast %112 : vector<1x1x8xf32> to vector<1x8xf32>
      %114 = vector.broadcast %113 : vector<1x8xf32> to vector<8x8xf32>
      %115 = arith.addf %110, %114 : vector<8x8xf32>
      %116 = arith.truncf %97 : vector<8x8xf32> to vector<8x8xbf16>
      %117 = arith.truncf %106 : vector<8x8xf32> to vector<8x8xbf16>
      %cst_63 = arith.constant dense<0.000000e+00> : vector<8x8xf32>
      %118 = tpu.matmul %116, %117, %cst_63 {dimension_numbers = #tpu.dot_dimension_numbers<[1], [1], [0], [0], [0, 0, 1, 0], [], []>} : vector<8x8xbf16>, vector<8x8xbf16>, vector<8x8xf32> -> vector<8x8xf32>
      %cst_64 = arith.constant 0.353553385 : f32
      %119 = vector.broadcast %cst_64 : f32 to vector<8x8xf32>
      %120 = arith.mulf %118, %119 : vector<8x8xf32>
      %121 = vector.broadcast %cst_10 : f32 to vector<8x8xf32>
      %122 = arith.select %12, %120, %121 : vector<8x8xi1>, vector<8x8xf32>
      %cst_65 = arith.constant dense<0xFF800000> : vector<8xf32>
      %123 = vector.multi_reduction <maximumf>, %122, %cst_65 [1] : vector<8x8xf32> to vector<8xf32>
      %124 = vector.shape_cast %123 : vector<8xf32> to vector<8x1xf32>
      %125 = vector.broadcast %124 : vector<8x1xf32> to vector<8x8xf32>
      %126 = arith.subf %122, %125 : vector<8x8xf32>
      %127 = math.exp %126 : vector<8x8xf32>
      %cst_66 = arith.constant dense<0.000000e+00> : vector<8xf32>
      %128 = vector.multi_reduction <add>, %127, %cst_66 [1] : vector<8x8xf32> to vector<8xf32>
      %129 = vector.shape_cast %128 : vector<8xf32> to vector<8x1xf32>
      %130 = tpu.reciprocal %129 {approx = true} : vector<8x1xf32> -> vector<8x1xf32>
      %131 = vector.broadcast %130 : vector<8x1xf32> to vector<8x8xf32>
      %132 = arith.mulf %127, %131 : vector<8x8xf32>
      %133 = arith.truncf %132 : vector<8x8xf32> to vector<8x8xbf16>
      %134 = arith.truncf %115 : vector<8x8xf32> to vector<8x8xbf16>
      %cst_67 = arith.constant dense<0.000000e+00> : vector<8x8xf32>
      %135 = tpu.matmul %133, %134, %cst_67 {dimension_numbers = #tpu.dot_dimension_numbers<[1], [0], [0], [1], [0, 0, 1, 1], [], []>} : vector<8x8xbf16>, vector<8x8xbf16>, vector<8x8xf32> -> vector<8x8xf32>
      %c0_68 = arith.constant 0 : index
      %c0_69 = arith.constant 0 : index
      %136 = vector.load %arg21[%c0_68, %c0_69] : memref<8x32xf32, #tpu.memory_space<vmem>>, vector<8x32xf32>
      %137 = arith.truncf %135 : vector<8x8xf32> to vector<8x8xbf16>
      %138 = arith.index_cast %arg22 : i32 to index
      %c0_70 = arith.constant 0 : index
      %c0_71 = arith.constant 0 : index
      %139 = vector.load %arg10[%138, %c0_70, %c0_71] : memref<4x8x32xbf16, #tpu.memory_space<vmem>>, vector<1x8x32xbf16>
      %140 = vector.shape_cast %139 : vector<1x8x32xbf16> to vector<8x32xbf16>
      %cst_72 = arith.constant dense<0.000000e+00> : vector<8x32xf32>
      %141 = tpu.matmul %137, %140, %cst_72 {dimension_numbers = #tpu.dot_dimension_numbers<[1], [0], [0], [1], [0, 0, 1, 1], [], []>} : vector<8x8xbf16>, vector<8x32xbf16>, vector<8x32xf32> -> vector<8x32xf32>
      %142 = arith.addf %136, %141 : vector<8x32xf32>
      %c0_73 = arith.constant 0 : index
      %c0_74 = arith.constant 0 : index
      %143 = vector.load %arg21[%c0_73, %c0_74] : memref<8x32xf32, #tpu.memory_space<vmem>>, vector<8x32xf32>
      tpu.vector_store %arg21[%c0_73, %c0_74], %142 {strides = array<i32>} : memref<8x32xf32, #tpu.memory_space<vmem>>, vector<8x32xf32>,
    }
    %c4_i32_11 = arith.constant 4 : i32
    %c0_12 = arith.constant 0 : index
    %c0_13 = arith.constant 0 : index
    %16 = vector.load %arg21[%c0_12, %c0_13] : memref<8x32xf32, #tpu.memory_space<vmem>>, vector<8x32xf32>
    %c0_14 = arith.constant 0 : index
    %c0_15 = arith.constant 0 : index
    %17 = vector.load %arg11[%c0_14, %c0_15] : memref<1x32xf32, #tpu.memory_space<vmem>>, vector<1x32xf32>
    %18 = vector.broadcast %17 : vector<1x32xf32> to vector<8x32xf32>
    %19 = arith.addf %16, %18 : vector<8x32xf32>
    %20 = arith.extf %6 : vector<8x32xbf16> to vector<8x32xf32>
    %21 = arith.addf %19, %20 : vector<8x32xf32>
    %cst_16 = arith.constant dense<0.000000e+00> : vector<8xf32>
    %22 = vector.multi_reduction <add>, %21, %cst_16 [1] : vector<8x32xf32> to vector<8xf32>
    %23 = vector.shape_cast %22 : vector<8xf32> to vector<8x1xf32>
    %cst_17 = arith.constant 3.200000e+01 : f32
    %24 = vector.broadcast %cst_17 : f32 to vector<8x1xf32>
    %25 = arith.divf %23, %24 : vector<8x1xf32>
    %26 = vector.broadcast %25 : vector<8x1xf32> to vector<8x32xf32>
    %27 = arith.subf %21, %26 : vector<8x32xf32>
    %28 = arith.mulf %27, %27 : vector<8x32xf32>
    %cst_18 = arith.constant dense<0.000000e+00> : vector<8xf32>
    %29 = vector.multi_reduction <add>, %28, %cst_18 [1] : vector<8x32xf32> to vector<8xf32>
    %30 = vector.shape_cast %29 : vector<8xf32> to vector<8x1xf32>
    %cst_19 = arith.constant 3.200000e+01 : f32
    %31 = vector.broadcast %cst_19 : f32 to vector<8x1xf32>
    %32 = arith.divf %30, %31 : vector<8x1xf32>
    %33 = vector.broadcast %25 : vector<8x1xf32> to vector<8x32xf32>
    %34 = arith.subf %21, %33 : vector<8x32xf32>
    %cst_20 = arith.constant 9.99999974E-6 : f32
    %35 = vector.broadcast %cst_20 : f32 to vector<8x1xf32>
    %36 = arith.addf %32, %35 : vector<8x1xf32>
    %37 = math.rsqrt %36 : vector<8x1xf32>
    %38 = vector.broadcast %37 : vector<8x1xf32> to vector<8x32xf32>
    %39 = arith.mulf %34, %38 : vector<8x32xf32>
    %c0_21 = arith.constant 0 : index
    %c0_22 = arith.constant 0 : index
    %40 = vector.load %arg12[%c0_21, %c0_22] : memref<1x32xf32, #tpu.memory_space<vmem>>, vector<1x32xf32>
    %41 = vector.broadcast %40 : vector<1x32xf32> to vector<8x32xf32>
    %42 = arith.mulf %39, %41 : vector<8x32xf32>
    %c0_23 = arith.constant 0 : index
    %c0_24 = arith.constant 0 : index
    %43 = vector.load %arg13[%c0_23, %c0_24] : memref<1x32xf32, #tpu.memory_space<vmem>>, vector<1x32xf32>
    %44 = vector.broadcast %43 : vector<1x32xf32> to vector<8x32xf32>
    %45 = arith.addf %42, %44 : vector<8x32xf32>
    %46 = arith.truncf %45 : vector<8x32xf32> to vector<8x32xbf16>
    %c0_25 = arith.constant 0 : index
    %c0_26 = arith.constant 0 : index
    %47 = vector.load %arg14[%c0_25, %c0_26] : memref<32x64xbf16, #tpu.memory_space<vmem>>, vector<32x64xbf16>
    %cst_27 = arith.constant dense<0.000000e+00> : vector<8x64xf32>
    %48 = tpu.matmul %46, %47, %cst_27 {dimension_numbers = #tpu.dot_dimension_numbers<[1], [0], [0], [1], [0, 0, 1, 1], [], []>} : vector<8x32xbf16>, vector<32x64xbf16>, vector<8x64xf32> -> vector<8x64xf32>
    %c0_28 = arith.constant 0 : index
    %c0_29 = arith.constant 0 : index
    %49 = vector.load %arg15[%c0_28, %c0_29] : memref<1x64xf32, #tpu.memory_space<vmem>>, vector<1x64xf32>
    %50 = vector.broadcast %49 : vector<1x64xf32> to vector<8x64xf32>
    %51 = arith.addf %48, %50 : vector<8x64xf32>
    %cst_30 = arith.constant 0.000000e+00 : f32
    %52 = vector.broadcast %cst_30 : f32 to vector<8x64xf32>
    %53 = arith.maximumf %51, %52 : vector<8x64xf32>
    %54 = arith.truncf %53 : vector<8x64xf32> to vector<8x64xbf16>
    %c0_31 = arith.constant 0 : index
    %c0_32 = arith.constant 0 : index
    %55 = vector.load %arg16[%c0_31, %c0_32] : memref<64x32xbf16, #tpu.memory_space<vmem>>, vector<64x32xbf16>
    %cst_33 = arith.constant dense<0.000000e+00> : vector<8x32xf32>
    %56 = tpu.matmul %54, %55, %cst_33 {dimension_numbers = #tpu.dot_dimension_numbers<[1], [0], [0], [1], [0, 0, 1, 1], [], []>} : vector<8x64xbf16>, vector<64x32xbf16>, vector<8x32xf32> -> vector<8x32xf32>
    %c0_34 = arith.constant 0 : index
    %c0_35 = arith.constant 0 : index
    %57 = vector.load %arg17[%c0_34, %c0_35] : memref<1x32xf32, #tpu.memory_space<vmem>>, vector<1x32xf32>
    %58 = vector.broadcast %57 : vector<1x32xf32> to vector<8x32xf32>
    %59 = arith.addf %56, %58 : vector<8x32xf32>
    %60 = arith.addf %59, %45 : vector<8x32xf32>
    %cst_36 = arith.constant dense<0.000000e+00> : vector<8xf32>
    %61 = vector.multi_reduction <add>, %60, %cst_36 [1] : vector<8x32xf32> to vector<8xf32>
    %62 = vector.shape_cast %61 : vector<8xf32> to vector<8x1xf32>
    %cst_37 = arith.constant 3.200000e+01 : f32
    %63 = vector.broadcast %cst_37 : f32 to vector<8x1xf32>
    %64 = arith.divf %62, %63 : vector<8x1xf32>
    %65 = vector.broadcast %64 : vector<8x1xf32> to vector<8x32xf32>
    %66 = arith.subf %60, %65 : vector<8x32xf32>
    %67 = arith.mulf %66, %66 : vector<8x32xf32>
    %cst_38 = arith.constant dense<0.000000e+00> : vector<8xf32>
    %68 = vector.multi_reduction <add>, %67, %cst_38 [1] : vector<8x32xf32> to vector<8xf32>
    %69 = vector.shape_cast %68 : vector<8xf32> to vector<8x1xf32>
    %cst_39 = arith.constant 3.200000e+01 : f32
    %70 = vector.broadcast %cst_39 : f32 to vector<8x1xf32>
    %71 = arith.divf %69, %70 : vector<8x1xf32>
    %72 = vector.broadcast %64 : vector<8x1xf32> to vector<8x32xf32>
    %73 = arith.subf %60, %72 : vector<8x32xf32>
    %cst_40 = arith.constant 9.99999974E-6 : f32
    %74 = vector.broadcast %cst_40 : f32 to vector<8x1xf32>
    %75 = arith.addf %71, %74 : vector<8x1xf32>
    %76 = math.rsqrt %75 : vector<8x1xf32>
    %77 = vector.broadcast %76 : vector<8x1xf32> to vector<8x32xf32>
    %78 = arith.mulf %73, %77 : vector<8x32xf32>
    %c0_41 = arith.constant 0 : index
    %c0_42 = arith.constant 0 : index
    %79 = vector.load %arg18[%c0_41, %c0_42] : memref<1x32xf32, #tpu.memory_space<vmem>>, vector<1x32xf32>
    %80 = vector.broadcast %79 : vector<1x32xf32> to vector<8x32xf32>
    %81 = arith.mulf %78, %80 : vector<8x32xf32>
    %c0_43 = arith.constant 0 : index
    %c0_44 = arith.constant 0 : index
    %82 = vector.load %arg19[%c0_43, %c0_44] : memref<1x32xf32, #tpu.memory_space<vmem>>, vector<1x32xf32>
    %83 = vector.broadcast %82 : vector<1x32xf32> to vector<8x32xf32>
    %84 = arith.addf %81, %83 : vector<8x32xf32>
    %85 = arith.truncf %84 : vector<8x32xf32> to vector<8x32xbf16>
    %c0_45 = arith.constant 0 : index
    %c0_46 = arith.constant 0 : index
    %c0_47 = arith.constant 0 : index
    %86 = vector.load %arg20[%c0_45, %c0_46, %c0_47] : memref<1x8x32xbf16, #tpu.memory_space<vmem>>, vector<1x8x32xbf16>
    %87 = vector.shape_cast %86 : vector<1x8x32xbf16> to vector<8x32xbf16>
    %88 = vector.shape_cast %85 : vector<8x32xbf16> to vector<1x8x32xbf16>
    tpu.vector_store %arg20[%c0_45, %c0_46, %c0_47], %88 {strides = array<i32>} : memref<1x8x32xbf16, #tpu.memory_space<vmem>>, vector<1x8x32xbf16>,
    return
  }
  func.func @transform_0(%arg0: i32, %arg1: i32) -> (i32, i32, i32) {
    %c0_i32 = arith.constant 0 : i32
    %c0_i32_0 = arith.constant 0 : i32
    %c0_i32_1 = arith.constant 0 : i32
    return %arg0, %c0_i32, %c0_i32_0 : i32, i32, i32
  }
  func.func @transform_1(%arg0: i32, %arg1: i32) -> (i32, i32, i32) {
    %c0_i32 = arith.constant 0 : i32
    %c0_i32_0 = arith.constant 0 : i32
    return %arg0, %arg1, %c0_i32 : i32, i32, i32
  }
  func.func @transform_2(%arg0: i32, %arg1: i32) -> (i32, i32, i32) {
    %c0_i32 = arith.constant 0 : i32
    %c0_i32_0 = arith.constant 0 : i32
    %c0_i32_1 = arith.constant 0 : i32
    %c0_i32_2 = arith.constant 0 : i32
    return %c0_i32, %c0_i32_0, %c0_i32_1 : i32, i32, i32
  }
  func.func @transform_3(%arg0: i32, %arg1: i32) -> (i32, i32, i32) {
    %c0_i32 = arith.constant 0 : i32
    %c0_i32_0 = arith.constant 0 : i32
    %c0_i32_1 = arith.constant 0 : i32
    %c0_i32_2 = arith.constant 0 : i32
    return %c0_i32, %c0_i32_0, %c0_i32_1 : i32, i32, i32
  }
  func.func @transform_4(%arg0: i32, %arg1: i32) -> (i32, i32, i32) {
    %c0_i32 = arith.constant 0 : i32
    %c0_i32_0 = arith.constant 0 : i32
    %c0_i32_1 = arith.constant 0 : i32
    %c0_i32_2 = arith.constant 0 : i32
    return %c0_i32, %c0_i32_0, %c0_i32_1 : i32, i32, i32
  }
  func.func @transform_5(%arg0: i32, %arg1: i32) -> (i32, i32, i32) {
    %c0_i32 = arith.constant 0 : i32
    %c0_i32_0 = arith.constant 0 : i32
    %c0_i32_1 = arith.constant 0 : i32
    %c0_i32_2 = arith.constant 0 : i32
    return %c0_i32, %c0_i32_0, %c0_i32_1 : i32, i32, i32
  }
  func.func @transform_6(%arg0: i32, %arg1: i32) -> (i32, i32, i32) {
    %c0_i32 = arith.constant 0 : i32
    %c0_i32_0 = arith.constant 0 : i32
    %c0_i32_1 = arith.constant 0 : i32
    %c0_i32_2 = arith.constant 0 : i32
    return %c0_i32, %c0_i32_0, %c0_i32_1 : i32, i32, i32
  }
  func.func @transform_7(%arg0: i32, %arg1: i32) -> (i32, i32, i32) {
    %c0_i32 = arith.constant 0 : i32
    %c0_i32_0 = arith.constant 0 : i32
    %c0_i32_1 = arith.constant 0 : i32
    %c0_i32_2 = arith.constant 0 : i32
    return %c0_i32, %c0_i32_0, %c0_i32_1 : i32, i32, i32
  }
  func.func @transform_8(%arg0: i32, %arg1: i32) -> (i32, i32, i32) {
    %c0_i32 = arith.constant 0 : i32
    %c0_i32_0 = arith.constant 0 : i32
    %c0_i32_1 = arith.constant 0 : i32
    %c0_i32_2 = arith.constant 0 : i32
    return %c0_i32, %c0_i32_0, %c0_i32_1 : i32, i32, i32
  }
  func.func @transform_9(%arg0: i32, %arg1: i32) -> (i32, i32) {
    %c0_i32 = arith.constant 0 : i32
    %c0_i32_0 = arith.constant 0 : i32
    %c0_i32_1 = arith.constant 0 : i32
    return %c0_i32, %c0_i32_0 : i32, i32
  }
  func.func @transform_10(%arg0: i32, %arg1: i32) -> (i32, i32) {
    %c0_i32 = arith.constant 0 : i32
    %c0_i32_0 = arith.constant 0 : i32
    %c0_i32_1 = arith.constant 0 : i32
    return %c0_i32, %c0_i32_0 : i32, i32
  }
  func.func @transform_11(%arg0: i32, %arg1: i32) -> (i32, i32) {
    %c0_i32 = arith.constant 0 : i32
    %c0_i32_0 = arith.constant 0 : i32
    %c0_i32_1 = arith.constant 0 : i32
    return %c0_i32, %c0_i32_0 : i32, i32
  }
  func.func @transform_12(%arg0: i32, %arg1: i32) -> (i32, i32) {
    %c0_i32 = arith.constant 0 : i32
    %c0_i32_0 = arith.constant 0 : i32
    %c0_i32_1 = arith.constant 0 : i32
    return %c0_i32, %c0_i32_0 : i32, i32
  }
  func.func @transform_13(%arg0: i32, %arg1: i32) -> (i32, i32) {
    %c0_i32 = arith.constant 0 : i32
    %c0_i32_0 = arith.constant 0 : i32
    %c0_i32_1 = arith.constant 0 : i32
    return %c0_i32, %c0_i32_0 : i32, i32
  }
  func.func @transform_14(%arg0: i32, %arg1: i32) -> (i32, i32) {
    %c0_i32 = arith.constant 0 : i32
    %c0_i32_0 = arith.constant 0 : i32
    %c0_i32_1 = arith.constant 0 : i32
    return %c0_i32, %c0_i32_0 : i32, i32
  }
  func.func @transform_15(%arg0: i32, %arg1: i32) -> (i32, i32) {
    %c0_i32 = arith.constant 0 : i32
    %c0_i32_0 = arith.constant 0 : i32
    %c0_i32_1 = arith.constant 0 : i32
    return %c0_i32, %c0_i32_0 : i32, i32
  }
  func.func @transform_16(%arg0: i32, %arg1: i32) -> (i32, i32) {
    %c0_i32 = arith.constant 0 : i32
    %c0_i32_0 = arith.constant 0 : i32
    %c0_i32_1 = arith.constant 0 : i32
    return %c0_i32, %c0_i32_0 : i32, i32
  }
  func.func @transform_17(%arg0: i32, %arg1: i32) -> (i32, i32) {
    %c0_i32 = arith.constant 0 : i32
    %c0_i32_0 = arith.constant 0 : i32
    %c0_i32_1 = arith.constant 0 : i32
    return %c0_i32, %c0_i32_0 : i32, i32
  }
  func.func @transform_18(%arg0: i32, %arg1: i32) -> (i32, i32, i32) {
    %c0_i32 = arith.constant 0 : i32
    %c0_i32_0 = arith.constant 0 : i32
    return %arg0, %arg1, %c0_i32 : i32, i32, i32
  }
}

module attributes {stable_mosaic.version = 11 : i64} {
  func.func @_attn_kernel(%arg0: i32, %arg1: i32, %arg2: memref<1x8x32xbf16, #tpu.memory_space<vmem>>, %arg3: memref<1x8x32xbf16, #tpu.memory_space<vmem>>, %arg4: memref<1x8x1xf32, #tpu.memory_space<vmem>>, %arg5: memref<4x32x8xbf16, #tpu.memory_space<vmem>>, %arg6: memref<4x1x8xf32, #tpu.memory_space<vmem>>, %arg7: memref<4x32x8xbf16, #tpu.memory_space<vmem>>, %arg8: memref<4x1x8xf32, #tpu.memory_space<vmem>>, %arg9: memref<4x32x8xbf16, #tpu.memory_space<vmem>>, %arg10: memref<4x1x8xf32, #tpu.memory_space<vmem>>, %arg11: memref<4x8x32xbf16, #tpu.memory_space<vmem>>, %arg12: memref<1x32xf32, #tpu.memory_space<vmem>>, %arg13: memref<1x32xf32, #tpu.memory_space<vmem>>, %arg14: memref<1x32xf32, #tpu.memory_space<vmem>>, %arg15: memref<32x64xbf16, #tpu.memory_space<vmem>>, %arg16: memref<1x64xf32, #tpu.memory_space<vmem>>, %arg17: memref<64x32xbf16, #tpu.memory_space<vmem>>, %arg18: memref<1x32xf32, #tpu.memory_space<vmem>>, %arg19: memref<1x32xf32, #tpu.memory_space<vmem>>, %arg20: memref<1x32xf32, #tpu.memory_space<vmem>>, %arg21: memref<1x8x32xbf16, #tpu.memory_space<vmem>>, %arg22: memref<1x4x8x8xbf16, #tpu.memory_space<vmem>>, %arg23: memref<8x32xf32, #tpu.memory_space<vmem>>) attributes {dimension_semantics = [#tpu.dimension_semantics<parallel>, #tpu.dimension_semantics<parallel>], iteration_bounds = array<i64: 2, 1>, scalar_prefetch = 0 : i64, scratch_operands = 1 : i64, tpu.core_type = #tpu.core_type<tc>, window_params = [{transform_indices = @transform_0, window_bounds = array<i64: 1, 8, 32>}, {transform_indices = @transform_1, window_bounds = array<i64: 1, 8, 32>}, {transform_indices = @transform_2, window_bounds = array<i64: 1, 8, 1>}, {pipeline_mode = #tpu.pipeline_mode<synchronous>, transform_indices = @transform_3, window_bounds = array<i64: 4, 32, 8>}, {pipeline_mode = #tpu.pipeline_mode<synchronous>, transform_indices = @transform_4, window_bounds = array<i64: 4, 1, 8>}, {pipeline_mode = #tpu.pipeline_mode<synchronous>, transform_indices = @transform_5, window_bounds = array<i64: 4, 32, 8>}, {pipeline_mode = #tpu.pipeline_mode<synchronous>, transform_indices = @transform_6, window_bounds = array<i64: 4, 1, 8>}, {pipeline_mode = #tpu.pipeline_mode<synchronous>, transform_indices = @transform_7, window_bounds = array<i64: 4, 32, 8>}, {pipeline_mode = #tpu.pipeline_mode<synchronous>, transform_indices = @transform_8, window_bounds = array<i64: 4, 1, 8>}, {pipeline_mode = #tpu.pipeline_mode<synchronous>, transform_indices = @transform_9, window_bounds = array<i64: 4, 8, 32>}, {pipeline_mode = #tpu.pipeline_mode<synchronous>, transform_indices = @transform_10, window_bounds = array<i64: 1, 32>}, {pipeline_mode = #tpu.pipeline_mode<synchronous>, transform_indices = @transform_11, window_bounds = array<i64: 1, 32>}, {pipeline_mode = #tpu.pipeline_mode<synchronous>, transform_indices = @transform_12, window_bounds = array<i64: 1, 32>}, {pipeline_mode = #tpu.pipeline_mode<synchronous>, transform_indices = @transform_13, window_bounds = array<i64: 32, 64>}, {pipeline_mode = #tpu.pipeline_mode<synchronous>, transform_indices = @transform_14, window_bounds = array<i64: 1, 64>}, {pipeline_mode = #tpu.pipeline_mode<synchronous>, transform_indices = @transform_15, window_bounds = array<i64: 64, 32>}, {pipeline_mode = #tpu.pipeline_mode<synchronous>, transform_indices = @transform_16, window_bounds = array<i64: 1, 32>}, {pipeline_mode = #tpu.pipeline_mode<synchronous>, transform_indices = @transform_17, window_bounds = array<i64: 1, 32>}, {pipeline_mode = #tpu.pipeline_mode<synchronous>, transform_indices = @transform_18, window_bounds = array<i64: 1, 32>}, {transform_indices = @transform_19, window_bounds = array<i64: 1, 8, 32>}, {transform_indices = @transform_20, window_bounds = array<i64: 1, 4, 8, 8>}]} {
    %c0 = arith.constant 0 : index
    %c0_0 = arith.constant 0 : index
    %c0_1 = arith.constant 0 : index
    %0 = vector.load %arg3[%c0, %c0_0, %c0_1] : memref<1x8x32xbf16, #tpu.memory_space<vmem>>, vector<1x8x32xbf16>
    %1 = vector.shape_cast %0 : vector<1x8x32xbf16> to vector<8x32xbf16>
    %c0_2 = arith.constant 0 : index
    %c0_3 = arith.constant 0 : index
    %c0_4 = arith.constant 0 : index
    %2 = vector.load %arg2[%c0_2, %c0_3, %c0_4] : memref<1x8x32xbf16, #tpu.memory_space<vmem>>, vector<1x8x32xbf16>
    %3 = vector.shape_cast %2 : vector<1x8x32xbf16> to vector<8x32xbf16>
    %c0_5 = arith.constant 0 : index
    %c0_6 = arith.constant 0 : index
    %c0_7 = arith.constant 0 : index
    %4 = vector.load %arg4[%c0_5, %c0_6, %c0_7] : memref<1x8x1xf32, #tpu.memory_space<vmem>>, vector<1x8x1xf32>
    %5 = vector.shape_cast %4 : vector<1x8x1xf32> to vector<8x1xf32>
    %cst = arith.constant 5.000000e-01 : f32
    %6 = vector.broadcast %cst : f32 to vector<8x1xf32>
    %7 = arith.cmpf ogt, %5, %6 : vector<8x1xf32>
    %8 = vector.shape_cast %7 : vector<8x1xi1> to vector<8x1xi1>
    %9 = vector.broadcast %8 : vector<8x1xi1> to vector<8x8xi1>
    %cst_8 = arith.constant 0.000000e+00 : f32
    %10 = vector.broadcast %cst_8 : f32 to vector<8x32xf32>
    %c0_9 = arith.constant 0 : index
    %c0_10 = arith.constant 0 : index
    %11 = vector.load %arg23[%c0_9, %c0_10] : memref<8x32xf32, #tpu.memory_space<vmem>>, vector<8x32xf32>
    tpu.vector_store %arg23[%c0_9, %c0_10], %10 {strides = array<i32>} : memref<8x32xf32, #tpu.memory_space<vmem>>, vector<8x32xf32>,
    %cst_11 = arith.constant -1.000000e+10 : f32
    %c0_i32 = arith.constant 0 : i32
    %c4_i32 = arith.constant 4 : i32
    %12 = arith.addi %c0_i32, %c4_i32 : i32
    %c1_i32 = arith.constant 1 : i32
    scf.for %arg24 = %c0_i32 to %12 step %c1_i32  : i32 {
      %86 = arith.index_cast %arg24 : i32 to index
      %c0_49 = arith.constant 0 : index
      %c0_50 = arith.constant 0 : index
      %87 = vector.load %arg5[%86, %c0_49, %c0_50] : memref<4x32x8xbf16, #tpu.memory_space<vmem>>, vector<1x32x8xbf16>
      %88 = vector.shape_cast %87 : vector<1x32x8xbf16> to vector<32x8xbf16>
      %cst_51 = arith.constant dense<0.000000e+00> : vector<8x8xf32>
      %89 = tpu.matmul %3, %88, %cst_51 {dimension_numbers = #tpu.dot_dimension_numbers<[1], [0], [0], [1], [0, 0, 1, 1], [], []>} : vector<8x32xbf16>, vector<32x8xbf16>, vector<8x8xf32> -> vector<8x8xf32>
      %90 = arith.index_cast %arg24 : i32 to index
      %c0_52 = arith.constant 0 : index
      %c0_53 = arith.constant 0 : index
      %91 = vector.load %arg6[%90, %c0_52, %c0_53] : memref<4x1x8xf32, #tpu.memory_space<vmem>>, vector<1x1x8xf32>
      %92 = vector.shape_cast %91 : vector<1x1x8xf32> to vector<1x8xf32>
      %93 = vector.broadcast %92 : vector<1x8xf32> to vector<8x8xf32>
      %94 = arith.addf %89, %93 : vector<8x8xf32>
      %95 = arith.index_cast %arg24 : i32 to index
      %c0_54 = arith.constant 0 : index
      %c0_55 = arith.constant 0 : index
      %96 = vector.load %arg7[%95, %c0_54, %c0_55] : memref<4x32x8xbf16, #tpu.memory_space<vmem>>, vector<1x32x8xbf16>
      %97 = vector.shape_cast %96 : vector<1x32x8xbf16> to vector<32x8xbf16>
      %cst_56 = arith.constant dense<0.000000e+00> : vector<8x8xf32>
      %98 = tpu.matmul %1, %97, %cst_56 {dimension_numbers = #tpu.dot_dimension_numbers<[1], [0], [0], [1], [0, 0, 1, 1], [], []>} : vector<8x32xbf16>, vector<32x8xbf16>, vector<8x8xf32> -> vector<8x8xf32>
      %99 = arith.index_cast %arg24 : i32 to index
      %c0_57 = arith.constant 0 : index
      %c0_58 = arith.constant 0 : index
      %100 = vector.load %arg8[%99, %c0_57, %c0_58] : memref<4x1x8xf32, #tpu.memory_space<vmem>>, vector<1x1x8xf32>
      %101 = vector.shape_cast %100 : vector<1x1x8xf32> to vector<1x8xf32>
      %102 = vector.broadcast %101 : vector<1x8xf32> to vector<8x8xf32>
      %103 = arith.addf %98, %102 : vector<8x8xf32>
      %104 = arith.index_cast %arg24 : i32 to index
      %c0_59 = arith.constant 0 : index
      %c0_60 = arith.constant 0 : index
      %105 = vector.load %arg9[%104, %c0_59, %c0_60] : memref<4x32x8xbf16, #tpu.memory_space<vmem>>, vector<1x32x8xbf16>
      %106 = vector.shape_cast %105 : vector<1x32x8xbf16> to vector<32x8xbf16>
      %cst_61 = arith.constant dense<0.000000e+00> : vector<8x8xf32>
      %107 = tpu.matmul %1, %106, %cst_61 {dimension_numbers = #tpu.dot_dimension_numbers<[1], [0], [0], [1], [0, 0, 1, 1], [], []>} : vector<8x32xbf16>, vector<32x8xbf16>, vector<8x8xf32> -> vector<8x8xf32>
      %108 = arith.index_cast %arg24 : i32 to index
      %c0_62 = arith.constant 0 : index
      %c0_63 = arith.constant 0 : index
      %109 = vector.load %arg10[%108, %c0_62, %c0_63] : memref<4x1x8xf32, #tpu.memory_space<vmem>>, vector<1x1x8xf32>
      %110 = vector.shape_cast %109 : vector<1x1x8xf32> to vector<1x8xf32>
      %111 = vector.broadcast %110 : vector<1x8xf32> to vector<8x8xf32>
      %112 = arith.addf %107, %111 : vector<8x8xf32>
      %113 = arith.truncf %94 : vector<8x8xf32> to vector<8x8xbf16>
      %114 = arith.truncf %103 : vector<8x8xf32> to vector<8x8xbf16>
      %cst_64 = arith.constant dense<0.000000e+00> : vector<8x8xf32>
      %115 = tpu.matmul %113, %114, %cst_64 {dimension_numbers = #tpu.dot_dimension_numbers<[1], [1], [0], [0], [0, 0, 1, 0], [], []>} : vector<8x8xbf16>, vector<8x8xbf16>, vector<8x8xf32> -> vector<8x8xf32>
      %cst_65 = arith.constant 0.353553385 : f32
      %116 = vector.broadcast %cst_65 : f32 to vector<8x8xf32>
      %117 = arith.mulf %115, %116 : vector<8x8xf32>
      %118 = vector.broadcast %cst_11 : f32 to vector<8x8xf32>
      %119 = arith.select %9, %117, %118 : vector<8x8xi1>, vector<8x8xf32>
      %cst_66 = arith.constant dense<0xFF800000> : vector<8xf32>
      %120 = vector.multi_reduction <maximumf>, %119, %cst_66 [1] : vector<8x8xf32> to vector<8xf32>
      %121 = vector.shape_cast %120 : vector<8xf32> to vector<8x1xf32>
      %122 = vector.broadcast %121 : vector<8x1xf32> to vector<8x8xf32>
      %123 = arith.subf %119, %122 : vector<8x8xf32>
      %124 = math.exp %123 : vector<8x8xf32>
      %cst_67 = arith.constant dense<0.000000e+00> : vector<8xf32>
      %125 = vector.multi_reduction <add>, %124, %cst_67 [1] : vector<8x8xf32> to vector<8xf32>
      %126 = vector.shape_cast %125 : vector<8xf32> to vector<8x1xf32>
      %127 = tpu.reciprocal %126 {approx = true} : vector<8x1xf32> -> vector<8x1xf32>
      %128 = vector.broadcast %127 : vector<8x1xf32> to vector<8x8xf32>
      %129 = arith.mulf %124, %128 : vector<8x8xf32>
      %130 = arith.truncf %129 : vector<8x8xf32> to vector<8x8xbf16>
      %c0_68 = arith.constant 0 : index
      %131 = arith.index_cast %arg24 : i32 to index
      %c0_69 = arith.constant 0 : index
      %c0_70 = arith.constant 0 : index
      %132 = vector.load %arg22[%c0_68, %131, %c0_69, %c0_70] : memref<1x4x8x8xbf16, #tpu.memory_space<vmem>>, vector<1x1x8x8xbf16>
      %133 = vector.shape_cast %132 : vector<1x1x8x8xbf16> to vector<8x8xbf16>
      %134 = vector.shape_cast %130 : vector<8x8xbf16> to vector<1x1x8x8xbf16>
      tpu.vector_store %arg22[%c0_68, %131, %c0_69, %c0_70], %134 {strides = array<i32>} : memref<1x4x8x8xbf16, #tpu.memory_space<vmem>>, vector<1x1x8x8xbf16>,
      %135 = arith.truncf %129 : vector<8x8xf32> to vector<8x8xbf16>
      %136 = arith.truncf %112 : vector<8x8xf32> to vector<8x8xbf16>
      %cst_71 = arith.constant dense<0.000000e+00> : vector<8x8xf32>
      %137 = tpu.matmul %135, %136, %cst_71 {dimension_numbers = #tpu.dot_dimension_numbers<[1], [0], [0], [1], [0, 0, 1, 1], [], []>} : vector<8x8xbf16>, vector<8x8xbf16>, vector<8x8xf32> -> vector<8x8xf32>
      %c0_72 = arith.constant 0 : index
      %c0_73 = arith.constant 0 : index
      %138 = vector.load %arg23[%c0_72, %c0_73] : memref<8x32xf32, #tpu.memory_space<vmem>>, vector<8x32xf32>
      %139 = arith.truncf %137 : vector<8x8xf32> to vector<8x8xbf16>
      %140 = arith.index_cast %arg24 : i32 to index
      %c0_74 = arith.constant 0 : index
      %c0_75 = arith.constant 0 : index
      %141 = vector.load %arg11[%140, %c0_74, %c0_75] : memref<4x8x32xbf16, #tpu.memory_space<vmem>>, vector<1x8x32xbf16>
      %142 = vector.shape_cast %141 : vector<1x8x32xbf16> to vector<8x32xbf16>
      %cst_76 = arith.constant dense<0.000000e+00> : vector<8x32xf32>
      %143 = tpu.matmul %139, %142, %cst_76 {dimension_numbers = #tpu.dot_dimension_numbers<[1], [0], [0], [1], [0, 0, 1, 1], [], []>} : vector<8x8xbf16>, vector<8x32xbf16>, vector<8x32xf32> -> vector<8x32xf32>
      %144 = arith.addf %138, %143 : vector<8x32xf32>
      %c0_77 = arith.constant 0 : index
      %c0_78 = arith.constant 0 : index
      %145 = vector.load %arg23[%c0_77, %c0_78] : memref<8x32xf32, #tpu.memory_space<vmem>>, vector<8x32xf32>
      tpu.vector_store %arg23[%c0_77, %c0_78], %144 {strides = array<i32>} : memref<8x32xf32, #tpu.memory_space<vmem>>, vector<8x32xf32>,
    }
    %c4_i32_12 = arith.constant 4 : i32
    %c0_13 = arith.constant 0 : index
    %c0_14 = arith.constant 0 : index
    %13 = vector.load %arg23[%c0_13, %c0_14] : memref<8x32xf32, #tpu.memory_space<vmem>>, vector<8x32xf32>
    %c0_15 = arith.constant 0 : index
    %c0_16 = arith.constant 0 : index
    %14 = vector.load %arg12[%c0_15, %c0_16] : memref<1x32xf32, #tpu.memory_space<vmem>>, vector<1x32xf32>
    %15 = vector.broadcast %14 : vector<1x32xf32> to vector<8x32xf32>
    %16 = arith.addf %13, %15 : vector<8x32xf32>
    %17 = arith.extf %3 : vector<8x32xbf16> to vector<8x32xf32>
    %18 = arith.addf %16, %17 : vector<8x32xf32>
    %cst_17 = arith.constant dense<0.000000e+00> : vector<8xf32>
    %19 = vector.multi_reduction <add>, %18, %cst_17 [1] : vector<8x32xf32> to vector<8xf32>
    %20 = vector.shape_cast %19 : vector<8xf32> to vector<8x1xf32>
    %cst_18 = arith.constant 3.200000e+01 : f32
    %21 = vector.broadcast %cst_18 : f32 to vector<8x1xf32>
    %22 = arith.divf %20, %21 : vector<8x1xf32>
    %23 = vector.broadcast %22 : vector<8x1xf32> to vector<8x32xf32>
    %24 = arith.subf %18, %23 : vector<8x32xf32>
    %25 = arith.mulf %24, %24 : vector<8x32xf32>
    %cst_19 = arith.constant dense<0.000000e+00> : vector<8xf32>
    %26 = vector.multi_reduction <add>, %25, %cst_19 [1] : vector<8x32xf32> to vector<8xf32>
    %27 = vector.shape_cast %26 : vector<8xf32> to vector<8x1xf32>
    %cst_20 = arith.constant 3.200000e+01 : f32
    %28 = vector.broadcast %cst_20 : f32 to vector<8x1xf32>
    %29 = arith.divf %27, %28 : vector<8x1xf32>
    %30 = vector.broadcast %22 : vector<8x1xf32> to vector<8x32xf32>
    %31 = arith.subf %18, %30 : vector<8x32xf32>
    %cst_21 = arith.constant 9.99999974E-6 : f32
    %32 = vector.broadcast %cst_21 : f32 to vector<8x1xf32>
    %33 = arith.addf %29, %32 : vector<8x1xf32>
    %34 = math.rsqrt %33 : vector<8x1xf32>
    %35 = vector.broadcast %34 : vector<8x1xf32> to vector<8x32xf32>
    %36 = arith.mulf %31, %35 : vector<8x32xf32>
    %c0_22 = arith.constant 0 : index
    %c0_23 = arith.constant 0 : index
    %37 = vector.load %arg13[%c0_22, %c0_23] : memref<1x32xf32, #tpu.memory_space<vmem>>, vector<1x32xf32>
    %38 = vector.broadcast %37 : vector<1x32xf32> to vector<8x32xf32>
    %39 = arith.mulf %36, %38 : vector<8x32xf32>
    %c0_24 = arith.constant 0 : index
    %c0_25 = arith.constant 0 : index
    %40 = vector.load %arg14[%c0_24, %c0_25] : memref<1x32xf32, #tpu.memory_space<vmem>>, vector<1x32xf32>
    %41 = vector.broadcast %40 : vector<1x32xf32> to vector<8x32xf32>
    %42 = arith.addf %39, %41 : vector<8x32xf32>
    %43 = arith.truncf %42 : vector<8x32xf32> to vector<8x32xbf16>
    %c0_26 = arith.constant 0 : index
    %c0_27 = arith.constant 0 : index
    %44 = vector.load %arg15[%c0_26, %c0_27] : memref<32x64xbf16, #tpu.memory_space<vmem>>, vector<32x64xbf16>
    %cst_28 = arith.constant dense<0.000000e+00> : vector<8x64xf32>
    %45 = tpu.matmul %43, %44, %cst_28 {dimension_numbers = #tpu.dot_dimension_numbers<[1], [0], [0], [1], [0, 0, 1, 1], [], []>} : vector<8x32xbf16>, vector<32x64xbf16>, vector<8x64xf32> -> vector<8x64xf32>
    %c0_29 = arith.constant 0 : index
    %c0_30 = arith.constant 0 : index
    %46 = vector.load %arg16[%c0_29, %c0_30] : memref<1x64xf32, #tpu.memory_space<vmem>>, vector<1x64xf32>
    %47 = vector.broadcast %46 : vector<1x64xf32> to vector<8x64xf32>
    %48 = arith.addf %45, %47 : vector<8x64xf32>
    %cst_31 = arith.constant 0.000000e+00 : f32
    %49 = vector.broadcast %cst_31 : f32 to vector<8x64xf32>
    %50 = arith.maximumf %48, %49 : vector<8x64xf32>
    %51 = arith.truncf %50 : vector<8x64xf32> to vector<8x64xbf16>
    %c0_32 = arith.constant 0 : index
    %c0_33 = arith.constant 0 : index
    %52 = vector.load %arg17[%c0_32, %c0_33] : memref<64x32xbf16, #tpu.memory_space<vmem>>, vector<64x32xbf16>
    %cst_34 = arith.constant dense<0.000000e+00> : vector<8x32xf32>
    %53 = tpu.matmul %51, %52, %cst_34 {dimension_numbers = #tpu.dot_dimension_numbers<[1], [0], [0], [1], [0, 0, 1, 1], [], []>} : vector<8x64xbf16>, vector<64x32xbf16>, vector<8x32xf32> -> vector<8x32xf32>
    %c0_35 = arith.constant 0 : index
    %c0_36 = arith.constant 0 : index
    %54 = vector.load %arg18[%c0_35, %c0_36] : memref<1x32xf32, #tpu.memory_space<vmem>>, vector<1x32xf32>
    %55 = vector.broadcast %54 : vector<1x32xf32> to vector<8x32xf32>
    %56 = arith.addf %53, %55 : vector<8x32xf32>
    %57 = arith.addf %56, %42 : vector<8x32xf32>
    %cst_37 = arith.constant dense<0.000000e+00> : vector<8xf32>
    %58 = vector.multi_reduction <add>, %57, %cst_37 [1] : vector<8x32xf32> to vector<8xf32>
    %59 = vector.shape_cast %58 : vector<8xf32> to vector<8x1xf32>
    %cst_38 = arith.constant 3.200000e+01 : f32
    %60 = vector.broadcast %cst_38 : f32 to vector<8x1xf32>
    %61 = arith.divf %59, %60 : vector<8x1xf32>
    %62 = vector.broadcast %61 : vector<8x1xf32> to vector<8x32xf32>
    %63 = arith.subf %57, %62 : vector<8x32xf32>
    %64 = arith.mulf %63, %63 : vector<8x32xf32>
    %cst_39 = arith.constant dense<0.000000e+00> : vector<8xf32>
    %65 = vector.multi_reduction <add>, %64, %cst_39 [1] : vector<8x32xf32> to vector<8xf32>
    %66 = vector.shape_cast %65 : vector<8xf32> to vector<8x1xf32>
    %cst_40 = arith.constant 3.200000e+01 : f32
    %67 = vector.broadcast %cst_40 : f32 to vector<8x1xf32>
    %68 = arith.divf %66, %67 : vector<8x1xf32>
    %69 = vector.broadcast %61 : vector<8x1xf32> to vector<8x32xf32>
    %70 = arith.subf %57, %69 : vector<8x32xf32>
    %cst_41 = arith.constant 9.99999974E-6 : f32
    %71 = vector.broadcast %cst_41 : f32 to vector<8x1xf32>
    %72 = arith.addf %68, %71 : vector<8x1xf32>
    %73 = math.rsqrt %72 : vector<8x1xf32>
    %74 = vector.broadcast %73 : vector<8x1xf32> to vector<8x32xf32>
    %75 = arith.mulf %70, %74 : vector<8x32xf32>
    %c0_42 = arith.constant 0 : index
    %c0_43 = arith.constant 0 : index
    %76 = vector.load %arg19[%c0_42, %c0_43] : memref<1x32xf32, #tpu.memory_space<vmem>>, vector<1x32xf32>
    %77 = vector.broadcast %76 : vector<1x32xf32> to vector<8x32xf32>
    %78 = arith.mulf %75, %77 : vector<8x32xf32>
    %c0_44 = arith.constant 0 : index
    %c0_45 = arith.constant 0 : index
    %79 = vector.load %arg20[%c0_44, %c0_45] : memref<1x32xf32, #tpu.memory_space<vmem>>, vector<1x32xf32>
    %80 = vector.broadcast %79 : vector<1x32xf32> to vector<8x32xf32>
    %81 = arith.addf %78, %80 : vector<8x32xf32>
    %82 = arith.truncf %81 : vector<8x32xf32> to vector<8x32xbf16>
    %c0_46 = arith.constant 0 : index
    %c0_47 = arith.constant 0 : index
    %c0_48 = arith.constant 0 : index
    %83 = vector.load %arg21[%c0_46, %c0_47, %c0_48] : memref<1x8x32xbf16, #tpu.memory_space<vmem>>, vector<1x8x32xbf16>
    %84 = vector.shape_cast %83 : vector<1x8x32xbf16> to vector<8x32xbf16>
    %85 = vector.shape_cast %82 : vector<8x32xbf16> to vector<1x8x32xbf16>
    tpu.vector_store %arg21[%c0_46, %c0_47, %c0_48], %85 {strides = array<i32>} : memref<1x8x32xbf16, #tpu.memory_space<vmem>>, vector<1x8x32xbf16>,
    return
  }
  func.func @transform_0(%arg0: i32, %arg1: i32) -> (i32, i32, i32) {
    %c0_i32 = arith.constant 0 : i32
    %c0_i32_0 = arith.constant 0 : i32
    return %arg0, %arg1, %c0_i32 : i32, i32, i32
  }
  func.func @transform_1(%arg0: i32, %arg1: i32) -> (i32, i32, i32) {
    %c0_i32 = arith.constant 0 : i32
    %c0_i32_0 = arith.constant 0 : i32
    %c0_i32_1 = arith.constant 0 : i32
    return %arg0, %c0_i32, %c0_i32_0 : i32, i32, i32
  }
  func.func @transform_2(%arg0: i32, %arg1: i32) -> (i32, i32, i32) {
    %c0_i32 = arith.constant 0 : i32
    %c0_i32_0 = arith.constant 0 : i32
    return %arg0, %arg1, %c0_i32 : i32, i32, i32
  }
  func.func @transform_3(%arg0: i32, %arg1: i32) -> (i32, i32, i32) {
    %c0_i32 = arith.constant 0 : i32
    %c0_i32_0 = arith.constant 0 : i32
    %c0_i32_1 = arith.constant 0 : i32
    %c0_i32_2 = arith.constant 0 : i32
    return %c0_i32, %c0_i32_0, %c0_i32_1 : i32, i32, i32
  }
  func.func @transform_4(%arg0: i32, %arg1: i32) -> (i32, i32, i32) {
    %c0_i32 = arith.constant 0 : i32
    %c0_i32_0 = arith.constant 0 : i32
    %c0_i32_1 = arith.constant 0 : i32
    %c0_i32_2 = arith.constant 0 : i32
    return %c0_i32, %c0_i32_0, %c0_i32_1 : i32, i32, i32
  }
  func.func @transform_5(%arg0: i32, %arg1: i32) -> (i32, i32, i32) {
    %c0_i32 = arith.constant 0 : i32
    %c0_i32_0 = arith.constant 0 : i32
    %c0_i32_1 = arith.constant 0 : i32
    %c0_i32_2 = arith.constant 0 : i32
    return %c0_i32, %c0_i32_0, %c0_i32_1 : i32, i32, i32
  }
  func.func @transform_6(%arg0: i32, %arg1: i32) -> (i32, i32, i32) {
    %c0_i32 = arith.constant 0 : i32
    %c0_i32_0 = arith.constant 0 : i32
    %c0_i32_1 = arith.constant 0 : i32
    %c0_i32_2 = arith.constant 0 : i32
    return %c0_i32, %c0_i32_0, %c0_i32_1 : i32, i32, i32
  }
  func.func @transform_7(%arg0: i32, %arg1: i32) -> (i32, i32, i32) {
    %c0_i32 = arith.constant 0 : i32
    %c0_i32_0 = arith.constant 0 : i32
    %c0_i32_1 = arith.constant 0 : i32
    %c0_i32_2 = arith.constant 0 : i32
    return %c0_i32, %c0_i32_0, %c0_i32_1 : i32, i32, i32
  }
  func.func @transform_8(%arg0: i32, %arg1: i32) -> (i32, i32, i32) {
    %c0_i32 = arith.constant 0 : i32
    %c0_i32_0 = arith.constant 0 : i32
    %c0_i32_1 = arith.constant 0 : i32
    %c0_i32_2 = arith.constant 0 : i32
    return %c0_i32, %c0_i32_0, %c0_i32_1 : i32, i32, i32
  }
  func.func @transform_9(%arg0: i32, %arg1: i32) -> (i32, i32, i32) {
    %c0_i32 = arith.constant 0 : i32
    %c0_i32_0 = arith.constant 0 : i32
    %c0_i32_1 = arith.constant 0 : i32
    %c0_i32_2 = arith.constant 0 : i32
    return %c0_i32, %c0_i32_0, %c0_i32_1 : i32, i32, i32
  }
  func.func @transform_10(%arg0: i32, %arg1: i32) -> (i32, i32) {
    %c0_i32 = arith.constant 0 : i32
    %c0_i32_0 = arith.constant 0 : i32
    %c0_i32_1 = arith.constant 0 : i32
    return %c0_i32, %c0_i32_0 : i32, i32
  }
  func.func @transform_11(%arg0: i32, %arg1: i32) -> (i32, i32) {
    %c0_i32 = arith.constant 0 : i32
    %c0_i32_0 = arith.constant 0 : i32
    %c0_i32_1 = arith.constant 0 : i32
    return %c0_i32, %c0_i32_0 : i32, i32
  }
  func.func @transform_12(%arg0: i32, %arg1: i32) -> (i32, i32) {
    %c0_i32 = arith.constant 0 : i32
    %c0_i32_0 = arith.constant 0 : i32
    %c0_i32_1 = arith.constant 0 : i32
    return %c0_i32, %c0_i32_0 : i32, i32
  }
  func.func @transform_13(%arg0: i32, %arg1: i32) -> (i32, i32) {
    %c0_i32 = arith.constant 0 : i32
    %c0_i32_0 = arith.constant 0 : i32
    %c0_i32_1 = arith.constant 0 : i32
    return %c0_i32, %c0_i32_0 : i32, i32
  }
  func.func @transform_14(%arg0: i32, %arg1: i32) -> (i32, i32) {
    %c0_i32 = arith.constant 0 : i32
    %c0_i32_0 = arith.constant 0 : i32
    %c0_i32_1 = arith.constant 0 : i32
    return %c0_i32, %c0_i32_0 : i32, i32
  }
  func.func @transform_15(%arg0: i32, %arg1: i32) -> (i32, i32) {
    %c0_i32 = arith.constant 0 : i32
    %c0_i32_0 = arith.constant 0 : i32
    %c0_i32_1 = arith.constant 0 : i32
    return %c0_i32, %c0_i32_0 : i32, i32
  }
  func.func @transform_16(%arg0: i32, %arg1: i32) -> (i32, i32) {
    %c0_i32 = arith.constant 0 : i32
    %c0_i32_0 = arith.constant 0 : i32
    %c0_i32_1 = arith.constant 0 : i32
    return %c0_i32, %c0_i32_0 : i32, i32
  }
  func.func @transform_17(%arg0: i32, %arg1: i32) -> (i32, i32) {
    %c0_i32 = arith.constant 0 : i32
    %c0_i32_0 = arith.constant 0 : i32
    %c0_i32_1 = arith.constant 0 : i32
    return %c0_i32, %c0_i32_0 : i32, i32
  }
  func.func @transform_18(%arg0: i32, %arg1: i32) -> (i32, i32) {
    %c0_i32 = arith.constant 0 : i32
    %c0_i32_0 = arith.constant 0 : i32
    %c0_i32_1 = arith.constant 0 : i32
    return %c0_i32, %c0_i32_0 : i32, i32
  }
  func.func @transform_19(%arg0: i32, %arg1: i32) -> (i32, i32, i32) {
    %c0_i32 = arith.constant 0 : i32
    %c0_i32_0 = arith.constant 0 : i32
    return %arg0, %arg1, %c0_i32 : i32, i32, i32
  }
  func.func @transform_20(%arg0: i32, %arg1: i32) -> (i32, i32, i32, i32) {
    %c0_i32 = arith.constant 0 : i32
    %c0_i32_0 = arith.constant 0 : i32
    %c0_i32_1 = arith.constant 0 : i32
    return %arg0, %c0_i32, %arg1, %c0_i32_0 : i32, i32, i32, i32
  }
}

module attributes {stable_mosaic.version = 11 : i64} {
  func.func @_linear_kernel(%arg0: i32, %arg1: i32, %arg2: memref<16x32xbf16, #tpu.memory_space<vmem>>, %arg3: memref<32x16xbf16, #tpu.memory_space<vmem>>, %arg4: memref<1x16xf32, #tpu.memory_space<vmem>>, %arg5: memref<16x16xf32, #tpu.memory_space<vmem>>) attributes {dimension_semantics = [#tpu.dimension_semantics<parallel>, #tpu.dimension_semantics<parallel>], iteration_bounds = array<i64: 1, 1>, scalar_prefetch = 0 : i64, scratch_operands = 0 : i64, tpu.core_type = #tpu.core_type<tc>, window_params = [{transform_indices = @transform_0, window_bounds = array<i64: 16, 32>}, {transform_indices = @transform_1, window_bounds = array<i64: 32, 16>}, {transform_indices = @transform_2, window_bounds = array<i64: 1, 16>}, {transform_indices = @transform_3, window_bounds = array<i64: 16, 16>}]} {
    %c0 = arith.constant 0 : index
    %c0_0 = arith.constant 0 : index
    %0 = vector.load %arg2[%c0, %c0_0] : memref<16x32xbf16, #tpu.memory_space<vmem>>, vector<16x32xbf16>
    %c0_1 = arith.constant 0 : index
    %c0_2 = arith.constant 0 : index
    %1 = vector.load %arg3[%c0_1, %c0_2] : memref<32x16xbf16, #tpu.memory_space<vmem>>, vector<32x16xbf16>
    %cst = arith.constant dense<0.000000e+00> : vector<16x16xf32>
    %2 = tpu.matmul %0, %1, %cst {dimension_numbers = #tpu.dot_dimension_numbers<[1], [0], [0], [1], [0, 0, 1, 1], [], []>} : vector<16x32xbf16>, vector<32x16xbf16>, vector<16x16xf32> -> vector<16x16xf32>
    %c0_3 = arith.constant 0 : index
    %c0_4 = arith.constant 0 : index
    %3 = vector.load %arg4[%c0_3, %c0_4] : memref<1x16xf32, #tpu.memory_space<vmem>>, vector<1x16xf32>
    %4 = vector.broadcast %3 : vector<1x16xf32> to vector<16x16xf32>
    %5 = arith.addf %2, %4 : vector<16x16xf32>
    %c0_5 = arith.constant 0 : index
    %c0_6 = arith.constant 0 : index
    %6 = vector.load %arg5[%c0_5, %c0_6] : memref<16x16xf32, #tpu.memory_space<vmem>>, vector<16x16xf32>
    tpu.vector_store %arg5[%c0_5, %c0_6], %5 {strides = array<i32>} : memref<16x16xf32, #tpu.memory_space<vmem>>, vector<16x16xf32>,
    return
  }
  func.func @transform_0(%arg0: i32, %arg1: i32) -> (i32, i32) {
    %c0_i32 = arith.constant 0 : i32
    %c0_i32_0 = arith.constant 0 : i32
    return %arg0, %c0_i32 : i32, i32
  }
  func.func @transform_1(%arg0: i32, %arg1: i32) -> (i32, i32) {
    %c0_i32 = arith.constant 0 : i32
    %c0_i32_0 = arith.constant 0 : i32
    return %c0_i32, %arg1 : i32, i32
  }
  func.func @transform_2(%arg0: i32, %arg1: i32) -> (i32, i32) {
    %c0_i32 = arith.constant 0 : i32
    %c0_i32_0 = arith.constant 0 : i32
    return %c0_i32, %arg1 : i32, i32
  }
  func.func @transform_3(%arg0: i32, %arg1: i32) -> (i32, i32) {
    %c0_i32 = arith.constant 0 : i32
    return %arg0, %arg1 : i32, i32
  }
}

</mosaic_0001>

<llo_original>
// kernel: seq2seq_forward.12
$region0: #{seq2seq_forward.12}
  #allocation0 [shape = 'u32[]', space=smem, size = 0x4, offset = 0x4, fixed_abs, tag = 'smem constant byte address 0x4 - core index']
  #allocation1 [shape = 'u32[144,128]{1,0:T(1,128)}', space=vmem, size = 0x12000, scoped, tag = 'internal scratch']
  #allocation2 [shape = 'f32[8,32]{1,0:T(8,128)}', space=vmem, size = 0x1000, scoped, tag = 'scratch operand']
  %s0 = inlined_call_operand.vmem [shape: bf16[2,8,32], index: 0, kind: input, shape index: {}]
  %s1 = inlined_call_operand.vmem [shape: bf16[2,8,32], index: 1, kind: input, shape index: {}]
  %s2 = inlined_call_operand.vmem [shape: f32[2,8,1], index: 2, kind: input, shape index: {}]
  %s3 = inlined_call_operand.vmem [shape: bf16[4,32,8], index: 3, kind: input, shape index: {}]
  %s4 = inlined_call_operand.vmem [shape: f32[4,1,8], index: 4, kind: input, shape index: {}]
  %s5 = inlined_call_operand.vmem [shape: bf16[4,32,8], index: 5, kind: input, shape index: {}]
  %s6 = inlined_call_operand.vmem [shape: f32[4,1,8], index: 6, kind: input, shape index: {}]
  %s7 = inlined_call_operand.vmem [shape: bf16[4,32,8], index: 7, kind: input, shape index: {}]
  %s8 = inlined_call_operand.vmem [shape: f32[4,1,8], index: 8, kind: input, shape index: {}]
  %s9 = inlined_call_operand.vmem [shape: bf16[4,8,32], index: 9, kind: input, shape index: {}]
  %s10 = inlined_call_operand.vmem [shape: f32[1,32], index: 10, kind: input, shape index: {}]
  %s11 = inlined_call_operand.vmem [shape: f32[1,32], index: 11, kind: input, shape index: {}]
  %s12 = inlined_call_operand.vmem [shape: f32[1,32], index: 12, kind: input, shape index: {}]
  %s13 = inlined_call_operand.vmem [shape: bf16[32,64], index: 13, kind: input, shape index: {}]
  %s14 = inlined_call_operand.vmem [shape: f32[1,64], index: 14, kind: input, shape index: {}]
  %s15 = inlined_call_operand.vmem [shape: bf16[64,32], index: 15, kind: input, shape index: {}]
  %s16 = inlined_call_operand.vmem [shape: f32[1,32], index: 16, kind: input, shape index: {}]
  %s17 = inlined_call_operand.vmem [shape: f32[1,32], index: 17, kind: input, shape index: {}]
  %s18 = inlined_call_operand.vmem [shape: f32[1,32], index: 18, kind: input, shape index: {}]
  %s19 = inlined_call_operand.vmem [shape: bf16[2,8,32], index: 19, kind: output, shape index: {0}]
  %s20 = inlined_call_operand.hbm [shape: bf16[2,4,8,8], index: 20, kind: output, shape index: {1}]
  %21 = xla_tuple %s19, %s20
  %s22 = sld [smem:[#allocation0]]
  $region124: #{seq2seq_forward.12} parent=0
    _
  %s24 = ssub.s32 1, %s22
  %s25 = scalar_select 0, %s24, %s22
  $region1: #{seq2seq_forward.12} parent=0
    #allocation3 [shape = 'u8[16384]{0}', space=vmem, size = 0x4000, scoped, tag = 'output window, operand 1']
    #allocation4 [shape = 's32[2]{0}', space=sflag, size = 0x8, scoped, tag = 'scoped memory for seq2seq_forward.12']
    %26 = vsyncpa [#allocation4], 0
    %s27 = scalar_lea.sflag [#allocation4], 1
    %28 = vsyncpa %s27, 0
    loop: start=0, step=1, limit=4
    $region2: #{seq2seq_forward.12} parent=1 // loop_pre_header
      _
    $region3: #{seq2seq_forward.12} parent=1 // loop_header
      %s30 = sphi 0, %s34
      %p31 = scmp.ge.s32.totalorder %s30, 4
      %s37 = sphi 0, %s49
      %s38 = sphi 0, %s45
      %s39 = sphi 0, %s37
      %s40 = sphi 0, %s38
      %s41 = sphi 0, %s39
      %s42 = sphi 0, %s40
      %s54 = sphi 0, %s56
      %s57 = sphi 0, %s54
      %s58 = sphi 0, %s57
      %s74 = sphi 0, %s58
      %s80 = sphi 0, %s82
      %s83 = sphi 0, %s80
      %s84 = sphi 0, %s83
      %s100 = sphi 0, %s84
      %s108 = sphi 0, %s110
      %s111 = sphi 0, %s108
      %s112 = sphi 0, %s111
      %s128 = sphi 0, %s112
      %s132 = sphi 0, %s132
      %s134 = sphi 0, %s132
      %s135 = sphi 0, %s134
      %s149 = sphi 0, %s135
      %s153 = sphi 0, %s153
      %s155 = sphi 0, %s153
      %s156 = sphi 0, %s155
      %s170 = sphi 0, %s156
      %s174 = sphi 0, %s174
      %s176 = sphi 0, %s174
      %s177 = sphi 0, %s176
      %s191 = sphi 0, %s177
      %s195 = sphi 0, %s195
      %s197 = sphi 0, %s195
      %s198 = sphi 0, %s197
      %s212 = sphi 0, %s198
      %s216 = sphi 0, %s216
      %s218 = sphi 0, %s216
      %s219 = sphi 0, %s218
      %s233 = sphi 0, %s219
      %s237 = sphi 0, %s237
      %s239 = sphi 0, %s237
      %s240 = sphi 0, %s239
      %s254 = sphi 0, %s240
      %s258 = sphi 0, %s258
      %s260 = sphi 0, %s258
      %s261 = sphi 0, %s260
      %s275 = sphi 0, %s261
      %s279 = sphi 0, %s279
      %s281 = sphi 0, %s279
      %s282 = sphi 0, %s281
      %s296 = sphi 0, %s282
      %s300 = sphi 0, %s300
      %s302 = sphi 0, %s300
      %s303 = sphi 0, %s302
      %s317 = sphi 0, %s303
      %s321 = sphi 0, %s321
      %s323 = sphi 0, %s321
      %s324 = sphi 0, %s323
      %s338 = sphi 0, %s324
      %s342 = sphi 0, %s342
      %s344 = sphi 0, %s342
      %s345 = sphi 0, %s344
      %s359 = sphi 0, %s345
      %s363 = sphi 0, %s363
      %s365 = sphi 0, %s363
      %s366 = sphi 0, %s365
      %s380 = sphi 0, %s366
      %s384 = sphi 0, %s384
      %s386 = sphi 0, %s384
      %s387 = sphi 0, %s386
      %s401 = sphi 0, %s387
      %s405 = sphi 0, %s405
      %s407 = sphi 0, %s405
      %s408 = sphi 0, %s407
      %s422 = sphi 0, %s408
      %s426 = sphi 0, %s426
      %s428 = sphi 0, %s426
      %s429 = sphi 0, %s428
      %s443 = sphi 0, %s429
      %s447 = sphi 0, %s447
      %s449 = sphi 0, %s447
      %s450 = sphi 0, %s449
      %s464 = sphi 0, %s450
      %s472 = sphi 0, %s474
      %s475 = sphi 0, %s472
      %s476 = sphi 0, %s475
      %s492 = sphi 0, %s476
      %s500 = sphi 0, %s502
      %s503 = sphi 0, %s500
      %s504 = sphi 0, %s503
      %s520 = sphi 0, %s504
    $region4: #{seq2seq_forward.12} parent=1 // loop_header_branch
      %33 = sbr.rel (%p31) target = $region8
    $region5: #{seq2seq_forward.12} parent=1 // loop_body
      %s35 = ssub.s32 %s30, 1
      %s36 = ssub.s32 %s30, 2
      %s43 = sadd.s32 1, %s38
      %p44 = scmp.ge.s32.totalorder %s43, 1
      %s45 = scalar_select %p44, 0, %s43
      %s46 = sadd.s32 1, %s37
      %s47 = scalar_select %p44, %s46, %s37
      %p48 = scmp.ge.s32.totalorder %s47, 2
      %s49 = scalar_select %p48, 0, %s47
      %s50 = ssub.s32 %s37, %s49
      %s51 = ssub.s32 %s38, %s45
      %s52 = sor.u32 %s50, %s51
      %p53 = scmp.eq.s32.totalorder %s52, 0
      %s55 = sadd.s32 %s54, 1
      %s56 = scalar_select %p53, %s54, %s55
      %p59 = pneg %p53
      %p60 = scmp.eq.s32.totalorder %s30, 1
      %p61 = por %p59, %p60
      %p62 = scmp.ne.s32.totalorder %s54, %s57
      %p63 = scmp.eq.s32.totalorder %s30, 0
      %p64 = por %p62, %p63
      %p65 = scmp.ne.s32.totalorder %s54, %s57
      %p66 = scmp.eq.s32.totalorder %s35, 1
      %p67 = por %p65, %p66
      %p68 = scmp.ne.s32.totalorder %s57, %s58
      %p69 = scmp.eq.s32.totalorder %s35, 0
      %p70 = por %p68, %p69
      %p71 = scmp.ne.s32.totalorder %s57, %s58
      %p72 = scmp.eq.s32.totalorder %s36, 1
      %p73 = por %p71, %p72
      %p75 = scmp.ne.s32.totalorder %s58, %s74
      %p76 = scmp.eq.s32.totalorder %s36, 0
      %p77 = por %p75, %p76
      %s78 = ssub.s32 %s37, %s49
      %p79 = scmp.eq.s32.totalorder %s78, 0
      %s81 = sadd.s32 %s80, 1
      %s82 = scalar_select %p79, %s80, %s81
      %p85 = pneg %p79
      %p86 = scmp.eq.s32.totalorder %s30, 1
      %p87 = por %p85, %p86
      %p88 = scmp.ne.s32.totalorder %s80, %s83
      %p89 = scmp.eq.s32.totalorder %s30, 0
      %p90 = por %p88, %p89
      %p91 = scmp.ne.s32.totalorder %s80, %s83
      %p92 = scmp.eq.s32.totalorder %s35, 1
      %p93 = por %p91, %p92
      %p94 = scmp.ne.s32.totalorder %s83, %s84
      %p95 = scmp.eq.s32.totalorder %s35, 0
      %p96 = por %p94, %p95
      %p97 = scmp.ne.s32.totalorder %s83, %s84
      %p98 = scmp.eq.s32.totalorder %s36, 1
      %p99 = por %p97, %p98
      %p101 = scmp.ne.s32.totalorder %s84, %s100
      %p102 = scmp.eq.s32.totalorder %s36, 0
      %p103 = por %p101, %p102
      %s104 = ssub.s32 %s37, %s49
      %s105 = ssub.s32 %s38, %s45
      %s106 = sor.u32 %s104, %s105
      %p107 = scmp.eq.s32.totalorder %s106, 0
      %s109 = sadd.s32 %s108, 1
      %s110 = scalar_select %p107, %s108, %s109
      %p113 = pneg %p107
      %p114 = scmp.eq.s32.totalorder %s30, 1
      %p115 = por %p113, %p114
      %p116 = scmp.ne.s32.totalorder %s108, %s111
      %p117 = scmp.eq.s32.totalorder %s30, 0
      %p118 = por %p116, %p117
      %p119 = scmp.ne.s32.totalorder %s108, %s111
      %p120 = scmp.eq.s32.totalorder %s35, 1
      %p121 = por %p119, %p120
      %p122 = scmp.ne.s32.totalorder %s111, %s112
      %p123 = scmp.eq.s32.totalorder %s35, 0
      %p124 = por %p122, %p123
      %p125 = scmp.ne.s32.totalorder %s111, %s112
      %p126 = scmp.eq.s32.totalorder %s36, 1
      %p127 = por %p125, %p126
      %p129 = scmp.ne.s32.totalorder %s112, %s128
      %p130 = scmp.eq.s32.totalorder %s36, 0
      %p131 = por %p129, %p130
      %s133 = sadd.s32 %s132, 1
      %p136 = scmp.eq.s32.totalorder %s30, 1
      %p137 = scmp.ne.s32.totalorder %s132, %s134
      %p138 = scmp.eq.s32.totalorder %s30, 0
      %p139 = por %p137, %p138
      %p140 = scmp.ne.s32.totalorder %s132, %s134
      %p141 = scmp.eq.s32.totalorder %s35, 1
      %p142 = por %p140, %p141
      %p143 = scmp.ne.s32.totalorder %s134, %s135
      %p144 = scmp.eq.s32.totalorder %s35, 0
      %p145 = por %p143, %p144
      %p146 = scmp.ne.s32.totalorder %s134, %s135
      %p147 = scmp.eq.s32.totalorder %s36, 1
      %p148 = por %p146, %p147
      %p150 = scmp.ne.s32.totalorder %s135, %s149
      %p151 = scmp.eq.s32.totalorder %s36, 0
      %p152 = por %p150, %p151
      %s154 = sadd.s32 %s153, 1
      %p157 = scmp.eq.s32.totalorder %s30, 1
      %p158 = scmp.ne.s32.totalorder %s153, %s155
      %p159 = scmp.eq.s32.totalorder %s30, 0
      %p160 = por %p158, %p159
      %p161 = scmp.ne.s32.totalorder %s153, %s155
      %p162 = scmp.eq.s32.totalorder %s35, 1
      %p163 = por %p161, %p162
      %p164 = scmp.ne.s32.totalorder %s155, %s156
      %p165 = scmp.eq.s32.totalorder %s35, 0
      %p166 = por %p164, %p165
      %p167 = scmp.ne.s32.totalorder %s155, %s156
      %p168 = scmp.eq.s32.totalorder %s36, 1
      %p169 = por %p167, %p168
      %p171 = scmp.ne.s32.totalorder %s156, %s170
      %p172 = scmp.eq.s32.totalorder %s36, 0
      %p173 = por %p171, %p172
      %s175 = sadd.s32 %s174, 1
      %p178 = scmp.eq.s32.totalorder %s30, 1
      %p179 = scmp.ne.s32.totalorder %s174, %s176
      %p180 = scmp.eq.s32.totalorder %s30, 0
      %p181 = por %p179, %p180
      %p182 = scmp.ne.s32.totalorder %s174, %s176
      %p183 = scmp.eq.s32.totalorder %s35, 1
      %p184 = por %p182, %p183
      %p185 = scmp.ne.s32.totalorder %s176, %s177
      %p186 = scmp.eq.s32.totalorder %s35, 0
      %p187 = por %p185, %p186
      %p188 = scmp.ne.s32.totalorder %s176, %s177
      %p189 = scmp.eq.s32.totalorder %s36, 1
      %p190 = por %p188, %p189
      %p192 = scmp.ne.s32.totalorder %s177, %s191
      %p193 = scmp.eq.s32.totalorder %s36, 0
      %p194 = por %p192, %p193
      %s196 = sadd.s32 %s195, 1
      %p199 = scmp.eq.s32.totalorder %s30, 1
      %p200 = scmp.ne.s32.totalorder %s195, %s197
      %p201 = scmp.eq.s32.totalorder %s30, 0
      %p202 = por %p200, %p201
      %p203 = scmp.ne.s32.totalorder %s195, %s197
      %p204 = scmp.eq.s32.totalorder %s35, 1
      %p205 = por %p203, %p204
      %p206 = scmp.ne.s32.totalorder %s197, %s198
      %p207 = scmp.eq.s32.totalorder %s35, 0
      %p208 = por %p206, %p207
      %p209 = scmp.ne.s32.totalorder %s197, %s198
      %p210 = scmp.eq.s32.totalorder %s36, 1
      %p211 = por %p209, %p210
      %p213 = scmp.ne.s32.totalorder %s198, %s212
      %p214 = scmp.eq.s32.totalorder %s36, 0
      %p215 = por %p213, %p214
      %s217 = sadd.s32 %s216, 1
      %p220 = scmp.eq.s32.totalorder %s30, 1
      %p221 = scmp.ne.s32.totalorder %s216, %s218
      %p222 = scmp.eq.s32.totalorder %s30, 0
      %p223 = por %p221, %p222
      %p224 = scmp.ne.s32.totalorder %s216, %s218
      %p225 = scmp.eq.s32.totalorder %s35, 1
      %p226 = por %p224, %p225
      %p227 = scmp.ne.s32.totalorder %s218, %s219
      %p228 = scmp.eq.s32.totalorder %s35, 0
      %p229 = por %p227, %p228
      %p230 = scmp.ne.s32.totalorder %s218, %s219
      %p231 = scmp.eq.s32.totalorder %s36, 1
      %p232 = por %p230, %p231
      %p234 = scmp.ne.s32.totalorder %s219, %s233
      %p235 = scmp.eq.s32.totalorder %s36, 0
      %p236 = por %p234, %p235
      %s238 = sadd.s32 %s237, 1
      %p241 = scmp.eq.s32.totalorder %s30, 1
      %p242 = scmp.ne.s32.totalorder %s237, %s239
      %p243 = scmp.eq.s32.totalorder %s30, 0
      %p244 = por %p242, %p243
      %p245 = scmp.ne.s32.totalorder %s237, %s239
      %p246 = scmp.eq.s32.totalorder %s35, 1
      %p247 = por %p245, %p246
      %p248 = scmp.ne.s32.totalorder %s239, %s240
      %p249 = scmp.eq.s32.totalorder %s35, 0
      %p250 = por %p248, %p249
      %p251 = scmp.ne.s32.totalorder %s239, %s240
      %p252 = scmp.eq.s32.totalorder %s36, 1
      %p253 = por %p251, %p252
      %p255 = scmp.ne.s32.totalorder %s240, %s254
      %p256 = scmp.eq.s32.totalorder %s36, 0
      %p257 = por %p255, %p256
      %s259 = sadd.s32 %s258, 1
      %p262 = scmp.eq.s32.totalorder %s30, 1
      %p263 = scmp.ne.s32.totalorder %s258, %s260
      %p264 = scmp.eq.s32.totalorder %s30, 0
      %p265 = por %p263, %p264
      %p266 = scmp.ne.s32.totalorder %s258, %s260
      %p267 = scmp.eq.s32.totalorder %s35, 1
      %p268 = por %p266, %p267
      %p269 = scmp.ne.s32.totalorder %s260, %s261
      %p270 = scmp.eq.s32.totalorder %s35, 0
      %p271 = por %p269, %p270
      %p272 = scmp.ne.s32.totalorder %s260, %s261
      %p273 = scmp.eq.s32.totalorder %s36, 1
      %p274 = por %p272, %p273
      %p276 = scmp.ne.s32.totalorder %s261, %s275
      %p277 = scmp.eq.s32.totalorder %s36, 0
      %p278 = por %p276, %p277
      %s280 = sadd.s32 %s279, 1
      %p283 = scmp.eq.s32.totalorder %s30, 1
      %p284 = scmp.ne.s32.totalorder %s279, %s281
      %p285 = scmp.eq.s32.totalorder %s30, 0
      %p286 = por %p284, %p285
      %p287 = scmp.ne.s32.totalorder %s279, %s281
      %p288 = scmp.eq.s32.totalorder %s35, 1
      %p289 = por %p287, %p288
      %p290 = scmp.ne.s32.totalorder %s281, %s282
      %p291 = scmp.eq.s32.totalorder %s35, 0
      %p292 = por %p290, %p291
      %p293 = scmp.ne.s32.totalorder %s281, %s282
      %p294 = scmp.eq.s32.totalorder %s36, 1
      %p295 = por %p293, %p294
      %p297 = scmp.ne.s32.totalorder %s282, %s296
      %p298 = scmp.eq.s32.totalorder %s36, 0
      %p299 = por %p297, %p298
      %s301 = sadd.s32 %s300, 1
      %p304 = scmp.eq.s32.totalorder %s30, 1
      %p305 = scmp.ne.s32.totalorder %s300, %s302
      %p306 = scmp.eq.s32.totalorder %s30, 0
      %p307 = por %p305, %p306
      %p308 = scmp.ne.s32.totalorder %s300, %s302
      %p309 = scmp.eq.s32.totalorder %s35, 1
      %p310 = por %p308, %p309
      %p311 = scmp.ne.s32.totalorder %s302, %s303
      %p312 = scmp.eq.s32.totalorder %s35, 0
      %p313 = por %p311, %p312
      %p314 = scmp.ne.s32.totalorder %s302, %s303
      %p315 = scmp.eq.s32.totalorder %s36, 1
      %p316 = por %p314, %p315
      %p318 = scmp.ne.s32.totalorder %s303, %s317
      %p319 = scmp.eq.s32.totalorder %s36, 0
      %p320 = por %p318, %p319
      %s322 = sadd.s32 %s321, 1
      %p325 = scmp.eq.s32.totalorder %s30, 1
      %p326 = scmp.ne.s32.totalorder %s321, %s323
      %p327 = scmp.eq.s32.totalorder %s30, 0
      %p328 = por %p326, %p327
      %p329 = scmp.ne.s32.totalorder %s321, %s323
      %p330 = scmp.eq.s32.totalorder %s35, 1
      %p331 = por %p329, %p330
      %p332 = scmp.ne.s32.totalorder %s323, %s324
      %p333 = scmp.eq.s32.totalorder %s35, 0
      %p334 = por %p332, %p333
      %p335 = scmp.ne.s32.totalorder %s323, %s324
      %p336 = scmp.eq.s32.totalorder %s36, 1
      %p337 = por %p335, %p336
      %p339 = scmp.ne.s32.totalorder %s324, %s338
      %p340 = scmp.eq.s32.totalorder %s36, 0
      %p341 = por %p339, %p340
      %s343 = sadd.s32 %s342, 1
      %p346 = scmp.eq.s32.totalorder %s30, 1
      %p347 = scmp.ne.s32.totalorder %s342, %s344
      %p348 = scmp.eq.s32.totalorder %s30, 0
      %p349 = por %p347, %p348
      %p350 = scmp.ne.s32.totalorder %s342, %s344
      %p351 = scmp.eq.s32.totalorder %s35, 1
      %p352 = por %p350, %p351
      %p353 = scmp.ne.s32.totalorder %s344, %s345
      %p354 = scmp.eq.s32.totalorder %s35, 0
      %p355 = por %p353, %p354
      %p356 = scmp.ne.s32.totalorder %s344, %s345
      %p357 = scmp.eq.s32.totalorder %s36, 1
      %p358 = por %p356, %p357
      %p360 = scmp.ne.s32.totalorder %s345, %s359
      %p361 = scmp.eq.s32.totalorder %s36, 0
      %p362 = por %p360, %p361
      %s364 = sadd.s32 %s363, 1
      %p367 = scmp.eq.s32.totalorder %s30, 1
      %p368 = scmp.ne.s32.totalorder %s363, %s365
      %p369 = scmp.eq.s32.totalorder %s30, 0
      %p370 = por %p368, %p369
      %p371 = scmp.ne.s32.totalorder %s363, %s365
      %p372 = scmp.eq.s32.totalorder %s35, 1
      %p373 = por %p371, %p372
      %p374 = scmp.ne.s32.totalorder %s365, %s366
      %p375 = scmp.eq.s32.totalorder %s35, 0
      %p376 = por %p374, %p375
      %p377 = scmp.ne.s32.totalorder %s365, %s366
      %p378 = scmp.eq.s32.totalorder %s36, 1
      %p379 = por %p377, %p378
      %p381 = scmp.ne.s32.totalorder %s366, %s380
      %p382 = scmp.eq.s32.totalorder %s36, 0
      %p383 = por %p381, %p382
      %s385 = sadd.s32 %s384, 1
      %p388 = scmp.eq.s32.totalorder %s30, 1
      %p389 = scmp.ne.s32.totalorder %s384, %s386
      %p390 = scmp.eq.s32.totalorder %s30, 0
      %p391 = por %p389, %p390
      %p392 = scmp.ne.s32.totalorder %s384, %s386
      %p393 = scmp.eq.s32.totalorder %s35, 1
      %p394 = por %p392, %p393
      %p395 = scmp.ne.s32.totalorder %s386, %s387
      %p396 = scmp.eq.s32.totalorder %s35, 0
      %p397 = por %p395, %p396
      %p398 = scmp.ne.s32.totalorder %s386, %s387
      %p399 = scmp.eq.s32.totalorder %s36, 1
      %p400 = por %p398, %p399
      %p402 = scmp.ne.s32.totalorder %s387, %s401
      %p403 = scmp.eq.s32.totalorder %s36, 0
      %p404 = por %p402, %p403
      %s406 = sadd.s32 %s405, 1
      %p409 = scmp.eq.s32.totalorder %s30, 1
      %p410 = scmp.ne.s32.totalorder %s405, %s407
      %p411 = scmp.eq.s32.totalorder %s30, 0
      %p412 = por %p410, %p411
      %p413 = scmp.ne.s32.totalorder %s405, %s407
      %p414 = scmp.eq.s32.totalorder %s35, 1
      %p415 = por %p413, %p414
      %p416 = scmp.ne.s32.totalorder %s407, %s408
      %p417 = scmp.eq.s32.totalorder %s35, 0
      %p418 = por %p416, %p417
      %p419 = scmp.ne.s32.totalorder %s407, %s408
      %p420 = scmp.eq.s32.totalorder %s36, 1
      %p421 = por %p419, %p420
      %p423 = scmp.ne.s32.totalorder %s408, %s422
      %p424 = scmp.eq.s32.totalorder %s36, 0
      %p425 = por %p423, %p424
      %s427 = sadd.s32 %s426, 1
      %p430 = scmp.eq.s32.totalorder %s30, 1
      %p431 = scmp.ne.s32.totalorder %s426, %s428
      %p432 = scmp.eq.s32.totalorder %s30, 0
      %p433 = por %p431, %p432
      %p434 = scmp.ne.s32.totalorder %s426, %s428
      %p435 = scmp.eq.s32.totalorder %s35, 1
      %p436 = por %p434, %p435
      %p437 = scmp.ne.s32.totalorder %s428, %s429
      %p438 = scmp.eq.s32.totalorder %s35, 0
      %p439 = por %p437, %p438
      %p440 = scmp.ne.s32.totalorder %s428, %s429
      %p441 = scmp.eq.s32.totalorder %s36, 1
      %p442 = por %p440, %p441
      %p444 = scmp.ne.s32.totalorder %s429, %s443
      %p445 = scmp.eq.s32.totalorder %s36, 0
      %p446 = por %p444, %p445
      %s448 = sadd.s32 %s447, 1
      %p451 = scmp.eq.s32.totalorder %s30, 1
      %p452 = scmp.ne.s32.totalorder %s447, %s449
      %p453 = scmp.eq.s32.totalorder %s30, 0
      %p454 = por %p452, %p453
      %p455 = scmp.ne.s32.totalorder %s447, %s449
      %p456 = scmp.eq.s32.totalorder %s35, 1
      %p457 = por %p455, %p456
      %p458 = scmp.ne.s32.totalorder %s449, %s450
      %p459 = scmp.eq.s32.totalorder %s35, 0
      %p460 = por %p458, %p459
      %p461 = scmp.ne.s32.totalorder %s449, %s450
      %p462 = scmp.eq.s32.totalorder %s36, 1
      %p463 = por %p461, %p462
      %p465 = scmp.ne.s32.totalorder %s450, %s464
      %p466 = scmp.eq.s32.totalorder %s36, 0
      %p467 = por %p465, %p466
      %s468 = ssub.s32 %s37, %s49
      %s469 = ssub.s32 %s38, %s45
      %s470 = sor.u32 %s468, %s469
      %p471 = scmp.eq.s32.totalorder %s470, 0
      %s473 = sadd.s32 %s472, 1
      %s474 = scalar_select %p471, %s472, %s473
      %p477 = pneg %p471
      %p478 = scmp.eq.s32.totalorder %s30, 1
      %p479 = por %p477, %p478
      %p480 = scmp.ne.s32.totalorder %s472, %s475
      %p481 = scmp.eq.s32.totalorder %s30, 0
      %p482 = por %p480, %p481
      %p483 = scmp.ne.s32.totalorder %s472, %s475
      %p484 = scmp.eq.s32.totalorder %s35, 1
      %p485 = por %p483, %p484
      %p486 = scmp.ne.s32.totalorder %s475, %s476
      %p487 = scmp.eq.s32.totalorder %s35, 0
      %p488 = por %p486, %p487
      %p489 = scmp.ne.s32.totalorder %s475, %s476
      %p490 = scmp.eq.s32.totalorder %s36, 1
      %p491 = por %p489, %p490
      %p493 = scmp.ne.s32.totalorder %s476, %s492
      %p494 = scmp.eq.s32.totalorder %s36, 0
      %p495 = por %p493, %p494
      %s496 = ssub.s32 %s37, %s49
      %s497 = ssub.s32 %s38, %s45
      %s498 = sor.u32 %s496, %s497
      %p499 = scmp.eq.s32.totalorder %s498, 0
      %s501 = sadd.s32 %s500, 1
      %s502 = scalar_select %p499, %s500, %s501
      %p505 = pneg %p499
      %p506 = scmp.eq.s32.totalorder %s30, 1
      %p507 = por %p505, %p506
      %p508 = scmp.ne.s32.totalorder %s500, %s503
      %p509 = scmp.eq.s32.totalorder %s30, 0
      %p510 = por %p508, %p509
      %p511 = scmp.ne.s32.totalorder %s500, %s503
      %p512 = scmp.eq.s32.totalorder %s35, 1
      %p513 = por %p511, %p512
      %p514 = scmp.ne.s32.totalorder %s503, %s504
      %p515 = scmp.eq.s32.totalorder %s35, 0
      %p516 = por %p514, %p515
      %p517 = scmp.ne.s32.totalorder %s503, %s504
      %p518 = scmp.eq.s32.totalorder %s36, 1
      %p519 = por %p517, %p518
      %p521 = scmp.ne.s32.totalorder %s504, %s520
      %p522 = scmp.eq.s32.totalorder %s36, 0
      %p523 = por %p521, %p522
      %p524 = scmp.le.s32.totalorder 1, %s30
      %p525 = scmp.lt.s32.totalorder %s30, 3
      %p526 = pnand %p524, %p525
      %p527 = pneg %p526
      // Predicated region
      $region9: #{seq2seq_forward.12} parent=5 // pred_check
        _
      $region10: #{seq2seq_forward.12} parent=5 // pred_check_branch
        %529 = sbr.rel (%p526) target = $region12
      $region11: #{seq2seq_forward.12} parent=5 // pred_region
        %s530 = ssub.s32 %s30, 1
        // Predicated region
        $region13: #{seq2seq_forward.12} parent=11 // pred_check
          %p531 = pneg %p145
        $region14: #{seq2seq_forward.12} parent=11 // pred_check_branch
          %533 = sbr.rel (%p531) target = $region16
        $region15: #{seq2seq_forward.12} parent=11 // pred_region
          _
        $region16: #{seq2seq_forward.12} parent=11 // pred_fallthru
          _
        // Predicated region
        $region17: #{seq2seq_forward.12} parent=11 // pred_check
          %p534 = pneg %p166
        $region18: #{seq2seq_forward.12} parent=11 // pred_check_branch
          %536 = sbr.rel (%p534) target = $region20
        $region19: #{seq2seq_forward.12} parent=11 // pred_region
          _
        $region20: #{seq2seq_forward.12} parent=11 // pred_fallthru
          _
        // Predicated region
        $region21: #{seq2seq_forward.12} parent=11 // pred_check
          %p537 = pneg %p187
        $region22: #{seq2seq_forward.12} parent=11 // pred_check_branch
          %539 = sbr.rel (%p537) target = $region24
        $region23: #{seq2seq_forward.12} parent=11 // pred_region
          _
        $region24: #{seq2seq_forward.12} parent=11 // pred_fallthru
          _
        // Predicated region
        $region25: #{seq2seq_forward.12} parent=11 // pred_check
          %p540 = pneg %p208
        $region26: #{seq2seq_forward.12} parent=11 // pred_check_branch
          %542 = sbr.rel (%p540) target = $region28
        $region27: #{seq2seq_forward.12} parent=11 // pred_region
          _
        $region28: #{seq2seq_forward.12} parent=11 // pred_fallthru
          _
        // Predicated region
        $region29: #{seq2seq_forward.12} parent=11 // pred_check
          %p543 = pneg %p229
        $region30: #{seq2seq_forward.12} parent=11 // pred_check_branch
          %545 = sbr.rel (%p543) target = $region32
        $region31: #{seq2seq_forward.12} parent=11 // pred_region
          _
        $region32: #{seq2seq_forward.12} parent=11 // pred_fallthru
          _
        // Predicated region
        $region33: #{seq2seq_forward.12} parent=11 // pred_check
          %p546 = pneg %p250
        $region34: #{seq2seq_forward.12} parent=11 // pred_check_branch
          %548 = sbr.rel (%p546) target = $region36
        $region35: #{seq2seq_forward.12} parent=11 // pred_region
          _
        $region36: #{seq2seq_forward.12} parent=11 // pred_fallthru
          _
        // Predicated region
        $region37: #{seq2seq_forward.12} parent=11 // pred_check
          %p549 = pneg %p271
        $region38: #{seq2seq_forward.12} parent=11 // pred_check_branch
          %551 = sbr.rel (%p549) target = $region40
        $region39: #{seq2seq_forward.12} parent=11 // pred_region
          _
        $region40: #{seq2seq_forward.12} parent=11 // pred_fallthru
          _
        // Predicated region
        $region41: #{seq2seq_forward.12} parent=11 // pred_check
          %p552 = pneg %p292
        $region42: #{seq2seq_forward.12} parent=11 // pred_check_branch
          %554 = sbr.rel (%p552) target = $region44
        $region43: #{seq2seq_forward.12} parent=11 // pred_region
          _
        $region44: #{seq2seq_forward.12} parent=11 // pred_fallthru
          _
        // Predicated region
        $region45: #{seq2seq_forward.12} parent=11 // pred_check
          %p555 = pneg %p313
        $region46: #{seq2seq_forward.12} parent=11 // pred_check_branch
          %557 = sbr.rel (%p555) target = $region48
        $region47: #{seq2seq_forward.12} parent=11 // pred_region
          _
        $region48: #{seq2seq_forward.12} parent=11 // pred_fallthru
          _
        // Predicated region
        $region49: #{seq2seq_forward.12} parent=11 // pred_check
          %p558 = pneg %p334
        $region50: #{seq2seq_forward.12} parent=11 // pred_check_branch
          %560 = sbr.rel (%p558) target = $region52
        $region51: #{seq2seq_forward.12} parent=11 // pred_region
          _
        $region52: #{seq2seq_forward.12} parent=11 // pred_fallthru
          _
        // Predicated region
        $region53: #{seq2seq_forward.12} parent=11 // pred_check
          %p561 = pneg %p355
        $region54: #{seq2seq_forward.12} parent=11 // pred_check_branch
          %563 = sbr.rel (%p561) target = $region56
        $region55: #{seq2seq_forward.12} parent=11 // pred_region
          _
        $region56: #{seq2seq_forward.12} parent=11 // pred_fallthru
          _
        // Predicated region
        $region57: #{seq2seq_forward.12} parent=11 // pred_check
          %p564 = pneg %p376
        $region58: #{seq2seq_forward.12} parent=11 // pred_check_branch
          %566 = sbr.rel (%p564) target = $region60
        $region59: #{seq2seq_forward.12} parent=11 // pred_region
          _
        $region60: #{seq2seq_forward.12} parent=11 // pred_fallthru
          _
        // Predicated region
        $region61: #{seq2seq_forward.12} parent=11 // pred_check
          %p567 = pneg %p397
        $region62: #{seq2seq_forward.12} parent=11 // pred_check_branch
          %569 = sbr.rel (%p567) target = $region64
        $region63: #{seq2seq_forward.12} parent=11 // pred_region
          _
        $region64: #{seq2seq_forward.12} parent=11 // pred_fallthru
          _
        // Predicated region
        $region65: #{seq2seq_forward.12} parent=11 // pred_check
          %p570 = pneg %p418
        $region66: #{seq2seq_forward.12} parent=11 // pred_check_branch
          %572 = sbr.rel (%p570) target = $region68
        $region67: #{seq2seq_forward.12} parent=11 // pred_region
          _
        $region68: #{seq2seq_forward.12} parent=11 // pred_fallthru
          _
        // Predicated region
        $region69: #{seq2seq_forward.12} parent=11 // pred_check
          %p573 = pneg %p439
        $region70: #{seq2seq_forward.12} parent=11 // pred_check_branch
          %575 = sbr.rel (%p573) target = $region72
        $region71: #{seq2seq_forward.12} parent=11 // pred_region
          _
        $region72: #{seq2seq_forward.12} parent=11 // pred_fallthru
          _
        // Predicated region
        $region73: #{seq2seq_forward.12} parent=11 // pred_check
          %p576 = pneg %p460
        $region74: #{seq2seq_forward.12} parent=11 // pred_check_branch
          %578 = sbr.rel (%p576) target = $region76
        $region75: #{seq2seq_forward.12} parent=11 // pred_region
          _
        $region76: #{seq2seq_forward.12} parent=11 // pred_fallthru
          _
      $region12: #{seq2seq_forward.12} parent=5 // pred_fallthru
        _
      %p579 = scmp.lt.s32.totalorder %s30, 2
      // Predicated region
      $region77: #{seq2seq_forward.12} parent=5 // pred_check
        %p580 = pneg %p579
      $region78: #{seq2seq_forward.12} parent=5 // pred_check_branch
        %582 = sbr.rel (%p580) target = $region80
      $region79: #{seq2seq_forward.12} parent=5 // pred_region
        // Predicated region
        $region81: #{seq2seq_forward.12} parent=79 // pred_check
          %p583 = pneg %p64
        $region82: #{seq2seq_forward.12} parent=79 // pred_check_branch
          %585 = sbr.rel (%p583) target = $region84
        $region83: #{seq2seq_forward.12} parent=79 // pred_region
          %p586 = scmp.lt.s32.totalorder %s37, 1
          %s587 = scalar_select %p586, %s37, 1
          %p588 = scmp.lt.s32.totalorder %s38, 0
          %s589 = scalar_select %p588, %s38, 0
          %s590 = sadd.s32 %s589, %s587
          %s591 = smul.addr %s590, 4
          %s592 = scalar_lea.vmem %s0, %s591
        $region84: #{seq2seq_forward.12} parent=79 // pred_fallthru
          _
        // Predicated region
        $region85: #{seq2seq_forward.12} parent=79 // pred_check
          %p593 = pneg %p90
        $region86: #{seq2seq_forward.12} parent=79 // pred_check_branch
          %595 = sbr.rel (%p593) target = $region88
        $region87: #{seq2seq_forward.12} parent=79 // pred_region
          %p596 = scmp.lt.s32.totalorder %s37, 1
          %s597 = scalar_select %p596, %s37, 1
          %s598 = smul.addr %s597, 4
          %s599 = scalar_lea.vmem %s1, %s598
        $region88: #{seq2seq_forward.12} parent=79 // pred_fallthru
          _
        // Predicated region
        $region89: #{seq2seq_forward.12} parent=79 // pred_check
          %p600 = pneg %p118
        $region90: #{seq2seq_forward.12} parent=79 // pred_check_branch
          %602 = sbr.rel (%p600) target = $region92
        $region91: #{seq2seq_forward.12} parent=79 // pred_region
          %p603 = scmp.lt.s32.totalorder %s37, 1
          %s604 = scalar_select %p603, %s37, 1
          %p605 = scmp.lt.s32.totalorder %s38, 0
          %s606 = scalar_select %p605, %s38, 0
          %s607 = sadd.s32 %s606, %s604
          %s608 = smul.addr %s607, 8
          %s609 = scalar_lea.vmem %s2, %s608
        $region92: #{seq2seq_forward.12} parent=79 // pred_fallthru
          _
      $region80: #{seq2seq_forward.12} parent=5 // pred_fallthru
        _
      %p610 = scmp.le.s32.totalorder 1, %s30
      %p611 = scmp.lt.s32.totalorder %s30, 3
      %p612 = pnand %p610, %p611
      %p613 = pneg %p612
      // Predicated region
      $region93: #{seq2seq_forward.12} parent=5 // pred_check
        _
      $region94: #{seq2seq_forward.12} parent=5 // pred_check_branch
        %615 = sbr.rel (%p612) target = $region96
      $region95: #{seq2seq_forward.12} parent=5 // pred_region
        %s616 = ssub.s32 %s30, 1
        %p617 = scmp.lt.s32.totalorder %s39, 1
        %s618 = scalar_select %p617, %s39, 1
        %p619 = scmp.lt.s32.totalorder %s40, 0
        %s620 = scalar_select %p619, %s40, 0
        %s621 = sadd.s32 %s620, %s618
        %s622 = smul.addr %s621, 4
        %s623 = scalar_lea.vmem %s0, %s622
        %p624 = pneg %p70
        %p625 = pneg %p67
        %p626 = scmp.lt.s32.totalorder %s39, 1
        %s627 = scalar_select %p626, %s39, 1
        %s628 = smul.addr %s627, 4
        %s629 = scalar_lea.vmem %s1, %s628
        %p630 = pneg %p96
        %p631 = pneg %p93
        %p632 = scmp.lt.s32.totalorder %s39, 1
        %s633 = scalar_select %p632, %s39, 1
        %p634 = scmp.lt.s32.totalorder %s40, 0
        %s635 = scalar_select %p634, %s40, 0
        %s636 = sadd.s32 %s635, %s633
        %s637 = smul.addr %s636, 8
        %s638 = scalar_lea.vmem %s2, %s637
        %p639 = pneg %p124
        %p640 = pneg %p121
        %p641 = pneg %p145
        %p642 = pneg %p142
        %p643 = pneg %p166
        %p644 = pneg %p163
        %p645 = pneg %p187
        %p646 = pneg %p184
        %p647 = pneg %p208
        %p648 = pneg %p205
        %p649 = pneg %p229
        %p650 = pneg %p226
        %p651 = pneg %p250
        %p652 = pneg %p247
        %p653 = pneg %p271
        %p654 = pneg %p268
        %p655 = pneg %p292
        %p656 = pneg %p289
        %p657 = pneg %p313
        %p658 = pneg %p310
        %p659 = pneg %p334
        %p660 = pneg %p331
        %p661 = pneg %p355
        %p662 = pneg %p352
        %p663 = pneg %p376
        %p664 = pneg %p373
        %p665 = pneg %p397
        %p666 = pneg %p394
        %p667 = pneg %p418
        %p668 = pneg %p415
        %p669 = pneg %p439
        %p670 = pneg %p436
        %p671 = pneg %p460
        %p672 = pneg %p457
        %p673 = pneg %p488
        %p674 = pneg %p485
        %p675 = scmp.lt.s32.totalorder %s39, 1
        %s676 = scalar_select %p675, %s39, 1
        %p677 = scmp.lt.s32.totalorder %s40, 0
        %s678 = scalar_select %p677, %s40, 0
        %s679 = sadd.s32 %s678, %s676
        %s680 = smul.addr %s679, 4
        %s681 = scalar_lea.vmem %s19, %s680
        %p682 = pneg %p516
        %p683 = pneg %p513
        %s684 = sand.u32 %s503, 1
        %s685 = scalar_lea.sflag [#allocation4], %s684
        %s686 = sand.u32 %s503, 1
        %s687 = smul.addr %s686, 16
        %s688 = scalar_lea.vmem [#allocation3], %s687
        %p689 = scmp.lt.s32.totalorder %s39, 1
        %s690 = scalar_select %p689, %s39, 1
        %p691 = scmp.lt.s32.totalorder %s40, 0
        %s692 = scalar_select %p691, %s40, 0
        %s693 = sadd.s32 %s692, %s690
        %s694 = smul.addr %s693, 4
        %s695 = scalar_lea.vmem %s0, %s694
        %p696 = scmp.lt.s32.totalorder %s39, 1
        %s697 = scalar_select %p696, %s39, 1
        %s698 = smul.addr %s697, 4
        %s699 = scalar_lea.vmem %s1, %s698
        %p700 = scmp.lt.s32.totalorder %s39, 1
        %s701 = scalar_select %p700, %s39, 1
        %p702 = scmp.lt.s32.totalorder %s40, 0
        %s703 = scalar_select %p702, %s40, 0
        %s704 = sadd.s32 %s703, %s701
        %s705 = smul.addr %s704, 8
        %s706 = scalar_lea.vmem %s2, %s705
        %p707 = scmp.lt.s32.totalorder %s39, 1
        %s708 = scalar_select %p707, %s39, 1
        %p709 = scmp.lt.s32.totalorder %s40, 0
        %s710 = scalar_select %p709, %s40, 0
        %s711 = sadd.s32 %s710, %s708
        %s712 = smul.addr %s711, 4
        %s713 = scalar_lea.vmem %s19, %s712
        %v715 = vld [vmem:[%s699] sm:$0xf]
        %v716 = vld [vmem:[%s695] sm:$0xf]
        %v717 = vld [vmem:[%s706] sm:$0xff]
        %vm718 = vcmp.gt.f32.partialorder %v717, 0.5
        %v719 = vsel %vm718, 1, 0
        %720 = vset.pattern.permute.xlu0 0
        %721 = vperm.xlu0 %720, %v719
        %v722 = vpop.permute.xlu0 %721
        %vm723 = vcmp.eq.s32.totalorder %v722, 1
        %vm724 = vcmask 261120
        %725 = vst.msk [vmem:[#allocation2] sm:$0xff] %vm724, 0.0
        loop: start=0, step=1, limit=4
        $region97: #{seq2seq_forward.12} parent=95 // loop_pre_header
          _
        $region98: #{seq2seq_forward.12} parent=95 // loop_header
          %s727 = sphi 0, %s731
          %p728 = scmp.ge.s32.totalorder %s727, 4
        $region99: #{seq2seq_forward.12} parent=95 // loop_header_branch
          %730 = sbr.rel (%p728) target = $region103
        $region100: #{seq2seq_forward.12} parent=95 // loop_body
          %s732 = smul.u32 %s727, 4
          %s733 = smul.addr %s732, 4
          %s734 = scalar_lea.vmem %s3, %s733
          %v735 = vld [vmem:[%s734] sm:$0xf]
          %v736 = vld [vmem:[%s734 + $0x4] sm:$0xf]
          %v737 = vld [vmem:[%s734 + $0x8] sm:$0xf]
          %v738 = vld [vmem:[%s734 + $0xc] sm:$0xf]
          %s739 = scalar_lea.vmem %s4, %s727
          %v740 = vld [vmem:[%s739] sm:$0x1]
          %v742 = vlaneseq
          %v743 = vshrl.u32 %v742, 7
          %v744 = vsub.s32 0, %v743
          %v745 = vrot.slane %v740, %v744
          %v751 = vunpack.c.l.b16 %v735
          %v752 = vunpack.c.l.b16 %v736
          %v753 = vunpack.c.l.b16 %v737
          %v754 = vunpack.c.l.b16 %v738
          %v755 = vpack.c.b16 %v752, %v751
          %v756 = vpack.c.b16 %v754, %v753
          %v760 = vsel %vm724, %v716, 0
          %762 = vmatprep.subr.bf16.mxu0 0
          %763 = vmatpush1.bf16.msra.mxu0 %v755
          %764 = vmatprep.subr.bf16.mxu0 0
          %765 = vmatpush1.bf16.msra.mxu0 %v756
          %766 = vmatprep.subr.bf16.mxu0 0
          %767 = vmatpush1.bf16.msra.mxu0 0
          %768 = vmatprep.subr.bf16.mxu0 0
          %769 = vmatpush1.bf16.msra.mxu0 0
          %770 = vmatprep.subr.bf16.mxu0 0
          %771 = vmatpush1.bf16.msra.mxu0 0
          %772 = vmatprep.subr.bf16.mxu0 0
          %773 = vmatpush1.bf16.msra.mxu0 0
          %774 = vmatprep.subr.bf16.mxu0 0
          %775 = vmatpush1.bf16.msra.mxu0 0
          %776 = vmatprep.subr.bf16.mxu0 0
          %777 = vmatpush1.bf16.msra.mxu0 0
          %778 = vmatprep.subr.bf16.mxu0 0
          %779 = vmatpush1.bf16.msra.mxu0 0
          %780 = vmatprep.subr.bf16.mxu0 0
          %781 = vmatpush1.bf16.msra.mxu0 0
          %782 = vmatprep.subr.bf16.mxu0 0
          %783 = vmatpush1.bf16.msra.mxu0 0
          %784 = vmatprep.subr.bf16.mxu0 0
          %785 = vmatpush1.bf16.msra.mxu0 0
          %786 = vmatprep.subr.bf16.mxu0 0
          %787 = vmatpush1.bf16.msra.mxu0 0
          %788 = vmatprep.subr.bf16.mxu0 0
          %789 = vmatpush1.bf16.msra.mxu0 0
          %790 = vmatprep.subr.bf16.mxu0 0
          %791 = vmatpush1.bf16.msra.mxu0 0
          %792 = vmatprep.subr.bf16.mxu0 0
          %793 = vmatpush1.bf16.msra.mxu0 0
          %794 = vmatprep.mubr.bf16.mxu0 0
          %795 = vmatmul.mubr.bf16.gmra.mrb[0].mxu0 %v760
          %v796 = vpop.f32.mrb[0].mxu0
          %v797 = vadd.f32 %v745, %v796
          %v798 = vpop.f32.mrb[0].mxu0
          %v799 = vpop.f32.mrb[0].mxu0
          %v800 = vpop.f32.mrb[0].mxu0
          %801 = vdwg.mxu0
          %s802 = smul.addr %s732, 4
          %s803 = scalar_lea.vmem %s5, %s802
          %v804 = vld [vmem:[%s803] sm:$0xf]
          %v805 = vld [vmem:[%s803 + $0x4] sm:$0xf]
          %v806 = vld [vmem:[%s803 + $0x8] sm:$0xf]
          %v807 = vld [vmem:[%s803 + $0xc] sm:$0xf]
          %s808 = scalar_lea.vmem %s6, %s727
          %v809 = vld [vmem:[%s808] sm:$0x1]
          %v811 = vlaneseq
          %v812 = vshrl.u32 %v811, 7
          %v813 = vsub.s32 0, %v812
          %v814 = vrot.slane %v809, %v813
          %v820 = vunpack.c.l.b16 %v804
          %v821 = vunpack.c.l.b16 %v805
          %v822 = vunpack.c.l.b16 %v806
          %v823 = vunpack.c.l.b16 %v807
          %v824 = vpack.c.b16 %v821, %v820
          %v825 = vpack.c.b16 %v823, %v822
          %v829 = vsel %vm724, %v715, 0
          %831 = vmatprep.subr.bf16.mxu0 0
          %832 = vmatpush1.bf16.msra.mxu0 %v824
          %833 = vmatprep.subr.bf16.mxu0 0
          %834 = vmatpush1.bf16.msra.mxu0 %v825
          %835 = vmatprep.subr.bf16.mxu0 0
          %836 = vmatpush1.bf16.msra.mxu0 0
          %837 = vmatprep.subr.bf16.mxu0 0
          %838 = vmatpush1.bf16.msra.mxu0 0
          %839 = vmatprep.subr.bf16.mxu0 0
          %840 = vmatpush1.bf16.msra.mxu0 0
          %841 = vmatprep.subr.bf16.mxu0 0
          %842 = vmatpush1.bf16.msra.mxu0 0
          %843 = vmatprep.subr.bf16.mxu0 0
          %844 = vmatpush1.bf16.msra.mxu0 0
          %845 = vmatprep.subr.bf16.mxu0 0
          %846 = vmatpush1.bf16.msra.mxu0 0
          %847 = vmatprep.subr.bf16.mxu0 0
          %848 = vmatpush1.bf16.msra.mxu0 0
          %849 = vmatprep.subr.bf16.mxu0 0
          %850 = vmatpush1.bf16.msra.mxu0 0
          %851 = vmatprep.subr.bf16.mxu0 0
          %852 = vmatpush1.bf16.msra.mxu0 0
          %853 = vmatprep.subr.bf16.mxu0 0
          %854 = vmatpush1.bf16.msra.mxu0 0
          %855 = vmatprep.subr.bf16.mxu0 0
          %856 = vmatpush1.bf16.msra.mxu0 0
          %857 = vmatprep.subr.bf16.mxu0 0
          %858 = vmatpush1.bf16.msra.mxu0 0
          %859 = vmatprep.subr.bf16.mxu0 0
          %860 = vmatpush1.bf16.msra.mxu0 0
          %861 = vmatprep.subr.bf16.mxu0 0
          %862 = vmatpush1.bf16.msra.mxu0 0
          %863 = vmatprep.mubr.bf16.mxu0 0
          %864 = vmatmul.mubr.bf16.gmra.mrb[0].mxu0 %v829
          %v865 = vpop.f32.mrb[0].mxu0
          %v866 = vadd.f32 %v814, %v865
          %v867 = vpop.f32.mrb[0].mxu0
          %v868 = vpop.f32.mrb[0].mxu0
          %v869 = vpop.f32.mrb[0].mxu0
          %870 = vdwg.mxu0
          %s871 = smul.addr %s732, 4
          %s872 = scalar_lea.vmem %s7, %s871
          %v873 = vld [vmem:[%s872] sm:$0xf]
          %v874 = vld [vmem:[%s872 + $0x4] sm:$0xf]
          %v875 = vld [vmem:[%s872 + $0x8] sm:$0xf]
          %v876 = vld [vmem:[%s872 + $0xc] sm:$0xf]
          %s877 = scalar_lea.vmem %s8, %s727
          %v878 = vld [vmem:[%s877] sm:$0x1]
          %v880 = vlaneseq
          %v881 = vshrl.u32 %v880, 7
          %v882 = vsub.s32 0, %v881
          %v883 = vrot.slane %v878, %v882
          %v889 = vunpack.c.l.b16 %v873
          %v890 = vunpack.c.l.b16 %v874
          %v891 = vunpack.c.l.b16 %v875
          %v892 = vunpack.c.l.b16 %v876
          %v893 = vpack.c.b16 %v890, %v889
          %v894 = vpack.c.b16 %v892, %v891
          %897 = vmatprep.subr.bf16.mxu0 0
          %898 = vmatpush1.bf16.msra.mxu0 %v893
          %899 = vmatprep.subr.bf16.mxu0 0
          %900 = vmatpush1.bf16.msra.mxu0 %v894
          %901 = vmatprep.subr.bf16.mxu0 0
          %902 = vmatpush1.bf16.msra.mxu0 0
          %903 = vmatprep.subr.bf16.mxu0 0
          %904 = vmatpush1.bf16.msra.mxu0 0
          %905 = vmatprep.subr.bf16.mxu0 0
          %906 = vmatpush1.bf16.msra.mxu0 0
          %907 = vmatprep.subr.bf16.mxu0 0
          %908 = vmatpush1.bf16.msra.mxu0 0
          %909 = vmatprep.subr.bf16.mxu0 0
          %910 = vmatpush1.bf16.msra.mxu0 0
          %911 = vmatprep.subr.bf16.mxu0 0
          %912 = vmatpush1.bf16.msra.mxu0 0
          %913 = vmatprep.subr.bf16.mxu0 0
          %914 = vmatpush1.bf16.msra.mxu0 0
          %915 = vmatprep.subr.bf16.mxu0 0
          %916 = vmatpush1.bf16.msra.mxu0 0
          %917 = vmatprep.subr.bf16.mxu0 0
          %918 = vmatpush1.bf16.msra.mxu0 0
          %919 = vmatprep.subr.bf16.mxu0 0
          %920 = vmatpush1.bf16.msra.mxu0 0
          %921 = vmatprep.subr.bf16.mxu0 0
          %922 = vmatpush1.bf16.msra.mxu0 0
          %923 = vmatprep.subr.bf16.mxu0 0
          %924 = vmatpush1.bf16.msra.mxu0 0
          %925 = vmatprep.subr.bf16.mxu0 0
          %926 = vmatpush1.bf16.msra.mxu0 0
          %927 = vmatprep.subr.bf16.mxu0 0
          %928 = vmatpush1.bf16.msra.mxu0 0
          %929 = vmatprep.mubr.bf16.mxu0 0
          %930 = vmatmul.mubr.bf16.gmra.mrb[0].mxu0 %v829
          %v931 = vpop.f32.mrb[0].mxu0
          %v932 = vadd.f32 %v883, %v931
          %v933 = vpop.f32.mrb[0].mxu0
          %v934 = vpop.f32.mrb[0].mxu0
          %v935 = vpop.f32.mrb[0].mxu0
          %936 = vdwg.mxu0
          %v937 = vpack.c.bf16 %v797, %v797
          %v938 = vpack.c.bf16 %v866, %v866
          %vm939 = vcmask 64512
          %v941 = vsel %vm939, %v937, 0
          %v944 = vsel %vm939, %v938, 0
          %946 = vmatprep.subr.bf16.mxu0 0
          %947 = vmatpush1.bf16.xpose.msra.mxu0 %v944
          %948 = vmatprep.subr.bf16.mxu0 0
          %949 = vmatpush1.bf16.xpose.msra.mxu0 0
          %950 = vmatprep.subr.bf16.mxu0 0
          %951 = vmatpush1.bf16.xpose.msra.mxu0 0
          %952 = vmatprep.subr.bf16.mxu0 0
          %953 = vmatpush1.bf16.xpose.msra.mxu0 0
          %954 = vmatprep.subr.bf16.mxu0 0
          %955 = vmatpush1.bf16.xpose.msra.mxu0 0
          %956 = vmatprep.subr.bf16.mxu0 0
          %957 = vmatpush1.bf16.xpose.msra.mxu0 0
          %958 = vmatprep.subr.bf16.mxu0 0
          %959 = vmatpush1.bf16.xpose.msra.mxu0 0
          %960 = vmatprep.subr.bf16.mxu0 0
          %961 = vmatpush1.bf16.xpose.msra.mxu0 0
          %962 = vmatprep.subr.bf16.mxu0 0
          %963 = vmatpush1.bf16.xpose.msra.mxu0 0
          %964 = vmatprep.subr.bf16.mxu0 0
          %965 = vmatpush1.bf16.xpose.msra.mxu0 0
          %966 = vmatprep.subr.bf16.mxu0 0
          %967 = vmatpush1.bf16.xpose.msra.mxu0 0
          %968 = vmatprep.subr.bf16.mxu0 0
          %969 = vmatpush1.bf16.xpose.msra.mxu0 0
          %970 = vmatprep.subr.bf16.mxu0 0
          %971 = vmatpush1.bf16.xpose.msra.mxu0 0
          %972 = vmatprep.subr.bf16.mxu0 0
          %973 = vmatpush1.bf16.xpose.msra.mxu0 0
          %974 = vmatprep.subr.bf16.mxu0 0
          %975 = vmatpush1.bf16.xpose.msra.mxu0 0
          %976 = vmatprep.subr.bf16.mxu0 0
          %977 = vmatpush1.bf16.xpose.msra.mxu0 0
          %978 = vmatprep.mubr.bf16.mxu0 0
          %979 = vmatmul.mubr.bf16.gmra.mrb[0].mxu0 %v941
          %v980 = vpop.f32.mrb[0].mxu0
          %v981 = vadd.f32 0.0, %v980
          %v982 = vpop.f32.mrb[0].mxu0
          %v983 = vpop.f32.mrb[0].mxu0
          %v984 = vpop.f32.mrb[0].mxu0
          %985 = vdwg.mxu0
          %v986 = vmul.f32 %v981, 0.35355338
          %v987 = vsel %vm723, %v986, -1e+10
          %v988 = vsel %vm939, %v987, -inf
          %989 = vmax.xlane.f32.xlu0 %v988
          %v990 = vpop.xlane.xlu0 %989
          %v991 = vsub.f32 %v987, %v990
          %v992 = vmul.f32 %v991, 1.442695
          %v993 = vpow.pop %v992
          %v994 = vsel %vm939, %v993, 0.0
          %995 = vadd.xlane.f32.xlu0 %v994
          %v996 = vpop.xlane.xlu0 %995
          %v997 = vrcp.pop %v996
          %v998 = vmul.f32 %v993, %v997
          %v999 = vpack.c.bf16 %v998, %v998
          %s1000 = smul.addr %s727, 4
          %s1001 = scalar_lea.vmem %s688, %s1000 [#allocation3]
          %vm1002 = vcmask 60416
          %1003 = vst.msk [vmem:[%s1001] sm:$0xf] %vm1002, %v999
          %v1004 = vpack.c.bf16 %v932, %v932
          %v1006 = vsel %vm939, %v999, 0
          %vm1008 = vcmask 1043456
          %v1010 = vsel %vm1008, %v1004, 0
          %1012 = vmatprep.subr.bf16.mxu0 0
          %1013 = vmatpush1.bf16.msra.mxu0 %v1010
          %1014 = vmatprep.subr.bf16.mxu0 0
          %1015 = vmatpush1.bf16.msra.mxu0 0
          %1016 = vmatprep.subr.bf16.mxu0 0
          %1017 = vmatpush1.bf16.msra.mxu0 0
          %1018 = vmatprep.subr.bf16.mxu0 0
          %1019 = vmatpush1.bf16.msra.mxu0 0
          %1020 = vmatprep.subr.bf16.mxu0 0
          %1021 = vmatpush1.bf16.msra.mxu0 0
          %1022 = vmatprep.subr.bf16.mxu0 0
          %1023 = vmatpush1.bf16.msra.mxu0 0
          %1024 = vmatprep.subr.bf16.mxu0 0
          %1025 = vmatpush1.bf16.msra.mxu0 0
          %1026 = vmatprep.subr.bf16.mxu0 0
          %1027 = vmatpush1.bf16.msra.mxu0 0
          %1028 = vmatprep.subr.bf16.mxu0 0
          %1029 = vmatpush1.bf16.msra.mxu0 0
          %1030 = vmatprep.subr.bf16.mxu0 0
          %1031 = vmatpush1.bf16.msra.mxu0 0
          %1032 = vmatprep.subr.bf16.mxu0 0
          %1033 = vmatpush1.bf16.msra.mxu0 0
          %1034 = vmatprep.subr.bf16.mxu0 0
          %1035 = vmatpush1.bf16.msra.mxu0 0
          %1036 = vmatprep.subr.bf16.mxu0 0
          %1037 = vmatpush1.bf16.msra.mxu0 0
          %1038 = vmatprep.subr.bf16.mxu0 0
          %1039 = vmatpush1.bf16.msra.mxu0 0
          %1040 = vmatprep.subr.bf16.mxu0 0
          %1041 = vmatpush1.bf16.msra.mxu0 0
          %1042 = vmatprep.subr.bf16.mxu0 0
          %1043 = vmatpush1.bf16.msra.mxu0 0
          %1044 = vmatprep.mubr.bf16.mxu0 0
          %1045 = vmatmul.mubr.bf16.gmra.mrb[0].mxu0 %v1006
          %v1046 = vpop.f32.mrb[0].mxu0
          %v1047 = vadd.f32 0.0, %v1046
          %v1048 = vpop.f32.mrb[0].mxu0
          %v1049 = vpop.f32.mrb[0].mxu0
          %v1050 = vpop.f32.mrb[0].mxu0
          %1051 = vdwg.mxu0
          %v1052 = vld [vmem:[#allocation2] sm:$0xff]
          %v1053 = vpack.c.bf16 %v1047, %v1047
          %s1054 = smul.addr %s727, 4
          %s1055 = scalar_lea.vmem %s9, %s1054
          %v1056 = vld [vmem:[%s1055] sm:$0xf]
          %v1058 = vsel %vm939, %v1053, 0
          %v1061 = vsel %vm1008, %v1056, 0
          %1063 = vmatprep.subr.bf16.mxu0 0
          %1064 = vmatpush1.bf16.msra.mxu0 %v1061
          %1065 = vmatprep.subr.bf16.mxu0 0
          %1066 = vmatpush1.bf16.msra.mxu0 0
          %1067 = vmatprep.subr.bf16.mxu0 0
          %1068 = vmatpush1.bf16.msra.mxu0 0
          %1069 = vmatprep.subr.bf16.mxu0 0
          %1070 = vmatpush1.bf16.msra.mxu0 0
          %1071 = vmatprep.subr.bf16.mxu0 0
          %1072 = vmatpush1.bf16.msra.mxu0 0
          %1073 = vmatprep.subr.bf16.mxu0 0
          %1074 = vmatpush1.bf16.msra.mxu0 0
          %1075 = vmatprep.subr.bf16.mxu0 0
          %1076 = vmatpush1.bf16.msra.mxu0 0
          %1077 = vmatprep.subr.bf16.mxu0 0
          %1078 = vmatpush1.bf16.msra.mxu0 0
          %1079 = vmatprep.subr.bf16.mxu0 0
          %1080 = vmatpush1.bf16.msra.mxu0 0
          %1081 = vmatprep.subr.bf16.mxu0 0
          %1082 = vmatpush1.bf16.msra.mxu0 0
          %1083 = vmatprep.subr.bf16.mxu0 0
          %1084 = vmatpush1.bf16.msra.mxu0 0
          %1085 = vmatprep.subr.bf16.mxu0 0
          %1086 = vmatpush1.bf16.msra.mxu0 0
          %1087 = vmatprep.subr.bf16.mxu0 0
          %1088 = vmatpush1.bf16.msra.mxu0 0
          %1089 = vmatprep.subr.bf16.mxu0 0
          %1090 = vmatpush1.bf16.msra.mxu0 0
          %1091 = vmatprep.subr.bf16.mxu0 0
          %1092 = vmatpush1.bf16.msra.mxu0 0
          %1093 = vmatprep.subr.bf16.mxu0 0
          %1094 = vmatpush1.bf16.msra.mxu0 0
          %1095 = vmatprep.mubr.bf16.mxu0 0
          %1096 = vmatmul.mubr.bf16.gmra.mrb[0].mxu0 %v1058
          %v1097 = vpop.f32.mrb[0].mxu0
          %v1098 = vadd.f32 0.0, %v1097
          %v1099 = vpop.f32.mrb[0].mxu0
          %v1100 = vpop.f32.mrb[0].mxu0
          %v1101 = vpop.f32.mrb[0].mxu0
          %1102 = vdwg.mxu0
          %v1103 = vadd.f32 %v1052, %v1098
          %1104 = vst.msk [vmem:[#allocation2] sm:$0xff] %vm724, %v1103
        $region101: #{seq2seq_forward.12} parent=95 // loop_footer
          %s731 = sadd.s32 1, %s727
        $region102: #{seq2seq_forward.12} parent=95 // loop_footer_branch
          %726 = sbr.rel target = $region98
        $region103: #{seq2seq_forward.12} parent=95 // loop_exit
          _
        %v1105 = vld [vmem:[#allocation2] sm:$0xff]
        %v1106 = vld [vmem:[%s10] sm:$0x1]
        %v1108 = vlaneseq
        %v1109 = vshrl.u32 %v1108, 7
        %v1110 = vsub.s32 0, %v1109
        %v1111 = vrot.slane %v1106, %v1110
        %v1113 = vadd.f32 %v1105, %v1111
        %v1114 = vunpack.c.l.bf16 %v716
        %v1115 = vadd.f32 %v1113, %v1114
        %v1116 = vsel %vm724, %v1115, 0.0
        %1117 = vadd.xlane.f32.xlu0 %v1116
        %v1118 = vpop.xlane.xlu0 %1117
        %v1119 = vrcp.pop 32.0
        %v1120 = vmul.f32 %v1118, %v1119
        %v1121 = vsub.f32 %v1115, %v1120
        %v1122 = vmul.f32 %v1121, %v1121
        %v1123 = vsel %vm724, %v1122, 0.0
        %1124 = vadd.xlane.f32.xlu0 %v1123
        %v1125 = vpop.xlane.xlu0 %1124
        %v1126 = vmul.f32 %v1125, %v1119
        %v1127 = vadd.f32 %v1126, 1e-05
        %v1128 = vrsqrt.pop %v1127
        %v1129 = vmul.f32 %v1121, %v1128
        %v1130 = vld [vmem:[%s11] sm:$0x1]
        %v1132 = vlaneseq
        %v1133 = vshrl.u32 %v1132, 7
        %v1134 = vsub.s32 0, %v1133
        %v1135 = vrot.slane %v1130, %v1134
        %v1137 = vmul.f32 %v1129, %v1135
        %v1138 = vld [vmem:[%s12] sm:$0x1]
        %v1140 = vlaneseq
        %v1141 = vshrl.u32 %v1140, 7
        %v1142 = vsub.s32 0, %v1141
        %v1143 = vrot.slane %v1138, %v1142
        %v1145 = vadd.f32 %v1137, %v1143
        %v1146 = vpack.c.bf16 %v1145, %v1145
        %v1147 = vld [vmem:[%s13] sm:$0xf]
        %v1148 = vld [vmem:[%s13 + $0x4] sm:$0xf]
        %v1149 = vld [vmem:[%s13 + $0x8] sm:$0xf]
        %v1150 = vld [vmem:[%s13 + $0xc] sm:$0xf]
        %v1151 = vld [vmem:[%s14] sm:$0x1]
        %v1153 = vlaneseq
        %v1154 = vshrl.u32 %v1153, 7
        %v1155 = vsub.s32 0, %v1154
        %v1156 = vrot.slane %v1151, %v1155
        %v1162 = vunpack.c.l.b16 %v1147
        %v1163 = vunpack.c.l.b16 %v1148
        %v1164 = vunpack.c.l.b16 %v1149
        %v1165 = vunpack.c.l.b16 %v1150
        %v1166 = vpack.c.b16 %v1163, %v1162
        %v1167 = vpack.c.b16 %v1165, %v1164
        %v1171 = vsel %vm724, %v1146, 0
        %1173 = vmatprep.subr.bf16.mxu0 0
        %1174 = vmatpush1.bf16.msra.mxu0 %v1166
        %1175 = vmatprep.subr.bf16.mxu0 0
        %1176 = vmatpush1.bf16.msra.mxu0 %v1167
        %1177 = vmatprep.subr.bf16.mxu0 0
        %1178 = vmatpush1.bf16.msra.mxu0 0
        %1179 = vmatprep.subr.bf16.mxu0 0
        %1180 = vmatpush1.bf16.msra.mxu0 0
        %1181 = vmatprep.subr.bf16.mxu0 0
        %1182 = vmatpush1.bf16.msra.mxu0 0
        %1183 = vmatprep.subr.bf16.mxu0 0
        %1184 = vmatpush1.bf16.msra.mxu0 0
        %1185 = vmatprep.subr.bf16.mxu0 0
        %1186 = vmatpush1.bf16.msra.mxu0 0
        %1187 = vmatprep.subr.bf16.mxu0 0
        %1188 = vmatpush1.bf16.msra.mxu0 0
        %1189 = vmatprep.subr.bf16.mxu0 0
        %1190 = vmatpush1.bf16.msra.mxu0 0
        %1191 = vmatprep.subr.bf16.mxu0 0
        %1192 = vmatpush1.bf16.msra.mxu0 0
        %1193 = vmatprep.subr.bf16.mxu0 0
        %1194 = vmatpush1.bf16.msra.mxu0 0
        %1195 = vmatprep.subr.bf16.mxu0 0
        %1196 = vmatpush1.bf16.msra.mxu0 0
        %1197 = vmatprep.subr.bf16.mxu0 0
        %1198 = vmatpush1.bf16.msra.mxu0 0
        %1199 = vmatprep.subr.bf16.mxu0 0
        %1200 = vmatpush1.bf16.msra.mxu0 0
        %1201 = vmatprep.subr.bf16.mxu0 0
        %1202 = vmatpush1.bf16.msra.mxu0 0
        %1203 = vmatprep.subr.bf16.mxu0 0
        %1204 = vmatpush1.bf16.msra.mxu0 0
        %1205 = vmatprep.mubr.bf16.mxu0 0
        %1206 = vmatmul.mubr.bf16.gmra.mrb[0].mxu0 %v1171
        %v1207 = vpop.f32.mrb[0].mxu0
        %v1208 = vadd.f32 %v1156, %v1207
        %v1209 = vpop.f32.mrb[0].mxu0
        %v1210 = vpop.f32.mrb[0].mxu0
        %v1211 = vpop.f32.mrb[0].mxu0
        %1212 = vdwg.mxu0
        %v1213 = vmax.f32 %v1208, 0.0
        %v1214 = vpack.c.bf16 %v1213, %v1213
        %v1215 = vld [vmem:[%s15] sm:$0xf]
        %v1216 = vld [vmem:[%s15 + $0x4] sm:$0xf]
        %v1217 = vld [vmem:[%s15 + $0x8] sm:$0xf]
        %v1218 = vld [vmem:[%s15 + $0xc] sm:$0xf]
        %v1219 = vld [vmem:[%s15 + $0x10] sm:$0xf]
        %v1220 = vld [vmem:[%s15 + $0x14] sm:$0xf]
        %v1221 = vld [vmem:[%s15 + $0x18] sm:$0xf]
        %v1222 = vld [vmem:[%s15 + $0x1c] sm:$0xf]
        %v1223 = vld [vmem:[%s16] sm:$0x1]
        %v1225 = vlaneseq
        %v1226 = vshrl.u32 %v1225, 7
        %v1227 = vsub.s32 0, %v1226
        %v1228 = vrot.slane %v1223, %v1227
        %v1238 = vunpack.c.l.b16 %v1215
        %v1239 = vunpack.c.l.b16 %v1216
        %v1240 = vunpack.c.l.b16 %v1217
        %v1241 = vunpack.c.l.b16 %v1218
        %v1242 = vunpack.c.l.b16 %v1219
        %v1243 = vunpack.c.l.b16 %v1220
        %v1244 = vunpack.c.l.b16 %v1221
        %v1245 = vunpack.c.l.b16 %v1222
        %v1246 = vpack.c.b16 %v1239, %v1238
        %v1247 = vpack.c.b16 %v1241, %v1240
        %v1248 = vpack.c.b16 %v1243, %v1242
        %v1249 = vpack.c.b16 %v1245, %v1244
        %vm1254 = vcmask 523264
        %v1256 = vsel %vm1254, %v1214, 0
        %1258 = vmatprep.subr.bf16.mxu0 0
        %1259 = vmatpush1.bf16.msra.mxu0 %v1246
        %1260 = vmatprep.subr.bf16.mxu0 0
        %1261 = vmatpush1.bf16.msra.mxu0 %v1247
        %1262 = vmatprep.subr.bf16.mxu0 0
        %1263 = vmatpush1.bf16.msra.mxu0 %v1248
        %1264 = vmatprep.subr.bf16.mxu0 0
        %1265 = vmatpush1.bf16.msra.mxu0 %v1249
        %1266 = vmatprep.subr.bf16.mxu0 0
        %1267 = vmatpush1.bf16.msra.mxu0 0
        %1268 = vmatprep.subr.bf16.mxu0 0
        %1269 = vmatpush1.bf16.msra.mxu0 0
        %1270 = vmatprep.subr.bf16.mxu0 0
        %1271 = vmatpush1.bf16.msra.mxu0 0
        %1272 = vmatprep.subr.bf16.mxu0 0
        %1273 = vmatpush1.bf16.msra.mxu0 0
        %1274 = vmatprep.subr.bf16.mxu0 0
        %1275 = vmatpush1.bf16.msra.mxu0 0
        %1276 = vmatprep.subr.bf16.mxu0 0
        %1277 = vmatpush1.bf16.msra.mxu0 0
        %1278 = vmatprep.subr.bf16.mxu0 0
        %1279 = vmatpush1.bf16.msra.mxu0 0
        %1280 = vmatprep.subr.bf16.mxu0 0
        %1281 = vmatpush1.bf16.msra.mxu0 0
        %1282 = vmatprep.subr.bf16.mxu0 0
        %1283 = vmatpush1.bf16.msra.mxu0 0
        %1284 = vmatprep.subr.bf16.mxu0 0
        %1285 = vmatpush1.bf16.msra.mxu0 0
        %1286 = vmatprep.subr.bf16.mxu0 0
        %1287 = vmatpush1.bf16.msra.mxu0 0
        %1288 = vmatprep.subr.bf16.mxu0 0
        %1289 = vmatpush1.bf16.msra.mxu0 0
        %1290 = vmatprep.mubr.bf16.mxu0 0
        %1291 = vmatmul.mubr.bf16.gmra.mrb[0].mxu0 %v1256
        %v1292 = vpop.f32.mrb[0].mxu0
        %v1293 = vadd.f32 %v1228, %v1292
        %v1294 = vpop.f32.mrb[0].mxu0
        %v1295 = vpop.f32.mrb[0].mxu0
        %v1296 = vpop.f32.mrb[0].mxu0
        %1297 = vdwg.mxu0
        %v1298 = vadd.f32 %v1293, %v1145
        %v1299 = vsel %vm724, %v1298, 0.0
        %1300 = vadd.xlane.f32.xlu0 %v1299
        %v1301 = vpop.xlane.xlu0 %1300
        %v1302 = vmul.f32 %v1301, %v1119
        %v1303 = vsub.f32 %v1298, %v1302
        %v1304 = vmul.f32 %v1303, %v1303
        %v1305 = vsel %vm724, %v1304, 0.0
        %1306 = vadd.xlane.f32.xlu0 %v1305
        %v1307 = vpop.xlane.xlu0 %1306
        %v1308 = vmul.f32 %v1307, %v1119
        %v1309 = vadd.f32 %v1308, 1e-05
        %v1310 = vrsqrt.pop %v1309
        %v1311 = vmul.f32 %v1303, %v1310
        %v1312 = vld [vmem:[%s17] sm:$0x1]
        %v1314 = vlaneseq
        %v1315 = vshrl.u32 %v1314, 7
        %v1316 = vsub.s32 0, %v1315
        %v1317 = vrot.slane %v1312, %v1316
        %v1319 = vmul.f32 %v1311, %v1317
        %v1320 = vld [vmem:[%s18] sm:$0x1]
        %v1322 = vlaneseq
        %v1323 = vshrl.u32 %v1322, 7
        %v1324 = vsub.s32 0, %v1323
        %v1325 = vrot.slane %v1320, %v1324
        %v1327 = vadd.f32 %v1319, %v1325
        %v1328 = vpack.c.bf16 %v1327, %v1327
        %vm1329 = vcmask 257024
        %1330 = vst.msk [vmem:[%s713] sm:$0xf] %vm1329, %v1328
        %p1331 = scmp.lt.s32.totalorder %s39, 1
        %s1332 = scalar_select %p1331, %s39, 1
        %p1333 = scmp.lt.s32.totalorder %s40, 0
        %s1334 = scalar_select %p1333, %s40, 0
        %s1335 = sadd.s32 %s1334, %s1332
        %s1336 = smul.addr %s1335, 4
        %s1337 = scalar_lea.vmem %s19, %s1336
        %s1338 = sand.u32 %s503, 1
        %s1339 = scalar_lea.sflag [#allocation4], %s1338
        %s1340 = sand.u32 %s503, 1
        %s1341 = smul.addr %s1340, 16
        %s1342 = scalar_lea.vmem [#allocation3], %s1341
        // Predicated region
        $region104: #{seq2seq_forward.12} parent=95 // pred_check
          %p1343 = pneg %p485
        $region105: #{seq2seq_forward.12} parent=95 // pred_check_branch
          %1345 = sbr.rel (%p1343) target = $region107
        $region106: #{seq2seq_forward.12} parent=95 // pred_region
          _
        $region107: #{seq2seq_forward.12} parent=95 // pred_fallthru
          _
        // Predicated region
        $region108: #{seq2seq_forward.12} parent=95 // pred_check
          %p1346 = pneg %p513
        $region109: #{seq2seq_forward.12} parent=95 // pred_check_branch
          %1348 = sbr.rel (%p1346) target = $region111
        $region110: #{seq2seq_forward.12} parent=95 // pred_region
          %s1350 = ssub.s32 256, 256
          %1351 = vsyncadd %s1339, %s1350
          %s1352 = smul.addr %s39, 4
          %s1353 = sadd.s32 %s40, %s1352
          %s1354 = smul.addr %s1353, 64
          %s1355 = scalar_lea.hbm %s20, %s1354
          %s1356 = sshll.u32 %s1342, 4
          %s1357 = int_to_ptr.vmem [resolvable:$true] %s1356
          %1362 = dma.vmem_to_hbm [thread:$0]  %s1357, 256, %s1355, %s1339, 64, 64, 4
        $region111: #{seq2seq_forward.12} parent=95 // pred_fallthru
          _
      $region96: #{seq2seq_forward.12} parent=5 // pred_fallthru
        _
      %p1363 = scmp.le.s32.totalorder 2, %s30
      // Predicated region
      $region112: #{seq2seq_forward.12} parent=5 // pred_check
        %p1364 = pneg %p1363
      $region113: #{seq2seq_forward.12} parent=5 // pred_check_branch
        %1366 = sbr.rel (%p1364) target = $region115
      $region114: #{seq2seq_forward.12} parent=5 // pred_region
        %s1367 = ssub.s32 %s30, 2
        // Predicated region
        $region116: #{seq2seq_forward.12} parent=114 // pred_check
          %p1368 = pneg %p491
        $region117: #{seq2seq_forward.12} parent=114 // pred_check_branch
          %1370 = sbr.rel (%p1368) target = $region119
        $region118: #{seq2seq_forward.12} parent=114 // pred_region
          %p1371 = scmp.lt.s32.totalorder %s41, 1
          %s1372 = scalar_select %p1371, %s41, 1
          %p1373 = scmp.lt.s32.totalorder %s42, 0
          %s1374 = scalar_select %p1373, %s42, 0
          %s1375 = sadd.s32 %s1374, %s1372
          %s1376 = smul.addr %s1375, 4
          %s1377 = scalar_lea.vmem %s19, %s1376
        $region119: #{seq2seq_forward.12} parent=114 // pred_fallthru
          _
        // Predicated region
        $region120: #{seq2seq_forward.12} parent=114 // pred_check
          %p1378 = pneg %p519
        $region121: #{seq2seq_forward.12} parent=114 // pred_check_branch
          %1380 = sbr.rel (%p1378) target = $region123
        $region122: #{seq2seq_forward.12} parent=114 // pred_region
          %s1381 = sand.u32 %s504, 1
          %s1382 = scalar_lea.sflag [#allocation4], %s1381
          %s1383 = sand.u32 %s504, 1
          %s1384 = smul.addr %s1383, 16
          %s1385 = scalar_lea.vmem [#allocation3], %s1384
          %1386 = dma.done %s1382, 256
        $region123: #{seq2seq_forward.12} parent=114 // pred_fallthru
          _
      $region115: #{seq2seq_forward.12} parent=5 // pred_fallthru
        _
    $region6: #{seq2seq_forward.12} parent=1 // loop_footer
      %s34 = sadd.s32 1, %s30
    $region7: #{seq2seq_forward.12} parent=1 // loop_footer_branch
      %29 = sbr.rel target = $region3
    $region8: #{seq2seq_forward.12} parent=1 // loop_exit
      _
    %1387 = vsyncpa [#allocation4], 1
    %s1388 = scalar_lea.sflag [#allocation4], 1
    %1389 = vsyncpa %s1388, 1

// kernel: seq2seq_forward.7
$region0: #{seq2seq_forward.7}
  #allocation0 [shape = 'u32[]', space=smem, size = 0x4, offset = 0x4, fixed_abs, tag = 'smem constant byte address 0x4 - core index']
  #allocation1 [shape = 'u32[144,128]{1,0:T(1,128)}', space=vmem, size = 0x12000, scoped, tag = 'internal scratch']
  #allocation2 [shape = 'f32[8,32]{1,0:T(8,128)}', space=vmem, size = 0x1000, scoped, tag = 'scratch operand']
  %s0 = inlined_call_operand.vmem [shape: bf16[2,8,32], index: 0, kind: input, shape index: {}]
  %s1 = inlined_call_operand.vmem [shape: f32[2,8,1], index: 1, kind: input, shape index: {}]
  %s2 = inlined_call_operand.vmem [shape: bf16[4,32,8], index: 2, kind: input, shape index: {}]
  %s3 = inlined_call_operand.vmem [shape: f32[4,1,8], index: 3, kind: input, shape index: {}]
  %s4 = inlined_call_operand.vmem [shape: bf16[4,32,8], index: 4, kind: input, shape index: {}]
  %s5 = inlined_call_operand.vmem [shape: f32[4,1,8], index: 5, kind: input, shape index: {}]
  %s6 = inlined_call_operand.vmem [shape: bf16[4,32,8], index: 6, kind: input, shape index: {}]
  %s7 = inlined_call_operand.vmem [shape: f32[4,1,8], index: 7, kind: input, shape index: {}]
  %s8 = inlined_call_operand.vmem [shape: bf16[4,8,32], index: 8, kind: input, shape index: {}]
  %s9 = inlined_call_operand.vmem [shape: f32[1,32], index: 9, kind: input, shape index: {}]
  %s10 = inlined_call_operand.vmem [shape: f32[1,32], index: 10, kind: input, shape index: {}]
  %s11 = inlined_call_operand.vmem [shape: f32[1,32], index: 11, kind: input, shape index: {}]
  %s12 = inlined_call_operand.vmem [shape: bf16[32,64], index: 12, kind: input, shape index: {}]
  %s13 = inlined_call_operand.vmem [shape: f32[1,64], index: 13, kind: input, shape index: {}]
  %s14 = inlined_call_operand.vmem [shape: bf16[64,32], index: 14, kind: input, shape index: {}]
  %s15 = inlined_call_operand.vmem [shape: f32[1,32], index: 15, kind: input, shape index: {}]
  %s16 = inlined_call_operand.vmem [shape: f32[1,32], index: 16, kind: input, shape index: {}]
  %s17 = inlined_call_operand.vmem [shape: f32[1,32], index: 17, kind: input, shape index: {}]
  %s18 = inlined_call_operand.vmem [shape: bf16[2,8,32], index: 18, kind: output, shape index: {}]
  %s19 = sld [smem:[#allocation0]]
  $region112: #{seq2seq_forward.7} parent=0
    _
  %s21 = ssub.s32 1, %s19
  %s22 = scalar_select 0, %s21, %s19
  loop: start=0, step=1, limit=4
  $region2: #{seq2seq_forward.7} parent=0 // loop_pre_header
    _
  $region3: #{seq2seq_forward.7} parent=0 // loop_header
    %s24 = sphi 0, %s28
    %p25 = scmp.ge.s32.totalorder %s24, 4
    %s31 = sphi 0, %s43
    %s32 = sphi 0, %s39
    %s33 = sphi 0, %s31
    %s34 = sphi 0, %s32
    %s35 = sphi 0, %s33
    %s36 = sphi 0, %s34
    %s46 = sphi 0, %s48
    %s49 = sphi 0, %s46
    %s50 = sphi 0, %s49
    %s66 = sphi 0, %s50
    %s74 = sphi 0, %s76
    %s77 = sphi 0, %s74
    %s78 = sphi 0, %s77
    %s94 = sphi 0, %s78
    %s98 = sphi 0, %s98
    %s100 = sphi 0, %s98
    %s101 = sphi 0, %s100
    %s115 = sphi 0, %s101
    %s119 = sphi 0, %s119
    %s121 = sphi 0, %s119
    %s122 = sphi 0, %s121
    %s136 = sphi 0, %s122
    %s140 = sphi 0, %s140
    %s142 = sphi 0, %s140
    %s143 = sphi 0, %s142
    %s157 = sphi 0, %s143
    %s161 = sphi 0, %s161
    %s163 = sphi 0, %s161
    %s164 = sphi 0, %s163
    %s178 = sphi 0, %s164
    %s182 = sphi 0, %s182
    %s184 = sphi 0, %s182
    %s185 = sphi 0, %s184
    %s199 = sphi 0, %s185
    %s203 = sphi 0, %s203
    %s205 = sphi 0, %s203
    %s206 = sphi 0, %s205
    %s220 = sphi 0, %s206
    %s224 = sphi 0, %s224
    %s226 = sphi 0, %s224
    %s227 = sphi 0, %s226
    %s241 = sphi 0, %s227
    %s245 = sphi 0, %s245
    %s247 = sphi 0, %s245
    %s248 = sphi 0, %s247
    %s262 = sphi 0, %s248
    %s266 = sphi 0, %s266
    %s268 = sphi 0, %s266
    %s269 = sphi 0, %s268
    %s283 = sphi 0, %s269
    %s287 = sphi 0, %s287
    %s289 = sphi 0, %s287
    %s290 = sphi 0, %s289
    %s304 = sphi 0, %s290
    %s308 = sphi 0, %s308
    %s310 = sphi 0, %s308
    %s311 = sphi 0, %s310
    %s325 = sphi 0, %s311
    %s329 = sphi 0, %s329
    %s331 = sphi 0, %s329
    %s332 = sphi 0, %s331
    %s346 = sphi 0, %s332
    %s350 = sphi 0, %s350
    %s352 = sphi 0, %s350
    %s353 = sphi 0, %s352
    %s367 = sphi 0, %s353
    %s371 = sphi 0, %s371
    %s373 = sphi 0, %s371
    %s374 = sphi 0, %s373
    %s388 = sphi 0, %s374
    %s392 = sphi 0, %s392
    %s394 = sphi 0, %s392
    %s395 = sphi 0, %s394
    %s409 = sphi 0, %s395
    %s413 = sphi 0, %s413
    %s415 = sphi 0, %s413
    %s416 = sphi 0, %s415
    %s430 = sphi 0, %s416
    %s438 = sphi 0, %s440
    %s441 = sphi 0, %s438
    %s442 = sphi 0, %s441
    %s458 = sphi 0, %s442
  $region4: #{seq2seq_forward.7} parent=0 // loop_header_branch
    %27 = sbr.rel (%p25) target = $region8
  $region5: #{seq2seq_forward.7} parent=0 // loop_body
    %s29 = ssub.s32 %s24, 1
    %s30 = ssub.s32 %s24, 2
    %s37 = sadd.s32 1, %s32
    %p38 = scmp.ge.s32.totalorder %s37, 1
    %s39 = scalar_select %p38, 0, %s37
    %s40 = sadd.s32 1, %s31
    %s41 = scalar_select %p38, %s40, %s31
    %p42 = scmp.ge.s32.totalorder %s41, 2
    %s43 = scalar_select %p42, 0, %s41
    %s44 = ssub.s32 %s31, %s43
    %p45 = scmp.eq.s32.totalorder %s44, 0
    %s47 = sadd.s32 %s46, 1
    %s48 = scalar_select %p45, %s46, %s47
    %p51 = pneg %p45
    %p52 = scmp.eq.s32.totalorder %s24, 1
    %p53 = por %p51, %p52
    %p54 = scmp.ne.s32.totalorder %s46, %s49
    %p55 = scmp.eq.s32.totalorder %s24, 0
    %p56 = por %p54, %p55
    %p57 = scmp.ne.s32.totalorder %s46, %s49
    %p58 = scmp.eq.s32.totalorder %s29, 1
    %p59 = por %p57, %p58
    %p60 = scmp.ne.s32.totalorder %s49, %s50
    %p61 = scmp.eq.s32.totalorder %s29, 0
    %p62 = por %p60, %p61
    %p63 = scmp.ne.s32.totalorder %s49, %s50
    %p64 = scmp.eq.s32.totalorder %s30, 1
    %p65 = por %p63, %p64
    %p67 = scmp.ne.s32.totalorder %s50, %s66
    %p68 = scmp.eq.s32.totalorder %s30, 0
    %p69 = por %p67, %p68
    %s70 = ssub.s32 %s31, %s43
    %s71 = ssub.s32 %s32, %s39
    %s72 = sor.u32 %s70, %s71
    %p73 = scmp.eq.s32.totalorder %s72, 0
    %s75 = sadd.s32 %s74, 1
    %s76 = scalar_select %p73, %s74, %s75
    %p79 = pneg %p73
    %p80 = scmp.eq.s32.totalorder %s24, 1
    %p81 = por %p79, %p80
    %p82 = scmp.ne.s32.totalorder %s74, %s77
    %p83 = scmp.eq.s32.totalorder %s24, 0
    %p84 = por %p82, %p83
    %p85 = scmp.ne.s32.totalorder %s74, %s77
    %p86 = scmp.eq.s32.totalorder %s29, 1
    %p87 = por %p85, %p86
    %p88 = scmp.ne.s32.totalorder %s77, %s78
    %p89 = scmp.eq.s32.totalorder %s29, 0
    %p90 = por %p88, %p89
    %p91 = scmp.ne.s32.totalorder %s77, %s78
    %p92 = scmp.eq.s32.totalorder %s30, 1
    %p93 = por %p91, %p92
    %p95 = scmp.ne.s32.totalorder %s78, %s94
    %p96 = scmp.eq.s32.totalorder %s30, 0
    %p97 = por %p95, %p96
    %s99 = sadd.s32 %s98, 1
    %p102 = scmp.eq.s32.totalorder %s24, 1
    %p103 = scmp.ne.s32.totalorder %s98, %s100
    %p104 = scmp.eq.s32.totalorder %s24, 0
    %p105 = por %p103, %p104
    %p106 = scmp.ne.s32.totalorder %s98, %s100
    %p107 = scmp.eq.s32.totalorder %s29, 1
    %p108 = por %p106, %p107
    %p109 = scmp.ne.s32.totalorder %s100, %s101
    %p110 = scmp.eq.s32.totalorder %s29, 0
    %p111 = por %p109, %p110
    %p112 = scmp.ne.s32.totalorder %s100, %s101
    %p113 = scmp.eq.s32.totalorder %s30, 1
    %p114 = por %p112, %p113
    %p116 = scmp.ne.s32.totalorder %s101, %s115
    %p117 = scmp.eq.s32.totalorder %s30, 0
    %p118 = por %p116, %p117
    %s120 = sadd.s32 %s119, 1
    %p123 = scmp.eq.s32.totalorder %s24, 1
    %p124 = scmp.ne.s32.totalorder %s119, %s121
    %p125 = scmp.eq.s32.totalorder %s24, 0
    %p126 = por %p124, %p125
    %p127 = scmp.ne.s32.totalorder %s119, %s121
    %p128 = scmp.eq.s32.totalorder %s29, 1
    %p129 = por %p127, %p128
    %p130 = scmp.ne.s32.totalorder %s121, %s122
    %p131 = scmp.eq.s32.totalorder %s29, 0
    %p132 = por %p130, %p131
    %p133 = scmp.ne.s32.totalorder %s121, %s122
    %p134 = scmp.eq.s32.totalorder %s30, 1
    %p135 = por %p133, %p134
    %p137 = scmp.ne.s32.totalorder %s122, %s136
    %p138 = scmp.eq.s32.totalorder %s30, 0
    %p139 = por %p137, %p138
    %s141 = sadd.s32 %s140, 1
    %p144 = scmp.eq.s32.totalorder %s24, 1
    %p145 = scmp.ne.s32.totalorder %s140, %s142
    %p146 = scmp.eq.s32.totalorder %s24, 0
    %p147 = por %p145, %p146
    %p148 = scmp.ne.s32.totalorder %s140, %s142
    %p149 = scmp.eq.s32.totalorder %s29, 1
    %p150 = por %p148, %p149
    %p151 = scmp.ne.s32.totalorder %s142, %s143
    %p152 = scmp.eq.s32.totalorder %s29, 0
    %p153 = por %p151, %p152
    %p154 = scmp.ne.s32.totalorder %s142, %s143
    %p155 = scmp.eq.s32.totalorder %s30, 1
    %p156 = por %p154, %p155
    %p158 = scmp.ne.s32.totalorder %s143, %s157
    %p159 = scmp.eq.s32.totalorder %s30, 0
    %p160 = por %p158, %p159
    %s162 = sadd.s32 %s161, 1
    %p165 = scmp.eq.s32.totalorder %s24, 1
    %p166 = scmp.ne.s32.totalorder %s161, %s163
    %p167 = scmp.eq.s32.totalorder %s24, 0
    %p168 = por %p166, %p167
    %p169 = scmp.ne.s32.totalorder %s161, %s163
    %p170 = scmp.eq.s32.totalorder %s29, 1
    %p171 = por %p169, %p170
    %p172 = scmp.ne.s32.totalorder %s163, %s164
    %p173 = scmp.eq.s32.totalorder %s29, 0
    %p174 = por %p172, %p173
    %p175 = scmp.ne.s32.totalorder %s163, %s164
    %p176 = scmp.eq.s32.totalorder %s30, 1
    %p177 = por %p175, %p176
    %p179 = scmp.ne.s32.totalorder %s164, %s178
    %p180 = scmp.eq.s32.totalorder %s30, 0
    %p181 = por %p179, %p180
    %s183 = sadd.s32 %s182, 1
    %p186 = scmp.eq.s32.totalorder %s24, 1
    %p187 = scmp.ne.s32.totalorder %s182, %s184
    %p188 = scmp.eq.s32.totalorder %s24, 0
    %p189 = por %p187, %p188
    %p190 = scmp.ne.s32.totalorder %s182, %s184
    %p191 = scmp.eq.s32.totalorder %s29, 1
    %p192 = por %p190, %p191
    %p193 = scmp.ne.s32.totalorder %s184, %s185
    %p194 = scmp.eq.s32.totalorder %s29, 0
    %p195 = por %p193, %p194
    %p196 = scmp.ne.s32.totalorder %s184, %s185
    %p197 = scmp.eq.s32.totalorder %s30, 1
    %p198 = por %p196, %p197
    %p200 = scmp.ne.s32.totalorder %s185, %s199
    %p201 = scmp.eq.s32.totalorder %s30, 0
    %p202 = por %p200, %p201
    %s204 = sadd.s32 %s203, 1
    %p207 = scmp.eq.s32.totalorder %s24, 1
    %p208 = scmp.ne.s32.totalorder %s203, %s205
    %p209 = scmp.eq.s32.totalorder %s24, 0
    %p210 = por %p208, %p209
    %p211 = scmp.ne.s32.totalorder %s203, %s205
    %p212 = scmp.eq.s32.totalorder %s29, 1
    %p213 = por %p211, %p212
    %p214 = scmp.ne.s32.totalorder %s205, %s206
    %p215 = scmp.eq.s32.totalorder %s29, 0
    %p216 = por %p214, %p215
    %p217 = scmp.ne.s32.totalorder %s205, %s206
    %p218 = scmp.eq.s32.totalorder %s30, 1
    %p219 = por %p217, %p218
    %p221 = scmp.ne.s32.totalorder %s206, %s220
    %p222 = scmp.eq.s32.totalorder %s30, 0
    %p223 = por %p221, %p222
    %s225 = sadd.s32 %s224, 1
    %p228 = scmp.eq.s32.totalorder %s24, 1
    %p229 = scmp.ne.s32.totalorder %s224, %s226
    %p230 = scmp.eq.s32.totalorder %s24, 0
    %p231 = por %p229, %p230
    %p232 = scmp.ne.s32.totalorder %s224, %s226
    %p233 = scmp.eq.s32.totalorder %s29, 1
    %p234 = por %p232, %p233
    %p235 = scmp.ne.s32.totalorder %s226, %s227
    %p236 = scmp.eq.s32.totalorder %s29, 0
    %p237 = por %p235, %p236
    %p238 = scmp.ne.s32.totalorder %s226, %s227
    %p239 = scmp.eq.s32.totalorder %s30, 1
    %p240 = por %p238, %p239
    %p242 = scmp.ne.s32.totalorder %s227, %s241
    %p243 = scmp.eq.s32.totalorder %s30, 0
    %p244 = por %p242, %p243
    %s246 = sadd.s32 %s245, 1
    %p249 = scmp.eq.s32.totalorder %s24, 1
    %p250 = scmp.ne.s32.totalorder %s245, %s247
    %p251 = scmp.eq.s32.totalorder %s24, 0
    %p252 = por %p250, %p251
    %p253 = scmp.ne.s32.totalorder %s245, %s247
    %p254 = scmp.eq.s32.totalorder %s29, 1
    %p255 = por %p253, %p254
    %p256 = scmp.ne.s32.totalorder %s247, %s248
    %p257 = scmp.eq.s32.totalorder %s29, 0
    %p258 = por %p256, %p257
    %p259 = scmp.ne.s32.totalorder %s247, %s248
    %p260 = scmp.eq.s32.totalorder %s30, 1
    %p261 = por %p259, %p260
    %p263 = scmp.ne.s32.totalorder %s248, %s262
    %p264 = scmp.eq.s32.totalorder %s30, 0
    %p265 = por %p263, %p264
    %s267 = sadd.s32 %s266, 1
    %p270 = scmp.eq.s32.totalorder %s24, 1
    %p271 = scmp.ne.s32.totalorder %s266, %s268
    %p272 = scmp.eq.s32.totalorder %s24, 0
    %p273 = por %p271, %p272
    %p274 = scmp.ne.s32.totalorder %s266, %s268
    %p275 = scmp.eq.s32.totalorder %s29, 1
    %p276 = por %p274, %p275
    %p277 = scmp.ne.s32.totalorder %s268, %s269
    %p278 = scmp.eq.s32.totalorder %s29, 0
    %p279 = por %p277, %p278
    %p280 = scmp.ne.s32.totalorder %s268, %s269
    %p281 = scmp.eq.s32.totalorder %s30, 1
    %p282 = por %p280, %p281
    %p284 = scmp.ne.s32.totalorder %s269, %s283
    %p285 = scmp.eq.s32.totalorder %s30, 0
    %p286 = por %p284, %p285
    %s288 = sadd.s32 %s287, 1
    %p291 = scmp.eq.s32.totalorder %s24, 1
    %p292 = scmp.ne.s32.totalorder %s287, %s289
    %p293 = scmp.eq.s32.totalorder %s24, 0
    %p294 = por %p292, %p293
    %p295 = scmp.ne.s32.totalorder %s287, %s289
    %p296 = scmp.eq.s32.totalorder %s29, 1
    %p297 = por %p295, %p296
    %p298 = scmp.ne.s32.totalorder %s289, %s290
    %p299 = scmp.eq.s32.totalorder %s29, 0
    %p300 = por %p298, %p299
    %p301 = scmp.ne.s32.totalorder %s289, %s290
    %p302 = scmp.eq.s32.totalorder %s30, 1
    %p303 = por %p301, %p302
    %p305 = scmp.ne.s32.totalorder %s290, %s304
    %p306 = scmp.eq.s32.totalorder %s30, 0
    %p307 = por %p305, %p306
    %s309 = sadd.s32 %s308, 1
    %p312 = scmp.eq.s32.totalorder %s24, 1
    %p313 = scmp.ne.s32.totalorder %s308, %s310
    %p314 = scmp.eq.s32.totalorder %s24, 0
    %p315 = por %p313, %p314
    %p316 = scmp.ne.s32.totalorder %s308, %s310
    %p317 = scmp.eq.s32.totalorder %s29, 1
    %p318 = por %p316, %p317
    %p319 = scmp.ne.s32.totalorder %s310, %s311
    %p320 = scmp.eq.s32.totalorder %s29, 0
    %p321 = por %p319, %p320
    %p322 = scmp.ne.s32.totalorder %s310, %s311
    %p323 = scmp.eq.s32.totalorder %s30, 1
    %p324 = por %p322, %p323
    %p326 = scmp.ne.s32.totalorder %s311, %s325
    %p327 = scmp.eq.s32.totalorder %s30, 0
    %p328 = por %p326, %p327
    %s330 = sadd.s32 %s329, 1
    %p333 = scmp.eq.s32.totalorder %s24, 1
    %p334 = scmp.ne.s32.totalorder %s329, %s331
    %p335 = scmp.eq.s32.totalorder %s24, 0
    %p336 = por %p334, %p335
    %p337 = scmp.ne.s32.totalorder %s329, %s331
    %p338 = scmp.eq.s32.totalorder %s29, 1
    %p339 = por %p337, %p338
    %p340 = scmp.ne.s32.totalorder %s331, %s332
    %p341 = scmp.eq.s32.totalorder %s29, 0
    %p342 = por %p340, %p341
    %p343 = scmp.ne.s32.totalorder %s331, %s332
    %p344 = scmp.eq.s32.totalorder %s30, 1
    %p345 = por %p343, %p344
    %p347 = scmp.ne.s32.totalorder %s332, %s346
    %p348 = scmp.eq.s32.totalorder %s30, 0
    %p349 = por %p347, %p348
    %s351 = sadd.s32 %s350, 1
    %p354 = scmp.eq.s32.totalorder %s24, 1
    %p355 = scmp.ne.s32.totalorder %s350, %s352
    %p356 = scmp.eq.s32.totalorder %s24, 0
    %p357 = por %p355, %p356
    %p358 = scmp.ne.s32.totalorder %s350, %s352
    %p359 = scmp.eq.s32.totalorder %s29, 1
    %p360 = por %p358, %p359
    %p361 = scmp.ne.s32.totalorder %s352, %s353
    %p362 = scmp.eq.s32.totalorder %s29, 0
    %p363 = por %p361, %p362
    %p364 = scmp.ne.s32.totalorder %s352, %s353
    %p365 = scmp.eq.s32.totalorder %s30, 1
    %p366 = por %p364, %p365
    %p368 = scmp.ne.s32.totalorder %s353, %s367
    %p369 = scmp.eq.s32.totalorder %s30, 0
    %p370 = por %p368, %p369
    %s372 = sadd.s32 %s371, 1
    %p375 = scmp.eq.s32.totalorder %s24, 1
    %p376 = scmp.ne.s32.totalorder %s371, %s373
    %p377 = scmp.eq.s32.totalorder %s24, 0
    %p378 = por %p376, %p377
    %p379 = scmp.ne.s32.totalorder %s371, %s373
    %p380 = scmp.eq.s32.totalorder %s29, 1
    %p381 = por %p379, %p380
    %p382 = scmp.ne.s32.totalorder %s373, %s374
    %p383 = scmp.eq.s32.totalorder %s29, 0
    %p384 = por %p382, %p383
    %p385 = scmp.ne.s32.totalorder %s373, %s374
    %p386 = scmp.eq.s32.totalorder %s30, 1
    %p387 = por %p385, %p386
    %p389 = scmp.ne.s32.totalorder %s374, %s388
    %p390 = scmp.eq.s32.totalorder %s30, 0
    %p391 = por %p389, %p390
    %s393 = sadd.s32 %s392, 1
    %p396 = scmp.eq.s32.totalorder %s24, 1
    %p397 = scmp.ne.s32.totalorder %s392, %s394
    %p398 = scmp.eq.s32.totalorder %s24, 0
    %p399 = por %p397, %p398
    %p400 = scmp.ne.s32.totalorder %s392, %s394
    %p401 = scmp.eq.s32.totalorder %s29, 1
    %p402 = por %p400, %p401
    %p403 = scmp.ne.s32.totalorder %s394, %s395
    %p404 = scmp.eq.s32.totalorder %s29, 0
    %p405 = por %p403, %p404
    %p406 = scmp.ne.s32.totalorder %s394, %s395
    %p407 = scmp.eq.s32.totalorder %s30, 1
    %p408 = por %p406, %p407
    %p410 = scmp.ne.s32.totalorder %s395, %s409
    %p411 = scmp.eq.s32.totalorder %s30, 0
    %p412 = por %p410, %p411
    %s414 = sadd.s32 %s413, 1
    %p417 = scmp.eq.s32.totalorder %s24, 1
    %p418 = scmp.ne.s32.totalorder %s413, %s415
    %p419 = scmp.eq.s32.totalorder %s24, 0
    %p420 = por %p418, %p419
    %p421 = scmp.ne.s32.totalorder %s413, %s415
    %p422 = scmp.eq.s32.totalorder %s29, 1
    %p423 = por %p421, %p422
    %p424 = scmp.ne.s32.totalorder %s415, %s416
    %p425 = scmp.eq.s32.totalorder %s29, 0
    %p426 = por %p424, %p425
    %p427 = scmp.ne.s32.totalorder %s415, %s416
    %p428 = scmp.eq.s32.totalorder %s30, 1
    %p429 = por %p427, %p428
    %p431 = scmp.ne.s32.totalorder %s416, %s430
    %p432 = scmp.eq.s32.totalorder %s30, 0
    %p433 = por %p431, %p432
    %s434 = ssub.s32 %s31, %s43
    %s435 = ssub.s32 %s32, %s39
    %s436 = sor.u32 %s434, %s435
    %p437 = scmp.eq.s32.totalorder %s436, 0
    %s439 = sadd.s32 %s438, 1
    %s440 = scalar_select %p437, %s438, %s439
    %p443 = pneg %p437
    %p444 = scmp.eq.s32.totalorder %s24, 1
    %p445 = por %p443, %p444
    %p446 = scmp.ne.s32.totalorder %s438, %s441
    %p447 = scmp.eq.s32.totalorder %s24, 0
    %p448 = por %p446, %p447
    %p449 = scmp.ne.s32.totalorder %s438, %s441
    %p450 = scmp.eq.s32.totalorder %s29, 1
    %p451 = por %p449, %p450
    %p452 = scmp.ne.s32.totalorder %s441, %s442
    %p453 = scmp.eq.s32.totalorder %s29, 0
    %p454 = por %p452, %p453
    %p455 = scmp.ne.s32.totalorder %s441, %s442
    %p456 = scmp.eq.s32.totalorder %s30, 1
    %p457 = por %p455, %p456
    %p459 = scmp.ne.s32.totalorder %s442, %s458
    %p460 = scmp.eq.s32.totalorder %s30, 0
    %p461 = por %p459, %p460
    %p462 = scmp.le.s32.totalorder 1, %s24
    %p463 = scmp.lt.s32.totalorder %s24, 3
    %p464 = pnand %p462, %p463
    %p465 = pneg %p464
    // Predicated region
    $region9: #{seq2seq_forward.7} parent=5 // pred_check
      _
    $region10: #{seq2seq_forward.7} parent=5 // pred_check_branch
      %467 = sbr.rel (%p464) target = $region12
    $region11: #{seq2seq_forward.7} parent=5 // pred_region
      %s468 = ssub.s32 %s24, 1
      // Predicated region
      $region13: #{seq2seq_forward.7} parent=11 // pred_check
        %p469 = pneg %p111
      $region14: #{seq2seq_forward.7} parent=11 // pred_check_branch
        %471 = sbr.rel (%p469) target = $region16
      $region15: #{seq2seq_forward.7} parent=11 // pred_region
        _
      $region16: #{seq2seq_forward.7} parent=11 // pred_fallthru
        _
      // Predicated region
      $region17: #{seq2seq_forward.7} parent=11 // pred_check
        %p472 = pneg %p132
      $region18: #{seq2seq_forward.7} parent=11 // pred_check_branch
        %474 = sbr.rel (%p472) target = $region20
      $region19: #{seq2seq_forward.7} parent=11 // pred_region
        _
      $region20: #{seq2seq_forward.7} parent=11 // pred_fallthru
        _
      // Predicated region
      $region21: #{seq2seq_forward.7} parent=11 // pred_check
        %p475 = pneg %p153
      $region22: #{seq2seq_forward.7} parent=11 // pred_check_branch
        %477 = sbr.rel (%p475) target = $region24
      $region23: #{seq2seq_forward.7} parent=11 // pred_region
        _
      $region24: #{seq2seq_forward.7} parent=11 // pred_fallthru
        _
      // Predicated region
      $region25: #{seq2seq_forward.7} parent=11 // pred_check
        %p478 = pneg %p174
      $region26: #{seq2seq_forward.7} parent=11 // pred_check_branch
        %480 = sbr.rel (%p478) target = $region28
      $region27: #{seq2seq_forward.7} parent=11 // pred_region
        _
      $region28: #{seq2seq_forward.7} parent=11 // pred_fallthru
        _
      // Predicated region
      $region29: #{seq2seq_forward.7} parent=11 // pred_check
        %p481 = pneg %p195
      $region30: #{seq2seq_forward.7} parent=11 // pred_check_branch
        %483 = sbr.rel (%p481) target = $region32
      $region31: #{seq2seq_forward.7} parent=11 // pred_region
        _
      $region32: #{seq2seq_forward.7} parent=11 // pred_fallthru
        _
      // Predicated region
      $region33: #{seq2seq_forward.7} parent=11 // pred_check
        %p484 = pneg %p216
      $region34: #{seq2seq_forward.7} parent=11 // pred_check_branch
        %486 = sbr.rel (%p484) target = $region36
      $region35: #{seq2seq_forward.7} parent=11 // pred_region
        _
      $region36: #{seq2seq_forward.7} parent=11 // pred_fallthru
        _
      // Predicated region
      $region37: #{seq2seq_forward.7} parent=11 // pred_check
        %p487 = pneg %p237
      $region38: #{seq2seq_forward.7} parent=11 // pred_check_branch
        %489 = sbr.rel (%p487) target = $region40
      $region39: #{seq2seq_forward.7} parent=11 // pred_region
        _
      $region40: #{seq2seq_forward.7} parent=11 // pred_fallthru
        _
      // Predicated region
      $region41: #{seq2seq_forward.7} parent=11 // pred_check
        %p490 = pneg %p258
      $region42: #{seq2seq_forward.7} parent=11 // pred_check_branch
        %492 = sbr.rel (%p490) target = $region44
      $region43: #{seq2seq_forward.7} parent=11 // pred_region
        _
      $region44: #{seq2seq_forward.7} parent=11 // pred_fallthru
        _
      // Predicated region
      $region45: #{seq2seq_forward.7} parent=11 // pred_check
        %p493 = pneg %p279
      $region46: #{seq2seq_forward.7} parent=11 // pred_check_branch
        %495 = sbr.rel (%p493) target = $region48
      $region47: #{seq2seq_forward.7} parent=11 // pred_region
        _
      $region48: #{seq2seq_forward.7} parent=11 // pred_fallthru
        _
      // Predicated region
      $region49: #{seq2seq_forward.7} parent=11 // pred_check
        %p496 = pneg %p300
      $region50: #{seq2seq_forward.7} parent=11 // pred_check_branch
        %498 = sbr.rel (%p496) target = $region52
      $region51: #{seq2seq_forward.7} parent=11 // pred_region
        _
      $region52: #{seq2seq_forward.7} parent=11 // pred_fallthru
        _
      // Predicated region
      $region53: #{seq2seq_forward.7} parent=11 // pred_check
        %p499 = pneg %p321
      $region54: #{seq2seq_forward.7} parent=11 // pred_check_branch
        %501 = sbr.rel (%p499) target = $region56
      $region55: #{seq2seq_forward.7} parent=11 // pred_region
        _
      $region56: #{seq2seq_forward.7} parent=11 // pred_fallthru
        _
      // Predicated region
      $region57: #{seq2seq_forward.7} parent=11 // pred_check
        %p502 = pneg %p342
      $region58: #{seq2seq_forward.7} parent=11 // pred_check_branch
        %504 = sbr.rel (%p502) target = $region60
      $region59: #{seq2seq_forward.7} parent=11 // pred_region
        _
      $region60: #{seq2seq_forward.7} parent=11 // pred_fallthru
        _
      // Predicated region
      $region61: #{seq2seq_forward.7} parent=11 // pred_check
        %p505 = pneg %p363
      $region62: #{seq2seq_forward.7} parent=11 // pred_check_branch
        %507 = sbr.rel (%p505) target = $region64
      $region63: #{seq2seq_forward.7} parent=11 // pred_region
        _
      $region64: #{seq2seq_forward.7} parent=11 // pred_fallthru
        _
      // Predicated region
      $region65: #{seq2seq_forward.7} parent=11 // pred_check
        %p508 = pneg %p384
      $region66: #{seq2seq_forward.7} parent=11 // pred_check_branch
        %510 = sbr.rel (%p508) target = $region68
      $region67: #{seq2seq_forward.7} parent=11 // pred_region
        _
      $region68: #{seq2seq_forward.7} parent=11 // pred_fallthru
        _
      // Predicated region
      $region69: #{seq2seq_forward.7} parent=11 // pred_check
        %p511 = pneg %p405
      $region70: #{seq2seq_forward.7} parent=11 // pred_check_branch
        %513 = sbr.rel (%p511) target = $region72
      $region71: #{seq2seq_forward.7} parent=11 // pred_region
        _
      $region72: #{seq2seq_forward.7} parent=11 // pred_fallthru
        _
      // Predicated region
      $region73: #{seq2seq_forward.7} parent=11 // pred_check
        %p514 = pneg %p426
      $region74: #{seq2seq_forward.7} parent=11 // pred_check_branch
        %516 = sbr.rel (%p514) target = $region76
      $region75: #{seq2seq_forward.7} parent=11 // pred_region
        _
      $region76: #{seq2seq_forward.7} parent=11 // pred_fallthru
        _
    $region12: #{seq2seq_forward.7} parent=5 // pred_fallthru
      _
    %p517 = scmp.lt.s32.totalorder %s24, 2
    // Predicated region
    $region77: #{seq2seq_forward.7} parent=5 // pred_check
      %p518 = pneg %p517
    $region78: #{seq2seq_forward.7} parent=5 // pred_check_branch
      %520 = sbr.rel (%p518) target = $region80
    $region79: #{seq2seq_forward.7} parent=5 // pred_region
      // Predicated region
      $region81: #{seq2seq_forward.7} parent=79 // pred_check
        %p521 = pneg %p56
      $region82: #{seq2seq_forward.7} parent=79 // pred_check_branch
        %523 = sbr.rel (%p521) target = $region84
      $region83: #{seq2seq_forward.7} parent=79 // pred_region
        %p524 = scmp.lt.s32.totalorder %s31, 1
        %s525 = scalar_select %p524, %s31, 1
        %s526 = smul.addr %s525, 4
        %s527 = scalar_lea.vmem %s0, %s526
      $region84: #{seq2seq_forward.7} parent=79 // pred_fallthru
        _
      // Predicated region
      $region85: #{seq2seq_forward.7} parent=79 // pred_check
        %p528 = pneg %p84
      $region86: #{seq2seq_forward.7} parent=79 // pred_check_branch
        %530 = sbr.rel (%p528) target = $region88
      $region87: #{seq2seq_forward.7} parent=79 // pred_region
        %p531 = scmp.lt.s32.totalorder %s31, 1
        %s532 = scalar_select %p531, %s31, 1
        %p533 = scmp.lt.s32.totalorder %s32, 0
        %s534 = scalar_select %p533, %s32, 0
        %s535 = sadd.s32 %s534, %s532
        %s536 = smul.addr %s535, 8
        %s537 = scalar_lea.vmem %s1, %s536
      $region88: #{seq2seq_forward.7} parent=79 // pred_fallthru
        _
    $region80: #{seq2seq_forward.7} parent=5 // pred_fallthru
      _
    %p538 = scmp.le.s32.totalorder 1, %s24
    %p539 = scmp.lt.s32.totalorder %s24, 3
    %p540 = pnand %p538, %p539
    %p541 = pneg %p540
    // Predicated region
    $region89: #{seq2seq_forward.7} parent=5 // pred_check
      _
    $region90: #{seq2seq_forward.7} parent=5 // pred_check_branch
      %543 = sbr.rel (%p540) target = $region92
    $region91: #{seq2seq_forward.7} parent=5 // pred_region
      %s544 = ssub.s32 %s24, 1
      %p545 = scmp.lt.s32.totalorder %s33, 1
      %s546 = scalar_select %p545, %s33, 1
      %s547 = smul.addr %s546, 4
      %s548 = scalar_lea.vmem %s0, %s547
      %p549 = pneg %p62
      %p550 = pneg %p59
      %p551 = scmp.lt.s32.totalorder %s33, 1
      %s552 = scalar_select %p551, %s33, 1
      %p553 = scmp.lt.s32.totalorder %s34, 0
      %s554 = scalar_select %p553, %s34, 0
      %s555 = sadd.s32 %s554, %s552
      %s556 = smul.addr %s555, 8
      %s557 = scalar_lea.vmem %s1, %s556
      %p558 = pneg %p90
      %p559 = pneg %p87
      %p560 = pneg %p111
      %p561 = pneg %p108
      %p562 = pneg %p132
      %p563 = pneg %p129
      %p564 = pneg %p153
      %p565 = pneg %p150
      %p566 = pneg %p174
      %p567 = pneg %p171
      %p568 = pneg %p195
      %p569 = pneg %p192
      %p570 = pneg %p216
      %p571 = pneg %p213
      %p572 = pneg %p237
      %p573 = pneg %p234
      %p574 = pneg %p258
      %p575 = pneg %p255
      %p576 = pneg %p279
      %p577 = pneg %p276
      %p578 = pneg %p300
      %p579 = pneg %p297
      %p580 = pneg %p321
      %p581 = pneg %p318
      %p582 = pneg %p342
      %p583 = pneg %p339
      %p584 = pneg %p363
      %p585 = pneg %p360
      %p586 = pneg %p384
      %p587 = pneg %p381
      %p588 = pneg %p405
      %p589 = pneg %p402
      %p590 = pneg %p426
      %p591 = pneg %p423
      %p592 = pneg %p454
      %p593 = pneg %p451
      %p594 = scmp.lt.s32.totalorder %s33, 1
      %s595 = scalar_select %p594, %s33, 1
      %p596 = scmp.lt.s32.totalorder %s34, 0
      %s597 = scalar_select %p596, %s34, 0
      %s598 = sadd.s32 %s597, %s595
      %s599 = smul.addr %s598, 4
      %s600 = scalar_lea.vmem %s18, %s599
      %p601 = scmp.lt.s32.totalorder %s33, 1
      %s602 = scalar_select %p601, %s33, 1
      %s603 = smul.addr %s602, 4
      %s604 = scalar_lea.vmem %s0, %s603
      %p605 = scmp.lt.s32.totalorder %s33, 1
      %s606 = scalar_select %p605, %s33, 1
      %p607 = scmp.lt.s32.totalorder %s34, 0
      %s608 = scalar_select %p607, %s34, 0
      %s609 = sadd.s32 %s608, %s606
      %s610 = smul.addr %s609, 8
      %s611 = scalar_lea.vmem %s1, %s610
      %p612 = scmp.lt.s32.totalorder %s33, 1
      %s613 = scalar_select %p612, %s33, 1
      %p614 = scmp.lt.s32.totalorder %s34, 0
      %s615 = scalar_select %p614, %s34, 0
      %s616 = sadd.s32 %s615, %s613
      %s617 = smul.addr %s616, 4
      %s618 = scalar_lea.vmem %s18, %s617
      %v620 = vld [vmem:[%s604] sm:$0xf]
      %s621 = smul.u32 %s34, 8
      %s622 = sshra.s32 %s621, 3
      %s623 = sand.u32 %s621, 7
      %s624 = smul.addr %s622, 4
      %s625 = scalar_lea.vmem %s604, %s624
      %v626 = vld [vmem:[%s625] sm:$0xf]
      %v627 = vld [vmem:[%s611] sm:$0xff]
      %vm628 = vcmp.gt.f32.partialorder %v627, 0.5
      %v629 = vsel %vm628, 1, 0
      %630 = vset.pattern.permute.xlu0 0
      %631 = vperm.xlu0 %630, %v629
      %v632 = vpop.permute.xlu0 %631
      %vm633 = vcmp.eq.s32.totalorder %v632, 1
      %vm634 = vcmask 261120
      %635 = vst.msk [vmem:[#allocation2] sm:$0xff] %vm634, 0.0
      loop: start=0, step=1, limit=4
      $region93: #{seq2seq_forward.7} parent=91 // loop_pre_header
        _
      $region94: #{seq2seq_forward.7} parent=91 // loop_header
        %s637 = sphi 0, %s641
        %p638 = scmp.ge.s32.totalorder %s637, 4
      $region95: #{seq2seq_forward.7} parent=91 // loop_header_branch
        %640 = sbr.rel (%p638) target = $region99
      $region96: #{seq2seq_forward.7} parent=91 // loop_body
        %s642 = smul.u32 %s637, 4
        %s643 = smul.addr %s642, 4
        %s644 = scalar_lea.vmem %s2, %s643
        %v645 = vld [vmem:[%s644] sm:$0xf]
        %v646 = vld [vmem:[%s644 + $0x4] sm:$0xf]
        %v647 = vld [vmem:[%s644 + $0x8] sm:$0xf]
        %v648 = vld [vmem:[%s644 + $0xc] sm:$0xf]
        %s649 = scalar_lea.vmem %s3, %s637
        %v650 = vld [vmem:[%s649] sm:$0x1]
        %v652 = vlaneseq
        %v653 = vshrl.u32 %v652, 7
        %v654 = vsub.s32 0, %v653
        %v655 = vrot.slane %v650, %v654
        %v661 = vunpack.c.l.b16 %v645
        %v662 = vunpack.c.l.b16 %v646
        %v663 = vunpack.c.l.b16 %v647
        %v664 = vunpack.c.l.b16 %v648
        %v665 = vpack.c.b16 %v662, %v661
        %v666 = vpack.c.b16 %v664, %v663
        %v670 = vsel %vm634, %v626, 0
        %672 = vmatprep.subr.bf16.mxu0 0
        %673 = vmatpush1.bf16.msra.mxu0 %v665
        %674 = vmatprep.subr.bf16.mxu0 0
        %675 = vmatpush1.bf16.msra.mxu0 %v666
        %676 = vmatprep.subr.bf16.mxu0 0
        %677 = vmatpush1.bf16.msra.mxu0 0
        %678 = vmatprep.subr.bf16.mxu0 0
        %679 = vmatpush1.bf16.msra.mxu0 0
        %680 = vmatprep.subr.bf16.mxu0 0
        %681 = vmatpush1.bf16.msra.mxu0 0
        %682 = vmatprep.subr.bf16.mxu0 0
        %683 = vmatpush1.bf16.msra.mxu0 0
        %684 = vmatprep.subr.bf16.mxu0 0
        %685 = vmatpush1.bf16.msra.mxu0 0
        %686 = vmatprep.subr.bf16.mxu0 0
        %687 = vmatpush1.bf16.msra.mxu0 0
        %688 = vmatprep.subr.bf16.mxu0 0
        %689 = vmatpush1.bf16.msra.mxu0 0
        %690 = vmatprep.subr.bf16.mxu0 0
        %691 = vmatpush1.bf16.msra.mxu0 0
        %692 = vmatprep.subr.bf16.mxu0 0
        %693 = vmatpush1.bf16.msra.mxu0 0
        %694 = vmatprep.subr.bf16.mxu0 0
        %695 = vmatpush1.bf16.msra.mxu0 0
        %696 = vmatprep.subr.bf16.mxu0 0
        %697 = vmatpush1.bf16.msra.mxu0 0
        %698 = vmatprep.subr.bf16.mxu0 0
        %699 = vmatpush1.bf16.msra.mxu0 0
        %700 = vmatprep.subr.bf16.mxu0 0
        %701 = vmatpush1.bf16.msra.mxu0 0
        %702 = vmatprep.subr.bf16.mxu0 0
        %703 = vmatpush1.bf16.msra.mxu0 0
        %704 = vmatprep.mubr.bf16.mxu0 0
        %705 = vmatmul.mubr.bf16.gmra.mrb[0].mxu0 %v670
        %v706 = vpop.f32.mrb[0].mxu0
        %v707 = vadd.f32 %v655, %v706
        %v708 = vpop.f32.mrb[0].mxu0
        %v709 = vpop.f32.mrb[0].mxu0
        %v710 = vpop.f32.mrb[0].mxu0
        %711 = vdwg.mxu0
        %s712 = smul.addr %s642, 4
        %s713 = scalar_lea.vmem %s4, %s712
        %v714 = vld [vmem:[%s713] sm:$0xf]
        %v715 = vld [vmem:[%s713 + $0x4] sm:$0xf]
        %v716 = vld [vmem:[%s713 + $0x8] sm:$0xf]
        %v717 = vld [vmem:[%s713 + $0xc] sm:$0xf]
        %s718 = scalar_lea.vmem %s5, %s637
        %v719 = vld [vmem:[%s718] sm:$0x1]
        %v721 = vlaneseq
        %v722 = vshrl.u32 %v721, 7
        %v723 = vsub.s32 0, %v722
        %v724 = vrot.slane %v719, %v723
        %v730 = vunpack.c.l.b16 %v714
        %v731 = vunpack.c.l.b16 %v715
        %v732 = vunpack.c.l.b16 %v716
        %v733 = vunpack.c.l.b16 %v717
        %v734 = vpack.c.b16 %v731, %v730
        %v735 = vpack.c.b16 %v733, %v732
        %v739 = vsel %vm634, %v620, 0
        %741 = vmatprep.subr.bf16.mxu0 0
        %742 = vmatpush1.bf16.msra.mxu0 %v734
        %743 = vmatprep.subr.bf16.mxu0 0
        %744 = vmatpush1.bf16.msra.mxu0 %v735
        %745 = vmatprep.subr.bf16.mxu0 0
        %746 = vmatpush1.bf16.msra.mxu0 0
        %747 = vmatprep.subr.bf16.mxu0 0
        %748 = vmatpush1.bf16.msra.mxu0 0
        %749 = vmatprep.subr.bf16.mxu0 0
        %750 = vmatpush1.bf16.msra.mxu0 0
        %751 = vmatprep.subr.bf16.mxu0 0
        %752 = vmatpush1.bf16.msra.mxu0 0
        %753 = vmatprep.subr.bf16.mxu0 0
        %754 = vmatpush1.bf16.msra.mxu0 0
        %755 = vmatprep.subr.bf16.mxu0 0
        %756 = vmatpush1.bf16.msra.mxu0 0
        %757 = vmatprep.subr.bf16.mxu0 0
        %758 = vmatpush1.bf16.msra.mxu0 0
        %759 = vmatprep.subr.bf16.mxu0 0
        %760 = vmatpush1.bf16.msra.mxu0 0
        %761 = vmatprep.subr.bf16.mxu0 0
        %762 = vmatpush1.bf16.msra.mxu0 0
        %763 = vmatprep.subr.bf16.mxu0 0
        %764 = vmatpush1.bf16.msra.mxu0 0
        %765 = vmatprep.subr.bf16.mxu0 0
        %766 = vmatpush1.bf16.msra.mxu0 0
        %767 = vmatprep.subr.bf16.mxu0 0
        %768 = vmatpush1.bf16.msra.mxu0 0
        %769 = vmatprep.subr.bf16.mxu0 0
        %770 = vmatpush1.bf16.msra.mxu0 0
        %771 = vmatprep.subr.bf16.mxu0 0
        %772 = vmatpush1.bf16.msra.mxu0 0
        %773 = vmatprep.mubr.bf16.mxu0 0
        %774 = vmatmul.mubr.bf16.gmra.mrb[0].mxu0 %v739
        %v775 = vpop.f32.mrb[0].mxu0
        %v776 = vadd.f32 %v724, %v775
        %v777 = vpop.f32.mrb[0].mxu0
        %v778 = vpop.f32.mrb[0].mxu0
        %v779 = vpop.f32.mrb[0].mxu0
        %780 = vdwg.mxu0
        %s781 = smul.addr %s642, 4
        %s782 = scalar_lea.vmem %s6, %s781
        %v783 = vld [vmem:[%s782] sm:$0xf]
        %v784 = vld [vmem:[%s782 + $0x4] sm:$0xf]
        %v785 = vld [vmem:[%s782 + $0x8] sm:$0xf]
        %v786 = vld [vmem:[%s782 + $0xc] sm:$0xf]
        %s787 = scalar_lea.vmem %s7, %s637
        %v788 = vld [vmem:[%s787] sm:$0x1]
        %v790 = vlaneseq
        %v791 = vshrl.u32 %v790, 7
        %v792 = vsub.s32 0, %v791
        %v793 = vrot.slane %v788, %v792
        %v799 = vunpack.c.l.b16 %v783
        %v800 = vunpack.c.l.b16 %v784
        %v801 = vunpack.c.l.b16 %v785
        %v802 = vunpack.c.l.b16 %v786
        %v803 = vpack.c.b16 %v800, %v799
        %v804 = vpack.c.b16 %v802, %v801
        %807 = vmatprep.subr.bf16.mxu0 0
        %808 = vmatpush1.bf16.msra.mxu0 %v803
        %809 = vmatprep.subr.bf16.mxu0 0
        %810 = vmatpush1.bf16.msra.mxu0 %v804
        %811 = vmatprep.subr.bf16.mxu0 0
        %812 = vmatpush1.bf16.msra.mxu0 0
        %813 = vmatprep.subr.bf16.mxu0 0
        %814 = vmatpush1.bf16.msra.mxu0 0
        %815 = vmatprep.subr.bf16.mxu0 0
        %816 = vmatpush1.bf16.msra.mxu0 0
        %817 = vmatprep.subr.bf16.mxu0 0
        %818 = vmatpush1.bf16.msra.mxu0 0
        %819 = vmatprep.subr.bf16.mxu0 0
        %820 = vmatpush1.bf16.msra.mxu0 0
        %821 = vmatprep.subr.bf16.mxu0 0
        %822 = vmatpush1.bf16.msra.mxu0 0
        %823 = vmatprep.subr.bf16.mxu0 0
        %824 = vmatpush1.bf16.msra.mxu0 0
        %825 = vmatprep.subr.bf16.mxu0 0
        %826 = vmatpush1.bf16.msra.mxu0 0
        %827 = vmatprep.subr.bf16.mxu0 0
        %828 = vmatpush1.bf16.msra.mxu0 0
        %829 = vmatprep.subr.bf16.mxu0 0
        %830 = vmatpush1.bf16.msra.mxu0 0
        %831 = vmatprep.subr.bf16.mxu0 0
        %832 = vmatpush1.bf16.msra.mxu0 0
        %833 = vmatprep.subr.bf16.mxu0 0
        %834 = vmatpush1.bf16.msra.mxu0 0
        %835 = vmatprep.subr.bf16.mxu0 0
        %836 = vmatpush1.bf16.msra.mxu0 0
        %837 = vmatprep.subr.bf16.mxu0 0
        %838 = vmatpush1.bf16.msra.mxu0 0
        %839 = vmatprep.mubr.bf16.mxu0 0
        %840 = vmatmul.mubr.bf16.gmra.mrb[0].mxu0 %v739
        %v841 = vpop.f32.mrb[0].mxu0
        %v842 = vadd.f32 %v793, %v841
        %v843 = vpop.f32.mrb[0].mxu0
        %v844 = vpop.f32.mrb[0].mxu0
        %v845 = vpop.f32.mrb[0].mxu0
        %846 = vdwg.mxu0
        %v847 = vpack.c.bf16 %v707, %v707
        %v848 = vpack.c.bf16 %v776, %v776
        %vm849 = vcmask 64512
        %v851 = vsel %vm849, %v847, 0
        %v854 = vsel %vm849, %v848, 0
        %856 = vmatprep.subr.bf16.mxu0 0
        %857 = vmatpush1.bf16.xpose.msra.mxu0 %v854
        %858 = vmatprep.subr.bf16.mxu0 0
        %859 = vmatpush1.bf16.xpose.msra.mxu0 0
        %860 = vmatprep.subr.bf16.mxu0 0
        %861 = vmatpush1.bf16.xpose.msra.mxu0 0
        %862 = vmatprep.subr.bf16.mxu0 0
        %863 = vmatpush1.bf16.xpose.msra.mxu0 0
        %864 = vmatprep.subr.bf16.mxu0 0
        %865 = vmatpush1.bf16.xpose.msra.mxu0 0
        %866 = vmatprep.subr.bf16.mxu0 0
        %867 = vmatpush1.bf16.xpose.msra.mxu0 0
        %868 = vmatprep.subr.bf16.mxu0 0
        %869 = vmatpush1.bf16.xpose.msra.mxu0 0
        %870 = vmatprep.subr.bf16.mxu0 0
        %871 = vmatpush1.bf16.xpose.msra.mxu0 0
        %872 = vmatprep.subr.bf16.mxu0 0
        %873 = vmatpush1.bf16.xpose.msra.mxu0 0
        %874 = vmatprep.subr.bf16.mxu0 0
        %875 = vmatpush1.bf16.xpose.msra.mxu0 0
        %876 = vmatprep.subr.bf16.mxu0 0
        %877 = vmatpush1.bf16.xpose.msra.mxu0 0
        %878 = vmatprep.subr.bf16.mxu0 0
        %879 = vmatpush1.bf16.xpose.msra.mxu0 0
        %880 = vmatprep.subr.bf16.mxu0 0
        %881 = vmatpush1.bf16.xpose.msra.mxu0 0
        %882 = vmatprep.subr.bf16.mxu0 0
        %883 = vmatpush1.bf16.xpose.msra.mxu0 0
        %884 = vmatprep.subr.bf16.mxu0 0
        %885 = vmatpush1.bf16.xpose.msra.mxu0 0
        %886 = vmatprep.subr.bf16.mxu0 0
        %887 = vmatpush1.bf16.xpose.msra.mxu0 0
        %888 = vmatprep.mubr.bf16.mxu0 0
        %889 = vmatmul.mubr.bf16.gmra.mrb[0].mxu0 %v851
        %v890 = vpop.f32.mrb[0].mxu0
        %v891 = vadd.f32 0.0, %v890
        %v892 = vpop.f32.mrb[0].mxu0
        %v893 = vpop.f32.mrb[0].mxu0
        %v894 = vpop.f32.mrb[0].mxu0
        %895 = vdwg.mxu0
        %v896 = vmul.f32 %v891, 0.35355338
        %v897 = vsel %vm633, %v896, -1e+10
        %v898 = vsel %vm849, %v897, -inf
        %899 = vmax.xlane.f32.xlu0 %v898
        %v900 = vpop.xlane.xlu0 %899
        %v901 = vsub.f32 %v897, %v900
        %v902 = vmul.f32 %v901, 1.442695
        %v903 = vpow.pop %v902
        %v904 = vsel %vm849, %v903, 0.0
        %905 = vadd.xlane.f32.xlu0 %v904
        %v906 = vpop.xlane.xlu0 %905
        %v907 = vrcp.pop %v906
        %v908 = vmul.f32 %v903, %v907
        %v909 = vpack.c.bf16 %v908, %v908
        %v910 = vpack.c.bf16 %v842, %v842
        %v912 = vsel %vm849, %v909, 0
        %vm914 = vcmask 1043456
        %v916 = vsel %vm914, %v910, 0
        %918 = vmatprep.subr.bf16.mxu0 0
        %919 = vmatpush1.bf16.msra.mxu0 %v916
        %920 = vmatprep.subr.bf16.mxu0 0
        %921 = vmatpush1.bf16.msra.mxu0 0
        %922 = vmatprep.subr.bf16.mxu0 0
        %923 = vmatpush1.bf16.msra.mxu0 0
        %924 = vmatprep.subr.bf16.mxu0 0
        %925 = vmatpush1.bf16.msra.mxu0 0
        %926 = vmatprep.subr.bf16.mxu0 0
        %927 = vmatpush1.bf16.msra.mxu0 0
        %928 = vmatprep.subr.bf16.mxu0 0
        %929 = vmatpush1.bf16.msra.mxu0 0
        %930 = vmatprep.subr.bf16.mxu0 0
        %931 = vmatpush1.bf16.msra.mxu0 0
        %932 = vmatprep.subr.bf16.mxu0 0
        %933 = vmatpush1.bf16.msra.mxu0 0
        %934 = vmatprep.subr.bf16.mxu0 0
        %935 = vmatpush1.bf16.msra.mxu0 0
        %936 = vmatprep.subr.bf16.mxu0 0
        %937 = vmatpush1.bf16.msra.mxu0 0
        %938 = vmatprep.subr.bf16.mxu0 0
        %939 = vmatpush1.bf16.msra.mxu0 0
        %940 = vmatprep.subr.bf16.mxu0 0
        %941 = vmatpush1.bf16.msra.mxu0 0
        %942 = vmatprep.subr.bf16.mxu0 0
        %943 = vmatpush1.bf16.msra.mxu0 0
        %944 = vmatprep.subr.bf16.mxu0 0
        %945 = vmatpush1.bf16.msra.mxu0 0
        %946 = vmatprep.subr.bf16.mxu0 0
        %947 = vmatpush1.bf16.msra.mxu0 0
        %948 = vmatprep.subr.bf16.mxu0 0
        %949 = vmatpush1.bf16.msra.mxu0 0
        %950 = vmatprep.mubr.bf16.mxu0 0
        %951 = vmatmul.mubr.bf16.gmra.mrb[0].mxu0 %v912
        %v952 = vpop.f32.mrb[0].mxu0
        %v953 = vadd.f32 0.0, %v952
        %v954 = vpop.f32.mrb[0].mxu0
        %v955 = vpop.f32.mrb[0].mxu0
        %v956 = vpop.f32.mrb[0].mxu0
        %957 = vdwg.mxu0
        %v958 = vld [vmem:[#allocation2] sm:$0xff]
        %v959 = vpack.c.bf16 %v953, %v953
        %s960 = smul.addr %s637, 4
        %s961 = scalar_lea.vmem %s8, %s960
        %v962 = vld [vmem:[%s961] sm:$0xf]
        %v964 = vsel %vm849, %v959, 0
        %v967 = vsel %vm914, %v962, 0
        %969 = vmatprep.subr.bf16.mxu0 0
        %970 = vmatpush1.bf16.msra.mxu0 %v967
        %971 = vmatprep.subr.bf16.mxu0 0
        %972 = vmatpush1.bf16.msra.mxu0 0
        %973 = vmatprep.subr.bf16.mxu0 0
        %974 = vmatpush1.bf16.msra.mxu0 0
        %975 = vmatprep.subr.bf16.mxu0 0
        %976 = vmatpush1.bf16.msra.mxu0 0
        %977 = vmatprep.subr.bf16.mxu0 0
        %978 = vmatpush1.bf16.msra.mxu0 0
        %979 = vmatprep.subr.bf16.mxu0 0
        %980 = vmatpush1.bf16.msra.mxu0 0
        %981 = vmatprep.subr.bf16.mxu0 0
        %982 = vmatpush1.bf16.msra.mxu0 0
        %983 = vmatprep.subr.bf16.mxu0 0
        %984 = vmatpush1.bf16.msra.mxu0 0
        %985 = vmatprep.subr.bf16.mxu0 0
        %986 = vmatpush1.bf16.msra.mxu0 0
        %987 = vmatprep.subr.bf16.mxu0 0
        %988 = vmatpush1.bf16.msra.mxu0 0
        %989 = vmatprep.subr.bf16.mxu0 0
        %990 = vmatpush1.bf16.msra.mxu0 0
        %991 = vmatprep.subr.bf16.mxu0 0
        %992 = vmatpush1.bf16.msra.mxu0 0
        %993 = vmatprep.subr.bf16.mxu0 0
        %994 = vmatpush1.bf16.msra.mxu0 0
        %995 = vmatprep.subr.bf16.mxu0 0
        %996 = vmatpush1.bf16.msra.mxu0 0
        %997 = vmatprep.subr.bf16.mxu0 0
        %998 = vmatpush1.bf16.msra.mxu0 0
        %999 = vmatprep.subr.bf16.mxu0 0
        %1000 = vmatpush1.bf16.msra.mxu0 0
        %1001 = vmatprep.mubr.bf16.mxu0 0
        %1002 = vmatmul.mubr.bf16.gmra.mrb[0].mxu0 %v964
        %v1003 = vpop.f32.mrb[0].mxu0
        %v1004 = vadd.f32 0.0, %v1003
        %v1005 = vpop.f32.mrb[0].mxu0
        %v1006 = vpop.f32.mrb[0].mxu0
        %v1007 = vpop.f32.mrb[0].mxu0
        %1008 = vdwg.mxu0
        %v1009 = vadd.f32 %v958, %v1004
        %1010 = vst.msk [vmem:[#allocation2] sm:$0xff] %vm634, %v1009
      $region97: #{seq2seq_forward.7} parent=91 // loop_footer
        %s641 = sadd.s32 1, %s637
      $region98: #{seq2seq_forward.7} parent=91 // loop_footer_branch
        %636 = sbr.rel target = $region94
      $region99: #{seq2seq_forward.7} parent=91 // loop_exit
        _
      %v1011 = vld [vmem:[#allocation2] sm:$0xff]
      %v1012 = vld [vmem:[%s9] sm:$0x1]
      %v1014 = vlaneseq
      %v1015 = vshrl.u32 %v1014, 7
      %v1016 = vsub.s32 0, %v1015
      %v1017 = vrot.slane %v1012, %v1016
      %v1019 = vadd.f32 %v1011, %v1017
      %v1020 = vunpack.c.l.bf16 %v626
      %v1021 = vadd.f32 %v1019, %v1020
      %v1022 = vsel %vm634, %v1021, 0.0
      %1023 = vadd.xlane.f32.xlu0 %v1022
      %v1024 = vpop.xlane.xlu0 %1023
      %v1025 = vrcp.pop 32.0
      %v1026 = vmul.f32 %v1024, %v1025
      %v1027 = vsub.f32 %v1021, %v1026
      %v1028 = vmul.f32 %v1027, %v1027
      %v1029 = vsel %vm634, %v1028, 0.0
      %1030 = vadd.xlane.f32.xlu0 %v1029
      %v1031 = vpop.xlane.xlu0 %1030
      %v1032 = vmul.f32 %v1031, %v1025
      %v1033 = vadd.f32 %v1032, 1e-05
      %v1034 = vrsqrt.pop %v1033
      %v1035 = vmul.f32 %v1027, %v1034
      %v1036 = vld [vmem:[%s10] sm:$0x1]
      %v1038 = vlaneseq
      %v1039 = vshrl.u32 %v1038, 7
      %v1040 = vsub.s32 0, %v1039
      %v1041 = vrot.slane %v1036, %v1040
      %v1043 = vmul.f32 %v1035, %v1041
      %v1044 = vld [vmem:[%s11] sm:$0x1]
      %v1046 = vlaneseq
      %v1047 = vshrl.u32 %v1046, 7
      %v1048 = vsub.s32 0, %v1047
      %v1049 = vrot.slane %v1044, %v1048
      %v1051 = vadd.f32 %v1043, %v1049
      %v1052 = vpack.c.bf16 %v1051, %v1051
      %v1053 = vld [vmem:[%s12] sm:$0xf]
      %v1054 = vld [vmem:[%s12 + $0x4] sm:$0xf]
      %v1055 = vld [vmem:[%s12 + $0x8] sm:$0xf]
      %v1056 = vld [vmem:[%s12 + $0xc] sm:$0xf]
      %v1057 = vld [vmem:[%s13] sm:$0x1]
      %v1059 = vlaneseq
      %v1060 = vshrl.u32 %v1059, 7
      %v1061 = vsub.s32 0, %v1060
      %v1062 = vrot.slane %v1057, %v1061
      %v1068 = vunpack.c.l.b16 %v1053
      %v1069 = vunpack.c.l.b16 %v1054
      %v1070 = vunpack.c.l.b16 %v1055
      %v1071 = vunpack.c.l.b16 %v1056
      %v1072 = vpack.c.b16 %v1069, %v1068
      %v1073 = vpack.c.b16 %v1071, %v1070
      %v1077 = vsel %vm634, %v1052, 0
      %1079 = vmatprep.subr.bf16.mxu0 0
      %1080 = vmatpush1.bf16.msra.mxu0 %v1072
      %1081 = vmatprep.subr.bf16.mxu0 0
      %1082 = vmatpush1.bf16.msra.mxu0 %v1073
      %1083 = vmatprep.subr.bf16.mxu0 0
      %1084 = vmatpush1.bf16.msra.mxu0 0
      %1085 = vmatprep.subr.bf16.mxu0 0
      %1086 = vmatpush1.bf16.msra.mxu0 0
      %1087 = vmatprep.subr.bf16.mxu0 0
      %1088 = vmatpush1.bf16.msra.mxu0 0
      %1089 = vmatprep.subr.bf16.mxu0 0
      %1090 = vmatpush1.bf16.msra.mxu0 0
      %1091 = vmatprep.subr.bf16.mxu0 0
      %1092 = vmatpush1.bf16.msra.mxu0 0
      %1093 = vmatprep.subr.bf16.mxu0 0
      %1094 = vmatpush1.bf16.msra.mxu0 0
      %1095 = vmatprep.subr.bf16.mxu0 0
      %1096 = vmatpush1.bf16.msra.mxu0 0
      %1097 = vmatprep.subr.bf16.mxu0 0
      %1098 = vmatpush1.bf16.msra.mxu0 0
      %1099 = vmatprep.subr.bf16.mxu0 0
      %1100 = vmatpush1.bf16.msra.mxu0 0
      %1101 = vmatprep.subr.bf16.mxu0 0
      %1102 = vmatpush1.bf16.msra.mxu0 0
      %1103 = vmatprep.subr.bf16.mxu0 0
      %1104 = vmatpush1.bf16.msra.mxu0 0
      %1105 = vmatprep.subr.bf16.mxu0 0
      %1106 = vmatpush1.bf16.msra.mxu0 0
      %1107 = vmatprep.subr.bf16.mxu0 0
      %1108 = vmatpush1.bf16.msra.mxu0 0
      %1109 = vmatprep.subr.bf16.mxu0 0
      %1110 = vmatpush1.bf16.msra.mxu0 0
      %1111 = vmatprep.mubr.bf16.mxu0 0
      %1112 = vmatmul.mubr.bf16.gmra.mrb[0].mxu0 %v1077
      %v1113 = vpop.f32.mrb[0].mxu0
      %v1114 = vadd.f32 %v1062, %v1113
      %v1115 = vpop.f32.mrb[0].mxu0
      %v1116 = vpop.f32.mrb[0].mxu0
      %v1117 = vpop.f32.mrb[0].mxu0
      %1118 = vdwg.mxu0
      %v1119 = vmax.f32 %v1114, 0.0
      %v1120 = vpack.c.bf16 %v1119, %v1119
      %v1121 = vld [vmem:[%s14] sm:$0xf]
      %v1122 = vld [vmem:[%s14 + $0x4] sm:$0xf]
      %v1123 = vld [vmem:[%s14 + $0x8] sm:$0xf]
      %v1124 = vld [vmem:[%s14 + $0xc] sm:$0xf]
      %v1125 = vld [vmem:[%s14 + $0x10] sm:$0xf]
      %v1126 = vld [vmem:[%s14 + $0x14] sm:$0xf]
      %v1127 = vld [vmem:[%s14 + $0x18] sm:$0xf]
      %v1128 = vld [vmem:[%s14 + $0x1c] sm:$0xf]
      %v1129 = vld [vmem:[%s15] sm:$0x1]
      %v1131 = vlaneseq
      %v1132 = vshrl.u32 %v1131, 7
      %v1133 = vsub.s32 0, %v1132
      %v1134 = vrot.slane %v1129, %v1133
      %v1144 = vunpack.c.l.b16 %v1121
      %v1145 = vunpack.c.l.b16 %v1122
      %v1146 = vunpack.c.l.b16 %v1123
      %v1147 = vunpack.c.l.b16 %v1124
      %v1148 = vunpack.c.l.b16 %v1125
      %v1149 = vunpack.c.l.b16 %v1126
      %v1150 = vunpack.c.l.b16 %v1127
      %v1151 = vunpack.c.l.b16 %v1128
      %v1152 = vpack.c.b16 %v1145, %v1144
      %v1153 = vpack.c.b16 %v1147, %v1146
      %v1154 = vpack.c.b16 %v1149, %v1148
      %v1155 = vpack.c.b16 %v1151, %v1150
      %vm1160 = vcmask 523264
      %v1162 = vsel %vm1160, %v1120, 0
      %1164 = vmatprep.subr.bf16.mxu0 0
      %1165 = vmatpush1.bf16.msra.mxu0 %v1152
      %1166 = vmatprep.subr.bf16.mxu0 0
      %1167 = vmatpush1.bf16.msra.mxu0 %v1153
      %1168 = vmatprep.subr.bf16.mxu0 0
      %1169 = vmatpush1.bf16.msra.mxu0 %v1154
      %1170 = vmatprep.subr.bf16.mxu0 0
      %1171 = vmatpush1.bf16.msra.mxu0 %v1155
      %1172 = vmatprep.subr.bf16.mxu0 0
      %1173 = vmatpush1.bf16.msra.mxu0 0
      %1174 = vmatprep.subr.bf16.mxu0 0
      %1175 = vmatpush1.bf16.msra.mxu0 0
      %1176 = vmatprep.subr.bf16.mxu0 0
      %1177 = vmatpush1.bf16.msra.mxu0 0
      %1178 = vmatprep.subr.bf16.mxu0 0
      %1179 = vmatpush1.bf16.msra.mxu0 0
      %1180 = vmatprep.subr.bf16.mxu0 0
      %1181 = vmatpush1.bf16.msra.mxu0 0
      %1182 = vmatprep.subr.bf16.mxu0 0
      %1183 = vmatpush1.bf16.msra.mxu0 0
      %1184 = vmatprep.subr.bf16.mxu0 0
      %1185 = vmatpush1.bf16.msra.mxu0 0
      %1186 = vmatprep.subr.bf16.mxu0 0
      %1187 = vmatpush1.bf16.msra.mxu0 0
      %1188 = vmatprep.subr.bf16.mxu0 0
      %1189 = vmatpush1.bf16.msra.mxu0 0
      %1190 = vmatprep.subr.bf16.mxu0 0
      %1191 = vmatpush1.bf16.msra.mxu0 0
      %1192 = vmatprep.subr.bf16.mxu0 0
      %1193 = vmatpush1.bf16.msra.mxu0 0
      %1194 = vmatprep.subr.bf16.mxu0 0
      %1195 = vmatpush1.bf16.msra.mxu0 0
      %1196 = vmatprep.mubr.bf16.mxu0 0
      %1197 = vmatmul.mubr.bf16.gmra.mrb[0].mxu0 %v1162
      %v1198 = vpop.f32.mrb[0].mxu0
      %v1199 = vadd.f32 %v1134, %v1198
      %v1200 = vpop.f32.mrb[0].mxu0
      %v1201 = vpop.f32.mrb[0].mxu0
      %v1202 = vpop.f32.mrb[0].mxu0
      %1203 = vdwg.mxu0
      %v1204 = vadd.f32 %v1199, %v1051
      %v1205 = vsel %vm634, %v1204, 0.0
      %1206 = vadd.xlane.f32.xlu0 %v1205
      %v1207 = vpop.xlane.xlu0 %1206
      %v1208 = vmul.f32 %v1207, %v1025
      %v1209 = vsub.f32 %v1204, %v1208
      %v1210 = vmul.f32 %v1209, %v1209
      %v1211 = vsel %vm634, %v1210, 0.0
      %1212 = vadd.xlane.f32.xlu0 %v1211
      %v1213 = vpop.xlane.xlu0 %1212
      %v1214 = vmul.f32 %v1213, %v1025
      %v1215 = vadd.f32 %v1214, 1e-05
      %v1216 = vrsqrt.pop %v1215
      %v1217 = vmul.f32 %v1209, %v1216
      %v1218 = vld [vmem:[%s16] sm:$0x1]
      %v1220 = vlaneseq
      %v1221 = vshrl.u32 %v1220, 7
      %v1222 = vsub.s32 0, %v1221
      %v1223 = vrot.slane %v1218, %v1222
      %v1225 = vmul.f32 %v1217, %v1223
      %v1226 = vld [vmem:[%s17] sm:$0x1]
      %v1228 = vlaneseq
      %v1229 = vshrl.u32 %v1228, 7
      %v1230 = vsub.s32 0, %v1229
      %v1231 = vrot.slane %v1226, %v1230
      %v1233 = vadd.f32 %v1225, %v1231
      %v1234 = vpack.c.bf16 %v1233, %v1233
      %vm1235 = vcmask 257024
      %1236 = vst.msk [vmem:[%s618] sm:$0xf] %vm1235, %v1234
      %p1237 = scmp.lt.s32.totalorder %s33, 1
      %s1238 = scalar_select %p1237, %s33, 1
      %p1239 = scmp.lt.s32.totalorder %s34, 0
      %s1240 = scalar_select %p1239, %s34, 0
      %s1241 = sadd.s32 %s1240, %s1238
      %s1242 = smul.addr %s1241, 4
      %s1243 = scalar_lea.vmem %s18, %s1242
      // Predicated region
      $region100: #{seq2seq_forward.7} parent=91 // pred_check
        %p1244 = pneg %p451
      $region101: #{seq2seq_forward.7} parent=91 // pred_check_branch
        %1246 = sbr.rel (%p1244) target = $region103
      $region102: #{seq2seq_forward.7} parent=91 // pred_region
        _
      $region103: #{seq2seq_forward.7} parent=91 // pred_fallthru
        _
    $region92: #{seq2seq_forward.7} parent=5 // pred_fallthru
      _
    %p1247 = scmp.le.s32.totalorder 2, %s24
    // Predicated region
    $region104: #{seq2seq_forward.7} parent=5 // pred_check
      %p1248 = pneg %p1247
    $region105: #{seq2seq_forward.7} parent=5 // pred_check_branch
      %1250 = sbr.rel (%p1248) target = $region107
    $region106: #{seq2seq_forward.7} parent=5 // pred_region
      %s1251 = ssub.s32 %s24, 2
      // Predicated region
      $region108: #{seq2seq_forward.7} parent=106 // pred_check
        %p1252 = pneg %p457
      $region109: #{seq2seq_forward.7} parent=106 // pred_check_branch
        %1254 = sbr.rel (%p1252) target = $region111
      $region110: #{seq2seq_forward.7} parent=106 // pred_region
        %p1255 = scmp.lt.s32.totalorder %s35, 1
        %s1256 = scalar_select %p1255, %s35, 1
        %p1257 = scmp.lt.s32.totalorder %s36, 0
        %s1258 = scalar_select %p1257, %s36, 0
        %s1259 = sadd.s32 %s1258, %s1256
        %s1260 = smul.addr %s1259, 4
        %s1261 = scalar_lea.vmem %s18, %s1260
      $region111: #{seq2seq_forward.7} parent=106 // pred_fallthru
        _
    $region107: #{seq2seq_forward.7} parent=5 // pred_fallthru
      _
  $region6: #{seq2seq_forward.7} parent=0 // loop_footer
    %s28 = sadd.s32 1, %s24
  $region7: #{seq2seq_forward.7} parent=0 // loop_footer_branch
    %23 = sbr.rel target = $region3
  $region8: #{seq2seq_forward.7} parent=0 // loop_exit
    _

// kernel: seq2seq_forward.9
$region0: #{seq2seq_forward.9}
  #allocation0 [shape = 'u32[]', space=smem, size = 0x4, offset = 0x4, fixed_abs, tag = 'smem constant byte address 0x4 - core index']
  #allocation1 [shape = 'u32[144,128]{1,0:T(1,128)}', space=vmem, size = 0x12000, scoped, tag = 'internal scratch']
  #allocation2 [shape = 'f32[8,32]{1,0:T(8,128)}', space=vmem, size = 0x1000, scoped, tag = 'scratch operand']
  %s0 = inlined_call_operand.vmem [shape: bf16[2,8,32], index: 0, kind: input, shape index: {}]
  %s1 = inlined_call_operand.vmem [shape: f32[2,8,1], index: 1, kind: input, shape index: {}]
  %s2 = inlined_call_operand.vmem [shape: bf16[4,32,8], index: 2, kind: input, shape index: {}]
  %s3 = inlined_call_operand.vmem [shape: f32[4,1,8], index: 3, kind: input, shape index: {}]
  %s4 = inlined_call_operand.vmem [shape: bf16[4,32,8], index: 4, kind: input, shape index: {}]
  %s5 = inlined_call_operand.vmem [shape: f32[4,1,8], index: 5, kind: input, shape index: {}]
  %s6 = inlined_call_operand.vmem [shape: bf16[4,32,8], index: 6, kind: input, shape index: {}]
  %s7 = inlined_call_operand.vmem [shape: f32[4,1,8], index: 7, kind: input, shape index: {}]
  %s8 = inlined_call_operand.vmem [shape: bf16[4,8,32], index: 8, kind: input, shape index: {}]
  %s9 = inlined_call_operand.vmem [shape: f32[1,32], index: 9, kind: input, shape index: {}]
  %s10 = inlined_call_operand.vmem [shape: f32[1,32], index: 10, kind: input, shape index: {}]
  %s11 = inlined_call_operand.vmem [shape: f32[1,32], index: 11, kind: input, shape index: {}]
  %s12 = inlined_call_operand.vmem [shape: bf16[2,8,32], index: 12, kind: output, shape index: {}]
  %s13 = sld [smem:[#allocation0]]
  $region88: #{seq2seq_forward.9} parent=0
    _
  %s15 = ssub.s32 1, %s13
  %s16 = scalar_select 0, %s15, %s13
  loop: start=0, step=1, limit=4
  $region2: #{seq2seq_forward.9} parent=0 // loop_pre_header
    _
  $region3: #{seq2seq_forward.9} parent=0 // loop_header
    %s18 = sphi 0, %s22
    %p19 = scmp.ge.s32.totalorder %s18, 4
    %s25 = sphi 0, %s37
    %s26 = sphi 0, %s33
    %s27 = sphi 0, %s25
    %s28 = sphi 0, %s26
    %s29 = sphi 0, %s27
    %s30 = sphi 0, %s28
    %s40 = sphi 0, %s42
    %s43 = sphi 0, %s40
    %s44 = sphi 0, %s43
    %s60 = sphi 0, %s44
    %s68 = sphi 0, %s70
    %s71 = sphi 0, %s68
    %s72 = sphi 0, %s71
    %s88 = sphi 0, %s72
    %s92 = sphi 0, %s92
    %s94 = sphi 0, %s92
    %s95 = sphi 0, %s94
    %s109 = sphi 0, %s95
    %s113 = sphi 0, %s113
    %s115 = sphi 0, %s113
    %s116 = sphi 0, %s115
    %s130 = sphi 0, %s116
    %s134 = sphi 0, %s134
    %s136 = sphi 0, %s134
    %s137 = sphi 0, %s136
    %s151 = sphi 0, %s137
    %s155 = sphi 0, %s155
    %s157 = sphi 0, %s155
    %s158 = sphi 0, %s157
    %s172 = sphi 0, %s158
    %s176 = sphi 0, %s176
    %s178 = sphi 0, %s176
    %s179 = sphi 0, %s178
    %s193 = sphi 0, %s179
    %s197 = sphi 0, %s197
    %s199 = sphi 0, %s197
    %s200 = sphi 0, %s199
    %s214 = sphi 0, %s200
    %s218 = sphi 0, %s218
    %s220 = sphi 0, %s218
    %s221 = sphi 0, %s220
    %s235 = sphi 0, %s221
    %s239 = sphi 0, %s239
    %s241 = sphi 0, %s239
    %s242 = sphi 0, %s241
    %s256 = sphi 0, %s242
    %s260 = sphi 0, %s260
    %s262 = sphi 0, %s260
    %s263 = sphi 0, %s262
    %s277 = sphi 0, %s263
    %s281 = sphi 0, %s281
    %s283 = sphi 0, %s281
    %s284 = sphi 0, %s283
    %s298 = sphi 0, %s284
    %s306 = sphi 0, %s308
    %s309 = sphi 0, %s306
    %s310 = sphi 0, %s309
    %s326 = sphi 0, %s310
  $region4: #{seq2seq_forward.9} parent=0 // loop_header_branch
    %21 = sbr.rel (%p19) target = $region8
  $region5: #{seq2seq_forward.9} parent=0 // loop_body
    %s23 = ssub.s32 %s18, 1
    %s24 = ssub.s32 %s18, 2
    %s31 = sadd.s32 1, %s26
    %p32 = scmp.ge.s32.totalorder %s31, 1
    %s33 = scalar_select %p32, 0, %s31
    %s34 = sadd.s32 1, %s25
    %s35 = scalar_select %p32, %s34, %s25
    %p36 = scmp.ge.s32.totalorder %s35, 2
    %s37 = scalar_select %p36, 0, %s35
    %s38 = ssub.s32 %s25, %s37
    %p39 = scmp.eq.s32.totalorder %s38, 0
    %s41 = sadd.s32 %s40, 1
    %s42 = scalar_select %p39, %s40, %s41
    %p45 = pneg %p39
    %p46 = scmp.eq.s32.totalorder %s18, 1
    %p47 = por %p45, %p46
    %p48 = scmp.ne.s32.totalorder %s40, %s43
    %p49 = scmp.eq.s32.totalorder %s18, 0
    %p50 = por %p48, %p49
    %p51 = scmp.ne.s32.totalorder %s40, %s43
    %p52 = scmp.eq.s32.totalorder %s23, 1
    %p53 = por %p51, %p52
    %p54 = scmp.ne.s32.totalorder %s43, %s44
    %p55 = scmp.eq.s32.totalorder %s23, 0
    %p56 = por %p54, %p55
    %p57 = scmp.ne.s32.totalorder %s43, %s44
    %p58 = scmp.eq.s32.totalorder %s24, 1
    %p59 = por %p57, %p58
    %p61 = scmp.ne.s32.totalorder %s44, %s60
    %p62 = scmp.eq.s32.totalorder %s24, 0
    %p63 = por %p61, %p62
    %s64 = ssub.s32 %s25, %s37
    %s65 = ssub.s32 %s26, %s33
    %s66 = sor.u32 %s64, %s65
    %p67 = scmp.eq.s32.totalorder %s66, 0
    %s69 = sadd.s32 %s68, 1
    %s70 = scalar_select %p67, %s68, %s69
    %p73 = pneg %p67
    %p74 = scmp.eq.s32.totalorder %s18, 1
    %p75 = por %p73, %p74
    %p76 = scmp.ne.s32.totalorder %s68, %s71
    %p77 = scmp.eq.s32.totalorder %s18, 0
    %p78 = por %p76, %p77
    %p79 = scmp.ne.s32.totalorder %s68, %s71
    %p80 = scmp.eq.s32.totalorder %s23, 1
    %p81 = por %p79, %p80
    %p82 = scmp.ne.s32.totalorder %s71, %s72
    %p83 = scmp.eq.s32.totalorder %s23, 0
    %p84 = por %p82, %p83
    %p85 = scmp.ne.s32.totalorder %s71, %s72
    %p86 = scmp.eq.s32.totalorder %s24, 1
    %p87 = por %p85, %p86
    %p89 = scmp.ne.s32.totalorder %s72, %s88
    %p90 = scmp.eq.s32.totalorder %s24, 0
    %p91 = por %p89, %p90
    %s93 = sadd.s32 %s92, 1
    %p96 = scmp.eq.s32.totalorder %s18, 1
    %p97 = scmp.ne.s32.totalorder %s92, %s94
    %p98 = scmp.eq.s32.totalorder %s18, 0
    %p99 = por %p97, %p98
    %p100 = scmp.ne.s32.totalorder %s92, %s94
    %p101 = scmp.eq.s32.totalorder %s23, 1
    %p102 = por %p100, %p101
    %p103 = scmp.ne.s32.totalorder %s94, %s95
    %p104 = scmp.eq.s32.totalorder %s23, 0
    %p105 = por %p103, %p104
    %p106 = scmp.ne.s32.totalorder %s94, %s95
    %p107 = scmp.eq.s32.totalorder %s24, 1
    %p108 = por %p106, %p107
    %p110 = scmp.ne.s32.totalorder %s95, %s109
    %p111 = scmp.eq.s32.totalorder %s24, 0
    %p112 = por %p110, %p111
    %s114 = sadd.s32 %s113, 1
    %p117 = scmp.eq.s32.totalorder %s18, 1
    %p118 = scmp.ne.s32.totalorder %s113, %s115
    %p119 = scmp.eq.s32.totalorder %s18, 0
    %p120 = por %p118, %p119
    %p121 = scmp.ne.s32.totalorder %s113, %s115
    %p122 = scmp.eq.s32.totalorder %s23, 1
    %p123 = por %p121, %p122
    %p124 = scmp.ne.s32.totalorder %s115, %s116
    %p125 = scmp.eq.s32.totalorder %s23, 0
    %p126 = por %p124, %p125
    %p127 = scmp.ne.s32.totalorder %s115, %s116
    %p128 = scmp.eq.s32.totalorder %s24, 1
    %p129 = por %p127, %p128
    %p131 = scmp.ne.s32.totalorder %s116, %s130
    %p132 = scmp.eq.s32.totalorder %s24, 0
    %p133 = por %p131, %p132
    %s135 = sadd.s32 %s134, 1
    %p138 = scmp.eq.s32.totalorder %s18, 1
    %p139 = scmp.ne.s32.totalorder %s134, %s136
    %p140 = scmp.eq.s32.totalorder %s18, 0
    %p141 = por %p139, %p140
    %p142 = scmp.ne.s32.totalorder %s134, %s136
    %p143 = scmp.eq.s32.totalorder %s23, 1
    %p144 = por %p142, %p143
    %p145 = scmp.ne.s32.totalorder %s136, %s137
    %p146 = scmp.eq.s32.totalorder %s23, 0
    %p147 = por %p145, %p146
    %p148 = scmp.ne.s32.totalorder %s136, %s137
    %p149 = scmp.eq.s32.totalorder %s24, 1
    %p150 = por %p148, %p149
    %p152 = scmp.ne.s32.totalorder %s137, %s151
    %p153 = scmp.eq.s32.totalorder %s24, 0
    %p154 = por %p152, %p153
    %s156 = sadd.s32 %s155, 1
    %p159 = scmp.eq.s32.totalorder %s18, 1
    %p160 = scmp.ne.s32.totalorder %s155, %s157
    %p161 = scmp.eq.s32.totalorder %s18, 0
    %p162 = por %p160, %p161
    %p163 = scmp.ne.s32.totalorder %s155, %s157
    %p164 = scmp.eq.s32.totalorder %s23, 1
    %p165 = por %p163, %p164
    %p166 = scmp.ne.s32.totalorder %s157, %s158
    %p167 = scmp.eq.s32.totalorder %s23, 0
    %p168 = por %p166, %p167
    %p169 = scmp.ne.s32.totalorder %s157, %s158
    %p170 = scmp.eq.s32.totalorder %s24, 1
    %p171 = por %p169, %p170
    %p173 = scmp.ne.s32.totalorder %s158, %s172
    %p174 = scmp.eq.s32.totalorder %s24, 0
    %p175 = por %p173, %p174
    %s177 = sadd.s32 %s176, 1
    %p180 = scmp.eq.s32.totalorder %s18, 1
    %p181 = scmp.ne.s32.totalorder %s176, %s178
    %p182 = scmp.eq.s32.totalorder %s18, 0
    %p183 = por %p181, %p182
    %p184 = scmp.ne.s32.totalorder %s176, %s178
    %p185 = scmp.eq.s32.totalorder %s23, 1
    %p186 = por %p184, %p185
    %p187 = scmp.ne.s32.totalorder %s178, %s179
    %p188 = scmp.eq.s32.totalorder %s23, 0
    %p189 = por %p187, %p188
    %p190 = scmp.ne.s32.totalorder %s178, %s179
    %p191 = scmp.eq.s32.totalorder %s24, 1
    %p192 = por %p190, %p191
    %p194 = scmp.ne.s32.totalorder %s179, %s193
    %p195 = scmp.eq.s32.totalorder %s24, 0
    %p196 = por %p194, %p195
    %s198 = sadd.s32 %s197, 1
    %p201 = scmp.eq.s32.totalorder %s18, 1
    %p202 = scmp.ne.s32.totalorder %s197, %s199
    %p203 = scmp.eq.s32.totalorder %s18, 0
    %p204 = por %p202, %p203
    %p205 = scmp.ne.s32.totalorder %s197, %s199
    %p206 = scmp.eq.s32.totalorder %s23, 1
    %p207 = por %p205, %p206
    %p208 = scmp.ne.s32.totalorder %s199, %s200
    %p209 = scmp.eq.s32.totalorder %s23, 0
    %p210 = por %p208, %p209
    %p211 = scmp.ne.s32.totalorder %s199, %s200
    %p212 = scmp.eq.s32.totalorder %s24, 1
    %p213 = por %p211, %p212
    %p215 = scmp.ne.s32.totalorder %s200, %s214
    %p216 = scmp.eq.s32.totalorder %s24, 0
    %p217 = por %p215, %p216
    %s219 = sadd.s32 %s218, 1
    %p222 = scmp.eq.s32.totalorder %s18, 1
    %p223 = scmp.ne.s32.totalorder %s218, %s220
    %p224 = scmp.eq.s32.totalorder %s18, 0
    %p225 = por %p223, %p224
    %p226 = scmp.ne.s32.totalorder %s218, %s220
    %p227 = scmp.eq.s32.totalorder %s23, 1
    %p228 = por %p226, %p227
    %p229 = scmp.ne.s32.totalorder %s220, %s221
    %p230 = scmp.eq.s32.totalorder %s23, 0
    %p231 = por %p229, %p230
    %p232 = scmp.ne.s32.totalorder %s220, %s221
    %p233 = scmp.eq.s32.totalorder %s24, 1
    %p234 = por %p232, %p233
    %p236 = scmp.ne.s32.totalorder %s221, %s235
    %p237 = scmp.eq.s32.totalorder %s24, 0
    %p238 = por %p236, %p237
    %s240 = sadd.s32 %s239, 1
    %p243 = scmp.eq.s32.totalorder %s18, 1
    %p244 = scmp.ne.s32.totalorder %s239, %s241
    %p245 = scmp.eq.s32.totalorder %s18, 0
    %p246 = por %p244, %p245
    %p247 = scmp.ne.s32.totalorder %s239, %s241
    %p248 = scmp.eq.s32.totalorder %s23, 1
    %p249 = por %p247, %p248
    %p250 = scmp.ne.s32.totalorder %s241, %s242
    %p251 = scmp.eq.s32.totalorder %s23, 0
    %p252 = por %p250, %p251
    %p253 = scmp.ne.s32.totalorder %s241, %s242
    %p254 = scmp.eq.s32.totalorder %s24, 1
    %p255 = por %p253, %p254
    %p257 = scmp.ne.s32.totalorder %s242, %s256
    %p258 = scmp.eq.s32.totalorder %s24, 0
    %p259 = por %p257, %p258
    %s261 = sadd.s32 %s260, 1
    %p264 = scmp.eq.s32.totalorder %s18, 1
    %p265 = scmp.ne.s32.totalorder %s260, %s262
    %p266 = scmp.eq.s32.totalorder %s18, 0
    %p267 = por %p265, %p266
    %p268 = scmp.ne.s32.totalorder %s260, %s262
    %p269 = scmp.eq.s32.totalorder %s23, 1
    %p270 = por %p268, %p269
    %p271 = scmp.ne.s32.totalorder %s262, %s263
    %p272 = scmp.eq.s32.totalorder %s23, 0
    %p273 = por %p271, %p272
    %p274 = scmp.ne.s32.totalorder %s262, %s263
    %p275 = scmp.eq.s32.totalorder %s24, 1
    %p276 = por %p274, %p275
    %p278 = scmp.ne.s32.totalorder %s263, %s277
    %p279 = scmp.eq.s32.totalorder %s24, 0
    %p280 = por %p278, %p279
    %s282 = sadd.s32 %s281, 1
    %p285 = scmp.eq.s32.totalorder %s18, 1
    %p286 = scmp.ne.s32.totalorder %s281, %s283
    %p287 = scmp.eq.s32.totalorder %s18, 0
    %p288 = por %p286, %p287
    %p289 = scmp.ne.s32.totalorder %s281, %s283
    %p290 = scmp.eq.s32.totalorder %s23, 1
    %p291 = por %p289, %p290
    %p292 = scmp.ne.s32.totalorder %s283, %s284
    %p293 = scmp.eq.s32.totalorder %s23, 0
    %p294 = por %p292, %p293
    %p295 = scmp.ne.s32.totalorder %s283, %s284
    %p296 = scmp.eq.s32.totalorder %s24, 1
    %p297 = por %p295, %p296
    %p299 = scmp.ne.s32.totalorder %s284, %s298
    %p300 = scmp.eq.s32.totalorder %s24, 0
    %p301 = por %p299, %p300
    %s302 = ssub.s32 %s25, %s37
    %s303 = ssub.s32 %s26, %s33
    %s304 = sor.u32 %s302, %s303
    %p305 = scmp.eq.s32.totalorder %s304, 0
    %s307 = sadd.s32 %s306, 1
    %s308 = scalar_select %p305, %s306, %s307
    %p311 = pneg %p305
    %p312 = scmp.eq.s32.totalorder %s18, 1
    %p313 = por %p311, %p312
    %p314 = scmp.ne.s32.totalorder %s306, %s309
    %p315 = scmp.eq.s32.totalorder %s18, 0
    %p316 = por %p314, %p315
    %p317 = scmp.ne.s32.totalorder %s306, %s309
    %p318 = scmp.eq.s32.totalorder %s23, 1
    %p319 = por %p317, %p318
    %p320 = scmp.ne.s32.totalorder %s309, %s310
    %p321 = scmp.eq.s32.totalorder %s23, 0
    %p322 = por %p320, %p321
    %p323 = scmp.ne.s32.totalorder %s309, %s310
    %p324 = scmp.eq.s32.totalorder %s24, 1
    %p325 = por %p323, %p324
    %p327 = scmp.ne.s32.totalorder %s310, %s326
    %p328 = scmp.eq.s32.totalorder %s24, 0
    %p329 = por %p327, %p328
    %p330 = scmp.le.s32.totalorder 1, %s18
    %p331 = scmp.lt.s32.totalorder %s18, 3
    %p332 = pnand %p330, %p331
    %p333 = pneg %p332
    // Predicated region
    $region9: #{seq2seq_forward.9} parent=5 // pred_check
      _
    $region10: #{seq2seq_forward.9} parent=5 // pred_check_branch
      %335 = sbr.rel (%p332) target = $region12
    $region11: #{seq2seq_forward.9} parent=5 // pred_region
      %s336 = ssub.s32 %s18, 1
      // Predicated region
      $region13: #{seq2seq_forward.9} parent=11 // pred_check
        %p337 = pneg %p105
      $region14: #{seq2seq_forward.9} parent=11 // pred_check_branch
        %339 = sbr.rel (%p337) target = $region16
      $region15: #{seq2seq_forward.9} parent=11 // pred_region
        _
      $region16: #{seq2seq_forward.9} parent=11 // pred_fallthru
        _
      // Predicated region
      $region17: #{seq2seq_forward.9} parent=11 // pred_check
        %p340 = pneg %p126
      $region18: #{seq2seq_forward.9} parent=11 // pred_check_branch
        %342 = sbr.rel (%p340) target = $region20
      $region19: #{seq2seq_forward.9} parent=11 // pred_region
        _
      $region20: #{seq2seq_forward.9} parent=11 // pred_fallthru
        _
      // Predicated region
      $region21: #{seq2seq_forward.9} parent=11 // pred_check
        %p343 = pneg %p147
      $region22: #{seq2seq_forward.9} parent=11 // pred_check_branch
        %345 = sbr.rel (%p343) target = $region24
      $region23: #{seq2seq_forward.9} parent=11 // pred_region
        _
      $region24: #{seq2seq_forward.9} parent=11 // pred_fallthru
        _
      // Predicated region
      $region25: #{seq2seq_forward.9} parent=11 // pred_check
        %p346 = pneg %p168
      $region26: #{seq2seq_forward.9} parent=11 // pred_check_branch
        %348 = sbr.rel (%p346) target = $region28
      $region27: #{seq2seq_forward.9} parent=11 // pred_region
        _
      $region28: #{seq2seq_forward.9} parent=11 // pred_fallthru
        _
      // Predicated region
      $region29: #{seq2seq_forward.9} parent=11 // pred_check
        %p349 = pneg %p189
      $region30: #{seq2seq_forward.9} parent=11 // pred_check_branch
        %351 = sbr.rel (%p349) target = $region32
      $region31: #{seq2seq_forward.9} parent=11 // pred_region
        _
      $region32: #{seq2seq_forward.9} parent=11 // pred_fallthru
        _
      // Predicated region
      $region33: #{seq2seq_forward.9} parent=11 // pred_check
        %p352 = pneg %p210
      $region34: #{seq2seq_forward.9} parent=11 // pred_check_branch
        %354 = sbr.rel (%p352) target = $region36
      $region35: #{seq2seq_forward.9} parent=11 // pred_region
        _
      $region36: #{seq2seq_forward.9} parent=11 // pred_fallthru
        _
      // Predicated region
      $region37: #{seq2seq_forward.9} parent=11 // pred_check
        %p355 = pneg %p231
      $region38: #{seq2seq_forward.9} parent=11 // pred_check_branch
        %357 = sbr.rel (%p355) target = $region40
      $region39: #{seq2seq_forward.9} parent=11 // pred_region
        _
      $region40: #{seq2seq_forward.9} parent=11 // pred_fallthru
        _
      // Predicated region
      $region41: #{seq2seq_forward.9} parent=11 // pred_check
        %p358 = pneg %p252
      $region42: #{seq2seq_forward.9} parent=11 // pred_check_branch
        %360 = sbr.rel (%p358) target = $region44
      $region43: #{seq2seq_forward.9} parent=11 // pred_region
        _
      $region44: #{seq2seq_forward.9} parent=11 // pred_fallthru
        _
      // Predicated region
      $region45: #{seq2seq_forward.9} parent=11 // pred_check
        %p361 = pneg %p273
      $region46: #{seq2seq_forward.9} parent=11 // pred_check_branch
        %363 = sbr.rel (%p361) target = $region48
      $region47: #{seq2seq_forward.9} parent=11 // pred_region
        _
      $region48: #{seq2seq_forward.9} parent=11 // pred_fallthru
        _
      // Predicated region
      $region49: #{seq2seq_forward.9} parent=11 // pred_check
        %p364 = pneg %p294
      $region50: #{seq2seq_forward.9} parent=11 // pred_check_branch
        %366 = sbr.rel (%p364) target = $region52
      $region51: #{seq2seq_forward.9} parent=11 // pred_region
        _
      $region52: #{seq2seq_forward.9} parent=11 // pred_fallthru
        _
    $region12: #{seq2seq_forward.9} parent=5 // pred_fallthru
      _
    %p367 = scmp.lt.s32.totalorder %s18, 2
    // Predicated region
    $region53: #{seq2seq_forward.9} parent=5 // pred_check
      %p368 = pneg %p367
    $region54: #{seq2seq_forward.9} parent=5 // pred_check_branch
      %370 = sbr.rel (%p368) target = $region56
    $region55: #{seq2seq_forward.9} parent=5 // pred_region
      // Predicated region
      $region57: #{seq2seq_forward.9} parent=55 // pred_check
        %p371 = pneg %p50
      $region58: #{seq2seq_forward.9} parent=55 // pred_check_branch
        %373 = sbr.rel (%p371) target = $region60
      $region59: #{seq2seq_forward.9} parent=55 // pred_region
        %p374 = scmp.lt.s32.totalorder %s25, 1
        %s375 = scalar_select %p374, %s25, 1
        %s376 = smul.addr %s375, 4
        %s377 = scalar_lea.vmem %s0, %s376
      $region60: #{seq2seq_forward.9} parent=55 // pred_fallthru
        _
      // Predicated region
      $region61: #{seq2seq_forward.9} parent=55 // pred_check
        %p378 = pneg %p78
      $region62: #{seq2seq_forward.9} parent=55 // pred_check_branch
        %380 = sbr.rel (%p378) target = $region64
      $region63: #{seq2seq_forward.9} parent=55 // pred_region
        %p381 = scmp.lt.s32.totalorder %s25, 1
        %s382 = scalar_select %p381, %s25, 1
        %p383 = scmp.lt.s32.totalorder %s26, 0
        %s384 = scalar_select %p383, %s26, 0
        %s385 = sadd.s32 %s384, %s382
        %s386 = smul.addr %s385, 8
        %s387 = scalar_lea.vmem %s1, %s386
      $region64: #{seq2seq_forward.9} parent=55 // pred_fallthru
        _
    $region56: #{seq2seq_forward.9} parent=5 // pred_fallthru
      _
    %p388 = scmp.le.s32.totalorder 1, %s18
    %p389 = scmp.lt.s32.totalorder %s18, 3
    %p390 = pnand %p388, %p389
    %p391 = pneg %p390
    // Predicated region
    $region65: #{seq2seq_forward.9} parent=5 // pred_check
      _
    $region66: #{seq2seq_forward.9} parent=5 // pred_check_branch
      %393 = sbr.rel (%p390) target = $region68
    $region67: #{seq2seq_forward.9} parent=5 // pred_region
      %s394 = ssub.s32 %s18, 1
      %p395 = scmp.lt.s32.totalorder %s27, 1
      %s396 = scalar_select %p395, %s27, 1
      %s397 = smul.addr %s396, 4
      %s398 = scalar_lea.vmem %s0, %s397
      %p399 = pneg %p56
      %p400 = pneg %p53
      %p401 = scmp.lt.s32.totalorder %s27, 1
      %s402 = scalar_select %p401, %s27, 1
      %p403 = scmp.lt.s32.totalorder %s28, 0
      %s404 = scalar_select %p403, %s28, 0
      %s405 = sadd.s32 %s404, %s402
      %s406 = smul.addr %s405, 8
      %s407 = scalar_lea.vmem %s1, %s406
      %p408 = pneg %p84
      %p409 = pneg %p81
      %p410 = pneg %p105
      %p411 = pneg %p102
      %p412 = pneg %p126
      %p413 = pneg %p123
      %p414 = pneg %p147
      %p415 = pneg %p144
      %p416 = pneg %p168
      %p417 = pneg %p165
      %p418 = pneg %p189
      %p419 = pneg %p186
      %p420 = pneg %p210
      %p421 = pneg %p207
      %p422 = pneg %p231
      %p423 = pneg %p228
      %p424 = pneg %p252
      %p425 = pneg %p249
      %p426 = pneg %p273
      %p427 = pneg %p270
      %p428 = pneg %p294
      %p429 = pneg %p291
      %p430 = pneg %p322
      %p431 = pneg %p319
      %p432 = scmp.lt.s32.totalorder %s27, 1
      %s433 = scalar_select %p432, %s27, 1
      %p434 = scmp.lt.s32.totalorder %s28, 0
      %s435 = scalar_select %p434, %s28, 0
      %s436 = sadd.s32 %s435, %s433
      %s437 = smul.addr %s436, 4
      %s438 = scalar_lea.vmem %s12, %s437
      %p439 = scmp.lt.s32.totalorder %s27, 1
      %s440 = scalar_select %p439, %s27, 1
      %s441 = smul.addr %s440, 4
      %s442 = scalar_lea.vmem %s0, %s441
      %p443 = scmp.lt.s32.totalorder %s27, 1
      %s444 = scalar_select %p443, %s27, 1
      %p445 = scmp.lt.s32.totalorder %s28, 0
      %s446 = scalar_select %p445, %s28, 0
      %s447 = sadd.s32 %s446, %s444
      %s448 = smul.addr %s447, 8
      %s449 = scalar_lea.vmem %s1, %s448
      %p450 = scmp.lt.s32.totalorder %s27, 1
      %s451 = scalar_select %p450, %s27, 1
      %p452 = scmp.lt.s32.totalorder %s28, 0
      %s453 = scalar_select %p452, %s28, 0
      %s454 = sadd.s32 %s453, %s451
      %s455 = smul.addr %s454, 4
      %s456 = scalar_lea.vmem %s12, %s455
      %v458 = vld [vmem:[%s442] sm:$0xf]
      %s459 = smul.u32 %s28, 8
      %s460 = sshra.s32 %s459, 3
      %s461 = sand.u32 %s459, 7
      %s462 = smul.addr %s460, 4
      %s463 = scalar_lea.vmem %s442, %s462
      %v464 = vld [vmem:[%s463] sm:$0xf]
      %v465 = vld [vmem:[%s449] sm:$0xff]
      %vm466 = vcmp.gt.f32.partialorder %v465, 0.5
      %v467 = vlaneseq
      %v468 = vshrl.u32 %v467, 7
      %v469 = vstv %s459
      %v470 = vadd.s32 %v468, %v469
      %v471 = vlaneseq
      %v472 = vand.u32 %v471, 127
      %vm473 = vcmp.le.s32.totalorder %v472, %v470
      %v474 = vsel %vm466, 1, 0
      %475 = vset.pattern.permute.xlu0 0
      %476 = vperm.xlu0 %475, %v474
      %v477 = vpop.permute.xlu0 %476
      %vm478 = vcmp.eq.s32.totalorder %v477, 1
      %vm479 = vmand %vm478, %vm473
      %vm480 = vcmask 261120
      %481 = vst.msk [vmem:[#allocation2] sm:$0xff] %vm480, 0.0
      loop: start=0, step=1, limit=4
      $region69: #{seq2seq_forward.9} parent=67 // loop_pre_header
        _
      $region70: #{seq2seq_forward.9} parent=67 // loop_header
        %s483 = sphi 0, %s487
        %p484 = scmp.ge.s32.totalorder %s483, 4
      $region71: #{seq2seq_forward.9} parent=67 // loop_header_branch
        %486 = sbr.rel (%p484) target = $region75
      $region72: #{seq2seq_forward.9} parent=67 // loop_body
        %s488 = smul.u32 %s483, 4
        %s489 = smul.addr %s488, 4
        %s490 = scalar_lea.vmem %s2, %s489
        %v491 = vld [vmem:[%s490] sm:$0xf]
        %v492 = vld [vmem:[%s490 + $0x4] sm:$0xf]
        %v493 = vld [vmem:[%s490 + $0x8] sm:$0xf]
        %v494 = vld [vmem:[%s490 + $0xc] sm:$0xf]
        %s495 = scalar_lea.vmem %s3, %s483
        %v496 = vld [vmem:[%s495] sm:$0x1]
        %v498 = vlaneseq
        %v499 = vshrl.u32 %v498, 7
        %v500 = vsub.s32 0, %v499
        %v501 = vrot.slane %v496, %v500
        %v507 = vunpack.c.l.b16 %v491
        %v508 = vunpack.c.l.b16 %v492
        %v509 = vunpack.c.l.b16 %v493
        %v510 = vunpack.c.l.b16 %v494
        %v511 = vpack.c.b16 %v508, %v507
        %v512 = vpack.c.b16 %v510, %v509
        %v516 = vsel %vm480, %v464, 0
        %518 = vmatprep.subr.bf16.mxu0 0
        %519 = vmatpush1.bf16.msra.mxu0 %v511
        %520 = vmatprep.subr.bf16.mxu0 0
        %521 = vmatpush1.bf16.msra.mxu0 %v512
        %522 = vmatprep.subr.bf16.mxu0 0
        %523 = vmatpush1.bf16.msra.mxu0 0
        %524 = vmatprep.subr.bf16.mxu0 0
        %525 = vmatpush1.bf16.msra.mxu0 0
        %526 = vmatprep.subr.bf16.mxu0 0
        %527 = vmatpush1.bf16.msra.mxu0 0
        %528 = vmatprep.subr.bf16.mxu0 0
        %529 = vmatpush1.bf16.msra.mxu0 0
        %530 = vmatprep.subr.bf16.mxu0 0
        %531 = vmatpush1.bf16.msra.mxu0 0
        %532 = vmatprep.subr.bf16.mxu0 0
        %533 = vmatpush1.bf16.msra.mxu0 0
        %534 = vmatprep.subr.bf16.mxu0 0
        %535 = vmatpush1.bf16.msra.mxu0 0
        %536 = vmatprep.subr.bf16.mxu0 0
        %537 = vmatpush1.bf16.msra.mxu0 0
        %538 = vmatprep.subr.bf16.mxu0 0
        %539 = vmatpush1.bf16.msra.mxu0 0
        %540 = vmatprep.subr.bf16.mxu0 0
        %541 = vmatpush1.bf16.msra.mxu0 0
        %542 = vmatprep.subr.bf16.mxu0 0
        %543 = vmatpush1.bf16.msra.mxu0 0
        %544 = vmatprep.subr.bf16.mxu0 0
        %545 = vmatpush1.bf16.msra.mxu0 0
        %546 = vmatprep.subr.bf16.mxu0 0
        %547 = vmatpush1.bf16.msra.mxu0 0
        %548 = vmatprep.subr.bf16.mxu0 0
        %549 = vmatpush1.bf16.msra.mxu0 0
        %550 = vmatprep.mubr.bf16.mxu0 0
        %551 = vmatmul.mubr.bf16.gmra.mrb[0].mxu0 %v516
        %v552 = vpop.f32.mrb[0].mxu0
        %v553 = vadd.f32 %v501, %v552
        %v554 = vpop.f32.mrb[0].mxu0
        %v555 = vpop.f32.mrb[0].mxu0
        %v556 = vpop.f32.mrb[0].mxu0
        %557 = vdwg.mxu0
        %s558 = smul.addr %s488, 4
        %s559 = scalar_lea.vmem %s4, %s558
        %v560 = vld [vmem:[%s559] sm:$0xf]
        %v561 = vld [vmem:[%s559 + $0x4] sm:$0xf]
        %v562 = vld [vmem:[%s559 + $0x8] sm:$0xf]
        %v563 = vld [vmem:[%s559 + $0xc] sm:$0xf]
        %s564 = scalar_lea.vmem %s5, %s483
        %v565 = vld [vmem:[%s564] sm:$0x1]
        %v567 = vlaneseq
        %v568 = vshrl.u32 %v567, 7
        %v569 = vsub.s32 0, %v568
        %v570 = vrot.slane %v565, %v569
        %v576 = vunpack.c.l.b16 %v560
        %v577 = vunpack.c.l.b16 %v561
        %v578 = vunpack.c.l.b16 %v562
        %v579 = vunpack.c.l.b16 %v563
        %v580 = vpack.c.b16 %v577, %v576
        %v581 = vpack.c.b16 %v579, %v578
        %v585 = vsel %vm480, %v458, 0
        %587 = vmatprep.subr.bf16.mxu0 0
        %588 = vmatpush1.bf16.msra.mxu0 %v580
        %589 = vmatprep.subr.bf16.mxu0 0
        %590 = vmatpush1.bf16.msra.mxu0 %v581
        %591 = vmatprep.subr.bf16.mxu0 0
        %592 = vmatpush1.bf16.msra.mxu0 0
        %593 = vmatprep.subr.bf16.mxu0 0
        %594 = vmatpush1.bf16.msra.mxu0 0
        %595 = vmatprep.subr.bf16.mxu0 0
        %596 = vmatpush1.bf16.msra.mxu0 0
        %597 = vmatprep.subr.bf16.mxu0 0
        %598 = vmatpush1.bf16.msra.mxu0 0
        %599 = vmatprep.subr.bf16.mxu0 0
        %600 = vmatpush1.bf16.msra.mxu0 0
        %601 = vmatprep.subr.bf16.mxu0 0
        %602 = vmatpush1.bf16.msra.mxu0 0
        %603 = vmatprep.subr.bf16.mxu0 0
        %604 = vmatpush1.bf16.msra.mxu0 0
        %605 = vmatprep.subr.bf16.mxu0 0
        %606 = vmatpush1.bf16.msra.mxu0 0
        %607 = vmatprep.subr.bf16.mxu0 0
        %608 = vmatpush1.bf16.msra.mxu0 0
        %609 = vmatprep.subr.bf16.mxu0 0
        %610 = vmatpush1.bf16.msra.mxu0 0
        %611 = vmatprep.subr.bf16.mxu0 0
        %612 = vmatpush1.bf16.msra.mxu0 0
        %613 = vmatprep.subr.bf16.mxu0 0
        %614 = vmatpush1.bf16.msra.mxu0 0
        %615 = vmatprep.subr.bf16.mxu0 0
        %616 = vmatpush1.bf16.msra.mxu0 0
        %617 = vmatprep.subr.bf16.mxu0 0
        %618 = vmatpush1.bf16.msra.mxu0 0
        %619 = vmatprep.mubr.bf16.mxu0 0
        %620 = vmatmul.mubr.bf16.gmra.mrb[0].mxu0 %v585
        %v621 = vpop.f32.mrb[0].mxu0
        %v622 = vadd.f32 %v570, %v621
        %v623 = vpop.f32.mrb[0].mxu0
        %v624 = vpop.f32.mrb[0].mxu0
        %v625 = vpop.f32.mrb[0].mxu0
        %626 = vdwg.mxu0
        %s627 = smul.addr %s488, 4
        %s628 = scalar_lea.vmem %s6, %s627
        %v629 = vld [vmem:[%s628] sm:$0xf]
        %v630 = vld [vmem:[%s628 + $0x4] sm:$0xf]
        %v631 = vld [vmem:[%s628 + $0x8] sm:$0xf]
        %v632 = vld [vmem:[%s628 + $0xc] sm:$0xf]
        %s633 = scalar_lea.vmem %s7, %s483
        %v634 = vld [vmem:[%s633] sm:$0x1]
        %v636 = vlaneseq
        %v637 = vshrl.u32 %v636, 7
        %v638 = vsub.s32 0, %v637
        %v639 = vrot.slane %v634, %v638
        %v645 = vunpack.c.l.b16 %v629
        %v646 = vunpack.c.l.b16 %v630
        %v647 = vunpack.c.l.b16 %v631
        %v648 = vunpack.c.l.b16 %v632
        %v649 = vpack.c.b16 %v646, %v645
        %v650 = vpack.c.b16 %v648, %v647
        %653 = vmatprep.subr.bf16.mxu0 0
        %654 = vmatpush1.bf16.msra.mxu0 %v649
        %655 = vmatprep.subr.bf16.mxu0 0
        %656 = vmatpush1.bf16.msra.mxu0 %v650
        %657 = vmatprep.subr.bf16.mxu0 0
        %658 = vmatpush1.bf16.msra.mxu0 0
        %659 = vmatprep.subr.bf16.mxu0 0
        %660 = vmatpush1.bf16.msra.mxu0 0
        %661 = vmatprep.subr.bf16.mxu0 0
        %662 = vmatpush1.bf16.msra.mxu0 0
        %663 = vmatprep.subr.bf16.mxu0 0
        %664 = vmatpush1.bf16.msra.mxu0 0
        %665 = vmatprep.subr.bf16.mxu0 0
        %666 = vmatpush1.bf16.msra.mxu0 0
        %667 = vmatprep.subr.bf16.mxu0 0
        %668 = vmatpush1.bf16.msra.mxu0 0
        %669 = vmatprep.subr.bf16.mxu0 0
        %670 = vmatpush1.bf16.msra.mxu0 0
        %671 = vmatprep.subr.bf16.mxu0 0
        %672 = vmatpush1.bf16.msra.mxu0 0
        %673 = vmatprep.subr.bf16.mxu0 0
        %674 = vmatpush1.bf16.msra.mxu0 0
        %675 = vmatprep.subr.bf16.mxu0 0
        %676 = vmatpush1.bf16.msra.mxu0 0
        %677 = vmatprep.subr.bf16.mxu0 0
        %678 = vmatpush1.bf16.msra.mxu0 0
        %679 = vmatprep.subr.bf16.mxu0 0
        %680 = vmatpush1.bf16.msra.mxu0 0
        %681 = vmatprep.subr.bf16.mxu0 0
        %682 = vmatpush1.bf16.msra.mxu0 0
        %683 = vmatprep.subr.bf16.mxu0 0
        %684 = vmatpush1.bf16.msra.mxu0 0
        %685 = vmatprep.mubr.bf16.mxu0 0
        %686 = vmatmul.mubr.bf16.gmra.mrb[0].mxu0 %v585
        %v687 = vpop.f32.mrb[0].mxu0
        %v688 = vadd.f32 %v639, %v687
        %v689 = vpop.f32.mrb[0].mxu0
        %v690 = vpop.f32.mrb[0].mxu0
        %v691 = vpop.f32.mrb[0].mxu0
        %692 = vdwg.mxu0
        %v693 = vpack.c.bf16 %v553, %v553
        %v694 = vpack.c.bf16 %v622, %v622
        %vm695 = vcmask 64512
        %v697 = vsel %vm695, %v693, 0
        %v700 = vsel %vm695, %v694, 0
        %702 = vmatprep.subr.bf16.mxu0 0
        %703 = vmatpush1.bf16.xpose.msra.mxu0 %v700
        %704 = vmatprep.subr.bf16.mxu0 0
        %705 = vmatpush1.bf16.xpose.msra.mxu0 0
        %706 = vmatprep.subr.bf16.mxu0 0
        %707 = vmatpush1.bf16.xpose.msra.mxu0 0
        %708 = vmatprep.subr.bf16.mxu0 0
        %709 = vmatpush1.bf16.xpose.msra.mxu0 0
        %710 = vmatprep.subr.bf16.mxu0 0
        %711 = vmatpush1.bf16.xpose.msra.mxu0 0
        %712 = vmatprep.subr.bf16.mxu0 0
        %713 = vmatpush1.bf16.xpose.msra.mxu0 0
        %714 = vmatprep.subr.bf16.mxu0 0
        %715 = vmatpush1.bf16.xpose.msra.mxu0 0
        %716 = vmatprep.subr.bf16.mxu0 0
        %717 = vmatpush1.bf16.xpose.msra.mxu0 0
        %718 = vmatprep.subr.bf16.mxu0 0
        %719 = vmatpush1.bf16.xpose.msra.mxu0 0
        %720 = vmatprep.subr.bf16.mxu0 0
        %721 = vmatpush1.bf16.xpose.msra.mxu0 0
        %722 = vmatprep.subr.bf16.mxu0 0
        %723 = vmatpush1.bf16.xpose.msra.mxu0 0
        %724 = vmatprep.subr.bf16.mxu0 0
        %725 = vmatpush1.bf16.xpose.msra.mxu0 0
        %726 = vmatprep.subr.bf16.mxu0 0
        %727 = vmatpush1.bf16.xpose.msra.mxu0 0
        %728 = vmatprep.subr.bf16.mxu0 0
        %729 = vmatpush1.bf16.xpose.msra.mxu0 0
        %730 = vmatprep.subr.bf16.mxu0 0
        %731 = vmatpush1.bf16.xpose.msra.mxu0 0
        %732 = vmatprep.subr.bf16.mxu0 0
        %733 = vmatpush1.bf16.xpose.msra.mxu0 0
        %734 = vmatprep.mubr.bf16.mxu0 0
        %735 = vmatmul.mubr.bf16.gmra.mrb[0].mxu0 %v697
        %v736 = vpop.f32.mrb[0].mxu0
        %v737 = vadd.f32 0.0, %v736
        %v738 = vpop.f32.mrb[0].mxu0
        %v739 = vpop.f32.mrb[0].mxu0
        %v740 = vpop.f32.mrb[0].mxu0
        %741 = vdwg.mxu0
        %v742 = vmul.f32 %v737, 0.35355338
        %v743 = vsel %vm479, %v742, -1e+10
        %v744 = vsel %vm695, %v743, -inf
        %745 = vmax.xlane.f32.xlu0 %v744
        %v746 = vpop.xlane.xlu0 %745
        %v747 = vsub.f32 %v743, %v746
        %v748 = vmul.f32 %v747, 1.442695
        %v749 = vpow.pop %v748
        %v750 = vsel %vm695, %v749, 0.0
        %751 = vadd.xlane.f32.xlu0 %v750
        %v752 = vpop.xlane.xlu0 %751
        %v753 = vrcp.pop %v752
        %v754 = vmul.f32 %v749, %v753
        %v755 = vpack.c.bf16 %v754, %v754
        %v756 = vpack.c.bf16 %v688, %v688
        %v758 = vsel %vm695, %v755, 0
        %vm760 = vcmask 1043456
        %v762 = vsel %vm760, %v756, 0
        %764 = vmatprep.subr.bf16.mxu0 0
        %765 = vmatpush1.bf16.msra.mxu0 %v762
        %766 = vmatprep.subr.bf16.mxu0 0
        %767 = vmatpush1.bf16.msra.mxu0 0
        %768 = vmatprep.subr.bf16.mxu0 0
        %769 = vmatpush1.bf16.msra.mxu0 0
        %770 = vmatprep.subr.bf16.mxu0 0
        %771 = vmatpush1.bf16.msra.mxu0 0
        %772 = vmatprep.subr.bf16.mxu0 0
        %773 = vmatpush1.bf16.msra.mxu0 0
        %774 = vmatprep.subr.bf16.mxu0 0
        %775 = vmatpush1.bf16.msra.mxu0 0
        %776 = vmatprep.subr.bf16.mxu0 0
        %777 = vmatpush1.bf16.msra.mxu0 0
        %778 = vmatprep.subr.bf16.mxu0 0
        %779 = vmatpush1.bf16.msra.mxu0 0
        %780 = vmatprep.subr.bf16.mxu0 0
        %781 = vmatpush1.bf16.msra.mxu0 0
        %782 = vmatprep.subr.bf16.mxu0 0
        %783 = vmatpush1.bf16.msra.mxu0 0
        %784 = vmatprep.subr.bf16.mxu0 0
        %785 = vmatpush1.bf16.msra.mxu0 0
        %786 = vmatprep.subr.bf16.mxu0 0
        %787 = vmatpush1.bf16.msra.mxu0 0
        %788 = vmatprep.subr.bf16.mxu0 0
        %789 = vmatpush1.bf16.msra.mxu0 0
        %790 = vmatprep.subr.bf16.mxu0 0
        %791 = vmatpush1.bf16.msra.mxu0 0
        %792 = vmatprep.subr.bf16.mxu0 0
        %793 = vmatpush1.bf16.msra.mxu0 0
        %794 = vmatprep.subr.bf16.mxu0 0
        %795 = vmatpush1.bf16.msra.mxu0 0
        %796 = vmatprep.mubr.bf16.mxu0 0
        %797 = vmatmul.mubr.bf16.gmra.mrb[0].mxu0 %v758
        %v798 = vpop.f32.mrb[0].mxu0
        %v799 = vadd.f32 0.0, %v798
        %v800 = vpop.f32.mrb[0].mxu0
        %v801 = vpop.f32.mrb[0].mxu0
        %v802 = vpop.f32.mrb[0].mxu0
        %803 = vdwg.mxu0
        %v804 = vld [vmem:[#allocation2] sm:$0xff]
        %v805 = vpack.c.bf16 %v799, %v799
        %s806 = smul.addr %s483, 4
        %s807 = scalar_lea.vmem %s8, %s806
        %v808 = vld [vmem:[%s807] sm:$0xf]
        %v810 = vsel %vm695, %v805, 0
        %v813 = vsel %vm760, %v808, 0
        %815 = vmatprep.subr.bf16.mxu0 0
        %816 = vmatpush1.bf16.msra.mxu0 %v813
        %817 = vmatprep.subr.bf16.mxu0 0
        %818 = vmatpush1.bf16.msra.mxu0 0
        %819 = vmatprep.subr.bf16.mxu0 0
        %820 = vmatpush1.bf16.msra.mxu0 0
        %821 = vmatprep.subr.bf16.mxu0 0
        %822 = vmatpush1.bf16.msra.mxu0 0
        %823 = vmatprep.subr.bf16.mxu0 0
        %824 = vmatpush1.bf16.msra.mxu0 0
        %825 = vmatprep.subr.bf16.mxu0 0
        %826 = vmatpush1.bf16.msra.mxu0 0
        %827 = vmatprep.subr.bf16.mxu0 0
        %828 = vmatpush1.bf16.msra.mxu0 0
        %829 = vmatprep.subr.bf16.mxu0 0
        %830 = vmatpush1.bf16.msra.mxu0 0
        %831 = vmatprep.subr.bf16.mxu0 0
        %832 = vmatpush1.bf16.msra.mxu0 0
        %833 = vmatprep.subr.bf16.mxu0 0
        %834 = vmatpush1.bf16.msra.mxu0 0
        %835 = vmatprep.subr.bf16.mxu0 0
        %836 = vmatpush1.bf16.msra.mxu0 0
        %837 = vmatprep.subr.bf16.mxu0 0
        %838 = vmatpush1.bf16.msra.mxu0 0
        %839 = vmatprep.subr.bf16.mxu0 0
        %840 = vmatpush1.bf16.msra.mxu0 0
        %841 = vmatprep.subr.bf16.mxu0 0
        %842 = vmatpush1.bf16.msra.mxu0 0
        %843 = vmatprep.subr.bf16.mxu0 0
        %844 = vmatpush1.bf16.msra.mxu0 0
        %845 = vmatprep.subr.bf16.mxu0 0
        %846 = vmatpush1.bf16.msra.mxu0 0
        %847 = vmatprep.mubr.bf16.mxu0 0
        %848 = vmatmul.mubr.bf16.gmra.mrb[0].mxu0 %v810
        %v849 = vpop.f32.mrb[0].mxu0
        %v850 = vadd.f32 0.0, %v849
        %v851 = vpop.f32.mrb[0].mxu0
        %v852 = vpop.f32.mrb[0].mxu0
        %v853 = vpop.f32.mrb[0].mxu0
        %854 = vdwg.mxu0
        %v855 = vadd.f32 %v804, %v850
        %856 = vst.msk [vmem:[#allocation2] sm:$0xff] %vm480, %v855
      $region73: #{seq2seq_forward.9} parent=67 // loop_footer
        %s487 = sadd.s32 1, %s483
      $region74: #{seq2seq_forward.9} parent=67 // loop_footer_branch
        %482 = sbr.rel target = $region70
      $region75: #{seq2seq_forward.9} parent=67 // loop_exit
        _
      %v857 = vld [vmem:[#allocation2] sm:$0xff]
      %v858 = vld [vmem:[%s9] sm:$0x1]
      %v860 = vlaneseq
      %v861 = vshrl.u32 %v860, 7
      %v862 = vsub.s32 0, %v861
      %v863 = vrot.slane %v858, %v862
      %v865 = vadd.f32 %v857, %v863
      %v866 = vunpack.c.l.bf16 %v464
      %v867 = vadd.f32 %v865, %v866
      %v868 = vsel %vm480, %v867, 0.0
      %869 = vadd.xlane.f32.xlu0 %v868
      %v870 = vpop.xlane.xlu0 %869
      %v871 = vrcp.pop 32.0
      %v872 = vmul.f32 %v870, %v871
      %v873 = vsub.f32 %v867, %v872
      %v874 = vmul.f32 %v873, %v873
      %v875 = vsel %vm480, %v874, 0.0
      %876 = vadd.xlane.f32.xlu0 %v875
      %v877 = vpop.xlane.xlu0 %876
      %v878 = vmul.f32 %v877, %v871
      %v879 = vadd.f32 %v878, 1e-05
      %v880 = vrsqrt.pop %v879
      %v881 = vmul.f32 %v873, %v880
      %v882 = vld [vmem:[%s10] sm:$0x1]
      %v884 = vlaneseq
      %v885 = vshrl.u32 %v884, 7
      %v886 = vsub.s32 0, %v885
      %v887 = vrot.slane %v882, %v886
      %v889 = vmul.f32 %v881, %v887
      %v890 = vld [vmem:[%s11] sm:$0x1]
      %v892 = vlaneseq
      %v893 = vshrl.u32 %v892, 7
      %v894 = vsub.s32 0, %v893
      %v895 = vrot.slane %v890, %v894
      %v897 = vadd.f32 %v889, %v895
      %v898 = vpack.c.bf16 %v897, %v897
      %vm899 = vcmask 257024
      %900 = vst.msk [vmem:[%s456] sm:$0xf] %vm899, %v898
      %p901 = scmp.lt.s32.totalorder %s27, 1
      %s902 = scalar_select %p901, %s27, 1
      %p903 = scmp.lt.s32.totalorder %s28, 0
      %s904 = scalar_select %p903, %s28, 0
      %s905 = sadd.s32 %s904, %s902
      %s906 = smul.addr %s905, 4
      %s907 = scalar_lea.vmem %s12, %s906
      // Predicated region
      $region76: #{seq2seq_forward.9} parent=67 // pred_check
        %p908 = pneg %p319
      $region77: #{seq2seq_forward.9} parent=67 // pred_check_branch
        %910 = sbr.rel (%p908) target = $region79
      $region78: #{seq2seq_forward.9} parent=67 // pred_region
        _
      $region79: #{seq2seq_forward.9} parent=67 // pred_fallthru
        _
    $region68: #{seq2seq_forward.9} parent=5 // pred_fallthru
      _
    %p911 = scmp.le.s32.totalorder 2, %s18
    // Predicated region
    $region80: #{seq2seq_forward.9} parent=5 // pred_check
      %p912 = pneg %p911
    $region81: #{seq2seq_forward.9} parent=5 // pred_check_branch
      %914 = sbr.rel (%p912) target = $region83
    $region82: #{seq2seq_forward.9} parent=5 // pred_region
      %s915 = ssub.s32 %s18, 2
      // Predicated region
      $region84: #{seq2seq_forward.9} parent=82 // pred_check
        %p916 = pneg %p325
      $region85: #{seq2seq_forward.9} parent=82 // pred_check_branch
        %918 = sbr.rel (%p916) target = $region87
      $region86: #{seq2seq_forward.9} parent=82 // pred_region
        %p919 = scmp.lt.s32.totalorder %s29, 1
        %s920 = scalar_select %p919, %s29, 1
        %p921 = scmp.lt.s32.totalorder %s30, 0
        %s922 = scalar_select %p921, %s30, 0
        %s923 = sadd.s32 %s922, %s920
        %s924 = smul.addr %s923, 4
        %s925 = scalar_lea.vmem %s12, %s924
      $region87: #{seq2seq_forward.9} parent=82 // pred_fallthru
        _
    $region83: #{seq2seq_forward.9} parent=5 // pred_fallthru
      _
  $region6: #{seq2seq_forward.9} parent=0 // loop_footer
    %s22 = sadd.s32 1, %s18
  $region7: #{seq2seq_forward.9} parent=0 // loop_footer_branch
    %17 = sbr.rel target = $region3
  $region8: #{seq2seq_forward.9} parent=0 // loop_exit
    _

// kernel: seq2seq_forward.10
$region0: #{seq2seq_forward.10}
  #allocation0 [shape = 'u32[]', space=smem, size = 0x4, offset = 0x4, fixed_abs, tag = 'smem constant byte address 0x4 - core index']
  #allocation1 [shape = 'u32[144,128]{1,0:T(1,128)}', space=vmem, size = 0x12000, scoped, tag = 'internal scratch']
  #allocation2 [shape = 'f32[8,32]{1,0:T(8,128)}', space=vmem, size = 0x1000, scoped, tag = 'scratch operand']
  %s0 = inlined_call_operand.vmem [shape: bf16[2,8,32], index: 0, kind: input, shape index: {}]
  %s1 = inlined_call_operand.vmem [shape: bf16[2,8,32], index: 1, kind: input, shape index: {}]
  %s2 = inlined_call_operand.vmem [shape: f32[2,8,1], index: 2, kind: input, shape index: {}]
  %s3 = inlined_call_operand.vmem [shape: bf16[4,32,8], index: 3, kind: input, shape index: {}]
  %s4 = inlined_call_operand.vmem [shape: f32[4,1,8], index: 4, kind: input, shape index: {}]
  %s5 = inlined_call_operand.vmem [shape: bf16[4,32,8], index: 5, kind: input, shape index: {}]
  %s6 = inlined_call_operand.vmem [shape: f32[4,1,8], index: 6, kind: input, shape index: {}]
  %s7 = inlined_call_operand.vmem [shape: bf16[4,32,8], index: 7, kind: input, shape index: {}]
  %s8 = inlined_call_operand.vmem [shape: f32[4,1,8], index: 8, kind: input, shape index: {}]
  %s9 = inlined_call_operand.vmem [shape: bf16[4,8,32], index: 9, kind: input, shape index: {}]
  %s10 = inlined_call_operand.vmem [shape: f32[1,32], index: 10, kind: input, shape index: {}]
  %s11 = inlined_call_operand.vmem [shape: f32[1,32], index: 11, kind: input, shape index: {}]
  %s12 = inlined_call_operand.vmem [shape: f32[1,32], index: 12, kind: input, shape index: {}]
  %s13 = inlined_call_operand.vmem [shape: bf16[32,64], index: 13, kind: input, shape index: {}]
  %s14 = inlined_call_operand.vmem [shape: f32[1,64], index: 14, kind: input, shape index: {}]
  %s15 = inlined_call_operand.vmem [shape: bf16[64,32], index: 15, kind: input, shape index: {}]
  %s16 = inlined_call_operand.vmem [shape: f32[1,32], index: 16, kind: input, shape index: {}]
  %s17 = inlined_call_operand.vmem [shape: f32[1,32], index: 17, kind: input, shape index: {}]
  %s18 = inlined_call_operand.vmem [shape: f32[1,32], index: 18, kind: input, shape index: {}]
  %s19 = inlined_call_operand.vmem [shape: bf16[2,8,32], index: 19, kind: output, shape index: {}]
  %s20 = sld [smem:[#allocation0]]
  $region116: #{seq2seq_forward.10} parent=0
    _
  %s22 = ssub.s32 1, %s20
  %s23 = scalar_select 0, %s22, %s20
  loop: start=0, step=1, limit=4
  $region2: #{seq2seq_forward.10} parent=0 // loop_pre_header
    _
  $region3: #{seq2seq_forward.10} parent=0 // loop_header
    %s25 = sphi 0, %s29
    %p26 = scmp.ge.s32.totalorder %s25, 4
    %s32 = sphi 0, %s44
    %s33 = sphi 0, %s40
    %s34 = sphi 0, %s32
    %s35 = sphi 0, %s33
    %s36 = sphi 0, %s34
    %s37 = sphi 0, %s35
    %s49 = sphi 0, %s51
    %s52 = sphi 0, %s49
    %s53 = sphi 0, %s52
    %s69 = sphi 0, %s53
    %s75 = sphi 0, %s77
    %s78 = sphi 0, %s75
    %s79 = sphi 0, %s78
    %s95 = sphi 0, %s79
    %s103 = sphi 0, %s105
    %s106 = sphi 0, %s103
    %s107 = sphi 0, %s106
    %s123 = sphi 0, %s107
    %s127 = sphi 0, %s127
    %s129 = sphi 0, %s127
    %s130 = sphi 0, %s129
    %s144 = sphi 0, %s130
    %s148 = sphi 0, %s148
    %s150 = sphi 0, %s148
    %s151 = sphi 0, %s150
    %s165 = sphi 0, %s151
    %s169 = sphi 0, %s169
    %s171 = sphi 0, %s169
    %s172 = sphi 0, %s171
    %s186 = sphi 0, %s172
    %s190 = sphi 0, %s190
    %s192 = sphi 0, %s190
    %s193 = sphi 0, %s192
    %s207 = sphi 0, %s193
    %s211 = sphi 0, %s211
    %s213 = sphi 0, %s211
    %s214 = sphi 0, %s213
    %s228 = sphi 0, %s214
    %s232 = sphi 0, %s232
    %s234 = sphi 0, %s232
    %s235 = sphi 0, %s234
    %s249 = sphi 0, %s235
    %s253 = sphi 0, %s253
    %s255 = sphi 0, %s253
    %s256 = sphi 0, %s255
    %s270 = sphi 0, %s256
    %s274 = sphi 0, %s274
    %s276 = sphi 0, %s274
    %s277 = sphi 0, %s276
    %s291 = sphi 0, %s277
    %s295 = sphi 0, %s295
    %s297 = sphi 0, %s295
    %s298 = sphi 0, %s297
    %s312 = sphi 0, %s298
    %s316 = sphi 0, %s316
    %s318 = sphi 0, %s316
    %s319 = sphi 0, %s318
    %s333 = sphi 0, %s319
    %s337 = sphi 0, %s337
    %s339 = sphi 0, %s337
    %s340 = sphi 0, %s339
    %s354 = sphi 0, %s340
    %s358 = sphi 0, %s358
    %s360 = sphi 0, %s358
    %s361 = sphi 0, %s360
    %s375 = sphi 0, %s361
    %s379 = sphi 0, %s379
    %s381 = sphi 0, %s379
    %s382 = sphi 0, %s381
    %s396 = sphi 0, %s382
    %s400 = sphi 0, %s400
    %s402 = sphi 0, %s400
    %s403 = sphi 0, %s402
    %s417 = sphi 0, %s403
    %s421 = sphi 0, %s421
    %s423 = sphi 0, %s421
    %s424 = sphi 0, %s423
    %s438 = sphi 0, %s424
    %s442 = sphi 0, %s442
    %s444 = sphi 0, %s442
    %s445 = sphi 0, %s444
    %s459 = sphi 0, %s445
    %s467 = sphi 0, %s469
    %s470 = sphi 0, %s467
    %s471 = sphi 0, %s470
    %s487 = sphi 0, %s471
  $region4: #{seq2seq_forward.10} parent=0 // loop_header_branch
    %28 = sbr.rel (%p26) target = $region8
  $region5: #{seq2seq_forward.10} parent=0 // loop_body
    %s30 = ssub.s32 %s25, 1
    %s31 = ssub.s32 %s25, 2
    %s38 = sadd.s32 1, %s33
    %p39 = scmp.ge.s32.totalorder %s38, 1
    %s40 = scalar_select %p39, 0, %s38
    %s41 = sadd.s32 1, %s32
    %s42 = scalar_select %p39, %s41, %s32
    %p43 = scmp.ge.s32.totalorder %s42, 2
    %s44 = scalar_select %p43, 0, %s42
    %s45 = ssub.s32 %s32, %s44
    %s46 = ssub.s32 %s33, %s40
    %s47 = sor.u32 %s45, %s46
    %p48 = scmp.eq.s32.totalorder %s47, 0
    %s50 = sadd.s32 %s49, 1
    %s51 = scalar_select %p48, %s49, %s50
    %p54 = pneg %p48
    %p55 = scmp.eq.s32.totalorder %s25, 1
    %p56 = por %p54, %p55
    %p57 = scmp.ne.s32.totalorder %s49, %s52
    %p58 = scmp.eq.s32.totalorder %s25, 0
    %p59 = por %p57, %p58
    %p60 = scmp.ne.s32.totalorder %s49, %s52
    %p61 = scmp.eq.s32.totalorder %s30, 1
    %p62 = por %p60, %p61
    %p63 = scmp.ne.s32.totalorder %s52, %s53
    %p64 = scmp.eq.s32.totalorder %s30, 0
    %p65 = por %p63, %p64
    %p66 = scmp.ne.s32.totalorder %s52, %s53
    %p67 = scmp.eq.s32.totalorder %s31, 1
    %p68 = por %p66, %p67
    %p70 = scmp.ne.s32.totalorder %s53, %s69
    %p71 = scmp.eq.s32.totalorder %s31, 0
    %p72 = por %p70, %p71
    %s73 = ssub.s32 %s32, %s44
    %p74 = scmp.eq.s32.totalorder %s73, 0
    %s76 = sadd.s32 %s75, 1
    %s77 = scalar_select %p74, %s75, %s76
    %p80 = pneg %p74
    %p81 = scmp.eq.s32.totalorder %s25, 1
    %p82 = por %p80, %p81
    %p83 = scmp.ne.s32.totalorder %s75, %s78
    %p84 = scmp.eq.s32.totalorder %s25, 0
    %p85 = por %p83, %p84
    %p86 = scmp.ne.s32.totalorder %s75, %s78
    %p87 = scmp.eq.s32.totalorder %s30, 1
    %p88 = por %p86, %p87
    %p89 = scmp.ne.s32.totalorder %s78, %s79
    %p90 = scmp.eq.s32.totalorder %s30, 0
    %p91 = por %p89, %p90
    %p92 = scmp.ne.s32.totalorder %s78, %s79
    %p93 = scmp.eq.s32.totalorder %s31, 1
    %p94 = por %p92, %p93
    %p96 = scmp.ne.s32.totalorder %s79, %s95
    %p97 = scmp.eq.s32.totalorder %s31, 0
    %p98 = por %p96, %p97
    %s99 = ssub.s32 %s32, %s44
    %s100 = ssub.s32 %s33, %s40
    %s101 = sor.u32 %s99, %s100
    %p102 = scmp.eq.s32.totalorder %s101, 0
    %s104 = sadd.s32 %s103, 1
    %s105 = scalar_select %p102, %s103, %s104
    %p108 = pneg %p102
    %p109 = scmp.eq.s32.totalorder %s25, 1
    %p110 = por %p108, %p109
    %p111 = scmp.ne.s32.totalorder %s103, %s106
    %p112 = scmp.eq.s32.totalorder %s25, 0
    %p113 = por %p111, %p112
    %p114 = scmp.ne.s32.totalorder %s103, %s106
    %p115 = scmp.eq.s32.totalorder %s30, 1
    %p116 = por %p114, %p115
    %p117 = scmp.ne.s32.totalorder %s106, %s107
    %p118 = scmp.eq.s32.totalorder %s30, 0
    %p119 = por %p117, %p118
    %p120 = scmp.ne.s32.totalorder %s106, %s107
    %p121 = scmp.eq.s32.totalorder %s31, 1
    %p122 = por %p120, %p121
    %p124 = scmp.ne.s32.totalorder %s107, %s123
    %p125 = scmp.eq.s32.totalorder %s31, 0
    %p126 = por %p124, %p125
    %s128 = sadd.s32 %s127, 1
    %p131 = scmp.eq.s32.totalorder %s25, 1
    %p132 = scmp.ne.s32.totalorder %s127, %s129
    %p133 = scmp.eq.s32.totalorder %s25, 0
    %p134 = por %p132, %p133
    %p135 = scmp.ne.s32.totalorder %s127, %s129
    %p136 = scmp.eq.s32.totalorder %s30, 1
    %p137 = por %p135, %p136
    %p138 = scmp.ne.s32.totalorder %s129, %s130
    %p139 = scmp.eq.s32.totalorder %s30, 0
    %p140 = por %p138, %p139
    %p141 = scmp.ne.s32.totalorder %s129, %s130
    %p142 = scmp.eq.s32.totalorder %s31, 1
    %p143 = por %p141, %p142
    %p145 = scmp.ne.s32.totalorder %s130, %s144
    %p146 = scmp.eq.s32.totalorder %s31, 0
    %p147 = por %p145, %p146
    %s149 = sadd.s32 %s148, 1
    %p152 = scmp.eq.s32.totalorder %s25, 1
    %p153 = scmp.ne.s32.totalorder %s148, %s150
    %p154 = scmp.eq.s32.totalorder %s25, 0
    %p155 = por %p153, %p154
    %p156 = scmp.ne.s32.totalorder %s148, %s150
    %p157 = scmp.eq.s32.totalorder %s30, 1
    %p158 = por %p156, %p157
    %p159 = scmp.ne.s32.totalorder %s150, %s151
    %p160 = scmp.eq.s32.totalorder %s30, 0
    %p161 = por %p159, %p160
    %p162 = scmp.ne.s32.totalorder %s150, %s151
    %p163 = scmp.eq.s32.totalorder %s31, 1
    %p164 = por %p162, %p163
    %p166 = scmp.ne.s32.totalorder %s151, %s165
    %p167 = scmp.eq.s32.totalorder %s31, 0
    %p168 = por %p166, %p167
    %s170 = sadd.s32 %s169, 1
    %p173 = scmp.eq.s32.totalorder %s25, 1
    %p174 = scmp.ne.s32.totalorder %s169, %s171
    %p175 = scmp.eq.s32.totalorder %s25, 0
    %p176 = por %p174, %p175
    %p177 = scmp.ne.s32.totalorder %s169, %s171
    %p178 = scmp.eq.s32.totalorder %s30, 1
    %p179 = por %p177, %p178
    %p180 = scmp.ne.s32.totalorder %s171, %s172
    %p181 = scmp.eq.s32.totalorder %s30, 0
    %p182 = por %p180, %p181
    %p183 = scmp.ne.s32.totalorder %s171, %s172
    %p184 = scmp.eq.s32.totalorder %s31, 1
    %p185 = por %p183, %p184
    %p187 = scmp.ne.s32.totalorder %s172, %s186
    %p188 = scmp.eq.s32.totalorder %s31, 0
    %p189 = por %p187, %p188
    %s191 = sadd.s32 %s190, 1
    %p194 = scmp.eq.s32.totalorder %s25, 1
    %p195 = scmp.ne.s32.totalorder %s190, %s192
    %p196 = scmp.eq.s32.totalorder %s25, 0
    %p197 = por %p195, %p196
    %p198 = scmp.ne.s32.totalorder %s190, %s192
    %p199 = scmp.eq.s32.totalorder %s30, 1
    %p200 = por %p198, %p199
    %p201 = scmp.ne.s32.totalorder %s192, %s193
    %p202 = scmp.eq.s32.totalorder %s30, 0
    %p203 = por %p201, %p202
    %p204 = scmp.ne.s32.totalorder %s192, %s193
    %p205 = scmp.eq.s32.totalorder %s31, 1
    %p206 = por %p204, %p205
    %p208 = scmp.ne.s32.totalorder %s193, %s207
    %p209 = scmp.eq.s32.totalorder %s31, 0
    %p210 = por %p208, %p209
    %s212 = sadd.s32 %s211, 1
    %p215 = scmp.eq.s32.totalorder %s25, 1
    %p216 = scmp.ne.s32.totalorder %s211, %s213
    %p217 = scmp.eq.s32.totalorder %s25, 0
    %p218 = por %p216, %p217
    %p219 = scmp.ne.s32.totalorder %s211, %s213
    %p220 = scmp.eq.s32.totalorder %s30, 1
    %p221 = por %p219, %p220
    %p222 = scmp.ne.s32.totalorder %s213, %s214
    %p223 = scmp.eq.s32.totalorder %s30, 0
    %p224 = por %p222, %p223
    %p225 = scmp.ne.s32.totalorder %s213, %s214
    %p226 = scmp.eq.s32.totalorder %s31, 1
    %p227 = por %p225, %p226
    %p229 = scmp.ne.s32.totalorder %s214, %s228
    %p230 = scmp.eq.s32.totalorder %s31, 0
    %p231 = por %p229, %p230
    %s233 = sadd.s32 %s232, 1
    %p236 = scmp.eq.s32.totalorder %s25, 1
    %p237 = scmp.ne.s32.totalorder %s232, %s234
    %p238 = scmp.eq.s32.totalorder %s25, 0
    %p239 = por %p237, %p238
    %p240 = scmp.ne.s32.totalorder %s232, %s234
    %p241 = scmp.eq.s32.totalorder %s30, 1
    %p242 = por %p240, %p241
    %p243 = scmp.ne.s32.totalorder %s234, %s235
    %p244 = scmp.eq.s32.totalorder %s30, 0
    %p245 = por %p243, %p244
    %p246 = scmp.ne.s32.totalorder %s234, %s235
    %p247 = scmp.eq.s32.totalorder %s31, 1
    %p248 = por %p246, %p247
    %p250 = scmp.ne.s32.totalorder %s235, %s249
    %p251 = scmp.eq.s32.totalorder %s31, 0
    %p252 = por %p250, %p251
    %s254 = sadd.s32 %s253, 1
    %p257 = scmp.eq.s32.totalorder %s25, 1
    %p258 = scmp.ne.s32.totalorder %s253, %s255
    %p259 = scmp.eq.s32.totalorder %s25, 0
    %p260 = por %p258, %p259
    %p261 = scmp.ne.s32.totalorder %s253, %s255
    %p262 = scmp.eq.s32.totalorder %s30, 1
    %p263 = por %p261, %p262
    %p264 = scmp.ne.s32.totalorder %s255, %s256
    %p265 = scmp.eq.s32.totalorder %s30, 0
    %p266 = por %p264, %p265
    %p267 = scmp.ne.s32.totalorder %s255, %s256
    %p268 = scmp.eq.s32.totalorder %s31, 1
    %p269 = por %p267, %p268
    %p271 = scmp.ne.s32.totalorder %s256, %s270
    %p272 = scmp.eq.s32.totalorder %s31, 0
    %p273 = por %p271, %p272
    %s275 = sadd.s32 %s274, 1
    %p278 = scmp.eq.s32.totalorder %s25, 1
    %p279 = scmp.ne.s32.totalorder %s274, %s276
    %p280 = scmp.eq.s32.totalorder %s25, 0
    %p281 = por %p279, %p280
    %p282 = scmp.ne.s32.totalorder %s274, %s276
    %p283 = scmp.eq.s32.totalorder %s30, 1
    %p284 = por %p282, %p283
    %p285 = scmp.ne.s32.totalorder %s276, %s277
    %p286 = scmp.eq.s32.totalorder %s30, 0
    %p287 = por %p285, %p286
    %p288 = scmp.ne.s32.totalorder %s276, %s277
    %p289 = scmp.eq.s32.totalorder %s31, 1
    %p290 = por %p288, %p289
    %p292 = scmp.ne.s32.totalorder %s277, %s291
    %p293 = scmp.eq.s32.totalorder %s31, 0
    %p294 = por %p292, %p293
    %s296 = sadd.s32 %s295, 1
    %p299 = scmp.eq.s32.totalorder %s25, 1
    %p300 = scmp.ne.s32.totalorder %s295, %s297
    %p301 = scmp.eq.s32.totalorder %s25, 0
    %p302 = por %p300, %p301
    %p303 = scmp.ne.s32.totalorder %s295, %s297
    %p304 = scmp.eq.s32.totalorder %s30, 1
    %p305 = por %p303, %p304
    %p306 = scmp.ne.s32.totalorder %s297, %s298
    %p307 = scmp.eq.s32.totalorder %s30, 0
    %p308 = por %p306, %p307
    %p309 = scmp.ne.s32.totalorder %s297, %s298
    %p310 = scmp.eq.s32.totalorder %s31, 1
    %p311 = por %p309, %p310
    %p313 = scmp.ne.s32.totalorder %s298, %s312
    %p314 = scmp.eq.s32.totalorder %s31, 0
    %p315 = por %p313, %p314
    %s317 = sadd.s32 %s316, 1
    %p320 = scmp.eq.s32.totalorder %s25, 1
    %p321 = scmp.ne.s32.totalorder %s316, %s318
    %p322 = scmp.eq.s32.totalorder %s25, 0
    %p323 = por %p321, %p322
    %p324 = scmp.ne.s32.totalorder %s316, %s318
    %p325 = scmp.eq.s32.totalorder %s30, 1
    %p326 = por %p324, %p325
    %p327 = scmp.ne.s32.totalorder %s318, %s319
    %p328 = scmp.eq.s32.totalorder %s30, 0
    %p329 = por %p327, %p328
    %p330 = scmp.ne.s32.totalorder %s318, %s319
    %p331 = scmp.eq.s32.totalorder %s31, 1
    %p332 = por %p330, %p331
    %p334 = scmp.ne.s32.totalorder %s319, %s333
    %p335 = scmp.eq.s32.totalorder %s31, 0
    %p336 = por %p334, %p335
    %s338 = sadd.s32 %s337, 1
    %p341 = scmp.eq.s32.totalorder %s25, 1
    %p342 = scmp.ne.s32.totalorder %s337, %s339
    %p343 = scmp.eq.s32.totalorder %s25, 0
    %p344 = por %p342, %p343
    %p345 = scmp.ne.s32.totalorder %s337, %s339
    %p346 = scmp.eq.s32.totalorder %s30, 1
    %p347 = por %p345, %p346
    %p348 = scmp.ne.s32.totalorder %s339, %s340
    %p349 = scmp.eq.s32.totalorder %s30, 0
    %p350 = por %p348, %p349
    %p351 = scmp.ne.s32.totalorder %s339, %s340
    %p352 = scmp.eq.s32.totalorder %s31, 1
    %p353 = por %p351, %p352
    %p355 = scmp.ne.s32.totalorder %s340, %s354
    %p356 = scmp.eq.s32.totalorder %s31, 0
    %p357 = por %p355, %p356
    %s359 = sadd.s32 %s358, 1
    %p362 = scmp.eq.s32.totalorder %s25, 1
    %p363 = scmp.ne.s32.totalorder %s358, %s360
    %p364 = scmp.eq.s32.totalorder %s25, 0
    %p365 = por %p363, %p364
    %p366 = scmp.ne.s32.totalorder %s358, %s360
    %p367 = scmp.eq.s32.totalorder %s30, 1
    %p368 = por %p366, %p367
    %p369 = scmp.ne.s32.totalorder %s360, %s361
    %p370 = scmp.eq.s32.totalorder %s30, 0
    %p371 = por %p369, %p370
    %p372 = scmp.ne.s32.totalorder %s360, %s361
    %p373 = scmp.eq.s32.totalorder %s31, 1
    %p374 = por %p372, %p373
    %p376 = scmp.ne.s32.totalorder %s361, %s375
    %p377 = scmp.eq.s32.totalorder %s31, 0
    %p378 = por %p376, %p377
    %s380 = sadd.s32 %s379, 1
    %p383 = scmp.eq.s32.totalorder %s25, 1
    %p384 = scmp.ne.s32.totalorder %s379, %s381
    %p385 = scmp.eq.s32.totalorder %s25, 0
    %p386 = por %p384, %p385
    %p387 = scmp.ne.s32.totalorder %s379, %s381
    %p388 = scmp.eq.s32.totalorder %s30, 1
    %p389 = por %p387, %p388
    %p390 = scmp.ne.s32.totalorder %s381, %s382
    %p391 = scmp.eq.s32.totalorder %s30, 0
    %p392 = por %p390, %p391
    %p393 = scmp.ne.s32.totalorder %s381, %s382
    %p394 = scmp.eq.s32.totalorder %s31, 1
    %p395 = por %p393, %p394
    %p397 = scmp.ne.s32.totalorder %s382, %s396
    %p398 = scmp.eq.s32.totalorder %s31, 0
    %p399 = por %p397, %p398
    %s401 = sadd.s32 %s400, 1
    %p404 = scmp.eq.s32.totalorder %s25, 1
    %p405 = scmp.ne.s32.totalorder %s400, %s402
    %p406 = scmp.eq.s32.totalorder %s25, 0
    %p407 = por %p405, %p406
    %p408 = scmp.ne.s32.totalorder %s400, %s402
    %p409 = scmp.eq.s32.totalorder %s30, 1
    %p410 = por %p408, %p409
    %p411 = scmp.ne.s32.totalorder %s402, %s403
    %p412 = scmp.eq.s32.totalorder %s30, 0
    %p413 = por %p411, %p412
    %p414 = scmp.ne.s32.totalorder %s402, %s403
    %p415 = scmp.eq.s32.totalorder %s31, 1
    %p416 = por %p414, %p415
    %p418 = scmp.ne.s32.totalorder %s403, %s417
    %p419 = scmp.eq.s32.totalorder %s31, 0
    %p420 = por %p418, %p419
    %s422 = sadd.s32 %s421, 1
    %p425 = scmp.eq.s32.totalorder %s25, 1
    %p426 = scmp.ne.s32.totalorder %s421, %s423
    %p427 = scmp.eq.s32.totalorder %s25, 0
    %p428 = por %p426, %p427
    %p429 = scmp.ne.s32.totalorder %s421, %s423
    %p430 = scmp.eq.s32.totalorder %s30, 1
    %p431 = por %p429, %p430
    %p432 = scmp.ne.s32.totalorder %s423, %s424
    %p433 = scmp.eq.s32.totalorder %s30, 0
    %p434 = por %p432, %p433
    %p435 = scmp.ne.s32.totalorder %s423, %s424
    %p436 = scmp.eq.s32.totalorder %s31, 1
    %p437 = por %p435, %p436
    %p439 = scmp.ne.s32.totalorder %s424, %s438
    %p440 = scmp.eq.s32.totalorder %s31, 0
    %p441 = por %p439, %p440
    %s443 = sadd.s32 %s442, 1
    %p446 = scmp.eq.s32.totalorder %s25, 1
    %p447 = scmp.ne.s32.totalorder %s442, %s444
    %p448 = scmp.eq.s32.totalorder %s25, 0
    %p449 = por %p447, %p448
    %p450 = scmp.ne.s32.totalorder %s442, %s444
    %p451 = scmp.eq.s32.totalorder %s30, 1
    %p452 = por %p450, %p451
    %p453 = scmp.ne.s32.totalorder %s444, %s445
    %p454 = scmp.eq.s32.totalorder %s30, 0
    %p455 = por %p453, %p454
    %p456 = scmp.ne.s32.totalorder %s444, %s445
    %p457 = scmp.eq.s32.totalorder %s31, 1
    %p458 = por %p456, %p457
    %p460 = scmp.ne.s32.totalorder %s445, %s459
    %p461 = scmp.eq.s32.totalorder %s31, 0
    %p462 = por %p460, %p461
    %s463 = ssub.s32 %s32, %s44
    %s464 = ssub.s32 %s33, %s40
    %s465 = sor.u32 %s463, %s464
    %p466 = scmp.eq.s32.totalorder %s465, 0
    %s468 = sadd.s32 %s467, 1
    %s469 = scalar_select %p466, %s467, %s468
    %p472 = pneg %p466
    %p473 = scmp.eq.s32.totalorder %s25, 1
    %p474 = por %p472, %p473
    %p475 = scmp.ne.s32.totalorder %s467, %s470
    %p476 = scmp.eq.s32.totalorder %s25, 0
    %p477 = por %p475, %p476
    %p478 = scmp.ne.s32.totalorder %s467, %s470
    %p479 = scmp.eq.s32.totalorder %s30, 1
    %p480 = por %p478, %p479
    %p481 = scmp.ne.s32.totalorder %s470, %s471
    %p482 = scmp.eq.s32.totalorder %s30, 0
    %p483 = por %p481, %p482
    %p484 = scmp.ne.s32.totalorder %s470, %s471
    %p485 = scmp.eq.s32.totalorder %s31, 1
    %p486 = por %p484, %p485
    %p488 = scmp.ne.s32.totalorder %s471, %s487
    %p489 = scmp.eq.s32.totalorder %s31, 0
    %p490 = por %p488, %p489
    %p491 = scmp.le.s32.totalorder 1, %s25
    %p492 = scmp.lt.s32.totalorder %s25, 3
    %p493 = pnand %p491, %p492
    %p494 = pneg %p493
    // Predicated region
    $region9: #{seq2seq_forward.10} parent=5 // pred_check
      _
    $region10: #{seq2seq_forward.10} parent=5 // pred_check_branch
      %496 = sbr.rel (%p493) target = $region12
    $region11: #{seq2seq_forward.10} parent=5 // pred_region
      %s497 = ssub.s32 %s25, 1
      // Predicated region
      $region13: #{seq2seq_forward.10} parent=11 // pred_check
        %p498 = pneg %p140
      $region14: #{seq2seq_forward.10} parent=11 // pred_check_branch
        %500 = sbr.rel (%p498) target = $region16
      $region15: #{seq2seq_forward.10} parent=11 // pred_region
        _
      $region16: #{seq2seq_forward.10} parent=11 // pred_fallthru
        _
      // Predicated region
      $region17: #{seq2seq_forward.10} parent=11 // pred_check
        %p501 = pneg %p161
      $region18: #{seq2seq_forward.10} parent=11 // pred_check_branch
        %503 = sbr.rel (%p501) target = $region20
      $region19: #{seq2seq_forward.10} parent=11 // pred_region
        _
      $region20: #{seq2seq_forward.10} parent=11 // pred_fallthru
        _
      // Predicated region
      $region21: #{seq2seq_forward.10} parent=11 // pred_check
        %p504 = pneg %p182
      $region22: #{seq2seq_forward.10} parent=11 // pred_check_branch
        %506 = sbr.rel (%p504) target = $region24
      $region23: #{seq2seq_forward.10} parent=11 // pred_region
        _
      $region24: #{seq2seq_forward.10} parent=11 // pred_fallthru
        _
      // Predicated region
      $region25: #{seq2seq_forward.10} parent=11 // pred_check
        %p507 = pneg %p203
      $region26: #{seq2seq_forward.10} parent=11 // pred_check_branch
        %509 = sbr.rel (%p507) target = $region28
      $region27: #{seq2seq_forward.10} parent=11 // pred_region
        _
      $region28: #{seq2seq_forward.10} parent=11 // pred_fallthru
        _
      // Predicated region
      $region29: #{seq2seq_forward.10} parent=11 // pred_check
        %p510 = pneg %p224
      $region30: #{seq2seq_forward.10} parent=11 // pred_check_branch
        %512 = sbr.rel (%p510) target = $region32
      $region31: #{seq2seq_forward.10} parent=11 // pred_region
        _
      $region32: #{seq2seq_forward.10} parent=11 // pred_fallthru
        _
      // Predicated region
      $region33: #{seq2seq_forward.10} parent=11 // pred_check
        %p513 = pneg %p245
      $region34: #{seq2seq_forward.10} parent=11 // pred_check_branch
        %515 = sbr.rel (%p513) target = $region36
      $region35: #{seq2seq_forward.10} parent=11 // pred_region
        _
      $region36: #{seq2seq_forward.10} parent=11 // pred_fallthru
        _
      // Predicated region
      $region37: #{seq2seq_forward.10} parent=11 // pred_check
        %p516 = pneg %p266
      $region38: #{seq2seq_forward.10} parent=11 // pred_check_branch
        %518 = sbr.rel (%p516) target = $region40
      $region39: #{seq2seq_forward.10} parent=11 // pred_region
        _
      $region40: #{seq2seq_forward.10} parent=11 // pred_fallthru
        _
      // Predicated region
      $region41: #{seq2seq_forward.10} parent=11 // pred_check
        %p519 = pneg %p287
      $region42: #{seq2seq_forward.10} parent=11 // pred_check_branch
        %521 = sbr.rel (%p519) target = $region44
      $region43: #{seq2seq_forward.10} parent=11 // pred_region
        _
      $region44: #{seq2seq_forward.10} parent=11 // pred_fallthru
        _
      // Predicated region
      $region45: #{seq2seq_forward.10} parent=11 // pred_check
        %p522 = pneg %p308
      $region46: #{seq2seq_forward.10} parent=11 // pred_check_branch
        %524 = sbr.rel (%p522) target = $region48
      $region47: #{seq2seq_forward.10} parent=11 // pred_region
        _
      $region48: #{seq2seq_forward.10} parent=11 // pred_fallthru
        _
      // Predicated region
      $region49: #{seq2seq_forward.10} parent=11 // pred_check
        %p525 = pneg %p329
      $region50: #{seq2seq_forward.10} parent=11 // pred_check_branch
        %527 = sbr.rel (%p525) target = $region52
      $region51: #{seq2seq_forward.10} parent=11 // pred_region
        _
      $region52: #{seq2seq_forward.10} parent=11 // pred_fallthru
        _
      // Predicated region
      $region53: #{seq2seq_forward.10} parent=11 // pred_check
        %p528 = pneg %p350
      $region54: #{seq2seq_forward.10} parent=11 // pred_check_branch
        %530 = sbr.rel (%p528) target = $region56
      $region55: #{seq2seq_forward.10} parent=11 // pred_region
        _
      $region56: #{seq2seq_forward.10} parent=11 // pred_fallthru
        _
      // Predicated region
      $region57: #{seq2seq_forward.10} parent=11 // pred_check
        %p531 = pneg %p371
      $region58: #{seq2seq_forward.10} parent=11 // pred_check_branch
        %533 = sbr.rel (%p531) target = $region60
      $region59: #{seq2seq_forward.10} parent=11 // pred_region
        _
      $region60: #{seq2seq_forward.10} parent=11 // pred_fallthru
        _
      // Predicated region
      $region61: #{seq2seq_forward.10} parent=11 // pred_check
        %p534 = pneg %p392
      $region62: #{seq2seq_forward.10} parent=11 // pred_check_branch
        %536 = sbr.rel (%p534) target = $region64
      $region63: #{seq2seq_forward.10} parent=11 // pred_region
        _
      $region64: #{seq2seq_forward.10} parent=11 // pred_fallthru
        _
      // Predicated region
      $region65: #{seq2seq_forward.10} parent=11 // pred_check
        %p537 = pneg %p413
      $region66: #{seq2seq_forward.10} parent=11 // pred_check_branch
        %539 = sbr.rel (%p537) target = $region68
      $region67: #{seq2seq_forward.10} parent=11 // pred_region
        _
      $region68: #{seq2seq_forward.10} parent=11 // pred_fallthru
        _
      // Predicated region
      $region69: #{seq2seq_forward.10} parent=11 // pred_check
        %p540 = pneg %p434
      $region70: #{seq2seq_forward.10} parent=11 // pred_check_branch
        %542 = sbr.rel (%p540) target = $region72
      $region71: #{seq2seq_forward.10} parent=11 // pred_region
        _
      $region72: #{seq2seq_forward.10} parent=11 // pred_fallthru
        _
      // Predicated region
      $region73: #{seq2seq_forward.10} parent=11 // pred_check
        %p543 = pneg %p455
      $region74: #{seq2seq_forward.10} parent=11 // pred_check_branch
        %545 = sbr.rel (%p543) target = $region76
      $region75: #{seq2seq_forward.10} parent=11 // pred_region
        _
      $region76: #{seq2seq_forward.10} parent=11 // pred_fallthru
        _
    $region12: #{seq2seq_forward.10} parent=5 // pred_fallthru
      _
    %p546 = scmp.lt.s32.totalorder %s25, 2
    // Predicated region
    $region77: #{seq2seq_forward.10} parent=5 // pred_check
      %p547 = pneg %p546
    $region78: #{seq2seq_forward.10} parent=5 // pred_check_branch
      %549 = sbr.rel (%p547) target = $region80
    $region79: #{seq2seq_forward.10} parent=5 // pred_region
      // Predicated region
      $region81: #{seq2seq_forward.10} parent=79 // pred_check
        %p550 = pneg %p59
      $region82: #{seq2seq_forward.10} parent=79 // pred_check_branch
        %552 = sbr.rel (%p550) target = $region84
      $region83: #{seq2seq_forward.10} parent=79 // pred_region
        %p553 = scmp.lt.s32.totalorder %s32, 1
        %s554 = scalar_select %p553, %s32, 1
        %p555 = scmp.lt.s32.totalorder %s33, 0
        %s556 = scalar_select %p555, %s33, 0
        %s557 = sadd.s32 %s556, %s554
        %s558 = smul.addr %s557, 4
        %s559 = scalar_lea.vmem %s0, %s558
      $region84: #{seq2seq_forward.10} parent=79 // pred_fallthru
        _
      // Predicated region
      $region85: #{seq2seq_forward.10} parent=79 // pred_check
        %p560 = pneg %p85
      $region86: #{seq2seq_forward.10} parent=79 // pred_check_branch
        %562 = sbr.rel (%p560) target = $region88
      $region87: #{seq2seq_forward.10} parent=79 // pred_region
        %p563 = scmp.lt.s32.totalorder %s32, 1
        %s564 = scalar_select %p563, %s32, 1
        %s565 = smul.addr %s564, 4
        %s566 = scalar_lea.vmem %s1, %s565
      $region88: #{seq2seq_forward.10} parent=79 // pred_fallthru
        _
      // Predicated region
      $region89: #{seq2seq_forward.10} parent=79 // pred_check
        %p567 = pneg %p113
      $region90: #{seq2seq_forward.10} parent=79 // pred_check_branch
        %569 = sbr.rel (%p567) target = $region92
      $region91: #{seq2seq_forward.10} parent=79 // pred_region
        %p570 = scmp.lt.s32.totalorder %s32, 1
        %s571 = scalar_select %p570, %s32, 1
        %p572 = scmp.lt.s32.totalorder %s33, 0
        %s573 = scalar_select %p572, %s33, 0
        %s574 = sadd.s32 %s573, %s571
        %s575 = smul.addr %s574, 8
        %s576 = scalar_lea.vmem %s2, %s575
      $region92: #{seq2seq_forward.10} parent=79 // pred_fallthru
        _
    $region80: #{seq2seq_forward.10} parent=5 // pred_fallthru
      _
    %p577 = scmp.le.s32.totalorder 1, %s25
    %p578 = scmp.lt.s32.totalorder %s25, 3
    %p579 = pnand %p577, %p578
    %p580 = pneg %p579
    // Predicated region
    $region93: #{seq2seq_forward.10} parent=5 // pred_check
      _
    $region94: #{seq2seq_forward.10} parent=5 // pred_check_branch
      %582 = sbr.rel (%p579) target = $region96
    $region95: #{seq2seq_forward.10} parent=5 // pred_region
      %s583 = ssub.s32 %s25, 1
      %p584 = scmp.lt.s32.totalorder %s34, 1
      %s585 = scalar_select %p584, %s34, 1
      %p586 = scmp.lt.s32.totalorder %s35, 0
      %s587 = scalar_select %p586, %s35, 0
      %s588 = sadd.s32 %s587, %s585
      %s589 = smul.addr %s588, 4
      %s590 = scalar_lea.vmem %s0, %s589
      %p591 = pneg %p65
      %p592 = pneg %p62
      %p593 = scmp.lt.s32.totalorder %s34, 1
      %s594 = scalar_select %p593, %s34, 1
      %s595 = smul.addr %s594, 4
      %s596 = scalar_lea.vmem %s1, %s595
      %p597 = pneg %p91
      %p598 = pneg %p88
      %p599 = scmp.lt.s32.totalorder %s34, 1
      %s600 = scalar_select %p599, %s34, 1
      %p601 = scmp.lt.s32.totalorder %s35, 0
      %s602 = scalar_select %p601, %s35, 0
      %s603 = sadd.s32 %s602, %s600
      %s604 = smul.addr %s603, 8
      %s605 = scalar_lea.vmem %s2, %s604
      %p606 = pneg %p119
      %p607 = pneg %p116
      %p608 = pneg %p140
      %p609 = pneg %p137
      %p610 = pneg %p161
      %p611 = pneg %p158
      %p612 = pneg %p182
      %p613 = pneg %p179
      %p614 = pneg %p203
      %p615 = pneg %p200
      %p616 = pneg %p224
      %p617 = pneg %p221
      %p618 = pneg %p245
      %p619 = pneg %p242
      %p620 = pneg %p266
      %p621 = pneg %p263
      %p622 = pneg %p287
      %p623 = pneg %p284
      %p624 = pneg %p308
      %p625 = pneg %p305
      %p626 = pneg %p329
      %p627 = pneg %p326
      %p628 = pneg %p350
      %p629 = pneg %p347
      %p630 = pneg %p371
      %p631 = pneg %p368
      %p632 = pneg %p392
      %p633 = pneg %p389
      %p634 = pneg %p413
      %p635 = pneg %p410
      %p636 = pneg %p434
      %p637 = pneg %p431
      %p638 = pneg %p455
      %p639 = pneg %p452
      %p640 = pneg %p483
      %p641 = pneg %p480
      %p642 = scmp.lt.s32.totalorder %s34, 1
      %s643 = scalar_select %p642, %s34, 1
      %p644 = scmp.lt.s32.totalorder %s35, 0
      %s645 = scalar_select %p644, %s35, 0
      %s646 = sadd.s32 %s645, %s643
      %s647 = smul.addr %s646, 4
      %s648 = scalar_lea.vmem %s19, %s647
      %p649 = scmp.lt.s32.totalorder %s34, 1
      %s650 = scalar_select %p649, %s34, 1
      %p651 = scmp.lt.s32.totalorder %s35, 0
      %s652 = scalar_select %p651, %s35, 0
      %s653 = sadd.s32 %s652, %s650
      %s654 = smul.addr %s653, 4
      %s655 = scalar_lea.vmem %s0, %s654
      %p656 = scmp.lt.s32.totalorder %s34, 1
      %s657 = scalar_select %p656, %s34, 1
      %s658 = smul.addr %s657, 4
      %s659 = scalar_lea.vmem %s1, %s658
      %p660 = scmp.lt.s32.totalorder %s34, 1
      %s661 = scalar_select %p660, %s34, 1
      %p662 = scmp.lt.s32.totalorder %s35, 0
      %s663 = scalar_select %p662, %s35, 0
      %s664 = sadd.s32 %s663, %s661
      %s665 = smul.addr %s664, 8
      %s666 = scalar_lea.vmem %s2, %s665
      %p667 = scmp.lt.s32.totalorder %s34, 1
      %s668 = scalar_select %p667, %s34, 1
      %p669 = scmp.lt.s32.totalorder %s35, 0
      %s670 = scalar_select %p669, %s35, 0
      %s671 = sadd.s32 %s670, %s668
      %s672 = smul.addr %s671, 4
      %s673 = scalar_lea.vmem %s19, %s672
      %v675 = vld [vmem:[%s659] sm:$0xf]
      %v676 = vld [vmem:[%s655] sm:$0xf]
      %v677 = vld [vmem:[%s666] sm:$0xff]
      %vm678 = vcmp.gt.f32.partialorder %v677, 0.5
      %v679 = vsel %vm678, 1, 0
      %680 = vset.pattern.permute.xlu0 0
      %681 = vperm.xlu0 %680, %v679
      %v682 = vpop.permute.xlu0 %681
      %vm683 = vcmp.eq.s32.totalorder %v682, 1
      %vm684 = vcmask 261120
      %685 = vst.msk [vmem:[#allocation2] sm:$0xff] %vm684, 0.0
      loop: start=0, step=1, limit=4
      $region97: #{seq2seq_forward.10} parent=95 // loop_pre_header
        _
      $region98: #{seq2seq_forward.10} parent=95 // loop_header
        %s687 = sphi 0, %s691
        %p688 = scmp.ge.s32.totalorder %s687, 4
      $region99: #{seq2seq_forward.10} parent=95 // loop_header_branch
        %690 = sbr.rel (%p688) target = $region103
      $region100: #{seq2seq_forward.10} parent=95 // loop_body
        %s692 = smul.u32 %s687, 4
        %s693 = smul.addr %s692, 4
        %s694 = scalar_lea.vmem %s3, %s693
        %v695 = vld [vmem:[%s694] sm:$0xf]
        %v696 = vld [vmem:[%s694 + $0x4] sm:$0xf]
        %v697 = vld [vmem:[%s694 + $0x8] sm:$0xf]
        %v698 = vld [vmem:[%s694 + $0xc] sm:$0xf]
        %s699 = scalar_lea.vmem %s4, %s687
        %v700 = vld [vmem:[%s699] sm:$0x1]
        %v702 = vlaneseq
        %v703 = vshrl.u32 %v702, 7
        %v704 = vsub.s32 0, %v703
        %v705 = vrot.slane %v700, %v704
        %v711 = vunpack.c.l.b16 %v695
        %v712 = vunpack.c.l.b16 %v696
        %v713 = vunpack.c.l.b16 %v697
        %v714 = vunpack.c.l.b16 %v698
        %v715 = vpack.c.b16 %v712, %v711
        %v716 = vpack.c.b16 %v714, %v713
        %v720 = vsel %vm684, %v676, 0
        %722 = vmatprep.subr.bf16.mxu0 0
        %723 = vmatpush1.bf16.msra.mxu0 %v715
        %724 = vmatprep.subr.bf16.mxu0 0
        %725 = vmatpush1.bf16.msra.mxu0 %v716
        %726 = vmatprep.subr.bf16.mxu0 0
        %727 = vmatpush1.bf16.msra.mxu0 0
        %728 = vmatprep.subr.bf16.mxu0 0
        %729 = vmatpush1.bf16.msra.mxu0 0
        %730 = vmatprep.subr.bf16.mxu0 0
        %731 = vmatpush1.bf16.msra.mxu0 0
        %732 = vmatprep.subr.bf16.mxu0 0
        %733 = vmatpush1.bf16.msra.mxu0 0
        %734 = vmatprep.subr.bf16.mxu0 0
        %735 = vmatpush1.bf16.msra.mxu0 0
        %736 = vmatprep.subr.bf16.mxu0 0
        %737 = vmatpush1.bf16.msra.mxu0 0
        %738 = vmatprep.subr.bf16.mxu0 0
        %739 = vmatpush1.bf16.msra.mxu0 0
        %740 = vmatprep.subr.bf16.mxu0 0
        %741 = vmatpush1.bf16.msra.mxu0 0
        %742 = vmatprep.subr.bf16.mxu0 0
        %743 = vmatpush1.bf16.msra.mxu0 0
        %744 = vmatprep.subr.bf16.mxu0 0
        %745 = vmatpush1.bf16.msra.mxu0 0
        %746 = vmatprep.subr.bf16.mxu0 0
        %747 = vmatpush1.bf16.msra.mxu0 0
        %748 = vmatprep.subr.bf16.mxu0 0
        %749 = vmatpush1.bf16.msra.mxu0 0
        %750 = vmatprep.subr.bf16.mxu0 0
        %751 = vmatpush1.bf16.msra.mxu0 0
        %752 = vmatprep.subr.bf16.mxu0 0
        %753 = vmatpush1.bf16.msra.mxu0 0
        %754 = vmatprep.mubr.bf16.mxu0 0
        %755 = vmatmul.mubr.bf16.gmra.mrb[0].mxu0 %v720
        %v756 = vpop.f32.mrb[0].mxu0
        %v757 = vadd.f32 %v705, %v756
        %v758 = vpop.f32.mrb[0].mxu0
        %v759 = vpop.f32.mrb[0].mxu0
        %v760 = vpop.f32.mrb[0].mxu0
        %761 = vdwg.mxu0
        %s762 = smul.addr %s692, 4
        %s763 = scalar_lea.vmem %s5, %s762
        %v764 = vld [vmem:[%s763] sm:$0xf]
        %v765 = vld [vmem:[%s763 + $0x4] sm:$0xf]
        %v766 = vld [vmem:[%s763 + $0x8] sm:$0xf]
        %v767 = vld [vmem:[%s763 + $0xc] sm:$0xf]
        %s768 = scalar_lea.vmem %s6, %s687
        %v769 = vld [vmem:[%s768] sm:$0x1]
        %v771 = vlaneseq
        %v772 = vshrl.u32 %v771, 7
        %v773 = vsub.s32 0, %v772
        %v774 = vrot.slane %v769, %v773
        %v780 = vunpack.c.l.b16 %v764
        %v781 = vunpack.c.l.b16 %v765
        %v782 = vunpack.c.l.b16 %v766
        %v783 = vunpack.c.l.b16 %v767
        %v784 = vpack.c.b16 %v781, %v780
        %v785 = vpack.c.b16 %v783, %v782
        %v789 = vsel %vm684, %v675, 0
        %791 = vmatprep.subr.bf16.mxu0 0
        %792 = vmatpush1.bf16.msra.mxu0 %v784
        %793 = vmatprep.subr.bf16.mxu0 0
        %794 = vmatpush1.bf16.msra.mxu0 %v785
        %795 = vmatprep.subr.bf16.mxu0 0
        %796 = vmatpush1.bf16.msra.mxu0 0
        %797 = vmatprep.subr.bf16.mxu0 0
        %798 = vmatpush1.bf16.msra.mxu0 0
        %799 = vmatprep.subr.bf16.mxu0 0
        %800 = vmatpush1.bf16.msra.mxu0 0
        %801 = vmatprep.subr.bf16.mxu0 0
        %802 = vmatpush1.bf16.msra.mxu0 0
        %803 = vmatprep.subr.bf16.mxu0 0
        %804 = vmatpush1.bf16.msra.mxu0 0
        %805 = vmatprep.subr.bf16.mxu0 0
        %806 = vmatpush1.bf16.msra.mxu0 0
        %807 = vmatprep.subr.bf16.mxu0 0
        %808 = vmatpush1.bf16.msra.mxu0 0
        %809 = vmatprep.subr.bf16.mxu0 0
        %810 = vmatpush1.bf16.msra.mxu0 0
        %811 = vmatprep.subr.bf16.mxu0 0
        %812 = vmatpush1.bf16.msra.mxu0 0
        %813 = vmatprep.subr.bf16.mxu0 0
        %814 = vmatpush1.bf16.msra.mxu0 0
        %815 = vmatprep.subr.bf16.mxu0 0
        %816 = vmatpush1.bf16.msra.mxu0 0
        %817 = vmatprep.subr.bf16.mxu0 0
        %818 = vmatpush1.bf16.msra.mxu0 0
        %819 = vmatprep.subr.bf16.mxu0 0
        %820 = vmatpush1.bf16.msra.mxu0 0
        %821 = vmatprep.subr.bf16.mxu0 0
        %822 = vmatpush1.bf16.msra.mxu0 0
        %823 = vmatprep.mubr.bf16.mxu0 0
        %824 = vmatmul.mubr.bf16.gmra.mrb[0].mxu0 %v789
        %v825 = vpop.f32.mrb[0].mxu0
        %v826 = vadd.f32 %v774, %v825
        %v827 = vpop.f32.mrb[0].mxu0
        %v828 = vpop.f32.mrb[0].mxu0
        %v829 = vpop.f32.mrb[0].mxu0
        %830 = vdwg.mxu0
        %s831 = smul.addr %s692, 4
        %s832 = scalar_lea.vmem %s7, %s831
        %v833 = vld [vmem:[%s832] sm:$0xf]
        %v834 = vld [vmem:[%s832 + $0x4] sm:$0xf]
        %v835 = vld [vmem:[%s832 + $0x8] sm:$0xf]
        %v836 = vld [vmem:[%s832 + $0xc] sm:$0xf]
        %s837 = scalar_lea.vmem %s8, %s687
        %v838 = vld [vmem:[%s837] sm:$0x1]
        %v840 = vlaneseq
        %v841 = vshrl.u32 %v840, 7
        %v842 = vsub.s32 0, %v841
        %v843 = vrot.slane %v838, %v842
        %v849 = vunpack.c.l.b16 %v833
        %v850 = vunpack.c.l.b16 %v834
        %v851 = vunpack.c.l.b16 %v835
        %v852 = vunpack.c.l.b16 %v836
        %v853 = vpack.c.b16 %v850, %v849
        %v854 = vpack.c.b16 %v852, %v851
        %857 = vmatprep.subr.bf16.mxu0 0
        %858 = vmatpush1.bf16.msra.mxu0 %v853
        %859 = vmatprep.subr.bf16.mxu0 0
        %860 = vmatpush1.bf16.msra.mxu0 %v854
        %861 = vmatprep.subr.bf16.mxu0 0
        %862 = vmatpush1.bf16.msra.mxu0 0
        %863 = vmatprep.subr.bf16.mxu0 0
        %864 = vmatpush1.bf16.msra.mxu0 0
        %865 = vmatprep.subr.bf16.mxu0 0
        %866 = vmatpush1.bf16.msra.mxu0 0
        %867 = vmatprep.subr.bf16.mxu0 0
        %868 = vmatpush1.bf16.msra.mxu0 0
        %869 = vmatprep.subr.bf16.mxu0 0
        %870 = vmatpush1.bf16.msra.mxu0 0
        %871 = vmatprep.subr.bf16.mxu0 0
        %872 = vmatpush1.bf16.msra.mxu0 0
        %873 = vmatprep.subr.bf16.mxu0 0
        %874 = vmatpush1.bf16.msra.mxu0 0
        %875 = vmatprep.subr.bf16.mxu0 0
        %876 = vmatpush1.bf16.msra.mxu0 0
        %877 = vmatprep.subr.bf16.mxu0 0
        %878 = vmatpush1.bf16.msra.mxu0 0
        %879 = vmatprep.subr.bf16.mxu0 0
        %880 = vmatpush1.bf16.msra.mxu0 0
        %881 = vmatprep.subr.bf16.mxu0 0
        %882 = vmatpush1.bf16.msra.mxu0 0
        %883 = vmatprep.subr.bf16.mxu0 0
        %884 = vmatpush1.bf16.msra.mxu0 0
        %885 = vmatprep.subr.bf16.mxu0 0
        %886 = vmatpush1.bf16.msra.mxu0 0
        %887 = vmatprep.subr.bf16.mxu0 0
        %888 = vmatpush1.bf16.msra.mxu0 0
        %889 = vmatprep.mubr.bf16.mxu0 0
        %890 = vmatmul.mubr.bf16.gmra.mrb[0].mxu0 %v789
        %v891 = vpop.f32.mrb[0].mxu0
        %v892 = vadd.f32 %v843, %v891
        %v893 = vpop.f32.mrb[0].mxu0
        %v894 = vpop.f32.mrb[0].mxu0
        %v895 = vpop.f32.mrb[0].mxu0
        %896 = vdwg.mxu0
        %v897 = vpack.c.bf16 %v757, %v757
        %v898 = vpack.c.bf16 %v826, %v826
        %vm899 = vcmask 64512
        %v901 = vsel %vm899, %v897, 0
        %v904 = vsel %vm899, %v898, 0
        %906 = vmatprep.subr.bf16.mxu0 0
        %907 = vmatpush1.bf16.xpose.msra.mxu0 %v904
        %908 = vmatprep.subr.bf16.mxu0 0
        %909 = vmatpush1.bf16.xpose.msra.mxu0 0
        %910 = vmatprep.subr.bf16.mxu0 0
        %911 = vmatpush1.bf16.xpose.msra.mxu0 0
        %912 = vmatprep.subr.bf16.mxu0 0
        %913 = vmatpush1.bf16.xpose.msra.mxu0 0
        %914 = vmatprep.subr.bf16.mxu0 0
        %915 = vmatpush1.bf16.xpose.msra.mxu0 0
        %916 = vmatprep.subr.bf16.mxu0 0
        %917 = vmatpush1.bf16.xpose.msra.mxu0 0
        %918 = vmatprep.subr.bf16.mxu0 0
        %919 = vmatpush1.bf16.xpose.msra.mxu0 0
        %920 = vmatprep.subr.bf16.mxu0 0
        %921 = vmatpush1.bf16.xpose.msra.mxu0 0
        %922 = vmatprep.subr.bf16.mxu0 0
        %923 = vmatpush1.bf16.xpose.msra.mxu0 0
        %924 = vmatprep.subr.bf16.mxu0 0
        %925 = vmatpush1.bf16.xpose.msra.mxu0 0
        %926 = vmatprep.subr.bf16.mxu0 0
        %927 = vmatpush1.bf16.xpose.msra.mxu0 0
        %928 = vmatprep.subr.bf16.mxu0 0
        %929 = vmatpush1.bf16.xpose.msra.mxu0 0
        %930 = vmatprep.subr.bf16.mxu0 0
        %931 = vmatpush1.bf16.xpose.msra.mxu0 0
        %932 = vmatprep.subr.bf16.mxu0 0
        %933 = vmatpush1.bf16.xpose.msra.mxu0 0
        %934 = vmatprep.subr.bf16.mxu0 0
        %935 = vmatpush1.bf16.xpose.msra.mxu0 0
        %936 = vmatprep.subr.bf16.mxu0 0
        %937 = vmatpush1.bf16.xpose.msra.mxu0 0
        %938 = vmatprep.mubr.bf16.mxu0 0
        %939 = vmatmul.mubr.bf16.gmra.mrb[0].mxu0 %v901
        %v940 = vpop.f32.mrb[0].mxu0
        %v941 = vadd.f32 0.0, %v940
        %v942 = vpop.f32.mrb[0].mxu0
        %v943 = vpop.f32.mrb[0].mxu0
        %v944 = vpop.f32.mrb[0].mxu0
        %945 = vdwg.mxu0
        %v946 = vmul.f32 %v941, 0.35355338
        %v947 = vsel %vm683, %v946, -1e+10
        %v948 = vsel %vm899, %v947, -inf
        %949 = vmax.xlane.f32.xlu0 %v948
        %v950 = vpop.xlane.xlu0 %949
        %v951 = vsub.f32 %v947, %v950
        %v952 = vmul.f32 %v951, 1.442695
        %v953 = vpow.pop %v952
        %v954 = vsel %vm899, %v953, 0.0
        %955 = vadd.xlane.f32.xlu0 %v954
        %v956 = vpop.xlane.xlu0 %955
        %v957 = vrcp.pop %v956
        %v958 = vmul.f32 %v953, %v957
        %v959 = vpack.c.bf16 %v958, %v958
        %v960 = vpack.c.bf16 %v892, %v892
        %v962 = vsel %vm899, %v959, 0
        %vm964 = vcmask 1043456
        %v966 = vsel %vm964, %v960, 0
        %968 = vmatprep.subr.bf16.mxu0 0
        %969 = vmatpush1.bf16.msra.mxu0 %v966
        %970 = vmatprep.subr.bf16.mxu0 0
        %971 = vmatpush1.bf16.msra.mxu0 0
        %972 = vmatprep.subr.bf16.mxu0 0
        %973 = vmatpush1.bf16.msra.mxu0 0
        %974 = vmatprep.subr.bf16.mxu0 0
        %975 = vmatpush1.bf16.msra.mxu0 0
        %976 = vmatprep.subr.bf16.mxu0 0
        %977 = vmatpush1.bf16.msra.mxu0 0
        %978 = vmatprep.subr.bf16.mxu0 0
        %979 = vmatpush1.bf16.msra.mxu0 0
        %980 = vmatprep.subr.bf16.mxu0 0
        %981 = vmatpush1.bf16.msra.mxu0 0
        %982 = vmatprep.subr.bf16.mxu0 0
        %983 = vmatpush1.bf16.msra.mxu0 0
        %984 = vmatprep.subr.bf16.mxu0 0
        %985 = vmatpush1.bf16.msra.mxu0 0
        %986 = vmatprep.subr.bf16.mxu0 0
        %987 = vmatpush1.bf16.msra.mxu0 0
        %988 = vmatprep.subr.bf16.mxu0 0
        %989 = vmatpush1.bf16.msra.mxu0 0
        %990 = vmatprep.subr.bf16.mxu0 0
        %991 = vmatpush1.bf16.msra.mxu0 0
        %992 = vmatprep.subr.bf16.mxu0 0
        %993 = vmatpush1.bf16.msra.mxu0 0
        %994 = vmatprep.subr.bf16.mxu0 0
        %995 = vmatpush1.bf16.msra.mxu0 0
        %996 = vmatprep.subr.bf16.mxu0 0
        %997 = vmatpush1.bf16.msra.mxu0 0
        %998 = vmatprep.subr.bf16.mxu0 0
        %999 = vmatpush1.bf16.msra.mxu0 0
        %1000 = vmatprep.mubr.bf16.mxu0 0
        %1001 = vmatmul.mubr.bf16.gmra.mrb[0].mxu0 %v962
        %v1002 = vpop.f32.mrb[0].mxu0
        %v1003 = vadd.f32 0.0, %v1002
        %v1004 = vpop.f32.mrb[0].mxu0
        %v1005 = vpop.f32.mrb[0].mxu0
        %v1006 = vpop.f32.mrb[0].mxu0
        %1007 = vdwg.mxu0
        %v1008 = vld [vmem:[#allocation2] sm:$0xff]
        %v1009 = vpack.c.bf16 %v1003, %v1003
        %s1010 = smul.addr %s687, 4
        %s1011 = scalar_lea.vmem %s9, %s1010
        %v1012 = vld [vmem:[%s1011] sm:$0xf]
        %v1014 = vsel %vm899, %v1009, 0
        %v1017 = vsel %vm964, %v1012, 0
        %1019 = vmatprep.subr.bf16.mxu0 0
        %1020 = vmatpush1.bf16.msra.mxu0 %v1017
        %1021 = vmatprep.subr.bf16.mxu0 0
        %1022 = vmatpush1.bf16.msra.mxu0 0
        %1023 = vmatprep.subr.bf16.mxu0 0
        %1024 = vmatpush1.bf16.msra.mxu0 0
        %1025 = vmatprep.subr.bf16.mxu0 0
        %1026 = vmatpush1.bf16.msra.mxu0 0
        %1027 = vmatprep.subr.bf16.mxu0 0
        %1028 = vmatpush1.bf16.msra.mxu0 0
        %1029 = vmatprep.subr.bf16.mxu0 0
        %1030 = vmatpush1.bf16.msra.mxu0 0
        %1031 = vmatprep.subr.bf16.mxu0 0
        %1032 = vmatpush1.bf16.msra.mxu0 0
        %1033 = vmatprep.subr.bf16.mxu0 0
        %1034 = vmatpush1.bf16.msra.mxu0 0
        %1035 = vmatprep.subr.bf16.mxu0 0
        %1036 = vmatpush1.bf16.msra.mxu0 0
        %1037 = vmatprep.subr.bf16.mxu0 0
        %1038 = vmatpush1.bf16.msra.mxu0 0
        %1039 = vmatprep.subr.bf16.mxu0 0
        %1040 = vmatpush1.bf16.msra.mxu0 0
        %1041 = vmatprep.subr.bf16.mxu0 0
        %1042 = vmatpush1.bf16.msra.mxu0 0
        %1043 = vmatprep.subr.bf16.mxu0 0
        %1044 = vmatpush1.bf16.msra.mxu0 0
        %1045 = vmatprep.subr.bf16.mxu0 0
        %1046 = vmatpush1.bf16.msra.mxu0 0
        %1047 = vmatprep.subr.bf16.mxu0 0
        %1048 = vmatpush1.bf16.msra.mxu0 0
        %1049 = vmatprep.subr.bf16.mxu0 0
        %1050 = vmatpush1.bf16.msra.mxu0 0
        %1051 = vmatprep.mubr.bf16.mxu0 0
        %1052 = vmatmul.mubr.bf16.gmra.mrb[0].mxu0 %v1014
        %v1053 = vpop.f32.mrb[0].mxu0
        %v1054 = vadd.f32 0.0, %v1053
        %v1055 = vpop.f32.mrb[0].mxu0
        %v1056 = vpop.f32.mrb[0].mxu0
        %v1057 = vpop.f32.mrb[0].mxu0
        %1058 = vdwg.mxu0
        %v1059 = vadd.f32 %v1008, %v1054
        %1060 = vst.msk [vmem:[#allocation2] sm:$0xff] %vm684, %v1059
      $region101: #{seq2seq_forward.10} parent=95 // loop_footer
        %s691 = sadd.s32 1, %s687
      $region102: #{seq2seq_forward.10} parent=95 // loop_footer_branch
        %686 = sbr.rel target = $region98
      $region103: #{seq2seq_forward.10} parent=95 // loop_exit
        _
      %v1061 = vld [vmem:[#allocation2] sm:$0xff]
      %v1062 = vld [vmem:[%s10] sm:$0x1]
      %v1064 = vlaneseq
      %v1065 = vshrl.u32 %v1064, 7
      %v1066 = vsub.s32 0, %v1065
      %v1067 = vrot.slane %v1062, %v1066
      %v1069 = vadd.f32 %v1061, %v1067
      %v1070 = vunpack.c.l.bf16 %v676
      %v1071 = vadd.f32 %v1069, %v1070
      %v1072 = vsel %vm684, %v1071, 0.0
      %1073 = vadd.xlane.f32.xlu0 %v1072
      %v1074 = vpop.xlane.xlu0 %1073
      %v1075 = vrcp.pop 32.0
      %v1076 = vmul.f32 %v1074, %v1075
      %v1077 = vsub.f32 %v1071, %v1076
      %v1078 = vmul.f32 %v1077, %v1077
      %v1079 = vsel %vm684, %v1078, 0.0
      %1080 = vadd.xlane.f32.xlu0 %v1079
      %v1081 = vpop.xlane.xlu0 %1080
      %v1082 = vmul.f32 %v1081, %v1075
      %v1083 = vadd.f32 %v1082, 1e-05
      %v1084 = vrsqrt.pop %v1083
      %v1085 = vmul.f32 %v1077, %v1084
      %v1086 = vld [vmem:[%s11] sm:$0x1]
      %v1088 = vlaneseq
      %v1089 = vshrl.u32 %v1088, 7
      %v1090 = vsub.s32 0, %v1089
      %v1091 = vrot.slane %v1086, %v1090
      %v1093 = vmul.f32 %v1085, %v1091
      %v1094 = vld [vmem:[%s12] sm:$0x1]
      %v1096 = vlaneseq
      %v1097 = vshrl.u32 %v1096, 7
      %v1098 = vsub.s32 0, %v1097
      %v1099 = vrot.slane %v1094, %v1098
      %v1101 = vadd.f32 %v1093, %v1099
      %v1102 = vpack.c.bf16 %v1101, %v1101
      %v1103 = vld [vmem:[%s13] sm:$0xf]
      %v1104 = vld [vmem:[%s13 + $0x4] sm:$0xf]
      %v1105 = vld [vmem:[%s13 + $0x8] sm:$0xf]
      %v1106 = vld [vmem:[%s13 + $0xc] sm:$0xf]
      %v1107 = vld [vmem:[%s14] sm:$0x1]
      %v1109 = vlaneseq
      %v1110 = vshrl.u32 %v1109, 7
      %v1111 = vsub.s32 0, %v1110
      %v1112 = vrot.slane %v1107, %v1111
      %v1118 = vunpack.c.l.b16 %v1103
      %v1119 = vunpack.c.l.b16 %v1104
      %v1120 = vunpack.c.l.b16 %v1105
      %v1121 = vunpack.c.l.b16 %v1106
      %v1122 = vpack.c.b16 %v1119, %v1118
      %v1123 = vpack.c.b16 %v1121, %v1120
      %v1127 = vsel %vm684, %v1102, 0
      %1129 = vmatprep.subr.bf16.mxu0 0
      %1130 = vmatpush1.bf16.msra.mxu0 %v1122
      %1131 = vmatprep.subr.bf16.mxu0 0
      %1132 = vmatpush1.bf16.msra.mxu0 %v1123
      %1133 = vmatprep.subr.bf16.mxu0 0
      %1134 = vmatpush1.bf16.msra.mxu0 0
      %1135 = vmatprep.subr.bf16.mxu0 0
      %1136 = vmatpush1.bf16.msra.mxu0 0
      %1137 = vmatprep.subr.bf16.mxu0 0
      %1138 = vmatpush1.bf16.msra.mxu0 0
      %1139 = vmatprep.subr.bf16.mxu0 0
      %1140 = vmatpush1.bf16.msra.mxu0 0
      %1141 = vmatprep.subr.bf16.mxu0 0
      %1142 = vmatpush1.bf16.msra.mxu0 0
      %1143 = vmatprep.subr.bf16.mxu0 0
      %1144 = vmatpush1.bf16.msra.mxu0 0
      %1145 = vmatprep.subr.bf16.mxu0 0
      %1146 = vmatpush1.bf16.msra.mxu0 0
      %1147 = vmatprep.subr.bf16.mxu0 0
      %1148 = vmatpush1.bf16.msra.mxu0 0
      %1149 = vmatprep.subr.bf16.mxu0 0
      %1150 = vmatpush1.bf16.msra.mxu0 0
      %1151 = vmatprep.subr.bf16.mxu0 0
      %1152 = vmatpush1.bf16.msra.mxu0 0
      %1153 = vmatprep.subr.bf16.mxu0 0
      %1154 = vmatpush1.bf16.msra.mxu0 0
      %1155 = vmatprep.subr.bf16.mxu0 0
      %1156 = vmatpush1.bf16.msra.mxu0 0
      %1157 = vmatprep.subr.bf16.mxu0 0
      %1158 = vmatpush1.bf16.msra.mxu0 0
      %1159 = vmatprep.subr.bf16.mxu0 0
      %1160 = vmatpush1.bf16.msra.mxu0 0
      %1161 = vmatprep.mubr.bf16.mxu0 0
      %1162 = vmatmul.mubr.bf16.gmra.mrb[0].mxu0 %v1127
      %v1163 = vpop.f32.mrb[0].mxu0
      %v1164 = vadd.f32 %v1112, %v1163
      %v1165 = vpop.f32.mrb[0].mxu0
      %v1166 = vpop.f32.mrb[0].mxu0
      %v1167 = vpop.f32.mrb[0].mxu0
      %1168 = vdwg.mxu0
      %v1169 = vmax.f32 %v1164, 0.0
      %v1170 = vpack.c.bf16 %v1169, %v1169
      %v1171 = vld [vmem:[%s15] sm:$0xf]
      %v1172 = vld [vmem:[%s15 + $0x4] sm:$0xf]
      %v1173 = vld [vmem:[%s15 + $0x8] sm:$0xf]
      %v1174 = vld [vmem:[%s15 + $0xc] sm:$0xf]
      %v1175 = vld [vmem:[%s15 + $0x10] sm:$0xf]
      %v1176 = vld [vmem:[%s15 + $0x14] sm:$0xf]
      %v1177 = vld [vmem:[%s15 + $0x18] sm:$0xf]
      %v1178 = vld [vmem:[%s15 + $0x1c] sm:$0xf]
      %v1179 = vld [vmem:[%s16] sm:$0x1]
      %v1181 = vlaneseq
      %v1182 = vshrl.u32 %v1181, 7
      %v1183 = vsub.s32 0, %v1182
      %v1184 = vrot.slane %v1179, %v1183
      %v1194 = vunpack.c.l.b16 %v1171
      %v1195 = vunpack.c.l.b16 %v1172
      %v1196 = vunpack.c.l.b16 %v1173
      %v1197 = vunpack.c.l.b16 %v1174
      %v1198 = vunpack.c.l.b16 %v1175
      %v1199 = vunpack.c.l.b16 %v1176
      %v1200 = vunpack.c.l.b16 %v1177
      %v1201 = vunpack.c.l.b16 %v1178
      %v1202 = vpack.c.b16 %v1195, %v1194
      %v1203 = vpack.c.b16 %v1197, %v1196
      %v1204 = vpack.c.b16 %v1199, %v1198
      %v1205 = vpack.c.b16 %v1201, %v1200
      %vm1210 = vcmask 523264
      %v1212 = vsel %vm1210, %v1170, 0
      %1214 = vmatprep.subr.bf16.mxu0 0
      %1215 = vmatpush1.bf16.msra.mxu0 %v1202
      %1216 = vmatprep.subr.bf16.mxu0 0
      %1217 = vmatpush1.bf16.msra.mxu0 %v1203
      %1218 = vmatprep.subr.bf16.mxu0 0
      %1219 = vmatpush1.bf16.msra.mxu0 %v1204
      %1220 = vmatprep.subr.bf16.mxu0 0
      %1221 = vmatpush1.bf16.msra.mxu0 %v1205
      %1222 = vmatprep.subr.bf16.mxu0 0
      %1223 = vmatpush1.bf16.msra.mxu0 0
      %1224 = vmatprep.subr.bf16.mxu0 0
      %1225 = vmatpush1.bf16.msra.mxu0 0
      %1226 = vmatprep.subr.bf16.mxu0 0
      %1227 = vmatpush1.bf16.msra.mxu0 0
      %1228 = vmatprep.subr.bf16.mxu0 0
      %1229 = vmatpush1.bf16.msra.mxu0 0
      %1230 = vmatprep.subr.bf16.mxu0 0
      %1231 = vmatpush1.bf16.msra.mxu0 0
      %1232 = vmatprep.subr.bf16.mxu0 0
      %1233 = vmatpush1.bf16.msra.mxu0 0
      %1234 = vmatprep.subr.bf16.mxu0 0
      %1235 = vmatpush1.bf16.msra.mxu0 0
      %1236 = vmatprep.subr.bf16.mxu0 0
      %1237 = vmatpush1.bf16.msra.mxu0 0
      %1238 = vmatprep.subr.bf16.mxu0 0
      %1239 = vmatpush1.bf16.msra.mxu0 0
      %1240 = vmatprep.subr.bf16.mxu0 0
      %1241 = vmatpush1.bf16.msra.mxu0 0
      %1242 = vmatprep.subr.bf16.mxu0 0
      %1243 = vmatpush1.bf16.msra.mxu0 0
      %1244 = vmatprep.subr.bf16.mxu0 0
      %1245 = vmatpush1.bf16.msra.mxu0 0
      %1246 = vmatprep.mubr.bf16.mxu0 0
      %1247 = vmatmul.mubr.bf16.gmra.mrb[0].mxu0 %v1212
      %v1248 = vpop.f32.mrb[0].mxu0
      %v1249 = vadd.f32 %v1184, %v1248
      %v1250 = vpop.f32.mrb[0].mxu0
      %v1251 = vpop.f32.mrb[0].mxu0
      %v1252 = vpop.f32.mrb[0].mxu0
      %1253 = vdwg.mxu0
      %v1254 = vadd.f32 %v1249, %v1101
      %v1255 = vsel %vm684, %v1254, 0.0
      %1256 = vadd.xlane.f32.xlu0 %v1255
      %v1257 = vpop.xlane.xlu0 %1256
      %v1258 = vmul.f32 %v1257, %v1075
      %v1259 = vsub.f32 %v1254, %v1258
      %v1260 = vmul.f32 %v1259, %v1259
      %v1261 = vsel %vm684, %v1260, 0.0
      %1262 = vadd.xlane.f32.xlu0 %v1261
      %v1263 = vpop.xlane.xlu0 %1262
      %v1264 = vmul.f32 %v1263, %v1075
      %v1265 = vadd.f32 %v1264, 1e-05
      %v1266 = vrsqrt.pop %v1265
      %v1267 = vmul.f32 %v1259, %v1266
      %v1268 = vld [vmem:[%s17] sm:$0x1]
      %v1270 = vlaneseq
      %v1271 = vshrl.u32 %v1270, 7
      %v1272 = vsub.s32 0, %v1271
      %v1273 = vrot.slane %v1268, %v1272
      %v1275 = vmul.f32 %v1267, %v1273
      %v1276 = vld [vmem:[%s18] sm:$0x1]
      %v1278 = vlaneseq
      %v1279 = vshrl.u32 %v1278, 7
      %v1280 = vsub.s32 0, %v1279
      %v1281 = vrot.slane %v1276, %v1280
      %v1283 = vadd.f32 %v1275, %v1281
      %v1284 = vpack.c.bf16 %v1283, %v1283
      %vm1285 = vcmask 257024
      %1286 = vst.msk [vmem:[%s673] sm:$0xf] %vm1285, %v1284
      %p1287 = scmp.lt.s32.totalorder %s34, 1
      %s1288 = scalar_select %p1287, %s34, 1
      %p1289 = scmp.lt.s32.totalorder %s35, 0
      %s1290 = scalar_select %p1289, %s35, 0
      %s1291 = sadd.s32 %s1290, %s1288
      %s1292 = smul.addr %s1291, 4
      %s1293 = scalar_lea.vmem %s19, %s1292
      // Predicated region
      $region104: #{seq2seq_forward.10} parent=95 // pred_check
        %p1294 = pneg %p480
      $region105: #{seq2seq_forward.10} parent=95 // pred_check_branch
        %1296 = sbr.rel (%p1294) target = $region107
      $region106: #{seq2seq_forward.10} parent=95 // pred_region
        _
      $region107: #{seq2seq_forward.10} parent=95 // pred_fallthru
        _
    $region96: #{seq2seq_forward.10} parent=5 // pred_fallthru
      _
    %p1297 = scmp.le.s32.totalorder 2, %s25
    // Predicated region
    $region108: #{seq2seq_forward.10} parent=5 // pred_check
      %p1298 = pneg %p1297
    $region109: #{seq2seq_forward.10} parent=5 // pred_check_branch
      %1300 = sbr.rel (%p1298) target = $region111
    $region110: #{seq2seq_forward.10} parent=5 // pred_region
      %s1301 = ssub.s32 %s25, 2
      // Predicated region
      $region112: #{seq2seq_forward.10} parent=110 // pred_check
        %p1302 = pneg %p486
      $region113: #{seq2seq_forward.10} parent=110 // pred_check_branch
        %1304 = sbr.rel (%p1302) target = $region115
      $region114: #{seq2seq_forward.10} parent=110 // pred_region
        %p1305 = scmp.lt.s32.totalorder %s36, 1
        %s1306 = scalar_select %p1305, %s36, 1
        %p1307 = scmp.lt.s32.totalorder %s37, 0
        %s1308 = scalar_select %p1307, %s37, 0
        %s1309 = sadd.s32 %s1308, %s1306
        %s1310 = smul.addr %s1309, 4
        %s1311 = scalar_lea.vmem %s19, %s1310
      $region115: #{seq2seq_forward.10} parent=110 // pred_fallthru
        _
    $region111: #{seq2seq_forward.10} parent=5 // pred_fallthru
      _
  $region6: #{seq2seq_forward.10} parent=0 // loop_footer
    %s29 = sadd.s32 1, %s25
  $region7: #{seq2seq_forward.10} parent=0 // loop_footer_branch
    %24 = sbr.rel target = $region3
  $region8: #{seq2seq_forward.10} parent=0 // loop_exit
    _

// kernel: seq2seq_forward.13
$region0: #{seq2seq_forward.13}
  #allocation0 [shape = 'u32[]', space=smem, size = 0x4, offset = 0x4, fixed_abs, tag = 'smem constant byte address 0x4 - core index']
  #allocation1 [shape = 'u32[144,128]{1,0:T(1,128)}', space=vmem, size = 0x12000, scoped, tag = 'internal scratch']
  %s0 = inlined_call_operand.vmem [shape: bf16[16,32], index: 0, kind: input, shape index: {}]
  %s1 = inlined_call_operand.vmem [shape: bf16[32,16], index: 1, kind: input, shape index: {}]
  %s2 = inlined_call_operand.vmem [shape: f32[1,16], index: 2, kind: input, shape index: {}]
  %s3 = inlined_call_operand.hbm [shape: f32[16,16], index: 3, kind: output, shape index: {}]
  %s4 = sld [smem:[#allocation0]]
  $region22: #{seq2seq_forward.13} parent=0
    _
  %s6 = ssub.s32 1, %s4
  %s7 = scalar_select 0, %s6, %s4
  $region1: #{seq2seq_forward.13} parent=0
    #allocation2 [shape = 'u8[8192]{0}', space=vmem, size = 0x2000, scoped, tag = 'output window, operand 0, single buffered']
    #allocation3 [shape = 's32[1]{0}', space=sflag, size = 0x4, scoped, tag = 'scoped memory for seq2seq_forward.13']
    %8 = vsyncpa [#allocation3], 0
    // Predicated region
    $region2: #{seq2seq_forward.13} parent=1 // pred_check
      _
    $region3: #{seq2seq_forward.13} parent=1 // pred_check_branch
      %10 = sbr.rel (0) target = $region5
    $region4: #{seq2seq_forward.13} parent=1 // pred_region
      _
    $region5: #{seq2seq_forward.13} parent=1 // pred_fallthru
      _
    // Predicated region
    $region6: #{seq2seq_forward.13} parent=1 // pred_check
      _
    $region7: #{seq2seq_forward.13} parent=1 // pred_check_branch
      %12 = sbr.rel (0) target = $region9
    $region8: #{seq2seq_forward.13} parent=1 // pred_region
      _
    $region9: #{seq2seq_forward.13} parent=1 // pred_fallthru
      _
    // Predicated region
    $region10: #{seq2seq_forward.13} parent=1 // pred_check
      _
    $region11: #{seq2seq_forward.13} parent=1 // pred_check_branch
      %14 = sbr.rel (0) target = $region13
    $region12: #{seq2seq_forward.13} parent=1 // pred_region
      _
    $region13: #{seq2seq_forward.13} parent=1 // pred_fallthru
      _
    %v16 = vld [vmem:[%s0] sm:$0xf]
    %v17 = vld [vmem:[%s0 + $0x4] sm:$0xf]
    %v18 = vld [vmem:[%s1] sm:$0xf]
    %v19 = vld [vmem:[%s1 + $0x4] sm:$0xf]
    %v20 = vld [vmem:[%s1 + $0x8] sm:$0xf]
    %v21 = vld [vmem:[%s1 + $0xc] sm:$0xf]
    %v22 = vld [vmem:[%s2] sm:$0x1]
    %v24 = vlaneseq
    %v25 = vshrl.u32 %v24, 7
    %v26 = vsub.s32 0, %v25
    %v27 = vrot.slane %v22, %v26
    %v31 = vunpack.c.l.b16 %v16
    %v32 = vunpack.c.l.b16 %v17
    %v33 = vpack.c.b16 %v32, %v31
    %v38 = vunpack.c.l.b16 %v18
    %v39 = vunpack.c.l.b16 %v19
    %v40 = vunpack.c.l.b16 %v20
    %v41 = vunpack.c.l.b16 %v21
    %v42 = vpack.c.b16 %v39, %v38
    %v43 = vpack.c.b16 %v41, %v40
    %vm46 = vcmask 261120
    %v48 = vsel %vm46, %v33, 0
    %50 = vmatprep.subr.bf16.mxu0 0
    %51 = vmatpush1.bf16.msra.mxu0 %v42
    %52 = vmatprep.subr.bf16.mxu0 0
    %53 = vmatpush1.bf16.msra.mxu0 %v43
    %54 = vmatprep.subr.bf16.mxu0 0
    %55 = vmatpush1.bf16.msra.mxu0 0
    %56 = vmatprep.subr.bf16.mxu0 0
    %57 = vmatpush1.bf16.msra.mxu0 0
    %58 = vmatprep.subr.bf16.mxu0 0
    %59 = vmatpush1.bf16.msra.mxu0 0
    %60 = vmatprep.subr.bf16.mxu0 0
    %61 = vmatpush1.bf16.msra.mxu0 0
    %62 = vmatprep.subr.bf16.mxu0 0
    %63 = vmatpush1.bf16.msra.mxu0 0
    %64 = vmatprep.subr.bf16.mxu0 0
    %65 = vmatpush1.bf16.msra.mxu0 0
    %66 = vmatprep.subr.bf16.mxu0 0
    %67 = vmatpush1.bf16.msra.mxu0 0
    %68 = vmatprep.subr.bf16.mxu0 0
    %69 = vmatpush1.bf16.msra.mxu0 0
    %70 = vmatprep.subr.bf16.mxu0 0
    %71 = vmatpush1.bf16.msra.mxu0 0
    %72 = vmatprep.subr.bf16.mxu0 0
    %73 = vmatpush1.bf16.msra.mxu0 0
    %74 = vmatprep.subr.bf16.mxu0 0
    %75 = vmatpush1.bf16.msra.mxu0 0
    %76 = vmatprep.subr.bf16.mxu0 0
    %77 = vmatpush1.bf16.msra.mxu0 0
    %78 = vmatprep.subr.bf16.mxu0 0
    %79 = vmatpush1.bf16.msra.mxu0 0
    %80 = vmatprep.subr.bf16.mxu0 0
    %81 = vmatpush1.bf16.msra.mxu0 0
    %82 = vmatprep.mubr.bf16.mxu0 0
    %83 = vmatmul.mubr.bf16.gmra.mrb[0].mxu0 %v48
    %v84 = vpop.f32.mrb[0].mxu0
    %v85 = vadd.f32 %v27, %v84
    %v86 = vpop.f32.mrb[0].mxu0
    %v87 = vpop.f32.mrb[0].mxu0
    %v88 = vadd.f32 %v27, %v87
    %v89 = vpop.f32.mrb[0].mxu0
    %90 = vdwg.mxu0
    %vm91 = vcmask 130048
    %92 = vst.msk [vmem:[#allocation2] sm:$0xff] %vm91, %v85
    %93 = vst.msk [vmem:[#allocation2 + $0x8] sm:$0xff] %vm91, %v88
    // Predicated region
    $region14: #{seq2seq_forward.13} parent=1 // pred_check
      _
    $region15: #{seq2seq_forward.13} parent=1 // pred_check_branch
      %95 = sbr.rel (0) target = $region17
    $region16: #{seq2seq_forward.13} parent=1 // pred_region
      %s97 = ssub.s32 256, 256
      %98 = vsyncadd [#allocation3], %s97
      %s99 = sshll.u32 [#allocation2], 4
      %s100 = int_to_ptr.vmem [resolvable:$true] %s99
      %105 = dma.vmem_to_hbm [thread:$0]  %s100, 256, %s3, [#allocation3], 128, 128, 8
    $region17: #{seq2seq_forward.13} parent=1 // pred_fallthru
      _
    // Predicated region
    $region18: #{seq2seq_forward.13} parent=1 // pred_check
      _
    $region19: #{seq2seq_forward.13} parent=1 // pred_check_branch
      %107 = sbr.rel (0) target = $region21
    $region20: #{seq2seq_forward.13} parent=1 // pred_region
      %108 = dma.done [#allocation3], 256
    $region21: #{seq2seq_forward.13} parent=1 // pred_fallthru
      _
    %109 = vsyncpa [#allocation3], 1

</llo_original>
